<compile_context>
chip_gen: v5e
topology: v5e:2x2
jax: 0.10.0
libtpu: 0.0.40
codegen_flags: <defaults>
</compile_context>

<pallas_src>
import math
import functools

import jax
import jax.numpy as jnp
from jax.experimental import pallas as pl
from jax.experimental.pallas import tpu as pltpu


def _detr_pos_embed_kernel(nm_ref, ltri_ref, utri_ref, dim_ref, out_ref, *,
                           num_pos_feats, normalize, scale, block_h, matmul_dtype):
    # nm_ref   : (1, H, W)        f32  not_mask for the whole image (valid=1, pad=0)
    # ltri_ref : (block_h, H)     f32  rows of the lower-triangular(incl diag) ones matrix
    # utri_ref : (W, W)           f32  upper-triangular(incl diag) ones matrix
    # dim_ref  : (2, npf)         f32  row0 = 1/dim_t, row1 = phase (0 even / pi/2 odd)
    # out_ref  : (1, block_h, W, 2*npf) f32, channels-last
    _, H, W = nm_ref.shape

    nm = nm_ref[0]                                        # (H, W) f32
    nm_mm = nm.astype(matmul_dtype)                       # full image, matmul operand

    if block_h == H:
        nm_rows_mm = nm_mm
    else:
        row0 = pl.multiple_of(pl.program_id(1) * block_h, block_h)
        nm_rows_mm = nm_ref[0, pl.ds(row0, block_h), :].astype(matmul_dtype)

    ltri = ltri_ref[...].astype(matmul_dtype)             # (block_h, H)
    utri = utri_ref[...].astype(matmul_dtype)             # (W, W)

    # Cumulative sums as triangular-ones matmuls on the MXU (exact: 0/1 operands,
    # f32 accumulation).
    #   y_embed[i, j] = sum_{r <= i} nm[r, j]   (over the full image height)
    #   x_embed[i, j] = sum_{c <= j} nm[i, c]   (within this row tile)
    y_embed = jnp.dot(ltri, nm_mm, preferred_element_type=jnp.float32)        # (block_h, W)
    x_embed = jnp.dot(nm_rows_mm, utri, preferred_element_type=jnp.float32)   # (block_h, W)

    if normalize:
        eps = 1e-6
        # Denominators: full-column totals (last row of the full y-cumsum) and
        # per-row totals (last column of the x-cumsum).
        col_tot = y_embed[-1:, :] if block_h == H else jnp.sum(nm, axis=0, keepdims=True)
        row_tot = x_embed[:, -1:]                                             # (block_h, 1)
        # Divide once per row/column, then broadcast-multiply.
        y_embed = y_embed * (scale / (col_tot + eps))
        x_embed = x_embed * (scale / (row_tot + eps))

    inv_dim_t = dim_ref[0:1, :][None]                     # (1, 1, npf)
    phase = dim_ref[1:2, :][None]                         # (1, 1, npf)

    # One transcendental per output element: even channels sin, odd channels cos via a
    # pi/2 phase shift (dim_t[2k] == dim_t[2k+1], matching PyTorch's interleave).
    pos_y = jnp.sin(y_embed[:, :, None] * inv_dim_t + phase)                  # (block_h, W, npf)
    pos_x = jnp.sin(x_embed[:, :, None] * inv_dim_t + phase)

    # Store the two halves directly (no concat buffer; lane-dense for npf multiples of 64).
    out_ref[0, :, :, :num_pos_feats] = pos_y
    out_ref[0, :, :, num_pos_feats:] = pos_x


def _pick_block_h(h, w, c, target_bytes=2 * 1024 * 1024):
    """Largest row tile that divides h, is a multiple of 8 (or equals h) and keeps the
    f32 output tile under ~target_bytes (bounds VMEM: v5e 16 MiB scoped default,
    v7x 64 MiB physical; also feeds both v7x TensorCores at small batch sizes)."""
    rows_budget = max(1, target_bytes // max(1, w * c * 4))
    if h <= rows_budget:
        return h
    candidates = [d for d in range(8, h, 8) if h % d == 0 and d <= rows_budget]
    return max(candidates) if candidates else h


def detr_position_embedding_sine(mask, *, num_pos_feats=128, temperature=10000,
                                 normalize=True, scale=None, channels_last=False,
                                 block_h=None):
    """mask: bool [B, H, W], True = padding.

    Returns float32 [B, 2*num_pos_feats, H, W] (NCHW, like the PyTorch module), or
    [B, H, W, 2*num_pos_feats] if channels_last=True (skips the layout transpose;
    preferred when the consumer flattens to (B, H*W, C) anyway)."""
    if scale is not None and not normalize:
        raise ValueError("normalize should be True if scale is passed")
    if scale is None:
        scale = 2 * math.pi

    b, h, w = mask.shape
    c = 2 * num_pos_feats

    if block_h is None:
        block_h = _pick_block_h(h, w, c)
    if h % block_h != 0 or not (block_h == h or block_h % 8 == 0):
        raise ValueError(f"invalid block_h={block_h} for H={h}")
    n_row_tiles = h // block_h

    # bf16 matmul operands are exact here (0/1 entries, integer sums accumulated in f32);
    # conservative f32 fallback for very large spatial dims.
    matmul_dtype = jnp.bfloat16 if max(h, w) <= 256 else jnp.float32

    # Grid-invariant constants, built once and kept VMEM-resident via constant index_maps.
    row_i = jnp.arange(h, dtype=jnp.int32)
    col_i = jnp.arange(w, dtype=jnp.int32)
    lower_tri = (row_i[:, None] >= row_i[None, :]).astype(jnp.float32)   # (H, H) L incl diag
    upper_tri = (col_i[:, None] <= col_i[None, :]).astype(jnp.float32)   # (W, W) U incl diag

    # dim_t = temperature ** (2 * (i // 2) / num_pos_feats); table row0 = 1/dim_t,
    # row1 = phase shift (0 for even channels -> sin, pi/2 for odd -> cos).
    i_f = jnp.arange(num_pos_feats, dtype=jnp.float32)
    inv_dim_t = jnp.float32(temperature) ** (-(2.0 * jnp.floor(i_f / 2.0))
                                             / float(num_pos_feats))
    phase = (jnp.arange(num_pos_feats, dtype=jnp.int32) % 2).astype(jnp.float32) \
        * (math.pi / 2.0)
    dim_table = jnp.stack([inv_dim_t, phase], axis=0)                    # (2, npf)

    not_mask = (~mask).astype(jnp.float32)                               # (B, H, W)

    kernel = functools.partial(
        _detr_pos_embed_kernel,
        num_pos_feats=num_pos_feats,
        normalize=normalize,
        scale=float(scale),
        block_h=block_h,
        matmul_dtype=matmul_dtype,
    )

    # Advisory cost so XLA schedules neighbouring ops sensibly around this custom call.
    cost = pl.CostEstimate(
        flops=int(b * (2 * h * h * w + 2 * h * w * w + 3 * h * w * c)),
        transcendentals=int(b * h * w * c),
        bytes_accessed=int(b * (h * w + h * w * c) * 4
                           + (h * h + w * w + 2 * num_pos_feats) * 4),
    )

    out_nhwc = pl.pallas_call(
        kernel,
        out_shape=jax.ShapeDtypeStruct((b, h, w, c), jnp.float32),
        grid_spec=pltpu.PrefetchScalarGridSpec(
            num_scalar_prefetch=0,
            grid=(b, n_row_tiles),
            in_specs=[
                pl.BlockSpec((1, h, w), lambda bi, ri: (bi, 0, 0)),          # not_mask (per batch)
                pl.BlockSpec((block_h, h), lambda bi, ri: (ri, 0)),          # lower-tri rows of tile
                pl.BlockSpec((w, w), lambda bi, ri: (0, 0)),                 # upper-tri (resident)
                pl.BlockSpec((2, num_pos_feats), lambda bi, ri: (0, 0)),     # 1/dim_t + phase
            ],
            out_specs=pl.BlockSpec((1, block_h, w, c),
                                   lambda bi, ri: (bi, ri, 0, 0)),
        ),
        compiler_params=pltpu.CompilerParams(
            dimension_semantics=("parallel", "parallel")),
        cost_estimate=cost,
    )(not_mask, lower_tri, upper_tri, dim_table)

    if channels_last:
        return out_nhwc
    # Match the PyTorch module's NCHW output (permute(0, 3, 1, 2)).
    return jnp.transpose(out_nhwc, (0, 3, 1, 2))


def _reference(mask, *, num_pos_feats, temperature, normalize, scale):
    """Pure-JAX port of the PyTorch forward, for verification."""
    if scale is None:
        scale = 2 * math.pi
    not_mask = (~mask).astype(jnp.float32)
    y_embed = jnp.cumsum(not_mask, axis=1)
    x_embed = jnp.cumsum(not_mask, axis=2)
    if normalize:
        eps = 1e-6
        y_embed = y_embed / (y_embed[:, -1:, :] + eps) * scale
        x_embed = x_embed / (x_embed[:, :, -1:] + eps) * scale
    dim_t = jnp.arange(num_pos_feats, dtype=jnp.float32)
    dim_t = temperature ** (2 * jnp.floor(dim_t / 2) / num_pos_feats)
    pos_x = x_embed[:, :, :, None] / dim_t
    pos_y = y_embed[:, :, :, None] / dim_t
    b, h, w = mask.shape
    pos_x = jnp.stack((jnp.sin(pos_x[:, :, :, 0::2]),
                       jnp.cos(pos_x[:, :, :, 1::2])), axis=4).reshape(b, h, w, -1)
    pos_y = jnp.stack((jnp.sin(pos_y[:, :, :, 0::2]),
                       jnp.cos(pos_y[:, :, :, 1::2])), axis=4).reshape(b, h, w, -1)
    pos = jnp.concatenate((pos_y, pos_x), axis=3).transpose(0, 3, 1, 2)
    return pos


if __name__ == "__main__":
    B, C_IN, H, W = 2, 4, 16, 16
    NUM_POS_FEATS = 16          # -> 32 output channels (small synthetic config)
    TEMPERATURE = 10000
    NORMALIZE = True
    SCALE = None

    key = jax.random.PRNGKey(0)
    kx, kh, kw = jax.random.split(key, 3)

    # NestedTensor.tensors (unused by the math, carried only for fidelity).
    x = jax.random.normal(kx, (B, C_IN, H, W), dtype=jnp.float32)

    # Padding mask: each batch element has a random valid (h, w) extent.
    valid_h = jax.random.randint(kh, (B,), 8, H + 1)
    valid_w = jax.random.randint(kw, (B,), 8, W + 1)
    row_ids = jnp.arange(H)[None, :, None]
    col_ids = jnp.arange(W)[None, None, :]
    mask = (row_ids >= valid_h[:, None, None]) | (col_ids >= valid_w[:, None, None])

    ref = _reference(mask, num_pos_feats=NUM_POS_FEATS, temperature=TEMPERATURE,
                     normalize=NORMALIZE, scale=SCALE)

    # 1) Module-equivalent NCHW output.
    pos = detr_position_embedding_sine(
        mask, num_pos_feats=NUM_POS_FEATS, temperature=TEMPERATURE,
        normalize=NORMALIZE, scale=SCALE)
    pos = jax.block_until_ready(pos)
    assert pos.shape == (B, 2 * NUM_POS_FEATS, H, W), pos.shape
    assert pos.dtype == jnp.float32
    assert jnp.allclose(pos, ref, atol=1e-4, rtol=1e-4), "NCHW mismatch vs reference"

    # 2) Fast channels-last path (no wrapper transpose), same values.
    pos_nhwc = detr_position_embedding_sine(
        mask, num_pos_feats=NUM_POS_FEATS, temperature=TEMPERATURE,
        normalize=NORMALIZE, scale=SCALE, channels_last=True)
    pos_nhwc = jax.block_until_ready(pos_nhwc)
    assert pos_nhwc.shape == (B, H, W, 2 * NUM_POS_FEATS)
    assert jnp.allclose(pos_nhwc, jnp.transpose(ref, (0, 2, 3, 1)),
                        atol=1e-4, rtol=1e-4), "NHWC mismatch vs reference"

    # 3) Exercise the row-tiled path (block_h < H) used for large feature maps.
    pos_tiled = detr_position_embedding_sine(
        mask, num_pos_feats=NUM_POS_FEATS, temperature=TEMPERATURE,
        NORMALIZE=True, scale=SCALE, block_h=8) if False else \
        detr_position_embedding_sine(
            mask, num_pos_feats=NUM_POS_FEATS, temperature=TEMPERATURE,
            normalize=NORMALIZE, scale=SCALE, block_h=8)
    pos_tiled = jax.block_until_ready(pos_tiled)
    assert jnp.allclose(pos_tiled, ref, atol=1e-4, rtol=1e-4), "tiled mismatch vs reference"

    print("KERNEL_OK")
</pallas_src>

<mosaic_0001>
module attributes {stable_mosaic.version = 11 : i64} {
  func.func @_detr_pos_embed_kernel(%arg0: i32, %arg1: i32, %arg2: memref<1x16x16xf32, #tpu.memory_space<vmem>>, %arg3: memref<16x16xf32, #tpu.memory_space<vmem>>, %arg4: memref<16x16xf32, #tpu.memory_space<vmem>>, %arg5: memref<2x16xf32, #tpu.memory_space<vmem>>, %arg6: memref<1x16x16x32xf32, #tpu.memory_space<vmem>>) attributes {dimension_semantics = [#tpu.dimension_semantics<parallel>, #tpu.dimension_semantics<parallel>], iteration_bounds = array<i64: 2, 1>, scalar_prefetch = 0 : i64, scratch_operands = 0 : i64, tpu.core_type = #tpu.core_type<tc>, window_params = [{transform_indices = @transform_0, window_bounds = array<i64: 1, 16, 16>}, {transform_indices = @transform_1, window_bounds = array<i64: 16, 16>}, {pipeline_mode = #tpu.pipeline_mode<synchronous>, transform_indices = @transform_2, window_bounds = array<i64: 16, 16>}, {pipeline_mode = #tpu.pipeline_mode<synchronous>, transform_indices = @transform_3, window_bounds = array<i64: 2, 16>}, {transform_indices = @transform_4, window_bounds = array<i64: 1, 16, 16, 32>}]} {
    %c0 = arith.constant 0 : index
    %c0_0 = arith.constant 0 : index
    %c0_1 = arith.constant 0 : index
    %0 = vector.load %arg2[%c0, %c0_0, %c0_1] : memref<1x16x16xf32, #tpu.memory_space<vmem>>, vector<1x16x16xf32>
    %1 = vector.shape_cast %0 : vector<1x16x16xf32> to vector<16x16xf32>
    %2 = arith.truncf %1 : vector<16x16xf32> to vector<16x16xbf16>
    %c0_2 = arith.constant 0 : index
    %c0_3 = arith.constant 0 : index
    %3 = vector.load %arg3[%c0_2, %c0_3] : memref<16x16xf32, #tpu.memory_space<vmem>>, vector<16x16xf32>
    %4 = arith.truncf %3 : vector<16x16xf32> to vector<16x16xbf16>
    %c0_4 = arith.constant 0 : index
    %c0_5 = arith.constant 0 : index
    %5 = vector.load %arg4[%c0_4, %c0_5] : memref<16x16xf32, #tpu.memory_space<vmem>>, vector<16x16xf32>
    %6 = arith.truncf %5 : vector<16x16xf32> to vector<16x16xbf16>
    %cst = arith.constant dense<0.000000e+00> : vector<16x16xf32>
    %7 = tpu.matmul %4, %2, %cst {dimension_numbers = #tpu.dot_dimension_numbers<[1], [0], [0], [1], [0, 0, 1, 1], [], []>} : vector<16x16xbf16>, vector<16x16xbf16>, vector<16x16xf32> -> vector<16x16xf32>
    %cst_6 = arith.constant dense<0.000000e+00> : vector<16x16xf32>
    %8 = tpu.matmul %2, %6, %cst_6 {dimension_numbers = #tpu.dot_dimension_numbers<[1], [0], [0], [1], [0, 0, 1, 1], [], []>} : vector<16x16xbf16>, vector<16x16xbf16>, vector<16x16xf32> -> vector<16x16xf32>
    %9 = vector.extract_strided_slice %7 {offsets = [15, 0], sizes = [1, 16], strides = [1, 1]} : vector<16x16xf32> to vector<1x16xf32>
    %10 = vector.extract_strided_slice %8 {offsets = [0, 15], sizes = [16, 1], strides = [1, 1]} : vector<16x16xf32> to vector<16x1xf32>
    %cst_7 = arith.constant 9.99999997E-7 : f32
    %11 = vector.broadcast %cst_7 : f32 to vector<1x16xf32>
    %12 = arith.addf %9, %11 : vector<1x16xf32>
    %cst_8 = arith.constant 6.28318548 : f32
    %13 = vector.broadcast %cst_8 : f32 to vector<1x16xf32>
    %14 = arith.divf %13, %12 : vector<1x16xf32>
    %15 = vector.broadcast %14 : vector<1x16xf32> to vector<16x16xf32>
    %16 = arith.mulf %7, %15 : vector<16x16xf32>
    %cst_9 = arith.constant 9.99999997E-7 : f32
    %17 = vector.broadcast %cst_9 : f32 to vector<16x1xf32>
    %18 = arith.addf %10, %17 : vector<16x1xf32>
    %cst_10 = arith.constant 6.28318548 : f32
    %19 = vector.broadcast %cst_10 : f32 to vector<16x1xf32>
    %20 = arith.divf %19, %18 : vector<16x1xf32>
    %21 = vector.broadcast %20 : vector<16x1xf32> to vector<16x16xf32>
    %22 = arith.mulf %8, %21 : vector<16x16xf32>
    %c0_11 = arith.constant 0 : index
    %c0_12 = arith.constant 0 : index
    %23 = vector.load %arg5[%c0_11, %c0_12] : memref<2x16xf32, #tpu.memory_space<vmem>>, vector<1x16xf32>
    %24 = vector.shape_cast %23 : vector<1x16xf32> to vector<1x1x16xf32>
    %c1 = arith.constant 1 : index
    %c0_13 = arith.constant 0 : index
    %25 = vector.load %arg5[%c1, %c0_13] : memref<2x16xf32, #tpu.memory_space<vmem>>, vector<1x16xf32>
    %26 = vector.shape_cast %25 : vector<1x16xf32> to vector<1x1x16xf32>
    %27 = vector.shape_cast %16 : vector<16x16xf32> to vector<16x16x1xf32>
    %28 = vector.broadcast %27 : vector<16x16x1xf32> to vector<16x16x16xf32>
    %29 = vector.broadcast %24 : vector<1x1x16xf32> to vector<16x16x16xf32>
    %30 = arith.mulf %28, %29 : vector<16x16x16xf32>
    %31 = vector.broadcast %26 : vector<1x1x16xf32> to vector<16x16x16xf32>
    %32 = arith.addf %30, %31 : vector<16x16x16xf32>
    %33 = math.sin %32 : vector<16x16x16xf32>
    %34 = vector.shape_cast %22 : vector<16x16xf32> to vector<16x16x1xf32>
    %35 = vector.broadcast %34 : vector<16x16x1xf32> to vector<16x16x16xf32>
    %36 = vector.broadcast %24 : vector<1x1x16xf32> to vector<16x16x16xf32>
    %37 = arith.mulf %35, %36 : vector<16x16x16xf32>
    %38 = vector.broadcast %26 : vector<1x1x16xf32> to vector<16x16x16xf32>
    %39 = arith.addf %37, %38 : vector<16x16x16xf32>
    %40 = math.sin %39 : vector<16x16x16xf32>
    %c0_14 = arith.constant 0 : index
    %c0_15 = arith.constant 0 : index
    %c0_16 = arith.constant 0 : index
    %c0_17 = arith.constant 0 : index
    %41 = vector.load %arg6[%c0_14, %c0_15, %c0_16, %c0_17] : memref<1x16x16x32xf32, #tpu.memory_space<vmem>>, vector<1x16x16x16xf32>
    %42 = vector.shape_cast %41 : vector<1x16x16x16xf32> to vector<16x16x16xf32>
    %43 = vector.shape_cast %33 : vector<16x16x16xf32> to vector<1x16x16x16xf32>
    tpu.vector_store %arg6[%c0_14, %c0_15, %c0_16, %c0_17], %43 {strides = array<i32>} : memref<1x16x16x32xf32, #tpu.memory_space<vmem>>, vector<1x16x16x16xf32>,
    %c0_18 = arith.constant 0 : index
    %c0_19 = arith.constant 0 : index
    %c0_20 = arith.constant 0 : index
    %c16 = arith.constant 16 : index
    %44 = vector.load %arg6[%c0_18, %c0_19, %c0_20, %c16] : memref<1x16x16x32xf32, #tpu.memory_space<vmem>>, vector<1x16x16x16xf32>
    %45 = vector.shape_cast %44 : vector<1x16x16x16xf32> to vector<16x16x16xf32>
    %46 = vector.shape_cast %40 : vector<16x16x16xf32> to vector<1x16x16x16xf32>
    tpu.vector_store %arg6[%c0_18, %c0_19, %c0_20, %c16], %46 {strides = array<i32>} : memref<1x16x16x32xf32, #tpu.memory_space<vmem>>, vector<1x16x16x16xf32>,
    return
  }
  func.func @transform_0(%arg0: i32, %arg1: i32) -> (i32, i32, i32) {
    %c0_i32 = arith.constant 0 : i32
    %c0_i32_0 = arith.constant 0 : i32
    %c0_i32_1 = arith.constant 0 : i32
    return %arg0, %c0_i32, %c0_i32_0 : i32, i32, i32
  }
  func.func @transform_1(%arg0: i32, %arg1: i32) -> (i32, i32) {
    %c0_i32 = arith.constant 0 : i32
    %c0_i32_0 = arith.constant 0 : i32
    return %arg1, %c0_i32 : i32, i32
  }
  func.func @transform_2(%arg0: i32, %arg1: i32) -> (i32, i32) {
    %c0_i32 = arith.constant 0 : i32
    %c0_i32_0 = arith.constant 0 : i32
    %c0_i32_1 = arith.constant 0 : i32
    return %c0_i32, %c0_i32_0 : i32, i32
  }
  func.func @transform_3(%arg0: i32, %arg1: i32) -> (i32, i32) {
    %c0_i32 = arith.constant 0 : i32
    %c0_i32_0 = arith.constant 0 : i32
    %c0_i32_1 = arith.constant 0 : i32
    return %c0_i32, %c0_i32_0 : i32, i32
  }
  func.func @transform_4(%arg0: i32, %arg1: i32) -> (i32, i32, i32, i32) {
    %c0_i32 = arith.constant 0 : i32
    %c0_i32_0 = arith.constant 0 : i32
    %c0_i32_1 = arith.constant 0 : i32
    return %arg0, %arg1, %c0_i32, %c0_i32_0 : i32, i32, i32, i32
  }
}

</mosaic_0001>

<llo_original>
// kernel: tpu_custom_call.1
$region0: #{tpu_custom_call.1}
  #allocation0 [shape = 'u32[]', space=smem, size = 0x4, offset = 0x4, fixed_abs, tag = 'smem constant byte address 0x4 - core index']
  #allocation1 [shape = 'u32[72,128]{1,0:T(1,128)}', space=vmem, size = 0x9000, scoped, tag = 'internal scratch']
  %s0 = inlined_call_operand.hbm [shape: f32[2,16,16], index: 0, kind: input, shape index: {}]
  %s1 = inlined_call_operand.hbm [shape: f32[16,16], index: 1, kind: input, shape index: {}]
  %s2 = inlined_call_operand.hbm [shape: f32[16,16], index: 2, kind: input, shape index: {}]
  %s3 = inlined_call_operand.vmem [shape: f32[2,16], index: 3, kind: input, shape index: {}]
  %s4 = inlined_call_operand.hbm [shape: f32[2,16,16,32], index: 4, kind: output, shape index: {}]
  %s5 = sld [smem:[#allocation0]]
  $region61: #{tpu_custom_call.1} parent=0
    _
  %s7 = ssub.s32 1, %s5
  %s8 = scalar_select 0, %s7, %s5
  $region1: #{tpu_custom_call.1} parent=0
    #allocation2 [shape = 'u8[16384]{0}', space=vmem, size = 0x4000, scoped, tag = 'input window, operand 0']
    #allocation3 [shape = 's32[2]{0}', space=sflag, size = 0x8, scoped, tag = 'scoped memory for tpu_custom_call.1']
    #allocation4 [shape = 's32[2]{0}', space=sflag, size = 0x8, scoped, tag = 'scoped memory for tpu_custom_call.1']
    #allocation5 [shape = 'u8[8192]{0}', space=vmem, size = 0x2000, scoped, tag = 'input window, operand 1, single buffered']
    #allocation6 [shape = 's32[1]{0}', space=sflag, size = 0x4, scoped, tag = 'scoped memory for tpu_custom_call.1']
    #allocation7 [shape = 'u8[8192]{0}', space=vmem, size = 0x2000, scoped, tag = 'input window, operand 2, single buffered']
    #allocation8 [shape = 'u8[262144]{0}', space=vmem, size = 0x40000, scoped, tag = 'output window, operand 0']
    %9 = vsyncpa [#allocation3], 0
    %s10 = scalar_lea.sflag [#allocation3], 1
    %11 = vsyncpa %s10, 0
    %12 = vsyncpa [#allocation6], 0
    %13 = vsyncpa [#allocation4], 0
    %s14 = scalar_lea.sflag [#allocation4], 1
    %15 = vsyncpa %s14, 0
    loop: start=0, step=1, limit=4
    $region2: #{tpu_custom_call.1} parent=1 // loop_pre_header
      _
    $region3: #{tpu_custom_call.1} parent=1 // loop_header
      %s17 = sphi 0, %s21
      %p18 = scmp.ge.s32.totalorder %s17, 4
      %s24 = sphi 0, %s36
      %s25 = sphi 0, %s32
      %s26 = sphi 0, %s24
      %s27 = sphi 0, %s25
      %s28 = sphi 0, %s26
      %s29 = sphi 0, %s27
      %s39 = sphi 0, %s41
      %s42 = sphi 0, %s39
      %s43 = sphi 0, %s42
      %s59 = sphi 0, %s43
      %s65 = sphi 0, %s67
      %s68 = sphi 0, %s65
      %s69 = sphi 0, %s68
      %s85 = sphi 0, %s69
      %s89 = sphi 0, %s89
      %s91 = sphi 0, %s89
      %s92 = sphi 0, %s91
      %s106 = sphi 0, %s92
      %s110 = sphi 0, %s110
      %s112 = sphi 0, %s110
      %s113 = sphi 0, %s112
      %s127 = sphi 0, %s113
      %s135 = sphi 0, %s137
      %s138 = sphi 0, %s135
      %s139 = sphi 0, %s138
      %s155 = sphi 0, %s139
    $region4: #{tpu_custom_call.1} parent=1 // loop_header_branch
      %20 = sbr.rel (%p18) target = $region8
    $region5: #{tpu_custom_call.1} parent=1 // loop_body
      %s22 = ssub.s32 %s17, 1
      %s23 = ssub.s32 %s17, 2
      %s30 = sadd.s32 1, %s25
      %p31 = scmp.ge.s32.totalorder %s30, 1
      %s32 = scalar_select %p31, 0, %s30
      %s33 = sadd.s32 1, %s24
      %s34 = scalar_select %p31, %s33, %s24
      %p35 = scmp.ge.s32.totalorder %s34, 2
      %s36 = scalar_select %p35, 0, %s34
      %s37 = ssub.s32 %s24, %s36
      %p38 = scmp.eq.s32.totalorder %s37, 0
      %s40 = sadd.s32 %s39, 1
      %s41 = scalar_select %p38, %s39, %s40
      %p44 = pneg %p38
      %p45 = scmp.eq.s32.totalorder %s17, 1
      %p46 = por %p44, %p45
      %p47 = scmp.ne.s32.totalorder %s39, %s42
      %p48 = scmp.eq.s32.totalorder %s17, 0
      %p49 = por %p47, %p48
      %p50 = scmp.ne.s32.totalorder %s39, %s42
      %p51 = scmp.eq.s32.totalorder %s22, 1
      %p52 = por %p50, %p51
      %p53 = scmp.ne.s32.totalorder %s42, %s43
      %p54 = scmp.eq.s32.totalorder %s22, 0
      %p55 = por %p53, %p54
      %p56 = scmp.ne.s32.totalorder %s42, %s43
      %p57 = scmp.eq.s32.totalorder %s23, 1
      %p58 = por %p56, %p57
      %p60 = scmp.ne.s32.totalorder %s43, %s59
      %p61 = scmp.eq.s32.totalorder %s23, 0
      %p62 = por %p60, %p61
      %s63 = ssub.s32 %s25, %s32
      %p64 = scmp.eq.s32.totalorder %s63, 0
      %s66 = sadd.s32 %s65, 1
      %s67 = scalar_select %p64, %s65, %s66
      %p70 = pneg %p64
      %p71 = scmp.eq.s32.totalorder %s17, 1
      %p72 = por %p70, %p71
      %p73 = scmp.ne.s32.totalorder %s65, %s68
      %p74 = scmp.eq.s32.totalorder %s17, 0
      %p75 = por %p73, %p74
      %p76 = scmp.ne.s32.totalorder %s65, %s68
      %p77 = scmp.eq.s32.totalorder %s22, 1
      %p78 = por %p76, %p77
      %p79 = scmp.ne.s32.totalorder %s68, %s69
      %p80 = scmp.eq.s32.totalorder %s22, 0
      %p81 = por %p79, %p80
      %p82 = scmp.ne.s32.totalorder %s68, %s69
      %p83 = scmp.eq.s32.totalorder %s23, 1
      %p84 = por %p82, %p83
      %p86 = scmp.ne.s32.totalorder %s69, %s85
      %p87 = scmp.eq.s32.totalorder %s23, 0
      %p88 = por %p86, %p87
      %s90 = sadd.s32 %s89, 1
      %p93 = scmp.eq.s32.totalorder %s17, 1
      %p94 = scmp.ne.s32.totalorder %s89, %s91
      %p95 = scmp.eq.s32.totalorder %s17, 0
      %p96 = por %p94, %p95
      %p97 = scmp.ne.s32.totalorder %s89, %s91
      %p98 = scmp.eq.s32.totalorder %s22, 1
      %p99 = por %p97, %p98
      %p100 = scmp.ne.s32.totalorder %s91, %s92
      %p101 = scmp.eq.s32.totalorder %s22, 0
      %p102 = por %p100, %p101
      %p103 = scmp.ne.s32.totalorder %s91, %s92
      %p104 = scmp.eq.s32.totalorder %s23, 1
      %p105 = por %p103, %p104
      %p107 = scmp.ne.s32.totalorder %s92, %s106
      %p108 = scmp.eq.s32.totalorder %s23, 0
      %p109 = por %p107, %p108
      %s111 = sadd.s32 %s110, 1
      %p114 = scmp.eq.s32.totalorder %s17, 1
      %p115 = scmp.ne.s32.totalorder %s110, %s112
      %p116 = scmp.eq.s32.totalorder %s17, 0
      %p117 = por %p115, %p116
      %p118 = scmp.ne.s32.totalorder %s110, %s112
      %p119 = scmp.eq.s32.totalorder %s22, 1
      %p120 = por %p118, %p119
      %p121 = scmp.ne.s32.totalorder %s112, %s113
      %p122 = scmp.eq.s32.totalorder %s22, 0
      %p123 = por %p121, %p122
      %p124 = scmp.ne.s32.totalorder %s112, %s113
      %p125 = scmp.eq.s32.totalorder %s23, 1
      %p126 = por %p124, %p125
      %p128 = scmp.ne.s32.totalorder %s113, %s127
      %p129 = scmp.eq.s32.totalorder %s23, 0
      %p130 = por %p128, %p129
      %s131 = ssub.s32 %s24, %s36
      %s132 = ssub.s32 %s25, %s32
      %s133 = sor.u32 %s131, %s132
      %p134 = scmp.eq.s32.totalorder %s133, 0
      %s136 = sadd.s32 %s135, 1
      %s137 = scalar_select %p134, %s135, %s136
      %p140 = pneg %p134
      %p141 = scmp.eq.s32.totalorder %s17, 1
      %p142 = por %p140, %p141
      %p143 = scmp.ne.s32.totalorder %s135, %s138
      %p144 = scmp.eq.s32.totalorder %s17, 0
      %p145 = por %p143, %p144
      %p146 = scmp.ne.s32.totalorder %s135, %s138
      %p147 = scmp.eq.s32.totalorder %s22, 1
      %p148 = por %p146, %p147
      %p149 = scmp.ne.s32.totalorder %s138, %s139
      %p150 = scmp.eq.s32.totalorder %s22, 0
      %p151 = por %p149, %p150
      %p152 = scmp.ne.s32.totalorder %s138, %s139
      %p153 = scmp.eq.s32.totalorder %s23, 1
      %p154 = por %p152, %p153
      %p156 = scmp.ne.s32.totalorder %s139, %s155
      %p157 = scmp.eq.s32.totalorder %s23, 0
      %p158 = por %p156, %p157
      %p159 = scmp.le.s32.totalorder 1, %s17
      %p160 = scmp.lt.s32.totalorder %s17, 3
      %p161 = pnand %p159, %p160
      %p162 = pneg %p161
      // Predicated region
      $region9: #{tpu_custom_call.1} parent=5 // pred_check
        _
      $region10: #{tpu_custom_call.1} parent=5 // pred_check_branch
        %164 = sbr.rel (%p161) target = $region12
      $region11: #{tpu_custom_call.1} parent=5 // pred_region
        %s165 = ssub.s32 %s17, 1
        // Predicated region
        $region13: #{tpu_custom_call.1} parent=11 // pred_check
          %p166 = pneg %p81
        $region14: #{tpu_custom_call.1} parent=11 // pred_check_branch
          %168 = sbr.rel (%p166) target = $region16
        $region15: #{tpu_custom_call.1} parent=11 // pred_region
          %s169 = smul.u32 2, %s27
          %171 = vsyncadd [#allocation6], 0
          %s172 = smul.addr %s169, 8
          %s173 = scalar_lea.hbm %s1, %s172
          %s174 = sshll.u32 %s173, 4
          %s175 = int_to_ptr.hbm [resolvable:$true] %s174
          %s176 = sshll.u32 [#allocation5], 4
          %s177 = int_to_ptr.vmem [resolvable:$true] %s176
          %182 = dma.hbm_to_vmem [thread:$0]  %s175, 256, %s177, [#allocation6], 128, 128, 8
        $region16: #{tpu_custom_call.1} parent=11 // pred_fallthru
          _
        // Predicated region
        $region17: #{tpu_custom_call.1} parent=11 // pred_check
          %p183 = pneg %p102
        $region18: #{tpu_custom_call.1} parent=11 // pred_check_branch
          %185 = sbr.rel (%p183) target = $region20
        $region19: #{tpu_custom_call.1} parent=11 // pred_region
          %187 = vsyncadd [#allocation6], 0
          %s188 = sshll.u32 %s2, 4
          %s189 = int_to_ptr.hbm [resolvable:$true] %s188
          %s190 = sshll.u32 [#allocation7], 4
          %s191 = int_to_ptr.vmem [resolvable:$true] %s190
          %196 = dma.hbm_to_vmem [thread:$0]  %s189, 256, %s191, [#allocation6], 128, 128, 8
        $region20: #{tpu_custom_call.1} parent=11 // pred_fallthru
          _
        // Predicated region
        $region21: #{tpu_custom_call.1} parent=11 // pred_check
          %p197 = pneg %p123
        $region22: #{tpu_custom_call.1} parent=11 // pred_check_branch
          %199 = sbr.rel (%p197) target = $region24
        $region23: #{tpu_custom_call.1} parent=11 // pred_region
          _
        $region24: #{tpu_custom_call.1} parent=11 // pred_fallthru
          _
      $region12: #{tpu_custom_call.1} parent=5 // pred_fallthru
        _
      %p200 = scmp.lt.s32.totalorder %s17, 2
      // Predicated region
      $region25: #{tpu_custom_call.1} parent=5 // pred_check
        %p201 = pneg %p200
      $region26: #{tpu_custom_call.1} parent=5 // pred_check_branch
        %203 = sbr.rel (%p201) target = $region28
      $region27: #{tpu_custom_call.1} parent=5 // pred_region
        // Predicated region
        $region29: #{tpu_custom_call.1} parent=27 // pred_check
          %p204 = pneg %p49
        $region30: #{tpu_custom_call.1} parent=27 // pred_check_branch
          %206 = sbr.rel (%p204) target = $region32
        $region31: #{tpu_custom_call.1} parent=27 // pred_region
          %s207 = sand.u32 %s39, 1
          %s208 = scalar_lea.sflag [#allocation3], %s207
          %s209 = sand.u32 %s39, 1
          %s210 = smul.addr %s209, 16
          %s211 = scalar_lea.vmem [#allocation2], %s210
          %213 = vsyncadd %s208, 0
          %s214 = smul.addr %s24, 2
          %s215 = smul.addr %s214, 8
          %s216 = scalar_lea.hbm %s0, %s215
          %s217 = sshll.u32 %s216, 4
          %s218 = int_to_ptr.hbm [resolvable:$true] %s217
          %s219 = sshll.u32 %s211, 4
          %s220 = int_to_ptr.vmem [resolvable:$true] %s219
          %225 = dma.hbm_to_vmem [thread:$0]  %s218, 256, %s220, %s208, 128, 128, 8
        $region32: #{tpu_custom_call.1} parent=27 // pred_fallthru
          _
      $region28: #{tpu_custom_call.1} parent=5 // pred_fallthru
        _
      %p226 = scmp.le.s32.totalorder 1, %s17
      %p227 = scmp.lt.s32.totalorder %s17, 3
      %p228 = pnand %p226, %p227
      %p229 = pneg %p228
      // Predicated region
      $region33: #{tpu_custom_call.1} parent=5 // pred_check
        _
      $region34: #{tpu_custom_call.1} parent=5 // pred_check_branch
        %231 = sbr.rel (%p228) target = $region36
      $region35: #{tpu_custom_call.1} parent=5 // pred_region
        %s232 = ssub.s32 %s17, 1
        %s233 = sand.u32 %s42, 1
        %s234 = scalar_lea.sflag [#allocation3], %s233
        %s235 = sand.u32 %s42, 1
        %s236 = smul.addr %s235, 16
        %s237 = scalar_lea.vmem [#allocation2], %s236
        // Predicated region
        $region37: #{tpu_custom_call.1} parent=35 // pred_check
          %p238 = pneg %p55
        $region38: #{tpu_custom_call.1} parent=35 // pred_check_branch
          %240 = sbr.rel (%p238) target = $region40
        $region39: #{tpu_custom_call.1} parent=35 // pred_region
          %242 = dma.done %s234, 256
        $region40: #{tpu_custom_call.1} parent=35 // pred_fallthru
          _
        // Predicated region
        $region41: #{tpu_custom_call.1} parent=35 // pred_check
          %p243 = pneg %p81
        $region42: #{tpu_custom_call.1} parent=35 // pred_check_branch
          %245 = sbr.rel (%p243) target = $region44
        $region43: #{tpu_custom_call.1} parent=35 // pred_region
          %247 = dma.done [#allocation6], 256
        $region44: #{tpu_custom_call.1} parent=35 // pred_fallthru
          _
        // Predicated region
        $region45: #{tpu_custom_call.1} parent=35 // pred_check
          %p248 = pneg %p102
        $region46: #{tpu_custom_call.1} parent=35 // pred_check_branch
          %250 = sbr.rel (%p248) target = $region48
        $region47: #{tpu_custom_call.1} parent=35 // pred_region
          %252 = dma.done [#allocation6], 256
        $region48: #{tpu_custom_call.1} parent=35 // pred_fallthru
          _
        %s253 = sand.u32 %s42, 1
        %s254 = scalar_lea.sflag [#allocation3], %s253
        %s255 = sand.u32 %s42, 1
        %s256 = smul.addr %s255, 16
        %s257 = scalar_lea.vmem [#allocation2], %s256
        %p258 = pneg %p55
        %p259 = pneg %p52
        %p260 = pneg %p81
        %p261 = pneg %p78
        %p262 = pneg %p102
        %p263 = pneg %p99
        %p264 = pneg %p123
        %p265 = pneg %p120
        %p266 = pneg %p151
        %p267 = pneg %p148
        %s268 = sand.u32 %s138, 1
        %s269 = scalar_lea.sflag [#allocation4], %s268
        %s270 = sand.u32 %s138, 1
        %s271 = smul.addr %s270, 256
        %s272 = scalar_lea.vmem [#allocation8], %s271
        %s273 = smul.u32 2, %s27
        %s274 = smul.u32 16, %s27
        %v276 = vld [vmem:[%s237] sm:$0xff]
        %v277 = vld [vmem:[%s237 + $0x8] sm:$0xff]
        %v278 = vpack.c.bf16 %v277, %v276
        %v279 = vld [vmem:[#allocation5] sm:$0xff]
        %v280 = vld [vmem:[#allocation5 + $0x8] sm:$0xff]
        %v281 = vpack.c.bf16 %v280, %v279
        %v282 = vld [vmem:[#allocation7] sm:$0xff]
        %v283 = vld [vmem:[#allocation7 + $0x8] sm:$0xff]
        %v284 = vpack.c.bf16 %v283, %v282
        %vm285 = vcmask 130048
        %v287 = vsel %vm285, %v281, 0
        %289 = vmatpush.bf16.msra.mxu0 0
        %290 = vmatpush.bf16.msra.mxu0 0
        %291 = vmatpush.bf16.msra.mxu0 0
        %292 = vmatpush.bf16.msra.mxu0 0
        %293 = vmatpush.bf16.msra.mxu0 0
        %294 = vmatpush.bf16.msra.mxu0 0
        %295 = vmatpush.bf16.msra.mxu0 0
        %296 = vmatpush.bf16.msra.mxu0 %v278
        %297 = vmatmul.bf16.gmra.mxu0 %v287
        %v298 = vpop.f32.mrf.mxu0
        %v299 = vadd.f32 0.0, %v298
        %v300 = vpop.f32.mrf.mxu0
        %v301 = vadd.f32 0.0, %v300
        %302 = vdwg.mxu0
        %v304 = vsel %vm285, %v278, 0
        %306 = vmatpush.bf16.msra.mxu0 0
        %307 = vmatpush.bf16.msra.mxu0 0
        %308 = vmatpush.bf16.msra.mxu0 0
        %309 = vmatpush.bf16.msra.mxu0 0
        %310 = vmatpush.bf16.msra.mxu0 0
        %311 = vmatpush.bf16.msra.mxu0 0
        %312 = vmatpush.bf16.msra.mxu0 0
        %313 = vmatpush.bf16.msra.mxu0 %v284
        %314 = vmatmul.bf16.gmra.mxu0 %v304
        %v315 = vpop.f32.mrf.mxu0
        %v316 = vadd.f32 0.0, %v315
        %v317 = vpop.f32.mrf.mxu0
        %v318 = vadd.f32 0.0, %v317
        %319 = vdwg.mxu0
        %v320 = vadd.f32 %v301, 1e-06
        %v321 = vrcp.pop %v320
        %v322 = vmul.f32 %v320, %v321
        %v323 = vsub.f32 1.0, %v322
        %v324 = vmul.f32 %v321, %v323
        %v325 = vadd.f32 %v321, %v324
        %vm326 = vweird.f32 %v320
        %vm327 = vweird.f32 %v321
        %vm328 = vmor %vm326, %vm327
        %v329 = vsel %vm328, %v321, %v325
        %v330 = vand.u32 2147483647, %v320
        %vm331 = vcmp.eq.f32.partialorder %v330, 8.507059e+37
        %v332 = vand.u32 %v320, 2147483648
        %v333 = vor.u32 1.1754944e-38, %v332
        %v334 = vsel %vm331, %v333, %v329
        %v335 = vmul.f32 6.2831855, %v334
        %v336 = vperm.slane %v335, 7
        %v337 = vmul.f32 %v299, %v336
        %v338 = vmul.f32 %v301, %v336
        %v339 = vadd.f32 %v316, 1e-06
        %v340 = vadd.f32 %v318, 1e-06
        %v341 = vrcp.pop %v339
        %v342 = vmul.f32 %v339, %v341
        %v343 = vsub.f32 1.0, %v342
        %v344 = vmul.f32 %v341, %v343
        %v345 = vadd.f32 %v341, %v344
        %vm346 = vweird.f32 %v339
        %vm347 = vweird.f32 %v341
        %vm348 = vmor %vm346, %vm347
        %v349 = vsel %vm348, %v341, %v345
        %v350 = vand.u32 2147483647, %v339
        %vm351 = vcmp.eq.f32.partialorder %v350, 8.507059e+37
        %v352 = vand.u32 %v339, 2147483648
        %v353 = vor.u32 1.1754944e-38, %v352
        %v354 = vsel %vm351, %v353, %v349
        %v355 = vmul.f32 6.2831855, %v354
        %v356 = vrcp.pop %v340
        %v357 = vmul.f32 %v340, %v356
        %v358 = vsub.f32 1.0, %v357
        %v359 = vmul.f32 %v356, %v358
        %v360 = vadd.f32 %v356, %v359
        %vm361 = vweird.f32 %v340
        %vm362 = vweird.f32 %v356
        %vm363 = vmor %vm361, %vm362
        %v364 = vsel %vm363, %v356, %v360
        %v365 = vand.u32 2147483647, %v340
        %vm366 = vcmp.eq.f32.partialorder %v365, 8.507059e+37
        %v367 = vand.u32 %v340, 2147483648
        %v368 = vor.u32 1.1754944e-38, %v367
        %v369 = vsel %vm366, %v368, %v364
        %v370 = vmul.f32 6.2831855, %v369
        %372 = vset.pattern.permute.xlu0 15
        %373 = vperm.xlu0 %372, %v355
        %v374 = vpop.permute.xlu0 %373
        %377 = vset.pattern.permute.xlu0 15
        %378 = vperm.xlu0 %377, %v370
        %v379 = vpop.permute.xlu0 %378
        %v381 = vmul.f32 %v316, %v374
        %v382 = vmul.f32 %v318, %v379
        %v383 = vld [vmem:[%s3] sm:$0x1]
        %v384 = vld [vmem:[%s3 + $0x1] sm:$0x1]
        %v385 = vperm.slane %v337, 0
        %v386 = vlaneseq
        %v387 = vshrl.u32 %v386, 7
        %389 = vset.pattern.permute.xlu0 %v387
        %390 = vperm.xlu0 %389, %v385
        %v391 = vpop.permute.xlu0 %390
        %v392 = vlaneseq
        %v393 = vshrl.u32 %v392, 7
        %v394 = vadd.s32 %v393, 8
        %395 = vset.pattern.permute.xlu0 %v394
        %396 = vperm.xlu0 %395, %v385
        %v397 = vpop.permute.xlu0 %396
        %v398 = vperm.slane %v337, 1
        %v399 = vlaneseq
        %v400 = vshrl.u32 %v399, 7
        %402 = vset.pattern.permute.xlu0 %v400
        %403 = vperm.xlu0 %402, %v398
        %v404 = vpop.permute.xlu0 %403
        %v405 = vlaneseq
        %v406 = vshrl.u32 %v405, 7
        %v407 = vadd.s32 %v406, 8
        %408 = vset.pattern.permute.xlu0 %v407
        %409 = vperm.xlu0 %408, %v398
        %v410 = vpop.permute.xlu0 %409
        %v411 = vperm.slane %v337, 2
        %v412 = vlaneseq
        %v413 = vshrl.u32 %v412, 7
        %415 = vset.pattern.permute.xlu0 %v413
        %416 = vperm.xlu0 %415, %v411
        %v417 = vpop.permute.xlu0 %416
        %v418 = vlaneseq
        %v419 = vshrl.u32 %v418, 7
        %v420 = vadd.s32 %v419, 8
        %421 = vset.pattern.permute.xlu0 %v420
        %422 = vperm.xlu0 %421, %v411
        %v423 = vpop.permute.xlu0 %422
        %v424 = vperm.slane %v337, 3
        %v425 = vlaneseq
        %v426 = vshrl.u32 %v425, 7
        %428 = vset.pattern.permute.xlu0 %v426
        %429 = vperm.xlu0 %428, %v424
        %v430 = vpop.permute.xlu0 %429
        %v431 = vlaneseq
        %v432 = vshrl.u32 %v431, 7
        %v433 = vadd.s32 %v432, 8
        %434 = vset.pattern.permute.xlu0 %v433
        %435 = vperm.xlu0 %434, %v424
        %v436 = vpop.permute.xlu0 %435
        %v437 = vperm.slane %v337, 4
        %v438 = vlaneseq
        %v439 = vshrl.u32 %v438, 7
        %441 = vset.pattern.permute.xlu0 %v439
        %442 = vperm.xlu0 %441, %v437
        %v443 = vpop.permute.xlu0 %442
        %v444 = vlaneseq
        %v445 = vshrl.u32 %v444, 7
        %v446 = vadd.s32 %v445, 8
        %447 = vset.pattern.permute.xlu0 %v446
        %448 = vperm.xlu0 %447, %v437
        %v449 = vpop.permute.xlu0 %448
        %v450 = vperm.slane %v337, 5
        %v451 = vlaneseq
        %v452 = vshrl.u32 %v451, 7
        %454 = vset.pattern.permute.xlu0 %v452
        %455 = vperm.xlu0 %454, %v450
        %v456 = vpop.permute.xlu0 %455
        %v457 = vlaneseq
        %v458 = vshrl.u32 %v457, 7
        %v459 = vadd.s32 %v458, 8
        %460 = vset.pattern.permute.xlu0 %v459
        %461 = vperm.xlu0 %460, %v450
        %v462 = vpop.permute.xlu0 %461
        %v463 = vperm.slane %v337, 6
        %v464 = vlaneseq
        %v465 = vshrl.u32 %v464, 7
        %467 = vset.pattern.permute.xlu0 %v465
        %468 = vperm.xlu0 %467, %v463
        %v469 = vpop.permute.xlu0 %468
        %v470 = vlaneseq
        %v471 = vshrl.u32 %v470, 7
        %v472 = vadd.s32 %v471, 8
        %473 = vset.pattern.permute.xlu0 %v472
        %474 = vperm.xlu0 %473, %v463
        %v475 = vpop.permute.xlu0 %474
        %v476 = vperm.slane %v337, 7
        %v477 = vlaneseq
        %v478 = vshrl.u32 %v477, 7
        %480 = vset.pattern.permute.xlu0 %v478
        %481 = vperm.xlu0 %480, %v476
        %v482 = vpop.permute.xlu0 %481
        %v483 = vlaneseq
        %v484 = vshrl.u32 %v483, 7
        %v485 = vadd.s32 %v484, 8
        %486 = vset.pattern.permute.xlu0 %v485
        %487 = vperm.xlu0 %486, %v476
        %v488 = vpop.permute.xlu0 %487
        %v489 = vperm.slane %v338, 0
        %v490 = vlaneseq
        %v491 = vshrl.u32 %v490, 7
        %493 = vset.pattern.permute.xlu0 %v491
        %494 = vperm.xlu0 %493, %v489
        %v495 = vpop.permute.xlu0 %494
        %v496 = vlaneseq
        %v497 = vshrl.u32 %v496, 7
        %v498 = vadd.s32 %v497, 8
        %499 = vset.pattern.permute.xlu0 %v498
        %500 = vperm.xlu0 %499, %v489
        %v501 = vpop.permute.xlu0 %500
        %v502 = vperm.slane %v338, 1
        %v503 = vlaneseq
        %v504 = vshrl.u32 %v503, 7
        %506 = vset.pattern.permute.xlu0 %v504
        %507 = vperm.xlu0 %506, %v502
        %v508 = vpop.permute.xlu0 %507
        %v509 = vlaneseq
        %v510 = vshrl.u32 %v509, 7
        %v511 = vadd.s32 %v510, 8
        %512 = vset.pattern.permute.xlu0 %v511
        %513 = vperm.xlu0 %512, %v502
        %v514 = vpop.permute.xlu0 %513
        %v515 = vperm.slane %v338, 2
        %v516 = vlaneseq
        %v517 = vshrl.u32 %v516, 7
        %519 = vset.pattern.permute.xlu0 %v517
        %520 = vperm.xlu0 %519, %v515
        %v521 = vpop.permute.xlu0 %520
        %v522 = vlaneseq
        %v523 = vshrl.u32 %v522, 7
        %v524 = vadd.s32 %v523, 8
        %525 = vset.pattern.permute.xlu0 %v524
        %526 = vperm.xlu0 %525, %v515
        %v527 = vpop.permute.xlu0 %526
        %v528 = vperm.slane %v338, 3
        %v529 = vlaneseq
        %v530 = vshrl.u32 %v529, 7
        %532 = vset.pattern.permute.xlu0 %v530
        %533 = vperm.xlu0 %532, %v528
        %v534 = vpop.permute.xlu0 %533
        %v535 = vlaneseq
        %v536 = vshrl.u32 %v535, 7
        %v537 = vadd.s32 %v536, 8
        %538 = vset.pattern.permute.xlu0 %v537
        %539 = vperm.xlu0 %538, %v528
        %v540 = vpop.permute.xlu0 %539
        %v541 = vperm.slane %v338, 4
        %v542 = vlaneseq
        %v543 = vshrl.u32 %v542, 7
        %545 = vset.pattern.permute.xlu0 %v543
        %546 = vperm.xlu0 %545, %v541
        %v547 = vpop.permute.xlu0 %546
        %v548 = vlaneseq
        %v549 = vshrl.u32 %v548, 7
        %v550 = vadd.s32 %v549, 8
        %551 = vset.pattern.permute.xlu0 %v550
        %552 = vperm.xlu0 %551, %v541
        %v553 = vpop.permute.xlu0 %552
        %v554 = vperm.slane %v338, 5
        %v555 = vlaneseq
        %v556 = vshrl.u32 %v555, 7
        %558 = vset.pattern.permute.xlu0 %v556
        %559 = vperm.xlu0 %558, %v554
        %v560 = vpop.permute.xlu0 %559
        %v561 = vlaneseq
        %v562 = vshrl.u32 %v561, 7
        %v563 = vadd.s32 %v562, 8
        %564 = vset.pattern.permute.xlu0 %v563
        %565 = vperm.xlu0 %564, %v554
        %v566 = vpop.permute.xlu0 %565
        %v567 = vperm.slane %v338, 6
        %v568 = vlaneseq
        %v569 = vshrl.u32 %v568, 7
        %571 = vset.pattern.permute.xlu0 %v569
        %572 = vperm.xlu0 %571, %v567
        %v573 = vpop.permute.xlu0 %572
        %v574 = vlaneseq
        %v575 = vshrl.u32 %v574, 7
        %v576 = vadd.s32 %v575, 8
        %577 = vset.pattern.permute.xlu0 %v576
        %578 = vperm.xlu0 %577, %v567
        %v579 = vpop.permute.xlu0 %578
        %v580 = vperm.slane %v338, 7
        %v581 = vlaneseq
        %v582 = vshrl.u32 %v581, 7
        %584 = vset.pattern.permute.xlu0 %v582
        %585 = vperm.xlu0 %584, %v580
        %v586 = vpop.permute.xlu0 %585
        %v587 = vlaneseq
        %v588 = vshrl.u32 %v587, 7
        %v589 = vadd.s32 %v588, 8
        %590 = vset.pattern.permute.xlu0 %v589
        %591 = vperm.xlu0 %590, %v580
        %v592 = vpop.permute.xlu0 %591
        %v593 = vperm.slane %v383, 0
        %v594 = vmul.f32 %v391, %v593
        %v595 = vmul.f32 %v397, %v593
        %v596 = vmul.f32 %v404, %v593
        %v597 = vmul.f32 %v410, %v593
        %v598 = vmul.f32 %v417, %v593
        %v599 = vmul.f32 %v423, %v593
        %v600 = vmul.f32 %v430, %v593
        %v601 = vmul.f32 %v436, %v593
        %v602 = vmul.f32 %v443, %v593
        %v603 = vmul.f32 %v449, %v593
        %v604 = vmul.f32 %v456, %v593
        %v605 = vmul.f32 %v462, %v593
        %v606 = vmul.f32 %v469, %v593
        %v607 = vmul.f32 %v475, %v593
        %v608 = vmul.f32 %v482, %v593
        %v609 = vmul.f32 %v488, %v593
        %v610 = vmul.f32 %v495, %v593
        %v611 = vmul.f32 %v501, %v593
        %v612 = vmul.f32 %v508, %v593
        %v613 = vmul.f32 %v514, %v593
        %v614 = vmul.f32 %v521, %v593
        %v615 = vmul.f32 %v527, %v593
        %v616 = vmul.f32 %v534, %v593
        %v617 = vmul.f32 %v540, %v593
        %v618 = vmul.f32 %v547, %v593
        %v619 = vmul.f32 %v553, %v593
        %v620 = vmul.f32 %v560, %v593
        %v621 = vmul.f32 %v566, %v593
        %v622 = vmul.f32 %v573, %v593
        %v623 = vmul.f32 %v579, %v593
        %v624 = vmul.f32 %v586, %v593
        %v625 = vmul.f32 %v592, %v593
        %v626 = vperm.slane %v384, 0
        %v627 = vadd.f32 %v594, %v626
        %v628 = vadd.f32 %v595, %v626
        %v629 = vadd.f32 %v596, %v626
        %v630 = vadd.f32 %v597, %v626
        %v631 = vadd.f32 %v598, %v626
        %v632 = vadd.f32 %v599, %v626
        %v633 = vadd.f32 %v600, %v626
        %v634 = vadd.f32 %v601, %v626
        %v635 = vadd.f32 %v602, %v626
        %v636 = vadd.f32 %v603, %v626
        %v637 = vadd.f32 %v604, %v626
        %v638 = vadd.f32 %v605, %v626
        %v639 = vadd.f32 %v606, %v626
        %v640 = vadd.f32 %v607, %v626
        %v641 = vadd.f32 %v608, %v626
        %v642 = vadd.f32 %v609, %v626
        %v643 = vadd.f32 %v610, %v626
        %v644 = vadd.f32 %v611, %v626
        %v645 = vadd.f32 %v612, %v626
        %v646 = vadd.f32 %v613, %v626
        %v647 = vadd.f32 %v614, %v626
        %v648 = vadd.f32 %v615, %v626
        %v649 = vadd.f32 %v616, %v626
        %v650 = vadd.f32 %v617, %v626
        %v651 = vadd.f32 %v618, %v626
        %v652 = vadd.f32 %v619, %v626
        %v653 = vadd.f32 %v620, %v626
        %v654 = vadd.f32 %v621, %v626
        %v655 = vadd.f32 %v622, %v626
        %v656 = vadd.f32 %v623, %v626
        %v657 = vadd.f32 %v624, %v626
        %v658 = vadd.f32 %v625, %v626
        %v659 = vand.u32 2147483647, %v627
        %vm660 = vcmp.le.f32.partialorder %v659, 0.7853982
        %vm661 = vcmp.lt.s32.totalorder %v627, 0
        %v662 = vand.u32 %v627, 2139095040
        %v663 = vshrl.u32 %v662, 23
        %v664 = vsub.s32 %v663, 127
        %v665 = vand.u32 2147483647, %v627
        %v666 = vand.u32 %v665, 8388607
        %v667 = vor.u32 %v666, 8388608
        %v668 = vsub.s32 0, %v667
        %v669 = vadd.s32 %v664, 1
        %vm670 = vcmp.gt.s32.totalorder %v669, 0
        %v671 = vsel %vm670, %v669, 0
        %v672 = vshrl.u32 %v671, 5
        %v673 = vand.u32 %v671, 31
        %v674 = vsub.s32 32, %v673
        %v675 = vshrl.u32 683565275, %v674
        %v676 = vshll.u32 683565275, %v673
        %v677 = vshrl.u32 2475754826, %v674
        %v678 = vor.u32 %v676, %v677
        %v679 = vshll.u32 2475754826, %v673
        %v680 = vshrl.u32 2131351028, %v674
        %v681 = vor.u32 %v679, %v680
        %v682 = vshll.u32 2131351028, %v673
        %v683 = vshrl.u32 2102212464, %v674
        %v684 = vor.u32 %v682, %v683
        %v685 = vshll.u32 2102212464, %v673
        %v686 = vshrl.u32 920167782, %v674
        %v687 = vor.u32 %v685, %v686
        %v688 = vshll.u32 920167782, %v673
        %v689 = vshrl.u32 1326507024, %v674
        %v690 = vor.u32 %v688, %v689
        %vm691 = vcmp.lt.s32.totalorder %v672, 1
        %vm692 = vcmp.lt.s32.totalorder %v672, 2
        %vm693 = vcmp.lt.s32.totalorder %v672, 3
        %vm694 = vcmp.lt.s32.totalorder %v672, 4
        %v695 = vsel %vm691, %v675, %v678
        %v696 = vsel %vm694, %v684, 2102212464
        %v697 = vsel %vm693, %v681, %v696
        %v698 = vsel %vm692, %v695, %v697
        %v699 = vsel %vm691, %v678, %v681
        %v700 = vsel %vm694, %v687, 920167782
        %v701 = vsel %vm693, %v684, %v700
        %v702 = vsel %vm692, %v699, %v701
        %v703 = vsel %vm691, %v681, %v684
        %v704 = vsel %vm694, %v690, 1326507024
        %v705 = vsel %vm693, %v687, %v704
        %v706 = vsel %vm692, %v703, %v705
        %v707 = vshll.u32 %v667, 8
        %v708 = vand.u32 %v707, 65535
        %v709 = vshrl.u32 %v707, 16
        %v710 = vand.u32 %v706, 65535
        %v711 = vshrl.u32 %v706, 16
        %v712 = vmul.u32 %v708, %v710
        %v713 = vmul.u32 %v708, %v711
        %v714 = vmul.u32 %v709, %v710
        %v715 = vmul.u32 %v709, %v711
        %v716 = vshll.u32 %v713, 16
        %v717 = vshrl.u32 %v713, 16
        %v718 = vshll.u32 %v714, 16
        %v719 = vshrl.u32 %v714, 16
        %vm720 = vc.u32 %v712, %v716
        %v721 = vsel %vm720, 1, 0
        %v722 = vadd.s32 %v712, %v716
        %v723 = vadd.s32 %v715, %v721
        %vm724 = vc.u32 %v722, %v718
        %v725 = vsel %vm724, 1, 0
        %v726 = vadd.s32 %v722, %v718
        %v727 = vadd.s32 %v723, %v725
        %v728 = vadd.s32 %v727, %v717
        %v729 = vadd.s32 %v728, %v719
        %v730 = vand.u32 %v707, 65535
        %v731 = vshrl.u32 %v707, 16
        %v732 = vand.u32 %v702, 65535
        %v733 = vshrl.u32 %v702, 16
        %v734 = vmul.u32 %v730, %v732
        %v735 = vmul.u32 %v730, %v733
        %v736 = vmul.u32 %v731, %v732
        %v737 = vmul.u32 %v731, %v733
        %v738 = vshll.u32 %v735, 16
        %v739 = vshrl.u32 %v735, 16
        %v740 = vshll.u32 %v736, 16
        %v741 = vshrl.u32 %v736, 16
        %vm742 = vc.u32 %v734, %v738
        %v743 = vsel %vm742, 1, 0
        %v744 = vadd.s32 %v734, %v738
        %v745 = vadd.s32 %v737, %v743
        %vm746 = vc.u32 %v744, %v740
        %v747 = vsel %vm746, 1, 0
        %v748 = vadd.s32 %v744, %v740
        %v749 = vadd.s32 %v745, %v747
        %v750 = vadd.s32 %v749, %v739
        %v751 = vadd.s32 %v750, %v741
        %v752 = vmul.u32 %v707, %v698
        %v753 = vadd.s32 %v729, %v748
        %vm754 = vc.u32 %v729, %v748
        %v755 = vadd.s32 %v751, 1
        %v756 = vsel %vm754, %v755, %v751
        %v757 = vadd.s32 %v752, %v756
        %v758 = vadd.s32 %v757, 536870912
        %v759 = vshrl.u32 %v758, 30
        %v760 = vshll.u32 %v759, 30
        %v761 = vsub.s32 %v757, %v760
        %vm762 = vcmp.lt.s32.totalorder %v761, 0
        %v763 = vsub.s32 0, %v761
        %v764 = vsel %vm762, %v763, %v761
        %v765 = vclz %v764
        %v766 = vsub.s32 %v765, 2
        %vm767 = vcmp.gt.s32.totalorder 0, %v766
        %v768 = vsel %vm767, 0, %v766
        %v769 = vsub.s32 32, %v768
        %v770 = vshll.u32 %v761, %v768
        %v771 = vshrl.u32 %v753, %v769
        %v772 = vor.u32 %v770, %v771
        %v773 = vsub.s32 4294967266, %v768
        %v774 = vadd.s32 %v773, 127
        %v775 = vshll.u32 %v774, 23
        %v776 = vor.u32 4788187, %v775
        %v777 = vand.u32 2147483647, %v776
        %v779 = vcvt.s32.f32 %v772
        %v780 = vmul.f32 %v779, %v777
        %v781 = vxor.u32 %v780, 2147483648
        %v782 = vsel %vm661, %v781, %v780
        %v783 = vsub.s32 4, %v759
        %v784 = vsel %vm661, %v783, %v759
        %v785 = vsel %vm660, %v627, %v782
        %v786 = vsel %vm660, 0, %v784
        %v787 = vmul.f32 %v785, %v785
        %v788 = vmul.f32 %v787, -0.001358992
        %v789 = vadd.f32 %v788, 0.041655596
        %v790 = vmul.f32 %v787, %v789
        %v791 = vadd.f32 %v790, -0.4999988
        %v792 = vmul.f32 %v787, %v791
        %v793 = vadd.f32 1.0, %v792
        %v794 = vmul.f32 %v785, %v785
        %v795 = vmul.f32 %v794, -0.00019511016
        %v796 = vadd.f32 %v795, 0.008332121
        %v797 = vmul.f32 %v794, %v796
        %v798 = vadd.f32 %v797, -0.16666654
        %v799 = vmul.f32 %v794, %v798
        %v800 = vadd.f32 %v799, 1.0
        %v801 = vmul.f32 %v800, %v785
        %vm802 = vweird.f32 %v627
        %v803 = vadd.s32 %v786, 3
        %v804 = vand.u32 %v803, 3
        %vm805 = vcmp.lt.s32.totalorder %v804, 2
        %vm806 = vcmp.eq.s32.totalorder %v804, 0
        %v807 = vxor.u32 %v801, 2147483648
        %v808 = vsel %vm806, %v793, %v807
        %vm809 = vcmp.eq.s32.totalorder %v804, 2
        %v810 = vxor.u32 %v793, 2147483648
        %v811 = vsel %vm809, %v810, %v801
        %v812 = vsel %vm805, %v808, %v811
        %v813 = vsel %vm802, nan, %v812
        %v814 = vand.u32 2147483647, %v628
        %vm815 = vcmp.le.f32.partialorder %v814, 0.7853982
        %vm816 = vcmp.lt.s32.totalorder %v628, 0
        %v817 = vand.u32 %v628, 2139095040
        %v818 = vshrl.u32 %v817, 23
        %v819 = vsub.s32 %v818, 127
        %v820 = vand.u32 2147483647, %v628
        %v821 = vand.u32 %v820, 8388607
        %v822 = vor.u32 %v821, 8388608
        %v823 = vsub.s32 0, %v822
        %v824 = vadd.s32 %v819, 1
        %vm825 = vcmp.gt.s32.totalorder %v824, 0
        %v826 = vsel %vm825, %v824, 0
        %v827 = vshrl.u32 %v826, 5
        %v828 = vand.u32 %v826, 31
        %v829 = vsub.s32 32, %v828
        %v830 = vshrl.u32 683565275, %v829
        %v831 = vshll.u32 683565275, %v828
        %v832 = vshrl.u32 2475754826, %v829
        %v833 = vor.u32 %v831, %v832
        %v834 = vshll.u32 2475754826, %v828
        %v835 = vshrl.u32 2131351028, %v829
        %v836 = vor.u32 %v834, %v835
        %v837 = vshll.u32 2131351028, %v828
        %v838 = vshrl.u32 2102212464, %v829
        %v839 = vor.u32 %v837, %v838
        %v840 = vshll.u32 2102212464, %v828
        %v841 = vshrl.u32 920167782, %v829
        %v842 = vor.u32 %v840, %v841
        %v843 = vshll.u32 920167782, %v828
        %v844 = vshrl.u32 1326507024, %v829
        %v845 = vor.u32 %v843, %v844
        %vm846 = vcmp.lt.s32.totalorder %v827, 1
        %vm847 = vcmp.lt.s32.totalorder %v827, 2
        %vm848 = vcmp.lt.s32.totalorder %v827, 3
        %vm849 = vcmp.lt.s32.totalorder %v827, 4
        %v850 = vsel %vm846, %v830, %v833
        %v851 = vsel %vm849, %v839, 2102212464
        %v852 = vsel %vm848, %v836, %v851
        %v853 = vsel %vm847, %v850, %v852
        %v854 = vsel %vm846, %v833, %v836
        %v855 = vsel %vm849, %v842, 920167782
        %v856 = vsel %vm848, %v839, %v855
        %v857 = vsel %vm847, %v854, %v856
        %v858 = vsel %vm846, %v836, %v839
        %v859 = vsel %vm849, %v845, 1326507024
        %v860 = vsel %vm848, %v842, %v859
        %v861 = vsel %vm847, %v858, %v860
        %v862 = vshll.u32 %v822, 8
        %v863 = vand.u32 %v862, 65535
        %v864 = vshrl.u32 %v862, 16
        %v865 = vand.u32 %v861, 65535
        %v866 = vshrl.u32 %v861, 16
        %v867 = vmul.u32 %v863, %v865
        %v868 = vmul.u32 %v863, %v866
        %v869 = vmul.u32 %v864, %v865
        %v870 = vmul.u32 %v864, %v866
        %v871 = vshll.u32 %v868, 16
        %v872 = vshrl.u32 %v868, 16
        %v873 = vshll.u32 %v869, 16
        %v874 = vshrl.u32 %v869, 16
        %vm875 = vc.u32 %v867, %v871
        %v876 = vsel %vm875, 1, 0
        %v877 = vadd.s32 %v867, %v871
        %v878 = vadd.s32 %v870, %v876
        %vm879 = vc.u32 %v877, %v873
        %v880 = vsel %vm879, 1, 0
        %v881 = vadd.s32 %v877, %v873
        %v882 = vadd.s32 %v878, %v880
        %v883 = vadd.s32 %v882, %v872
        %v884 = vadd.s32 %v883, %v874
        %v885 = vand.u32 %v862, 65535
        %v886 = vshrl.u32 %v862, 16
        %v887 = vand.u32 %v857, 65535
        %v888 = vshrl.u32 %v857, 16
        %v889 = vmul.u32 %v885, %v887
        %v890 = vmul.u32 %v885, %v888
        %v891 = vmul.u32 %v886, %v887
        %v892 = vmul.u32 %v886, %v888
        %v893 = vshll.u32 %v890, 16
        %v894 = vshrl.u32 %v890, 16
        %v895 = vshll.u32 %v891, 16
        %v896 = vshrl.u32 %v891, 16
        %vm897 = vc.u32 %v889, %v893
        %v898 = vsel %vm897, 1, 0
        %v899 = vadd.s32 %v889, %v893
        %v900 = vadd.s32 %v892, %v898
        %vm901 = vc.u32 %v899, %v895
        %v902 = vsel %vm901, 1, 0
        %v903 = vadd.s32 %v899, %v895
        %v904 = vadd.s32 %v900, %v902
        %v905 = vadd.s32 %v904, %v894
        %v906 = vadd.s32 %v905, %v896
        %v907 = vmul.u32 %v862, %v853
        %v908 = vadd.s32 %v884, %v903
        %vm909 = vc.u32 %v884, %v903
        %v910 = vadd.s32 %v906, 1
        %v911 = vsel %vm909, %v910, %v906
        %v912 = vadd.s32 %v907, %v911
        %v913 = vadd.s32 %v912, 536870912
        %v914 = vshrl.u32 %v913, 30
        %v915 = vshll.u32 %v914, 30
        %v916 = vsub.s32 %v912, %v915
        %vm917 = vcmp.lt.s32.totalorder %v916, 0
        %v918 = vsub.s32 0, %v916
        %v919 = vsel %vm917, %v918, %v916
        %v920 = vclz %v919
        %v921 = vsub.s32 %v920, 2
        %vm922 = vcmp.gt.s32.totalorder 0, %v921
        %v923 = vsel %vm922, 0, %v921
        %v924 = vsub.s32 32, %v923
        %v925 = vshll.u32 %v916, %v923
        %v926 = vshrl.u32 %v908, %v924
        %v927 = vor.u32 %v925, %v926
        %v928 = vsub.s32 4294967266, %v923
        %v929 = vadd.s32 %v928, 127
        %v930 = vshll.u32 %v929, 23
        %v931 = vor.u32 4788187, %v930
        %v932 = vand.u32 2147483647, %v931
        %v934 = vcvt.s32.f32 %v927
        %v935 = vmul.f32 %v934, %v932
        %v936 = vxor.u32 %v935, 2147483648
        %v937 = vsel %vm816, %v936, %v935
        %v938 = vsub.s32 4, %v914
        %v939 = vsel %vm816, %v938, %v914
        %v940 = vsel %vm815, %v628, %v937
        %v941 = vsel %vm815, 0, %v939
        %v942 = vmul.f32 %v940, %v940
        %v943 = vmul.f32 %v942, -0.001358992
        %v944 = vadd.f32 %v943, 0.041655596
        %v945 = vmul.f32 %v942, %v944
        %v946 = vadd.f32 %v945, -0.4999988
        %v947 = vmul.f32 %v942, %v946
        %v948 = vadd.f32 1.0, %v947
        %v949 = vmul.f32 %v940, %v940
        %v950 = vmul.f32 %v949, -0.00019511016
        %v951 = vadd.f32 %v950, 0.008332121
        %v952 = vmul.f32 %v949, %v951
        %v953 = vadd.f32 %v952, -0.16666654
        %v954 = vmul.f32 %v949, %v953
        %v955 = vadd.f32 %v954, 1.0
        %v956 = vmul.f32 %v955, %v940
        %vm957 = vweird.f32 %v628
        %v958 = vadd.s32 %v941, 3
        %v959 = vand.u32 %v958, 3
        %vm960 = vcmp.lt.s32.totalorder %v959, 2
        %vm961 = vcmp.eq.s32.totalorder %v959, 0
        %v962 = vxor.u32 %v956, 2147483648
        %v963 = vsel %vm961, %v948, %v962
        %vm964 = vcmp.eq.s32.totalorder %v959, 2
        %v965 = vxor.u32 %v948, 2147483648
        %v966 = vsel %vm964, %v965, %v956
        %v967 = vsel %vm960, %v963, %v966
        %v968 = vsel %vm957, nan, %v967
        %v969 = vand.u32 2147483647, %v629
        %vm970 = vcmp.le.f32.partialorder %v969, 0.7853982
        %vm971 = vcmp.lt.s32.totalorder %v629, 0
        %v972 = vand.u32 %v629, 2139095040
        %v973 = vshrl.u32 %v972, 23
        %v974 = vsub.s32 %v973, 127
        %v975 = vand.u32 2147483647, %v629
        %v976 = vand.u32 %v975, 8388607
        %v977 = vor.u32 %v976, 8388608
        %v978 = vsub.s32 0, %v977
        %v979 = vadd.s32 %v974, 1
        %vm980 = vcmp.gt.s32.totalorder %v979, 0
        %v981 = vsel %vm980, %v979, 0
        %v982 = vshrl.u32 %v981, 5
        %v983 = vand.u32 %v981, 31
        %v984 = vsub.s32 32, %v983
        %v985 = vshrl.u32 683565275, %v984
        %v986 = vshll.u32 683565275, %v983
        %v987 = vshrl.u32 2475754826, %v984
        %v988 = vor.u32 %v986, %v987
        %v989 = vshll.u32 2475754826, %v983
        %v990 = vshrl.u32 2131351028, %v984
        %v991 = vor.u32 %v989, %v990
        %v992 = vshll.u32 2131351028, %v983
        %v993 = vshrl.u32 2102212464, %v984
        %v994 = vor.u32 %v992, %v993
        %v995 = vshll.u32 2102212464, %v983
        %v996 = vshrl.u32 920167782, %v984
        %v997 = vor.u32 %v995, %v996
        %v998 = vshll.u32 920167782, %v983
        %v999 = vshrl.u32 1326507024, %v984
        %v1000 = vor.u32 %v998, %v999
        %vm1001 = vcmp.lt.s32.totalorder %v982, 1
        %vm1002 = vcmp.lt.s32.totalorder %v982, 2
        %vm1003 = vcmp.lt.s32.totalorder %v982, 3
        %vm1004 = vcmp.lt.s32.totalorder %v982, 4
        %v1005 = vsel %vm1001, %v985, %v988
        %v1006 = vsel %vm1004, %v994, 2102212464
        %v1007 = vsel %vm1003, %v991, %v1006
        %v1008 = vsel %vm1002, %v1005, %v1007
        %v1009 = vsel %vm1001, %v988, %v991
        %v1010 = vsel %vm1004, %v997, 920167782
        %v1011 = vsel %vm1003, %v994, %v1010
        %v1012 = vsel %vm1002, %v1009, %v1011
        %v1013 = vsel %vm1001, %v991, %v994
        %v1014 = vsel %vm1004, %v1000, 1326507024
        %v1015 = vsel %vm1003, %v997, %v1014
        %v1016 = vsel %vm1002, %v1013, %v1015
        %v1017 = vshll.u32 %v977, 8
        %v1018 = vand.u32 %v1017, 65535
        %v1019 = vshrl.u32 %v1017, 16
        %v1020 = vand.u32 %v1016, 65535
        %v1021 = vshrl.u32 %v1016, 16
        %v1022 = vmul.u32 %v1018, %v1020
        %v1023 = vmul.u32 %v1018, %v1021
        %v1024 = vmul.u32 %v1019, %v1020
        %v1025 = vmul.u32 %v1019, %v1021
        %v1026 = vshll.u32 %v1023, 16
        %v1027 = vshrl.u32 %v1023, 16
        %v1028 = vshll.u32 %v1024, 16
        %v1029 = vshrl.u32 %v1024, 16
        %vm1030 = vc.u32 %v1022, %v1026
        %v1031 = vsel %vm1030, 1, 0
        %v1032 = vadd.s32 %v1022, %v1026
        %v1033 = vadd.s32 %v1025, %v1031
        %vm1034 = vc.u32 %v1032, %v1028
        %v1035 = vsel %vm1034, 1, 0
        %v1036 = vadd.s32 %v1032, %v1028
        %v1037 = vadd.s32 %v1033, %v1035
        %v1038 = vadd.s32 %v1037, %v1027
        %v1039 = vadd.s32 %v1038, %v1029
        %v1040 = vand.u32 %v1017, 65535
        %v1041 = vshrl.u32 %v1017, 16
        %v1042 = vand.u32 %v1012, 65535
        %v1043 = vshrl.u32 %v1012, 16
        %v1044 = vmul.u32 %v1040, %v1042
        %v1045 = vmul.u32 %v1040, %v1043
        %v1046 = vmul.u32 %v1041, %v1042
        %v1047 = vmul.u32 %v1041, %v1043
        %v1048 = vshll.u32 %v1045, 16
        %v1049 = vshrl.u32 %v1045, 16
        %v1050 = vshll.u32 %v1046, 16
        %v1051 = vshrl.u32 %v1046, 16
        %vm1052 = vc.u32 %v1044, %v1048
        %v1053 = vsel %vm1052, 1, 0
        %v1054 = vadd.s32 %v1044, %v1048
        %v1055 = vadd.s32 %v1047, %v1053
        %vm1056 = vc.u32 %v1054, %v1050
        %v1057 = vsel %vm1056, 1, 0
        %v1058 = vadd.s32 %v1054, %v1050
        %v1059 = vadd.s32 %v1055, %v1057
        %v1060 = vadd.s32 %v1059, %v1049
        %v1061 = vadd.s32 %v1060, %v1051
        %v1062 = vmul.u32 %v1017, %v1008
        %v1063 = vadd.s32 %v1039, %v1058
        %vm1064 = vc.u32 %v1039, %v1058
        %v1065 = vadd.s32 %v1061, 1
        %v1066 = vsel %vm1064, %v1065, %v1061
        %v1067 = vadd.s32 %v1062, %v1066
        %v1068 = vadd.s32 %v1067, 536870912
        %v1069 = vshrl.u32 %v1068, 30
        %v1070 = vshll.u32 %v1069, 30
        %v1071 = vsub.s32 %v1067, %v1070
        %vm1072 = vcmp.lt.s32.totalorder %v1071, 0
        %v1073 = vsub.s32 0, %v1071
        %v1074 = vsel %vm1072, %v1073, %v1071
        %v1075 = vclz %v1074
        %v1076 = vsub.s32 %v1075, 2
        %vm1077 = vcmp.gt.s32.totalorder 0, %v1076
        %v1078 = vsel %vm1077, 0, %v1076
        %v1079 = vsub.s32 32, %v1078
        %v1080 = vshll.u32 %v1071, %v1078
        %v1081 = vshrl.u32 %v1063, %v1079
        %v1082 = vor.u32 %v1080, %v1081
        %v1083 = vsub.s32 4294967266, %v1078
        %v1084 = vadd.s32 %v1083, 127
        %v1085 = vshll.u32 %v1084, 23
        %v1086 = vor.u32 4788187, %v1085
        %v1087 = vand.u32 2147483647, %v1086
        %v1089 = vcvt.s32.f32 %v1082
        %v1090 = vmul.f32 %v1089, %v1087
        %v1091 = vxor.u32 %v1090, 2147483648
        %v1092 = vsel %vm971, %v1091, %v1090
        %v1093 = vsub.s32 4, %v1069
        %v1094 = vsel %vm971, %v1093, %v1069
        %v1095 = vsel %vm970, %v629, %v1092
        %v1096 = vsel %vm970, 0, %v1094
        %v1097 = vmul.f32 %v1095, %v1095
        %v1098 = vmul.f32 %v1097, -0.001358992
        %v1099 = vadd.f32 %v1098, 0.041655596
        %v1100 = vmul.f32 %v1097, %v1099
        %v1101 = vadd.f32 %v1100, -0.4999988
        %v1102 = vmul.f32 %v1097, %v1101
        %v1103 = vadd.f32 1.0, %v1102
        %v1104 = vmul.f32 %v1095, %v1095
        %v1105 = vmul.f32 %v1104, -0.00019511016
        %v1106 = vadd.f32 %v1105, 0.008332121
        %v1107 = vmul.f32 %v1104, %v1106
        %v1108 = vadd.f32 %v1107, -0.16666654
        %v1109 = vmul.f32 %v1104, %v1108
        %v1110 = vadd.f32 %v1109, 1.0
        %v1111 = vmul.f32 %v1110, %v1095
        %vm1112 = vweird.f32 %v629
        %v1113 = vadd.s32 %v1096, 3
        %v1114 = vand.u32 %v1113, 3
        %vm1115 = vcmp.lt.s32.totalorder %v1114, 2
        %vm1116 = vcmp.eq.s32.totalorder %v1114, 0
        %v1117 = vxor.u32 %v1111, 2147483648
        %v1118 = vsel %vm1116, %v1103, %v1117
        %vm1119 = vcmp.eq.s32.totalorder %v1114, 2
        %v1120 = vxor.u32 %v1103, 2147483648
        %v1121 = vsel %vm1119, %v1120, %v1111
        %v1122 = vsel %vm1115, %v1118, %v1121
        %v1123 = vsel %vm1112, nan, %v1122
        %v1124 = vand.u32 2147483647, %v630
        %vm1125 = vcmp.le.f32.partialorder %v1124, 0.7853982
        %vm1126 = vcmp.lt.s32.totalorder %v630, 0
        %v1127 = vand.u32 %v630, 2139095040
        %v1128 = vshrl.u32 %v1127, 23
        %v1129 = vsub.s32 %v1128, 127
        %v1130 = vand.u32 2147483647, %v630
        %v1131 = vand.u32 %v1130, 8388607
        %v1132 = vor.u32 %v1131, 8388608
        %v1133 = vsub.s32 0, %v1132
        %v1134 = vadd.s32 %v1129, 1
        %vm1135 = vcmp.gt.s32.totalorder %v1134, 0
        %v1136 = vsel %vm1135, %v1134, 0
        %v1137 = vshrl.u32 %v1136, 5
        %v1138 = vand.u32 %v1136, 31
        %v1139 = vsub.s32 32, %v1138
        %v1140 = vshrl.u32 683565275, %v1139
        %v1141 = vshll.u32 683565275, %v1138
        %v1142 = vshrl.u32 2475754826, %v1139
        %v1143 = vor.u32 %v1141, %v1142
        %v1144 = vshll.u32 2475754826, %v1138
        %v1145 = vshrl.u32 2131351028, %v1139
        %v1146 = vor.u32 %v1144, %v1145
        %v1147 = vshll.u32 2131351028, %v1138
        %v1148 = vshrl.u32 2102212464, %v1139
        %v1149 = vor.u32 %v1147, %v1148
        %v1150 = vshll.u32 2102212464, %v1138
        %v1151 = vshrl.u32 920167782, %v1139
        %v1152 = vor.u32 %v1150, %v1151
        %v1153 = vshll.u32 920167782, %v1138
        %v1154 = vshrl.u32 1326507024, %v1139
        %v1155 = vor.u32 %v1153, %v1154
        %vm1156 = vcmp.lt.s32.totalorder %v1137, 1
        %vm1157 = vcmp.lt.s32.totalorder %v1137, 2
        %vm1158 = vcmp.lt.s32.totalorder %v1137, 3
        %vm1159 = vcmp.lt.s32.totalorder %v1137, 4
        %v1160 = vsel %vm1156, %v1140, %v1143
        %v1161 = vsel %vm1159, %v1149, 2102212464
        %v1162 = vsel %vm1158, %v1146, %v1161
        %v1163 = vsel %vm1157, %v1160, %v1162
        %v1164 = vsel %vm1156, %v1143, %v1146
        %v1165 = vsel %vm1159, %v1152, 920167782
        %v1166 = vsel %vm1158, %v1149, %v1165
        %v1167 = vsel %vm1157, %v1164, %v1166
        %v1168 = vsel %vm1156, %v1146, %v1149
        %v1169 = vsel %vm1159, %v1155, 1326507024
        %v1170 = vsel %vm1158, %v1152, %v1169
        %v1171 = vsel %vm1157, %v1168, %v1170
        %v1172 = vshll.u32 %v1132, 8
        %v1173 = vand.u32 %v1172, 65535
        %v1174 = vshrl.u32 %v1172, 16
        %v1175 = vand.u32 %v1171, 65535
        %v1176 = vshrl.u32 %v1171, 16
        %v1177 = vmul.u32 %v1173, %v1175
        %v1178 = vmul.u32 %v1173, %v1176
        %v1179 = vmul.u32 %v1174, %v1175
        %v1180 = vmul.u32 %v1174, %v1176
        %v1181 = vshll.u32 %v1178, 16
        %v1182 = vshrl.u32 %v1178, 16
        %v1183 = vshll.u32 %v1179, 16
        %v1184 = vshrl.u32 %v1179, 16
        %vm1185 = vc.u32 %v1177, %v1181
        %v1186 = vsel %vm1185, 1, 0
        %v1187 = vadd.s32 %v1177, %v1181
        %v1188 = vadd.s32 %v1180, %v1186
        %vm1189 = vc.u32 %v1187, %v1183
        %v1190 = vsel %vm1189, 1, 0
        %v1191 = vadd.s32 %v1187, %v1183
        %v1192 = vadd.s32 %v1188, %v1190
        %v1193 = vadd.s32 %v1192, %v1182
        %v1194 = vadd.s32 %v1193, %v1184
        %v1195 = vand.u32 %v1172, 65535
        %v1196 = vshrl.u32 %v1172, 16
        %v1197 = vand.u32 %v1167, 65535
        %v1198 = vshrl.u32 %v1167, 16
        %v1199 = vmul.u32 %v1195, %v1197
        %v1200 = vmul.u32 %v1195, %v1198
        %v1201 = vmul.u32 %v1196, %v1197
        %v1202 = vmul.u32 %v1196, %v1198
        %v1203 = vshll.u32 %v1200, 16
        %v1204 = vshrl.u32 %v1200, 16
        %v1205 = vshll.u32 %v1201, 16
        %v1206 = vshrl.u32 %v1201, 16
        %vm1207 = vc.u32 %v1199, %v1203
        %v1208 = vsel %vm1207, 1, 0
        %v1209 = vadd.s32 %v1199, %v1203
        %v1210 = vadd.s32 %v1202, %v1208
        %vm1211 = vc.u32 %v1209, %v1205
        %v1212 = vsel %vm1211, 1, 0
        %v1213 = vadd.s32 %v1209, %v1205
        %v1214 = vadd.s32 %v1210, %v1212
        %v1215 = vadd.s32 %v1214, %v1204
        %v1216 = vadd.s32 %v1215, %v1206
        %v1217 = vmul.u32 %v1172, %v1163
        %v1218 = vadd.s32 %v1194, %v1213
        %vm1219 = vc.u32 %v1194, %v1213
        %v1220 = vadd.s32 %v1216, 1
        %v1221 = vsel %vm1219, %v1220, %v1216
        %v1222 = vadd.s32 %v1217, %v1221
        %v1223 = vadd.s32 %v1222, 536870912
        %v1224 = vshrl.u32 %v1223, 30
        %v1225 = vshll.u32 %v1224, 30
        %v1226 = vsub.s32 %v1222, %v1225
        %vm1227 = vcmp.lt.s32.totalorder %v1226, 0
        %v1228 = vsub.s32 0, %v1226
        %v1229 = vsel %vm1227, %v1228, %v1226
        %v1230 = vclz %v1229
        %v1231 = vsub.s32 %v1230, 2
        %vm1232 = vcmp.gt.s32.totalorder 0, %v1231
        %v1233 = vsel %vm1232, 0, %v1231
        %v1234 = vsub.s32 32, %v1233
        %v1235 = vshll.u32 %v1226, %v1233
        %v1236 = vshrl.u32 %v1218, %v1234
        %v1237 = vor.u32 %v1235, %v1236
        %v1238 = vsub.s32 4294967266, %v1233
        %v1239 = vadd.s32 %v1238, 127
        %v1240 = vshll.u32 %v1239, 23
        %v1241 = vor.u32 4788187, %v1240
        %v1242 = vand.u32 2147483647, %v1241
        %v1244 = vcvt.s32.f32 %v1237
        %v1245 = vmul.f32 %v1244, %v1242
        %v1246 = vxor.u32 %v1245, 2147483648
        %v1247 = vsel %vm1126, %v1246, %v1245
        %v1248 = vsub.s32 4, %v1224
        %v1249 = vsel %vm1126, %v1248, %v1224
        %v1250 = vsel %vm1125, %v630, %v1247
        %v1251 = vsel %vm1125, 0, %v1249
        %v1252 = vmul.f32 %v1250, %v1250
        %v1253 = vmul.f32 %v1252, -0.001358992
        %v1254 = vadd.f32 %v1253, 0.041655596
        %v1255 = vmul.f32 %v1252, %v1254
        %v1256 = vadd.f32 %v1255, -0.4999988
        %v1257 = vmul.f32 %v1252, %v1256
        %v1258 = vadd.f32 1.0, %v1257
        %v1259 = vmul.f32 %v1250, %v1250
        %v1260 = vmul.f32 %v1259, -0.00019511016
        %v1261 = vadd.f32 %v1260, 0.008332121
        %v1262 = vmul.f32 %v1259, %v1261
        %v1263 = vadd.f32 %v1262, -0.16666654
        %v1264 = vmul.f32 %v1259, %v1263
        %v1265 = vadd.f32 %v1264, 1.0
        %v1266 = vmul.f32 %v1265, %v1250
        %vm1267 = vweird.f32 %v630
        %v1268 = vadd.s32 %v1251, 3
        %v1269 = vand.u32 %v1268, 3
        %vm1270 = vcmp.lt.s32.totalorder %v1269, 2
        %vm1271 = vcmp.eq.s32.totalorder %v1269, 0
        %v1272 = vxor.u32 %v1266, 2147483648
        %v1273 = vsel %vm1271, %v1258, %v1272
        %vm1274 = vcmp.eq.s32.totalorder %v1269, 2
        %v1275 = vxor.u32 %v1258, 2147483648
        %v1276 = vsel %vm1274, %v1275, %v1266
        %v1277 = vsel %vm1270, %v1273, %v1276
        %v1278 = vsel %vm1267, nan, %v1277
        %v1279 = vand.u32 2147483647, %v631
        %vm1280 = vcmp.le.f32.partialorder %v1279, 0.7853982
        %vm1281 = vcmp.lt.s32.totalorder %v631, 0
        %v1282 = vand.u32 %v631, 2139095040
        %v1283 = vshrl.u32 %v1282, 23
        %v1284 = vsub.s32 %v1283, 127
        %v1285 = vand.u32 2147483647, %v631
        %v1286 = vand.u32 %v1285, 8388607
        %v1287 = vor.u32 %v1286, 8388608
        %v1288 = vsub.s32 0, %v1287
        %v1289 = vadd.s32 %v1284, 1
        %vm1290 = vcmp.gt.s32.totalorder %v1289, 0
        %v1291 = vsel %vm1290, %v1289, 0
        %v1292 = vshrl.u32 %v1291, 5
        %v1293 = vand.u32 %v1291, 31
        %v1294 = vsub.s32 32, %v1293
        %v1295 = vshrl.u32 683565275, %v1294
        %v1296 = vshll.u32 683565275, %v1293
        %v1297 = vshrl.u32 2475754826, %v1294
        %v1298 = vor.u32 %v1296, %v1297
        %v1299 = vshll.u32 2475754826, %v1293
        %v1300 = vshrl.u32 2131351028, %v1294
        %v1301 = vor.u32 %v1299, %v1300
        %v1302 = vshll.u32 2131351028, %v1293
        %v1303 = vshrl.u32 2102212464, %v1294
        %v1304 = vor.u32 %v1302, %v1303
        %v1305 = vshll.u32 2102212464, %v1293
        %v1306 = vshrl.u32 920167782, %v1294
        %v1307 = vor.u32 %v1305, %v1306
        %v1308 = vshll.u32 920167782, %v1293
        %v1309 = vshrl.u32 1326507024, %v1294
        %v1310 = vor.u32 %v1308, %v1309
        %vm1311 = vcmp.lt.s32.totalorder %v1292, 1
        %vm1312 = vcmp.lt.s32.totalorder %v1292, 2
        %vm1313 = vcmp.lt.s32.totalorder %v1292, 3
        %vm1314 = vcmp.lt.s32.totalorder %v1292, 4
        %v1315 = vsel %vm1311, %v1295, %v1298
        %v1316 = vsel %vm1314, %v1304, 2102212464
        %v1317 = vsel %vm1313, %v1301, %v1316
        %v1318 = vsel %vm1312, %v1315, %v1317
        %v1319 = vsel %vm1311, %v1298, %v1301
        %v1320 = vsel %vm1314, %v1307, 920167782
        %v1321 = vsel %vm1313, %v1304, %v1320
        %v1322 = vsel %vm1312, %v1319, %v1321
        %v1323 = vsel %vm1311, %v1301, %v1304
        %v1324 = vsel %vm1314, %v1310, 1326507024
        %v1325 = vsel %vm1313, %v1307, %v1324
        %v1326 = vsel %vm1312, %v1323, %v1325
        %v1327 = vshll.u32 %v1287, 8
        %v1328 = vand.u32 %v1327, 65535
        %v1329 = vshrl.u32 %v1327, 16
        %v1330 = vand.u32 %v1326, 65535
        %v1331 = vshrl.u32 %v1326, 16
        %v1332 = vmul.u32 %v1328, %v1330
        %v1333 = vmul.u32 %v1328, %v1331
        %v1334 = vmul.u32 %v1329, %v1330
        %v1335 = vmul.u32 %v1329, %v1331
        %v1336 = vshll.u32 %v1333, 16
        %v1337 = vshrl.u32 %v1333, 16
        %v1338 = vshll.u32 %v1334, 16
        %v1339 = vshrl.u32 %v1334, 16
        %vm1340 = vc.u32 %v1332, %v1336
        %v1341 = vsel %vm1340, 1, 0
        %v1342 = vadd.s32 %v1332, %v1336
        %v1343 = vadd.s32 %v1335, %v1341
        %vm1344 = vc.u32 %v1342, %v1338
        %v1345 = vsel %vm1344, 1, 0
        %v1346 = vadd.s32 %v1342, %v1338
        %v1347 = vadd.s32 %v1343, %v1345
        %v1348 = vadd.s32 %v1347, %v1337
        %v1349 = vadd.s32 %v1348, %v1339
        %v1350 = vand.u32 %v1327, 65535
        %v1351 = vshrl.u32 %v1327, 16
        %v1352 = vand.u32 %v1322, 65535
        %v1353 = vshrl.u32 %v1322, 16
        %v1354 = vmul.u32 %v1350, %v1352
        %v1355 = vmul.u32 %v1350, %v1353
        %v1356 = vmul.u32 %v1351, %v1352
        %v1357 = vmul.u32 %v1351, %v1353
        %v1358 = vshll.u32 %v1355, 16
        %v1359 = vshrl.u32 %v1355, 16
        %v1360 = vshll.u32 %v1356, 16
        %v1361 = vshrl.u32 %v1356, 16
        %vm1362 = vc.u32 %v1354, %v1358
        %v1363 = vsel %vm1362, 1, 0
        %v1364 = vadd.s32 %v1354, %v1358
        %v1365 = vadd.s32 %v1357, %v1363
        %vm1366 = vc.u32 %v1364, %v1360
        %v1367 = vsel %vm1366, 1, 0
        %v1368 = vadd.s32 %v1364, %v1360
        %v1369 = vadd.s32 %v1365, %v1367
        %v1370 = vadd.s32 %v1369, %v1359
        %v1371 = vadd.s32 %v1370, %v1361
        %v1372 = vmul.u32 %v1327, %v1318
        %v1373 = vadd.s32 %v1349, %v1368
        %vm1374 = vc.u32 %v1349, %v1368
        %v1375 = vadd.s32 %v1371, 1
        %v1376 = vsel %vm1374, %v1375, %v1371
        %v1377 = vadd.s32 %v1372, %v1376
        %v1378 = vadd.s32 %v1377, 536870912
        %v1379 = vshrl.u32 %v1378, 30
        %v1380 = vshll.u32 %v1379, 30
        %v1381 = vsub.s32 %v1377, %v1380
        %vm1382 = vcmp.lt.s32.totalorder %v1381, 0
        %v1383 = vsub.s32 0, %v1381
        %v1384 = vsel %vm1382, %v1383, %v1381
        %v1385 = vclz %v1384
        %v1386 = vsub.s32 %v1385, 2
        %vm1387 = vcmp.gt.s32.totalorder 0, %v1386
        %v1388 = vsel %vm1387, 0, %v1386
        %v1389 = vsub.s32 32, %v1388
        %v1390 = vshll.u32 %v1381, %v1388
        %v1391 = vshrl.u32 %v1373, %v1389
        %v1392 = vor.u32 %v1390, %v1391
        %v1393 = vsub.s32 4294967266, %v1388
        %v1394 = vadd.s32 %v1393, 127
        %v1395 = vshll.u32 %v1394, 23
        %v1396 = vor.u32 4788187, %v1395
        %v1397 = vand.u32 2147483647, %v1396
        %v1399 = vcvt.s32.f32 %v1392
        %v1400 = vmul.f32 %v1399, %v1397
        %v1401 = vxor.u32 %v1400, 2147483648
        %v1402 = vsel %vm1281, %v1401, %v1400
        %v1403 = vsub.s32 4, %v1379
        %v1404 = vsel %vm1281, %v1403, %v1379
        %v1405 = vsel %vm1280, %v631, %v1402
        %v1406 = vsel %vm1280, 0, %v1404
        %v1407 = vmul.f32 %v1405, %v1405
        %v1408 = vmul.f32 %v1407, -0.001358992
        %v1409 = vadd.f32 %v1408, 0.041655596
        %v1410 = vmul.f32 %v1407, %v1409
        %v1411 = vadd.f32 %v1410, -0.4999988
        %v1412 = vmul.f32 %v1407, %v1411
        %v1413 = vadd.f32 1.0, %v1412
        %v1414 = vmul.f32 %v1405, %v1405
        %v1415 = vmul.f32 %v1414, -0.00019511016
        %v1416 = vadd.f32 %v1415, 0.008332121
        %v1417 = vmul.f32 %v1414, %v1416
        %v1418 = vadd.f32 %v1417, -0.16666654
        %v1419 = vmul.f32 %v1414, %v1418
        %v1420 = vadd.f32 %v1419, 1.0
        %v1421 = vmul.f32 %v1420, %v1405
        %vm1422 = vweird.f32 %v631
        %v1423 = vadd.s32 %v1406, 3
        %v1424 = vand.u32 %v1423, 3
        %vm1425 = vcmp.lt.s32.totalorder %v1424, 2
        %vm1426 = vcmp.eq.s32.totalorder %v1424, 0
        %v1427 = vxor.u32 %v1421, 2147483648
        %v1428 = vsel %vm1426, %v1413, %v1427
        %vm1429 = vcmp.eq.s32.totalorder %v1424, 2
        %v1430 = vxor.u32 %v1413, 2147483648
        %v1431 = vsel %vm1429, %v1430, %v1421
        %v1432 = vsel %vm1425, %v1428, %v1431
        %v1433 = vsel %vm1422, nan, %v1432
        %v1434 = vand.u32 2147483647, %v632
        %vm1435 = vcmp.le.f32.partialorder %v1434, 0.7853982
        %vm1436 = vcmp.lt.s32.totalorder %v632, 0
        %v1437 = vand.u32 %v632, 2139095040
        %v1438 = vshrl.u32 %v1437, 23
        %v1439 = vsub.s32 %v1438, 127
        %v1440 = vand.u32 2147483647, %v632
        %v1441 = vand.u32 %v1440, 8388607
        %v1442 = vor.u32 %v1441, 8388608
        %v1443 = vsub.s32 0, %v1442
        %v1444 = vadd.s32 %v1439, 1
        %vm1445 = vcmp.gt.s32.totalorder %v1444, 0
        %v1446 = vsel %vm1445, %v1444, 0
        %v1447 = vshrl.u32 %v1446, 5
        %v1448 = vand.u32 %v1446, 31
        %v1449 = vsub.s32 32, %v1448
        %v1450 = vshrl.u32 683565275, %v1449
        %v1451 = vshll.u32 683565275, %v1448
        %v1452 = vshrl.u32 2475754826, %v1449
        %v1453 = vor.u32 %v1451, %v1452
        %v1454 = vshll.u32 2475754826, %v1448
        %v1455 = vshrl.u32 2131351028, %v1449
        %v1456 = vor.u32 %v1454, %v1455
        %v1457 = vshll.u32 2131351028, %v1448
        %v1458 = vshrl.u32 2102212464, %v1449
        %v1459 = vor.u32 %v1457, %v1458
        %v1460 = vshll.u32 2102212464, %v1448
        %v1461 = vshrl.u32 920167782, %v1449
        %v1462 = vor.u32 %v1460, %v1461
        %v1463 = vshll.u32 920167782, %v1448
        %v1464 = vshrl.u32 1326507024, %v1449
        %v1465 = vor.u32 %v1463, %v1464
        %vm1466 = vcmp.lt.s32.totalorder %v1447, 1
        %vm1467 = vcmp.lt.s32.totalorder %v1447, 2
        %vm1468 = vcmp.lt.s32.totalorder %v1447, 3
        %vm1469 = vcmp.lt.s32.totalorder %v1447, 4
        %v1470 = vsel %vm1466, %v1450, %v1453
        %v1471 = vsel %vm1469, %v1459, 2102212464
        %v1472 = vsel %vm1468, %v1456, %v1471
        %v1473 = vsel %vm1467, %v1470, %v1472
        %v1474 = vsel %vm1466, %v1453, %v1456
        %v1475 = vsel %vm1469, %v1462, 920167782
        %v1476 = vsel %vm1468, %v1459, %v1475
        %v1477 = vsel %vm1467, %v1474, %v1476
        %v1478 = vsel %vm1466, %v1456, %v1459
        %v1479 = vsel %vm1469, %v1465, 1326507024
        %v1480 = vsel %vm1468, %v1462, %v1479
        %v1481 = vsel %vm1467, %v1478, %v1480
        %v1482 = vshll.u32 %v1442, 8
        %v1483 = vand.u32 %v1482, 65535
        %v1484 = vshrl.u32 %v1482, 16
        %v1485 = vand.u32 %v1481, 65535
        %v1486 = vshrl.u32 %v1481, 16
        %v1487 = vmul.u32 %v1483, %v1485
        %v1488 = vmul.u32 %v1483, %v1486
        %v1489 = vmul.u32 %v1484, %v1485
        %v1490 = vmul.u32 %v1484, %v1486
        %v1491 = vshll.u32 %v1488, 16
        %v1492 = vshrl.u32 %v1488, 16
        %v1493 = vshll.u32 %v1489, 16
        %v1494 = vshrl.u32 %v1489, 16
        %vm1495 = vc.u32 %v1487, %v1491
        %v1496 = vsel %vm1495, 1, 0
        %v1497 = vadd.s32 %v1487, %v1491
        %v1498 = vadd.s32 %v1490, %v1496
        %vm1499 = vc.u32 %v1497, %v1493
        %v1500 = vsel %vm1499, 1, 0
        %v1501 = vadd.s32 %v1497, %v1493
        %v1502 = vadd.s32 %v1498, %v1500
        %v1503 = vadd.s32 %v1502, %v1492
        %v1504 = vadd.s32 %v1503, %v1494
        %v1505 = vand.u32 %v1482, 65535
        %v1506 = vshrl.u32 %v1482, 16
        %v1507 = vand.u32 %v1477, 65535
        %v1508 = vshrl.u32 %v1477, 16
        %v1509 = vmul.u32 %v1505, %v1507
        %v1510 = vmul.u32 %v1505, %v1508
        %v1511 = vmul.u32 %v1506, %v1507
        %v1512 = vmul.u32 %v1506, %v1508
        %v1513 = vshll.u32 %v1510, 16
        %v1514 = vshrl.u32 %v1510, 16
        %v1515 = vshll.u32 %v1511, 16
        %v1516 = vshrl.u32 %v1511, 16
        %vm1517 = vc.u32 %v1509, %v1513
        %v1518 = vsel %vm1517, 1, 0
        %v1519 = vadd.s32 %v1509, %v1513
        %v1520 = vadd.s32 %v1512, %v1518
        %vm1521 = vc.u32 %v1519, %v1515
        %v1522 = vsel %vm1521, 1, 0
        %v1523 = vadd.s32 %v1519, %v1515
        %v1524 = vadd.s32 %v1520, %v1522
        %v1525 = vadd.s32 %v1524, %v1514
        %v1526 = vadd.s32 %v1525, %v1516
        %v1527 = vmul.u32 %v1482, %v1473
        %v1528 = vadd.s32 %v1504, %v1523
        %vm1529 = vc.u32 %v1504, %v1523
        %v1530 = vadd.s32 %v1526, 1
        %v1531 = vsel %vm1529, %v1530, %v1526
        %v1532 = vadd.s32 %v1527, %v1531
        %v1533 = vadd.s32 %v1532, 536870912
        %v1534 = vshrl.u32 %v1533, 30
        %v1535 = vshll.u32 %v1534, 30
        %v1536 = vsub.s32 %v1532, %v1535
        %vm1537 = vcmp.lt.s32.totalorder %v1536, 0
        %v1538 = vsub.s32 0, %v1536
        %v1539 = vsel %vm1537, %v1538, %v1536
        %v1540 = vclz %v1539
        %v1541 = vsub.s32 %v1540, 2
        %vm1542 = vcmp.gt.s32.totalorder 0, %v1541
        %v1543 = vsel %vm1542, 0, %v1541
        %v1544 = vsub.s32 32, %v1543
        %v1545 = vshll.u32 %v1536, %v1543
        %v1546 = vshrl.u32 %v1528, %v1544
        %v1547 = vor.u32 %v1545, %v1546
        %v1548 = vsub.s32 4294967266, %v1543
        %v1549 = vadd.s32 %v1548, 127
        %v1550 = vshll.u32 %v1549, 23
        %v1551 = vor.u32 4788187, %v1550
        %v1552 = vand.u32 2147483647, %v1551
        %v1554 = vcvt.s32.f32 %v1547
        %v1555 = vmul.f32 %v1554, %v1552
        %v1556 = vxor.u32 %v1555, 2147483648
        %v1557 = vsel %vm1436, %v1556, %v1555
        %v1558 = vsub.s32 4, %v1534
        %v1559 = vsel %vm1436, %v1558, %v1534
        %v1560 = vsel %vm1435, %v632, %v1557
        %v1561 = vsel %vm1435, 0, %v1559
        %v1562 = vmul.f32 %v1560, %v1560
        %v1563 = vmul.f32 %v1562, -0.001358992
        %v1564 = vadd.f32 %v1563, 0.041655596
        %v1565 = vmul.f32 %v1562, %v1564
        %v1566 = vadd.f32 %v1565, -0.4999988
        %v1567 = vmul.f32 %v1562, %v1566
        %v1568 = vadd.f32 1.0, %v1567
        %v1569 = vmul.f32 %v1560, %v1560
        %v1570 = vmul.f32 %v1569, -0.00019511016
        %v1571 = vadd.f32 %v1570, 0.008332121
        %v1572 = vmul.f32 %v1569, %v1571
        %v1573 = vadd.f32 %v1572, -0.16666654
        %v1574 = vmul.f32 %v1569, %v1573
        %v1575 = vadd.f32 %v1574, 1.0
        %v1576 = vmul.f32 %v1575, %v1560
        %vm1577 = vweird.f32 %v632
        %v1578 = vadd.s32 %v1561, 3
        %v1579 = vand.u32 %v1578, 3
        %vm1580 = vcmp.lt.s32.totalorder %v1579, 2
        %vm1581 = vcmp.eq.s32.totalorder %v1579, 0
        %v1582 = vxor.u32 %v1576, 2147483648
        %v1583 = vsel %vm1581, %v1568, %v1582
        %vm1584 = vcmp.eq.s32.totalorder %v1579, 2
        %v1585 = vxor.u32 %v1568, 2147483648
        %v1586 = vsel %vm1584, %v1585, %v1576
        %v1587 = vsel %vm1580, %v1583, %v1586
        %v1588 = vsel %vm1577, nan, %v1587
        %v1589 = vand.u32 2147483647, %v633
        %vm1590 = vcmp.le.f32.partialorder %v1589, 0.7853982
        %vm1591 = vcmp.lt.s32.totalorder %v633, 0
        %v1592 = vand.u32 %v633, 2139095040
        %v1593 = vshrl.u32 %v1592, 23
        %v1594 = vsub.s32 %v1593, 127
        %v1595 = vand.u32 2147483647, %v633
        %v1596 = vand.u32 %v1595, 8388607
        %v1597 = vor.u32 %v1596, 8388608
        %v1598 = vsub.s32 0, %v1597
        %v1599 = vadd.s32 %v1594, 1
        %vm1600 = vcmp.gt.s32.totalorder %v1599, 0
        %v1601 = vsel %vm1600, %v1599, 0
        %v1602 = vshrl.u32 %v1601, 5
        %v1603 = vand.u32 %v1601, 31
        %v1604 = vsub.s32 32, %v1603
        %v1605 = vshrl.u32 683565275, %v1604
        %v1606 = vshll.u32 683565275, %v1603
        %v1607 = vshrl.u32 2475754826, %v1604
        %v1608 = vor.u32 %v1606, %v1607
        %v1609 = vshll.u32 2475754826, %v1603
        %v1610 = vshrl.u32 2131351028, %v1604
        %v1611 = vor.u32 %v1609, %v1610
        %v1612 = vshll.u32 2131351028, %v1603
        %v1613 = vshrl.u32 2102212464, %v1604
        %v1614 = vor.u32 %v1612, %v1613
        %v1615 = vshll.u32 2102212464, %v1603
        %v1616 = vshrl.u32 920167782, %v1604
        %v1617 = vor.u32 %v1615, %v1616
        %v1618 = vshll.u32 920167782, %v1603
        %v1619 = vshrl.u32 1326507024, %v1604
        %v1620 = vor.u32 %v1618, %v1619
        %vm1621 = vcmp.lt.s32.totalorder %v1602, 1
        %vm1622 = vcmp.lt.s32.totalorder %v1602, 2
        %vm1623 = vcmp.lt.s32.totalorder %v1602, 3
        %vm1624 = vcmp.lt.s32.totalorder %v1602, 4
        %v1625 = vsel %vm1621, %v1605, %v1608
        %v1626 = vsel %vm1624, %v1614, 2102212464
        %v1627 = vsel %vm1623, %v1611, %v1626
        %v1628 = vsel %vm1622, %v1625, %v1627
        %v1629 = vsel %vm1621, %v1608, %v1611
        %v1630 = vsel %vm1624, %v1617, 920167782
        %v1631 = vsel %vm1623, %v1614, %v1630
        %v1632 = vsel %vm1622, %v1629, %v1631
        %v1633 = vsel %vm1621, %v1611, %v1614
        %v1634 = vsel %vm1624, %v1620, 1326507024
        %v1635 = vsel %vm1623, %v1617, %v1634
        %v1636 = vsel %vm1622, %v1633, %v1635
        %v1637 = vshll.u32 %v1597, 8
        %v1638 = vand.u32 %v1637, 65535
        %v1639 = vshrl.u32 %v1637, 16
        %v1640 = vand.u32 %v1636, 65535
        %v1641 = vshrl.u32 %v1636, 16
        %v1642 = vmul.u32 %v1638, %v1640
        %v1643 = vmul.u32 %v1638, %v1641
        %v1644 = vmul.u32 %v1639, %v1640
        %v1645 = vmul.u32 %v1639, %v1641
        %v1646 = vshll.u32 %v1643, 16
        %v1647 = vshrl.u32 %v1643, 16
        %v1648 = vshll.u32 %v1644, 16
        %v1649 = vshrl.u32 %v1644, 16
        %vm1650 = vc.u32 %v1642, %v1646
        %v1651 = vsel %vm1650, 1, 0
        %v1652 = vadd.s32 %v1642, %v1646
        %v1653 = vadd.s32 %v1645, %v1651
        %vm1654 = vc.u32 %v1652, %v1648
        %v1655 = vsel %vm1654, 1, 0
        %v1656 = vadd.s32 %v1652, %v1648
        %v1657 = vadd.s32 %v1653, %v1655
        %v1658 = vadd.s32 %v1657, %v1647
        %v1659 = vadd.s32 %v1658, %v1649
        %v1660 = vand.u32 %v1637, 65535
        %v1661 = vshrl.u32 %v1637, 16
        %v1662 = vand.u32 %v1632, 65535
        %v1663 = vshrl.u32 %v1632, 16
        %v1664 = vmul.u32 %v1660, %v1662
        %v1665 = vmul.u32 %v1660, %v1663
        %v1666 = vmul.u32 %v1661, %v1662
        %v1667 = vmul.u32 %v1661, %v1663
        %v1668 = vshll.u32 %v1665, 16
        %v1669 = vshrl.u32 %v1665, 16
        %v1670 = vshll.u32 %v1666, 16
        %v1671 = vshrl.u32 %v1666, 16
        %vm1672 = vc.u32 %v1664, %v1668
        %v1673 = vsel %vm1672, 1, 0
        %v1674 = vadd.s32 %v1664, %v1668
        %v1675 = vadd.s32 %v1667, %v1673
        %vm1676 = vc.u32 %v1674, %v1670
        %v1677 = vsel %vm1676, 1, 0
        %v1678 = vadd.s32 %v1674, %v1670
        %v1679 = vadd.s32 %v1675, %v1677
        %v1680 = vadd.s32 %v1679, %v1669
        %v1681 = vadd.s32 %v1680, %v1671
        %v1682 = vmul.u32 %v1637, %v1628
        %v1683 = vadd.s32 %v1659, %v1678
        %vm1684 = vc.u32 %v1659, %v1678
        %v1685 = vadd.s32 %v1681, 1
        %v1686 = vsel %vm1684, %v1685, %v1681
        %v1687 = vadd.s32 %v1682, %v1686
        %v1688 = vadd.s32 %v1687, 536870912
        %v1689 = vshrl.u32 %v1688, 30
        %v1690 = vshll.u32 %v1689, 30
        %v1691 = vsub.s32 %v1687, %v1690
        %vm1692 = vcmp.lt.s32.totalorder %v1691, 0
        %v1693 = vsub.s32 0, %v1691
        %v1694 = vsel %vm1692, %v1693, %v1691
        %v1695 = vclz %v1694
        %v1696 = vsub.s32 %v1695, 2
        %vm1697 = vcmp.gt.s32.totalorder 0, %v1696
        %v1698 = vsel %vm1697, 0, %v1696
        %v1699 = vsub.s32 32, %v1698
        %v1700 = vshll.u32 %v1691, %v1698
        %v1701 = vshrl.u32 %v1683, %v1699
        %v1702 = vor.u32 %v1700, %v1701
        %v1703 = vsub.s32 4294967266, %v1698
        %v1704 = vadd.s32 %v1703, 127
        %v1705 = vshll.u32 %v1704, 23
        %v1706 = vor.u32 4788187, %v1705
        %v1707 = vand.u32 2147483647, %v1706
        %v1709 = vcvt.s32.f32 %v1702
        %v1710 = vmul.f32 %v1709, %v1707
        %v1711 = vxor.u32 %v1710, 2147483648
        %v1712 = vsel %vm1591, %v1711, %v1710
        %v1713 = vsub.s32 4, %v1689
        %v1714 = vsel %vm1591, %v1713, %v1689
        %v1715 = vsel %vm1590, %v633, %v1712
        %v1716 = vsel %vm1590, 0, %v1714
        %v1717 = vmul.f32 %v1715, %v1715
        %v1718 = vmul.f32 %v1717, -0.001358992
        %v1719 = vadd.f32 %v1718, 0.041655596
        %v1720 = vmul.f32 %v1717, %v1719
        %v1721 = vadd.f32 %v1720, -0.4999988
        %v1722 = vmul.f32 %v1717, %v1721
        %v1723 = vadd.f32 1.0, %v1722
        %v1724 = vmul.f32 %v1715, %v1715
        %v1725 = vmul.f32 %v1724, -0.00019511016
        %v1726 = vadd.f32 %v1725, 0.008332121
        %v1727 = vmul.f32 %v1724, %v1726
        %v1728 = vadd.f32 %v1727, -0.16666654
        %v1729 = vmul.f32 %v1724, %v1728
        %v1730 = vadd.f32 %v1729, 1.0
        %v1731 = vmul.f32 %v1730, %v1715
        %vm1732 = vweird.f32 %v633
        %v1733 = vadd.s32 %v1716, 3
        %v1734 = vand.u32 %v1733, 3
        %vm1735 = vcmp.lt.s32.totalorder %v1734, 2
        %vm1736 = vcmp.eq.s32.totalorder %v1734, 0
        %v1737 = vxor.u32 %v1731, 2147483648
        %v1738 = vsel %vm1736, %v1723, %v1737
        %vm1739 = vcmp.eq.s32.totalorder %v1734, 2
        %v1740 = vxor.u32 %v1723, 2147483648
        %v1741 = vsel %vm1739, %v1740, %v1731
        %v1742 = vsel %vm1735, %v1738, %v1741
        %v1743 = vsel %vm1732, nan, %v1742
        %v1744 = vand.u32 2147483647, %v634
        %vm1745 = vcmp.le.f32.partialorder %v1744, 0.7853982
        %vm1746 = vcmp.lt.s32.totalorder %v634, 0
        %v1747 = vand.u32 %v634, 2139095040
        %v1748 = vshrl.u32 %v1747, 23
        %v1749 = vsub.s32 %v1748, 127
        %v1750 = vand.u32 2147483647, %v634
        %v1751 = vand.u32 %v1750, 8388607
        %v1752 = vor.u32 %v1751, 8388608
        %v1753 = vsub.s32 0, %v1752
        %v1754 = vadd.s32 %v1749, 1
        %vm1755 = vcmp.gt.s32.totalorder %v1754, 0
        %v1756 = vsel %vm1755, %v1754, 0
        %v1757 = vshrl.u32 %v1756, 5
        %v1758 = vand.u32 %v1756, 31
        %v1759 = vsub.s32 32, %v1758
        %v1760 = vshrl.u32 683565275, %v1759
        %v1761 = vshll.u32 683565275, %v1758
        %v1762 = vshrl.u32 2475754826, %v1759
        %v1763 = vor.u32 %v1761, %v1762
        %v1764 = vshll.u32 2475754826, %v1758
        %v1765 = vshrl.u32 2131351028, %v1759
        %v1766 = vor.u32 %v1764, %v1765
        %v1767 = vshll.u32 2131351028, %v1758
        %v1768 = vshrl.u32 2102212464, %v1759
        %v1769 = vor.u32 %v1767, %v1768
        %v1770 = vshll.u32 2102212464, %v1758
        %v1771 = vshrl.u32 920167782, %v1759
        %v1772 = vor.u32 %v1770, %v1771
        %v1773 = vshll.u32 920167782, %v1758
        %v1774 = vshrl.u32 1326507024, %v1759
        %v1775 = vor.u32 %v1773, %v1774
        %vm1776 = vcmp.lt.s32.totalorder %v1757, 1
        %vm1777 = vcmp.lt.s32.totalorder %v1757, 2
        %vm1778 = vcmp.lt.s32.totalorder %v1757, 3
        %vm1779 = vcmp.lt.s32.totalorder %v1757, 4
        %v1780 = vsel %vm1776, %v1760, %v1763
        %v1781 = vsel %vm1779, %v1769, 2102212464
        %v1782 = vsel %vm1778, %v1766, %v1781
        %v1783 = vsel %vm1777, %v1780, %v1782
        %v1784 = vsel %vm1776, %v1763, %v1766
        %v1785 = vsel %vm1779, %v1772, 920167782
        %v1786 = vsel %vm1778, %v1769, %v1785
        %v1787 = vsel %vm1777, %v1784, %v1786
        %v1788 = vsel %vm1776, %v1766, %v1769
        %v1789 = vsel %vm1779, %v1775, 1326507024
        %v1790 = vsel %vm1778, %v1772, %v1789
        %v1791 = vsel %vm1777, %v1788, %v1790
        %v1792 = vshll.u32 %v1752, 8
        %v1793 = vand.u32 %v1792, 65535
        %v1794 = vshrl.u32 %v1792, 16
        %v1795 = vand.u32 %v1791, 65535
        %v1796 = vshrl.u32 %v1791, 16
        %v1797 = vmul.u32 %v1793, %v1795
        %v1798 = vmul.u32 %v1793, %v1796
        %v1799 = vmul.u32 %v1794, %v1795
        %v1800 = vmul.u32 %v1794, %v1796
        %v1801 = vshll.u32 %v1798, 16
        %v1802 = vshrl.u32 %v1798, 16
        %v1803 = vshll.u32 %v1799, 16
        %v1804 = vshrl.u32 %v1799, 16
        %vm1805 = vc.u32 %v1797, %v1801
        %v1806 = vsel %vm1805, 1, 0
        %v1807 = vadd.s32 %v1797, %v1801
        %v1808 = vadd.s32 %v1800, %v1806
        %vm1809 = vc.u32 %v1807, %v1803
        %v1810 = vsel %vm1809, 1, 0
        %v1811 = vadd.s32 %v1807, %v1803
        %v1812 = vadd.s32 %v1808, %v1810
        %v1813 = vadd.s32 %v1812, %v1802
        %v1814 = vadd.s32 %v1813, %v1804
        %v1815 = vand.u32 %v1792, 65535
        %v1816 = vshrl.u32 %v1792, 16
        %v1817 = vand.u32 %v1787, 65535
        %v1818 = vshrl.u32 %v1787, 16
        %v1819 = vmul.u32 %v1815, %v1817
        %v1820 = vmul.u32 %v1815, %v1818
        %v1821 = vmul.u32 %v1816, %v1817
        %v1822 = vmul.u32 %v1816, %v1818
        %v1823 = vshll.u32 %v1820, 16
        %v1824 = vshrl.u32 %v1820, 16
        %v1825 = vshll.u32 %v1821, 16
        %v1826 = vshrl.u32 %v1821, 16
        %vm1827 = vc.u32 %v1819, %v1823
        %v1828 = vsel %vm1827, 1, 0
        %v1829 = vadd.s32 %v1819, %v1823
        %v1830 = vadd.s32 %v1822, %v1828
        %vm1831 = vc.u32 %v1829, %v1825
        %v1832 = vsel %vm1831, 1, 0
        %v1833 = vadd.s32 %v1829, %v1825
        %v1834 = vadd.s32 %v1830, %v1832
        %v1835 = vadd.s32 %v1834, %v1824
        %v1836 = vadd.s32 %v1835, %v1826
        %v1837 = vmul.u32 %v1792, %v1783
        %v1838 = vadd.s32 %v1814, %v1833
        %vm1839 = vc.u32 %v1814, %v1833
        %v1840 = vadd.s32 %v1836, 1
        %v1841 = vsel %vm1839, %v1840, %v1836
        %v1842 = vadd.s32 %v1837, %v1841
        %v1843 = vadd.s32 %v1842, 536870912
        %v1844 = vshrl.u32 %v1843, 30
        %v1845 = vshll.u32 %v1844, 30
        %v1846 = vsub.s32 %v1842, %v1845
        %vm1847 = vcmp.lt.s32.totalorder %v1846, 0
        %v1848 = vsub.s32 0, %v1846
        %v1849 = vsel %vm1847, %v1848, %v1846
        %v1850 = vclz %v1849
        %v1851 = vsub.s32 %v1850, 2
        %vm1852 = vcmp.gt.s32.totalorder 0, %v1851
        %v1853 = vsel %vm1852, 0, %v1851
        %v1854 = vsub.s32 32, %v1853
        %v1855 = vshll.u32 %v1846, %v1853
        %v1856 = vshrl.u32 %v1838, %v1854
        %v1857 = vor.u32 %v1855, %v1856
        %v1858 = vsub.s32 4294967266, %v1853
        %v1859 = vadd.s32 %v1858, 127
        %v1860 = vshll.u32 %v1859, 23
        %v1861 = vor.u32 4788187, %v1860
        %v1862 = vand.u32 2147483647, %v1861
        %v1864 = vcvt.s32.f32 %v1857
        %v1865 = vmul.f32 %v1864, %v1862
        %v1866 = vxor.u32 %v1865, 2147483648
        %v1867 = vsel %vm1746, %v1866, %v1865
        %v1868 = vsub.s32 4, %v1844
        %v1869 = vsel %vm1746, %v1868, %v1844
        %v1870 = vsel %vm1745, %v634, %v1867
        %v1871 = vsel %vm1745, 0, %v1869
        %v1872 = vmul.f32 %v1870, %v1870
        %v1873 = vmul.f32 %v1872, -0.001358992
        %v1874 = vadd.f32 %v1873, 0.041655596
        %v1875 = vmul.f32 %v1872, %v1874
        %v1876 = vadd.f32 %v1875, -0.4999988
        %v1877 = vmul.f32 %v1872, %v1876
        %v1878 = vadd.f32 1.0, %v1877
        %v1879 = vmul.f32 %v1870, %v1870
        %v1880 = vmul.f32 %v1879, -0.00019511016
        %v1881 = vadd.f32 %v1880, 0.008332121
        %v1882 = vmul.f32 %v1879, %v1881
        %v1883 = vadd.f32 %v1882, -0.16666654
        %v1884 = vmul.f32 %v1879, %v1883
        %v1885 = vadd.f32 %v1884, 1.0
        %v1886 = vmul.f32 %v1885, %v1870
        %vm1887 = vweird.f32 %v634
        %v1888 = vadd.s32 %v1871, 3
        %v1889 = vand.u32 %v1888, 3
        %vm1890 = vcmp.lt.s32.totalorder %v1889, 2
        %vm1891 = vcmp.eq.s32.totalorder %v1889, 0
        %v1892 = vxor.u32 %v1886, 2147483648
        %v1893 = vsel %vm1891, %v1878, %v1892
        %vm1894 = vcmp.eq.s32.totalorder %v1889, 2
        %v1895 = vxor.u32 %v1878, 2147483648
        %v1896 = vsel %vm1894, %v1895, %v1886
        %v1897 = vsel %vm1890, %v1893, %v1896
        %v1898 = vsel %vm1887, nan, %v1897
        %v1899 = vand.u32 2147483647, %v635
        %vm1900 = vcmp.le.f32.partialorder %v1899, 0.7853982
        %vm1901 = vcmp.lt.s32.totalorder %v635, 0
        %v1902 = vand.u32 %v635, 2139095040
        %v1903 = vshrl.u32 %v1902, 23
        %v1904 = vsub.s32 %v1903, 127
        %v1905 = vand.u32 2147483647, %v635
        %v1906 = vand.u32 %v1905, 8388607
        %v1907 = vor.u32 %v1906, 8388608
        %v1908 = vsub.s32 0, %v1907
        %v1909 = vadd.s32 %v1904, 1
        %vm1910 = vcmp.gt.s32.totalorder %v1909, 0
        %v1911 = vsel %vm1910, %v1909, 0
        %v1912 = vshrl.u32 %v1911, 5
        %v1913 = vand.u32 %v1911, 31
        %v1914 = vsub.s32 32, %v1913
        %v1915 = vshrl.u32 683565275, %v1914
        %v1916 = vshll.u32 683565275, %v1913
        %v1917 = vshrl.u32 2475754826, %v1914
        %v1918 = vor.u32 %v1916, %v1917
        %v1919 = vshll.u32 2475754826, %v1913
        %v1920 = vshrl.u32 2131351028, %v1914
        %v1921 = vor.u32 %v1919, %v1920
        %v1922 = vshll.u32 2131351028, %v1913
        %v1923 = vshrl.u32 2102212464, %v1914
        %v1924 = vor.u32 %v1922, %v1923
        %v1925 = vshll.u32 2102212464, %v1913
        %v1926 = vshrl.u32 920167782, %v1914
        %v1927 = vor.u32 %v1925, %v1926
        %v1928 = vshll.u32 920167782, %v1913
        %v1929 = vshrl.u32 1326507024, %v1914
        %v1930 = vor.u32 %v1928, %v1929
        %vm1931 = vcmp.lt.s32.totalorder %v1912, 1
        %vm1932 = vcmp.lt.s32.totalorder %v1912, 2
        %vm1933 = vcmp.lt.s32.totalorder %v1912, 3
        %vm1934 = vcmp.lt.s32.totalorder %v1912, 4
        %v1935 = vsel %vm1931, %v1915, %v1918
        %v1936 = vsel %vm1934, %v1924, 2102212464
        %v1937 = vsel %vm1933, %v1921, %v1936
        %v1938 = vsel %vm1932, %v1935, %v1937
        %v1939 = vsel %vm1931, %v1918, %v1921
        %v1940 = vsel %vm1934, %v1927, 920167782
        %v1941 = vsel %vm1933, %v1924, %v1940
        %v1942 = vsel %vm1932, %v1939, %v1941
        %v1943 = vsel %vm1931, %v1921, %v1924
        %v1944 = vsel %vm1934, %v1930, 1326507024
        %v1945 = vsel %vm1933, %v1927, %v1944
        %v1946 = vsel %vm1932, %v1943, %v1945
        %v1947 = vshll.u32 %v1907, 8
        %v1948 = vand.u32 %v1947, 65535
        %v1949 = vshrl.u32 %v1947, 16
        %v1950 = vand.u32 %v1946, 65535
        %v1951 = vshrl.u32 %v1946, 16
        %v1952 = vmul.u32 %v1948, %v1950
        %v1953 = vmul.u32 %v1948, %v1951
        %v1954 = vmul.u32 %v1949, %v1950
        %v1955 = vmul.u32 %v1949, %v1951
        %v1956 = vshll.u32 %v1953, 16
        %v1957 = vshrl.u32 %v1953, 16
        %v1958 = vshll.u32 %v1954, 16
        %v1959 = vshrl.u32 %v1954, 16
        %vm1960 = vc.u32 %v1952, %v1956
        %v1961 = vsel %vm1960, 1, 0
        %v1962 = vadd.s32 %v1952, %v1956
        %v1963 = vadd.s32 %v1955, %v1961
        %vm1964 = vc.u32 %v1962, %v1958
        %v1965 = vsel %vm1964, 1, 0
        %v1966 = vadd.s32 %v1962, %v1958
        %v1967 = vadd.s32 %v1963, %v1965
        %v1968 = vadd.s32 %v1967, %v1957
        %v1969 = vadd.s32 %v1968, %v1959
        %v1970 = vand.u32 %v1947, 65535
        %v1971 = vshrl.u32 %v1947, 16
        %v1972 = vand.u32 %v1942, 65535
        %v1973 = vshrl.u32 %v1942, 16
        %v1974 = vmul.u32 %v1970, %v1972
        %v1975 = vmul.u32 %v1970, %v1973
        %v1976 = vmul.u32 %v1971, %v1972
        %v1977 = vmul.u32 %v1971, %v1973
        %v1978 = vshll.u32 %v1975, 16
        %v1979 = vshrl.u32 %v1975, 16
        %v1980 = vshll.u32 %v1976, 16
        %v1981 = vshrl.u32 %v1976, 16
        %vm1982 = vc.u32 %v1974, %v1978
        %v1983 = vsel %vm1982, 1, 0
        %v1984 = vadd.s32 %v1974, %v1978
        %v1985 = vadd.s32 %v1977, %v1983
        %vm1986 = vc.u32 %v1984, %v1980
        %v1987 = vsel %vm1986, 1, 0
        %v1988 = vadd.s32 %v1984, %v1980
        %v1989 = vadd.s32 %v1985, %v1987
        %v1990 = vadd.s32 %v1989, %v1979
        %v1991 = vadd.s32 %v1990, %v1981
        %v1992 = vmul.u32 %v1947, %v1938
        %v1993 = vadd.s32 %v1969, %v1988
        %vm1994 = vc.u32 %v1969, %v1988
        %v1995 = vadd.s32 %v1991, 1
        %v1996 = vsel %vm1994, %v1995, %v1991
        %v1997 = vadd.s32 %v1992, %v1996
        %v1998 = vadd.s32 %v1997, 536870912
        %v1999 = vshrl.u32 %v1998, 30
        %v2000 = vshll.u32 %v1999, 30
        %v2001 = vsub.s32 %v1997, %v2000
        %vm2002 = vcmp.lt.s32.totalorder %v2001, 0
        %v2003 = vsub.s32 0, %v2001
        %v2004 = vsel %vm2002, %v2003, %v2001
        %v2005 = vclz %v2004
        %v2006 = vsub.s32 %v2005, 2
        %vm2007 = vcmp.gt.s32.totalorder 0, %v2006
        %v2008 = vsel %vm2007, 0, %v2006
        %v2009 = vsub.s32 32, %v2008
        %v2010 = vshll.u32 %v2001, %v2008
        %v2011 = vshrl.u32 %v1993, %v2009
        %v2012 = vor.u32 %v2010, %v2011
        %v2013 = vsub.s32 4294967266, %v2008
        %v2014 = vadd.s32 %v2013, 127
        %v2015 = vshll.u32 %v2014, 23
        %v2016 = vor.u32 4788187, %v2015
        %v2017 = vand.u32 2147483647, %v2016
        %v2019 = vcvt.s32.f32 %v2012
        %v2020 = vmul.f32 %v2019, %v2017
        %v2021 = vxor.u32 %v2020, 2147483648
        %v2022 = vsel %vm1901, %v2021, %v2020
        %v2023 = vsub.s32 4, %v1999
        %v2024 = vsel %vm1901, %v2023, %v1999
        %v2025 = vsel %vm1900, %v635, %v2022
        %v2026 = vsel %vm1900, 0, %v2024
        %v2027 = vmul.f32 %v2025, %v2025
        %v2028 = vmul.f32 %v2027, -0.001358992
        %v2029 = vadd.f32 %v2028, 0.041655596
        %v2030 = vmul.f32 %v2027, %v2029
        %v2031 = vadd.f32 %v2030, -0.4999988
        %v2032 = vmul.f32 %v2027, %v2031
        %v2033 = vadd.f32 1.0, %v2032
        %v2034 = vmul.f32 %v2025, %v2025
        %v2035 = vmul.f32 %v2034, -0.00019511016
        %v2036 = vadd.f32 %v2035, 0.008332121
        %v2037 = vmul.f32 %v2034, %v2036
        %v2038 = vadd.f32 %v2037, -0.16666654
        %v2039 = vmul.f32 %v2034, %v2038
        %v2040 = vadd.f32 %v2039, 1.0
        %v2041 = vmul.f32 %v2040, %v2025
        %vm2042 = vweird.f32 %v635
        %v2043 = vadd.s32 %v2026, 3
        %v2044 = vand.u32 %v2043, 3
        %vm2045 = vcmp.lt.s32.totalorder %v2044, 2
        %vm2046 = vcmp.eq.s32.totalorder %v2044, 0
        %v2047 = vxor.u32 %v2041, 2147483648
        %v2048 = vsel %vm2046, %v2033, %v2047
        %vm2049 = vcmp.eq.s32.totalorder %v2044, 2
        %v2050 = vxor.u32 %v2033, 2147483648
        %v2051 = vsel %vm2049, %v2050, %v2041
        %v2052 = vsel %vm2045, %v2048, %v2051
        %v2053 = vsel %vm2042, nan, %v2052
        %v2054 = vand.u32 2147483647, %v636
        %vm2055 = vcmp.le.f32.partialorder %v2054, 0.7853982
        %vm2056 = vcmp.lt.s32.totalorder %v636, 0
        %v2057 = vand.u32 %v636, 2139095040
        %v2058 = vshrl.u32 %v2057, 23
        %v2059 = vsub.s32 %v2058, 127
        %v2060 = vand.u32 2147483647, %v636
        %v2061 = vand.u32 %v2060, 8388607
        %v2062 = vor.u32 %v2061, 8388608
        %v2063 = vsub.s32 0, %v2062
        %v2064 = vadd.s32 %v2059, 1
        %vm2065 = vcmp.gt.s32.totalorder %v2064, 0
        %v2066 = vsel %vm2065, %v2064, 0
        %v2067 = vshrl.u32 %v2066, 5
        %v2068 = vand.u32 %v2066, 31
        %v2069 = vsub.s32 32, %v2068
        %v2070 = vshrl.u32 683565275, %v2069
        %v2071 = vshll.u32 683565275, %v2068
        %v2072 = vshrl.u32 2475754826, %v2069
        %v2073 = vor.u32 %v2071, %v2072
        %v2074 = vshll.u32 2475754826, %v2068
        %v2075 = vshrl.u32 2131351028, %v2069
        %v2076 = vor.u32 %v2074, %v2075
        %v2077 = vshll.u32 2131351028, %v2068
        %v2078 = vshrl.u32 2102212464, %v2069
        %v2079 = vor.u32 %v2077, %v2078
        %v2080 = vshll.u32 2102212464, %v2068
        %v2081 = vshrl.u32 920167782, %v2069
        %v2082 = vor.u32 %v2080, %v2081
        %v2083 = vshll.u32 920167782, %v2068
        %v2084 = vshrl.u32 1326507024, %v2069
        %v2085 = vor.u32 %v2083, %v2084
        %vm2086 = vcmp.lt.s32.totalorder %v2067, 1
        %vm2087 = vcmp.lt.s32.totalorder %v2067, 2
        %vm2088 = vcmp.lt.s32.totalorder %v2067, 3
        %vm2089 = vcmp.lt.s32.totalorder %v2067, 4
        %v2090 = vsel %vm2086, %v2070, %v2073
        %v2091 = vsel %vm2089, %v2079, 2102212464
        %v2092 = vsel %vm2088, %v2076, %v2091
        %v2093 = vsel %vm2087, %v2090, %v2092
        %v2094 = vsel %vm2086, %v2073, %v2076
        %v2095 = vsel %vm2089, %v2082, 920167782
        %v2096 = vsel %vm2088, %v2079, %v2095
        %v2097 = vsel %vm2087, %v2094, %v2096
        %v2098 = vsel %vm2086, %v2076, %v2079
        %v2099 = vsel %vm2089, %v2085, 1326507024
        %v2100 = vsel %vm2088, %v2082, %v2099
        %v2101 = vsel %vm2087, %v2098, %v2100
        %v2102 = vshll.u32 %v2062, 8
        %v2103 = vand.u32 %v2102, 65535
        %v2104 = vshrl.u32 %v2102, 16
        %v2105 = vand.u32 %v2101, 65535
        %v2106 = vshrl.u32 %v2101, 16
        %v2107 = vmul.u32 %v2103, %v2105
        %v2108 = vmul.u32 %v2103, %v2106
        %v2109 = vmul.u32 %v2104, %v2105
        %v2110 = vmul.u32 %v2104, %v2106
        %v2111 = vshll.u32 %v2108, 16
        %v2112 = vshrl.u32 %v2108, 16
        %v2113 = vshll.u32 %v2109, 16
        %v2114 = vshrl.u32 %v2109, 16
        %vm2115 = vc.u32 %v2107, %v2111
        %v2116 = vsel %vm2115, 1, 0
        %v2117 = vadd.s32 %v2107, %v2111
        %v2118 = vadd.s32 %v2110, %v2116
        %vm2119 = vc.u32 %v2117, %v2113
        %v2120 = vsel %vm2119, 1, 0
        %v2121 = vadd.s32 %v2117, %v2113
        %v2122 = vadd.s32 %v2118, %v2120
        %v2123 = vadd.s32 %v2122, %v2112
        %v2124 = vadd.s32 %v2123, %v2114
        %v2125 = vand.u32 %v2102, 65535
        %v2126 = vshrl.u32 %v2102, 16
        %v2127 = vand.u32 %v2097, 65535
        %v2128 = vshrl.u32 %v2097, 16
        %v2129 = vmul.u32 %v2125, %v2127
        %v2130 = vmul.u32 %v2125, %v2128
        %v2131 = vmul.u32 %v2126, %v2127
        %v2132 = vmul.u32 %v2126, %v2128
        %v2133 = vshll.u32 %v2130, 16
        %v2134 = vshrl.u32 %v2130, 16
        %v2135 = vshll.u32 %v2131, 16
        %v2136 = vshrl.u32 %v2131, 16
        %vm2137 = vc.u32 %v2129, %v2133
        %v2138 = vsel %vm2137, 1, 0
        %v2139 = vadd.s32 %v2129, %v2133
        %v2140 = vadd.s32 %v2132, %v2138
        %vm2141 = vc.u32 %v2139, %v2135
        %v2142 = vsel %vm2141, 1, 0
        %v2143 = vadd.s32 %v2139, %v2135
        %v2144 = vadd.s32 %v2140, %v2142
        %v2145 = vadd.s32 %v2144, %v2134
        %v2146 = vadd.s32 %v2145, %v2136
        %v2147 = vmul.u32 %v2102, %v2093
        %v2148 = vadd.s32 %v2124, %v2143
        %vm2149 = vc.u32 %v2124, %v2143
        %v2150 = vadd.s32 %v2146, 1
        %v2151 = vsel %vm2149, %v2150, %v2146
        %v2152 = vadd.s32 %v2147, %v2151
        %v2153 = vadd.s32 %v2152, 536870912
        %v2154 = vshrl.u32 %v2153, 30
        %v2155 = vshll.u32 %v2154, 30
        %v2156 = vsub.s32 %v2152, %v2155
        %vm2157 = vcmp.lt.s32.totalorder %v2156, 0
        %v2158 = vsub.s32 0, %v2156
        %v2159 = vsel %vm2157, %v2158, %v2156
        %v2160 = vclz %v2159
        %v2161 = vsub.s32 %v2160, 2
        %vm2162 = vcmp.gt.s32.totalorder 0, %v2161
        %v2163 = vsel %vm2162, 0, %v2161
        %v2164 = vsub.s32 32, %v2163
        %v2165 = vshll.u32 %v2156, %v2163
        %v2166 = vshrl.u32 %v2148, %v2164
        %v2167 = vor.u32 %v2165, %v2166
        %v2168 = vsub.s32 4294967266, %v2163
        %v2169 = vadd.s32 %v2168, 127
        %v2170 = vshll.u32 %v2169, 23
        %v2171 = vor.u32 4788187, %v2170
        %v2172 = vand.u32 2147483647, %v2171
        %v2174 = vcvt.s32.f32 %v2167
        %v2175 = vmul.f32 %v2174, %v2172
        %v2176 = vxor.u32 %v2175, 2147483648
        %v2177 = vsel %vm2056, %v2176, %v2175
        %v2178 = vsub.s32 4, %v2154
        %v2179 = vsel %vm2056, %v2178, %v2154
        %v2180 = vsel %vm2055, %v636, %v2177
        %v2181 = vsel %vm2055, 0, %v2179
        %v2182 = vmul.f32 %v2180, %v2180
        %v2183 = vmul.f32 %v2182, -0.001358992
        %v2184 = vadd.f32 %v2183, 0.041655596
        %v2185 = vmul.f32 %v2182, %v2184
        %v2186 = vadd.f32 %v2185, -0.4999988
        %v2187 = vmul.f32 %v2182, %v2186
        %v2188 = vadd.f32 1.0, %v2187
        %v2189 = vmul.f32 %v2180, %v2180
        %v2190 = vmul.f32 %v2189, -0.00019511016
        %v2191 = vadd.f32 %v2190, 0.008332121
        %v2192 = vmul.f32 %v2189, %v2191
        %v2193 = vadd.f32 %v2192, -0.16666654
        %v2194 = vmul.f32 %v2189, %v2193
        %v2195 = vadd.f32 %v2194, 1.0
        %v2196 = vmul.f32 %v2195, %v2180
        %vm2197 = vweird.f32 %v636
        %v2198 = vadd.s32 %v2181, 3
        %v2199 = vand.u32 %v2198, 3
        %vm2200 = vcmp.lt.s32.totalorder %v2199, 2
        %vm2201 = vcmp.eq.s32.totalorder %v2199, 0
        %v2202 = vxor.u32 %v2196, 2147483648
        %v2203 = vsel %vm2201, %v2188, %v2202
        %vm2204 = vcmp.eq.s32.totalorder %v2199, 2
        %v2205 = vxor.u32 %v2188, 2147483648
        %v2206 = vsel %vm2204, %v2205, %v2196
        %v2207 = vsel %vm2200, %v2203, %v2206
        %v2208 = vsel %vm2197, nan, %v2207
        %v2209 = vand.u32 2147483647, %v637
        %vm2210 = vcmp.le.f32.partialorder %v2209, 0.7853982
        %vm2211 = vcmp.lt.s32.totalorder %v637, 0
        %v2212 = vand.u32 %v637, 2139095040
        %v2213 = vshrl.u32 %v2212, 23
        %v2214 = vsub.s32 %v2213, 127
        %v2215 = vand.u32 2147483647, %v637
        %v2216 = vand.u32 %v2215, 8388607
        %v2217 = vor.u32 %v2216, 8388608
        %v2218 = vsub.s32 0, %v2217
        %v2219 = vadd.s32 %v2214, 1
        %vm2220 = vcmp.gt.s32.totalorder %v2219, 0
        %v2221 = vsel %vm2220, %v2219, 0
        %v2222 = vshrl.u32 %v2221, 5
        %v2223 = vand.u32 %v2221, 31
        %v2224 = vsub.s32 32, %v2223
        %v2225 = vshrl.u32 683565275, %v2224
        %v2226 = vshll.u32 683565275, %v2223
        %v2227 = vshrl.u32 2475754826, %v2224
        %v2228 = vor.u32 %v2226, %v2227
        %v2229 = vshll.u32 2475754826, %v2223
        %v2230 = vshrl.u32 2131351028, %v2224
        %v2231 = vor.u32 %v2229, %v2230
        %v2232 = vshll.u32 2131351028, %v2223
        %v2233 = vshrl.u32 2102212464, %v2224
        %v2234 = vor.u32 %v2232, %v2233
        %v2235 = vshll.u32 2102212464, %v2223
        %v2236 = vshrl.u32 920167782, %v2224
        %v2237 = vor.u32 %v2235, %v2236
        %v2238 = vshll.u32 920167782, %v2223
        %v2239 = vshrl.u32 1326507024, %v2224
        %v2240 = vor.u32 %v2238, %v2239
        %vm2241 = vcmp.lt.s32.totalorder %v2222, 1
        %vm2242 = vcmp.lt.s32.totalorder %v2222, 2
        %vm2243 = vcmp.lt.s32.totalorder %v2222, 3
        %vm2244 = vcmp.lt.s32.totalorder %v2222, 4
        %v2245 = vsel %vm2241, %v2225, %v2228
        %v2246 = vsel %vm2244, %v2234, 2102212464
        %v2247 = vsel %vm2243, %v2231, %v2246
        %v2248 = vsel %vm2242, %v2245, %v2247
        %v2249 = vsel %vm2241, %v2228, %v2231
        %v2250 = vsel %vm2244, %v2237, 920167782
        %v2251 = vsel %vm2243, %v2234, %v2250
        %v2252 = vsel %vm2242, %v2249, %v2251
        %v2253 = vsel %vm2241, %v2231, %v2234
        %v2254 = vsel %vm2244, %v2240, 1326507024
        %v2255 = vsel %vm2243, %v2237, %v2254
        %v2256 = vsel %vm2242, %v2253, %v2255
        %v2257 = vshll.u32 %v2217, 8
        %v2258 = vand.u32 %v2257, 65535
        %v2259 = vshrl.u32 %v2257, 16
        %v2260 = vand.u32 %v2256, 65535
        %v2261 = vshrl.u32 %v2256, 16
        %v2262 = vmul.u32 %v2258, %v2260
        %v2263 = vmul.u32 %v2258, %v2261
        %v2264 = vmul.u32 %v2259, %v2260
        %v2265 = vmul.u32 %v2259, %v2261
        %v2266 = vshll.u32 %v2263, 16
        %v2267 = vshrl.u32 %v2263, 16
        %v2268 = vshll.u32 %v2264, 16
        %v2269 = vshrl.u32 %v2264, 16
        %vm2270 = vc.u32 %v2262, %v2266
        %v2271 = vsel %vm2270, 1, 0
        %v2272 = vadd.s32 %v2262, %v2266
        %v2273 = vadd.s32 %v2265, %v2271
        %vm2274 = vc.u32 %v2272, %v2268
        %v2275 = vsel %vm2274, 1, 0
        %v2276 = vadd.s32 %v2272, %v2268
        %v2277 = vadd.s32 %v2273, %v2275
        %v2278 = vadd.s32 %v2277, %v2267
        %v2279 = vadd.s32 %v2278, %v2269
        %v2280 = vand.u32 %v2257, 65535
        %v2281 = vshrl.u32 %v2257, 16
        %v2282 = vand.u32 %v2252, 65535
        %v2283 = vshrl.u32 %v2252, 16
        %v2284 = vmul.u32 %v2280, %v2282
        %v2285 = vmul.u32 %v2280, %v2283
        %v2286 = vmul.u32 %v2281, %v2282
        %v2287 = vmul.u32 %v2281, %v2283
        %v2288 = vshll.u32 %v2285, 16
        %v2289 = vshrl.u32 %v2285, 16
        %v2290 = vshll.u32 %v2286, 16
        %v2291 = vshrl.u32 %v2286, 16
        %vm2292 = vc.u32 %v2284, %v2288
        %v2293 = vsel %vm2292, 1, 0
        %v2294 = vadd.s32 %v2284, %v2288
        %v2295 = vadd.s32 %v2287, %v2293
        %vm2296 = vc.u32 %v2294, %v2290
        %v2297 = vsel %vm2296, 1, 0
        %v2298 = vadd.s32 %v2294, %v2290
        %v2299 = vadd.s32 %v2295, %v2297
        %v2300 = vadd.s32 %v2299, %v2289
        %v2301 = vadd.s32 %v2300, %v2291
        %v2302 = vmul.u32 %v2257, %v2248
        %v2303 = vadd.s32 %v2279, %v2298
        %vm2304 = vc.u32 %v2279, %v2298
        %v2305 = vadd.s32 %v2301, 1
        %v2306 = vsel %vm2304, %v2305, %v2301
        %v2307 = vadd.s32 %v2302, %v2306
        %v2308 = vadd.s32 %v2307, 536870912
        %v2309 = vshrl.u32 %v2308, 30
        %v2310 = vshll.u32 %v2309, 30
        %v2311 = vsub.s32 %v2307, %v2310
        %vm2312 = vcmp.lt.s32.totalorder %v2311, 0
        %v2313 = vsub.s32 0, %v2311
        %v2314 = vsel %vm2312, %v2313, %v2311
        %v2315 = vclz %v2314
        %v2316 = vsub.s32 %v2315, 2
        %vm2317 = vcmp.gt.s32.totalorder 0, %v2316
        %v2318 = vsel %vm2317, 0, %v2316
        %v2319 = vsub.s32 32, %v2318
        %v2320 = vshll.u32 %v2311, %v2318
        %v2321 = vshrl.u32 %v2303, %v2319
        %v2322 = vor.u32 %v2320, %v2321
        %v2323 = vsub.s32 4294967266, %v2318
        %v2324 = vadd.s32 %v2323, 127
        %v2325 = vshll.u32 %v2324, 23
        %v2326 = vor.u32 4788187, %v2325
        %v2327 = vand.u32 2147483647, %v2326
        %v2329 = vcvt.s32.f32 %v2322
        %v2330 = vmul.f32 %v2329, %v2327
        %v2331 = vxor.u32 %v2330, 2147483648
        %v2332 = vsel %vm2211, %v2331, %v2330
        %v2333 = vsub.s32 4, %v2309
        %v2334 = vsel %vm2211, %v2333, %v2309
        %v2335 = vsel %vm2210, %v637, %v2332
        %v2336 = vsel %vm2210, 0, %v2334
        %v2337 = vmul.f32 %v2335, %v2335
        %v2338 = vmul.f32 %v2337, -0.001358992
        %v2339 = vadd.f32 %v2338, 0.041655596
        %v2340 = vmul.f32 %v2337, %v2339
        %v2341 = vadd.f32 %v2340, -0.4999988
        %v2342 = vmul.f32 %v2337, %v2341
        %v2343 = vadd.f32 1.0, %v2342
        %v2344 = vmul.f32 %v2335, %v2335
        %v2345 = vmul.f32 %v2344, -0.00019511016
        %v2346 = vadd.f32 %v2345, 0.008332121
        %v2347 = vmul.f32 %v2344, %v2346
        %v2348 = vadd.f32 %v2347, -0.16666654
        %v2349 = vmul.f32 %v2344, %v2348
        %v2350 = vadd.f32 %v2349, 1.0
        %v2351 = vmul.f32 %v2350, %v2335
        %vm2352 = vweird.f32 %v637
        %v2353 = vadd.s32 %v2336, 3
        %v2354 = vand.u32 %v2353, 3
        %vm2355 = vcmp.lt.s32.totalorder %v2354, 2
        %vm2356 = vcmp.eq.s32.totalorder %v2354, 0
        %v2357 = vxor.u32 %v2351, 2147483648
        %v2358 = vsel %vm2356, %v2343, %v2357
        %vm2359 = vcmp.eq.s32.totalorder %v2354, 2
        %v2360 = vxor.u32 %v2343, 2147483648
        %v2361 = vsel %vm2359, %v2360, %v2351
        %v2362 = vsel %vm2355, %v2358, %v2361
        %v2363 = vsel %vm2352, nan, %v2362
        %v2364 = vand.u32 2147483647, %v638
        %vm2365 = vcmp.le.f32.partialorder %v2364, 0.7853982
        %vm2366 = vcmp.lt.s32.totalorder %v638, 0
        %v2367 = vand.u32 %v638, 2139095040
        %v2368 = vshrl.u32 %v2367, 23
        %v2369 = vsub.s32 %v2368, 127
        %v2370 = vand.u32 2147483647, %v638
        %v2371 = vand.u32 %v2370, 8388607
        %v2372 = vor.u32 %v2371, 8388608
        %v2373 = vsub.s32 0, %v2372
        %v2374 = vadd.s32 %v2369, 1
        %vm2375 = vcmp.gt.s32.totalorder %v2374, 0
        %v2376 = vsel %vm2375, %v2374, 0
        %v2377 = vshrl.u32 %v2376, 5
        %v2378 = vand.u32 %v2376, 31
        %v2379 = vsub.s32 32, %v2378
        %v2380 = vshrl.u32 683565275, %v2379
        %v2381 = vshll.u32 683565275, %v2378
        %v2382 = vshrl.u32 2475754826, %v2379
        %v2383 = vor.u32 %v2381, %v2382
        %v2384 = vshll.u32 2475754826, %v2378
        %v2385 = vshrl.u32 2131351028, %v2379
        %v2386 = vor.u32 %v2384, %v2385
        %v2387 = vshll.u32 2131351028, %v2378
        %v2388 = vshrl.u32 2102212464, %v2379
        %v2389 = vor.u32 %v2387, %v2388
        %v2390 = vshll.u32 2102212464, %v2378
        %v2391 = vshrl.u32 920167782, %v2379
        %v2392 = vor.u32 %v2390, %v2391
        %v2393 = vshll.u32 920167782, %v2378
        %v2394 = vshrl.u32 1326507024, %v2379
        %v2395 = vor.u32 %v2393, %v2394
        %vm2396 = vcmp.lt.s32.totalorder %v2377, 1
        %vm2397 = vcmp.lt.s32.totalorder %v2377, 2
        %vm2398 = vcmp.lt.s32.totalorder %v2377, 3
        %vm2399 = vcmp.lt.s32.totalorder %v2377, 4
        %v2400 = vsel %vm2396, %v2380, %v2383
        %v2401 = vsel %vm2399, %v2389, 2102212464
        %v2402 = vsel %vm2398, %v2386, %v2401
        %v2403 = vsel %vm2397, %v2400, %v2402
        %v2404 = vsel %vm2396, %v2383, %v2386
        %v2405 = vsel %vm2399, %v2392, 920167782
        %v2406 = vsel %vm2398, %v2389, %v2405
        %v2407 = vsel %vm2397, %v2404, %v2406
        %v2408 = vsel %vm2396, %v2386, %v2389
        %v2409 = vsel %vm2399, %v2395, 1326507024
        %v2410 = vsel %vm2398, %v2392, %v2409
        %v2411 = vsel %vm2397, %v2408, %v2410
        %v2412 = vshll.u32 %v2372, 8
        %v2413 = vand.u32 %v2412, 65535
        %v2414 = vshrl.u32 %v2412, 16
        %v2415 = vand.u32 %v2411, 65535
        %v2416 = vshrl.u32 %v2411, 16
        %v2417 = vmul.u32 %v2413, %v2415
        %v2418 = vmul.u32 %v2413, %v2416
        %v2419 = vmul.u32 %v2414, %v2415
        %v2420 = vmul.u32 %v2414, %v2416
        %v2421 = vshll.u32 %v2418, 16
        %v2422 = vshrl.u32 %v2418, 16
        %v2423 = vshll.u32 %v2419, 16
        %v2424 = vshrl.u32 %v2419, 16
        %vm2425 = vc.u32 %v2417, %v2421
        %v2426 = vsel %vm2425, 1, 0
        %v2427 = vadd.s32 %v2417, %v2421
        %v2428 = vadd.s32 %v2420, %v2426
        %vm2429 = vc.u32 %v2427, %v2423
        %v2430 = vsel %vm2429, 1, 0
        %v2431 = vadd.s32 %v2427, %v2423
        %v2432 = vadd.s32 %v2428, %v2430
        %v2433 = vadd.s32 %v2432, %v2422
        %v2434 = vadd.s32 %v2433, %v2424
        %v2435 = vand.u32 %v2412, 65535
        %v2436 = vshrl.u32 %v2412, 16
        %v2437 = vand.u32 %v2407, 65535
        %v2438 = vshrl.u32 %v2407, 16
        %v2439 = vmul.u32 %v2435, %v2437
        %v2440 = vmul.u32 %v2435, %v2438
        %v2441 = vmul.u32 %v2436, %v2437
        %v2442 = vmul.u32 %v2436, %v2438
        %v2443 = vshll.u32 %v2440, 16
        %v2444 = vshrl.u32 %v2440, 16
        %v2445 = vshll.u32 %v2441, 16
        %v2446 = vshrl.u32 %v2441, 16
        %vm2447 = vc.u32 %v2439, %v2443
        %v2448 = vsel %vm2447, 1, 0
        %v2449 = vadd.s32 %v2439, %v2443
        %v2450 = vadd.s32 %v2442, %v2448
        %vm2451 = vc.u32 %v2449, %v2445
        %v2452 = vsel %vm2451, 1, 0
        %v2453 = vadd.s32 %v2449, %v2445
        %v2454 = vadd.s32 %v2450, %v2452
        %v2455 = vadd.s32 %v2454, %v2444
        %v2456 = vadd.s32 %v2455, %v2446
        %v2457 = vmul.u32 %v2412, %v2403
        %v2458 = vadd.s32 %v2434, %v2453
        %vm2459 = vc.u32 %v2434, %v2453
        %v2460 = vadd.s32 %v2456, 1
        %v2461 = vsel %vm2459, %v2460, %v2456
        %v2462 = vadd.s32 %v2457, %v2461
        %v2463 = vadd.s32 %v2462, 536870912
        %v2464 = vshrl.u32 %v2463, 30
        %v2465 = vshll.u32 %v2464, 30
        %v2466 = vsub.s32 %v2462, %v2465
        %vm2467 = vcmp.lt.s32.totalorder %v2466, 0
        %v2468 = vsub.s32 0, %v2466
        %v2469 = vsel %vm2467, %v2468, %v2466
        %v2470 = vclz %v2469
        %v2471 = vsub.s32 %v2470, 2
        %vm2472 = vcmp.gt.s32.totalorder 0, %v2471
        %v2473 = vsel %vm2472, 0, %v2471
        %v2474 = vsub.s32 32, %v2473
        %v2475 = vshll.u32 %v2466, %v2473
        %v2476 = vshrl.u32 %v2458, %v2474
        %v2477 = vor.u32 %v2475, %v2476
        %v2478 = vsub.s32 4294967266, %v2473
        %v2479 = vadd.s32 %v2478, 127
        %v2480 = vshll.u32 %v2479, 23
        %v2481 = vor.u32 4788187, %v2480
        %v2482 = vand.u32 2147483647, %v2481
        %v2484 = vcvt.s32.f32 %v2477
        %v2485 = vmul.f32 %v2484, %v2482
        %v2486 = vxor.u32 %v2485, 2147483648
        %v2487 = vsel %vm2366, %v2486, %v2485
        %v2488 = vsub.s32 4, %v2464
        %v2489 = vsel %vm2366, %v2488, %v2464
        %v2490 = vsel %vm2365, %v638, %v2487
        %v2491 = vsel %vm2365, 0, %v2489
        %v2492 = vmul.f32 %v2490, %v2490
        %v2493 = vmul.f32 %v2492, -0.001358992
        %v2494 = vadd.f32 %v2493, 0.041655596
        %v2495 = vmul.f32 %v2492, %v2494
        %v2496 = vadd.f32 %v2495, -0.4999988
        %v2497 = vmul.f32 %v2492, %v2496
        %v2498 = vadd.f32 1.0, %v2497
        %v2499 = vmul.f32 %v2490, %v2490
        %v2500 = vmul.f32 %v2499, -0.00019511016
        %v2501 = vadd.f32 %v2500, 0.008332121
        %v2502 = vmul.f32 %v2499, %v2501
        %v2503 = vadd.f32 %v2502, -0.16666654
        %v2504 = vmul.f32 %v2499, %v2503
        %v2505 = vadd.f32 %v2504, 1.0
        %v2506 = vmul.f32 %v2505, %v2490
        %vm2507 = vweird.f32 %v638
        %v2508 = vadd.s32 %v2491, 3
        %v2509 = vand.u32 %v2508, 3
        %vm2510 = vcmp.lt.s32.totalorder %v2509, 2
        %vm2511 = vcmp.eq.s32.totalorder %v2509, 0
        %v2512 = vxor.u32 %v2506, 2147483648
        %v2513 = vsel %vm2511, %v2498, %v2512
        %vm2514 = vcmp.eq.s32.totalorder %v2509, 2
        %v2515 = vxor.u32 %v2498, 2147483648
        %v2516 = vsel %vm2514, %v2515, %v2506
        %v2517 = vsel %vm2510, %v2513, %v2516
        %v2518 = vsel %vm2507, nan, %v2517
        %v2519 = vand.u32 2147483647, %v639
        %vm2520 = vcmp.le.f32.partialorder %v2519, 0.7853982
        %vm2521 = vcmp.lt.s32.totalorder %v639, 0
        %v2522 = vand.u32 %v639, 2139095040
        %v2523 = vshrl.u32 %v2522, 23
        %v2524 = vsub.s32 %v2523, 127
        %v2525 = vand.u32 2147483647, %v639
        %v2526 = vand.u32 %v2525, 8388607
        %v2527 = vor.u32 %v2526, 8388608
        %v2528 = vsub.s32 0, %v2527
        %v2529 = vadd.s32 %v2524, 1
        %vm2530 = vcmp.gt.s32.totalorder %v2529, 0
        %v2531 = vsel %vm2530, %v2529, 0
        %v2532 = vshrl.u32 %v2531, 5
        %v2533 = vand.u32 %v2531, 31
        %v2534 = vsub.s32 32, %v2533
        %v2535 = vshrl.u32 683565275, %v2534
        %v2536 = vshll.u32 683565275, %v2533
        %v2537 = vshrl.u32 2475754826, %v2534
        %v2538 = vor.u32 %v2536, %v2537
        %v2539 = vshll.u32 2475754826, %v2533
        %v2540 = vshrl.u32 2131351028, %v2534
        %v2541 = vor.u32 %v2539, %v2540
        %v2542 = vshll.u32 2131351028, %v2533
        %v2543 = vshrl.u32 2102212464, %v2534
        %v2544 = vor.u32 %v2542, %v2543
        %v2545 = vshll.u32 2102212464, %v2533
        %v2546 = vshrl.u32 920167782, %v2534
        %v2547 = vor.u32 %v2545, %v2546
        %v2548 = vshll.u32 920167782, %v2533
        %v2549 = vshrl.u32 1326507024, %v2534
        %v2550 = vor.u32 %v2548, %v2549
        %vm2551 = vcmp.lt.s32.totalorder %v2532, 1
        %vm2552 = vcmp.lt.s32.totalorder %v2532, 2
        %vm2553 = vcmp.lt.s32.totalorder %v2532, 3
        %vm2554 = vcmp.lt.s32.totalorder %v2532, 4
        %v2555 = vsel %vm2551, %v2535, %v2538
        %v2556 = vsel %vm2554, %v2544, 2102212464
        %v2557 = vsel %vm2553, %v2541, %v2556
        %v2558 = vsel %vm2552, %v2555, %v2557
        %v2559 = vsel %vm2551, %v2538, %v2541
        %v2560 = vsel %vm2554, %v2547, 920167782
        %v2561 = vsel %vm2553, %v2544, %v2560
        %v2562 = vsel %vm2552, %v2559, %v2561
        %v2563 = vsel %vm2551, %v2541, %v2544
        %v2564 = vsel %vm2554, %v2550, 1326507024
        %v2565 = vsel %vm2553, %v2547, %v2564
        %v2566 = vsel %vm2552, %v2563, %v2565
        %v2567 = vshll.u32 %v2527, 8
        %v2568 = vand.u32 %v2567, 65535
        %v2569 = vshrl.u32 %v2567, 16
        %v2570 = vand.u32 %v2566, 65535
        %v2571 = vshrl.u32 %v2566, 16
        %v2572 = vmul.u32 %v2568, %v2570
        %v2573 = vmul.u32 %v2568, %v2571
        %v2574 = vmul.u32 %v2569, %v2570
        %v2575 = vmul.u32 %v2569, %v2571
        %v2576 = vshll.u32 %v2573, 16
        %v2577 = vshrl.u32 %v2573, 16
        %v2578 = vshll.u32 %v2574, 16
        %v2579 = vshrl.u32 %v2574, 16
        %vm2580 = vc.u32 %v2572, %v2576
        %v2581 = vsel %vm2580, 1, 0
        %v2582 = vadd.s32 %v2572, %v2576
        %v2583 = vadd.s32 %v2575, %v2581
        %vm2584 = vc.u32 %v2582, %v2578
        %v2585 = vsel %vm2584, 1, 0
        %v2586 = vadd.s32 %v2582, %v2578
        %v2587 = vadd.s32 %v2583, %v2585
        %v2588 = vadd.s32 %v2587, %v2577
        %v2589 = vadd.s32 %v2588, %v2579
        %v2590 = vand.u32 %v2567, 65535
        %v2591 = vshrl.u32 %v2567, 16
        %v2592 = vand.u32 %v2562, 65535
        %v2593 = vshrl.u32 %v2562, 16
        %v2594 = vmul.u32 %v2590, %v2592
        %v2595 = vmul.u32 %v2590, %v2593
        %v2596 = vmul.u32 %v2591, %v2592
        %v2597 = vmul.u32 %v2591, %v2593
        %v2598 = vshll.u32 %v2595, 16
        %v2599 = vshrl.u32 %v2595, 16
        %v2600 = vshll.u32 %v2596, 16
        %v2601 = vshrl.u32 %v2596, 16
        %vm2602 = vc.u32 %v2594, %v2598
        %v2603 = vsel %vm2602, 1, 0
        %v2604 = vadd.s32 %v2594, %v2598
        %v2605 = vadd.s32 %v2597, %v2603
        %vm2606 = vc.u32 %v2604, %v2600
        %v2607 = vsel %vm2606, 1, 0
        %v2608 = vadd.s32 %v2604, %v2600
        %v2609 = vadd.s32 %v2605, %v2607
        %v2610 = vadd.s32 %v2609, %v2599
        %v2611 = vadd.s32 %v2610, %v2601
        %v2612 = vmul.u32 %v2567, %v2558
        %v2613 = vadd.s32 %v2589, %v2608
        %vm2614 = vc.u32 %v2589, %v2608
        %v2615 = vadd.s32 %v2611, 1
        %v2616 = vsel %vm2614, %v2615, %v2611
        %v2617 = vadd.s32 %v2612, %v2616
        %v2618 = vadd.s32 %v2617, 536870912
        %v2619 = vshrl.u32 %v2618, 30
        %v2620 = vshll.u32 %v2619, 30
        %v2621 = vsub.s32 %v2617, %v2620
        %vm2622 = vcmp.lt.s32.totalorder %v2621, 0
        %v2623 = vsub.s32 0, %v2621
        %v2624 = vsel %vm2622, %v2623, %v2621
        %v2625 = vclz %v2624
        %v2626 = vsub.s32 %v2625, 2
        %vm2627 = vcmp.gt.s32.totalorder 0, %v2626
        %v2628 = vsel %vm2627, 0, %v2626
        %v2629 = vsub.s32 32, %v2628
        %v2630 = vshll.u32 %v2621, %v2628
        %v2631 = vshrl.u32 %v2613, %v2629
        %v2632 = vor.u32 %v2630, %v2631
        %v2633 = vsub.s32 4294967266, %v2628
        %v2634 = vadd.s32 %v2633, 127
        %v2635 = vshll.u32 %v2634, 23
        %v2636 = vor.u32 4788187, %v2635
        %v2637 = vand.u32 2147483647, %v2636
        %v2639 = vcvt.s32.f32 %v2632
        %v2640 = vmul.f32 %v2639, %v2637
        %v2641 = vxor.u32 %v2640, 2147483648
        %v2642 = vsel %vm2521, %v2641, %v2640
        %v2643 = vsub.s32 4, %v2619
        %v2644 = vsel %vm2521, %v2643, %v2619
        %v2645 = vsel %vm2520, %v639, %v2642
        %v2646 = vsel %vm2520, 0, %v2644
        %v2647 = vmul.f32 %v2645, %v2645
        %v2648 = vmul.f32 %v2647, -0.001358992
        %v2649 = vadd.f32 %v2648, 0.041655596
        %v2650 = vmul.f32 %v2647, %v2649
        %v2651 = vadd.f32 %v2650, -0.4999988
        %v2652 = vmul.f32 %v2647, %v2651
        %v2653 = vadd.f32 1.0, %v2652
        %v2654 = vmul.f32 %v2645, %v2645
        %v2655 = vmul.f32 %v2654, -0.00019511016
        %v2656 = vadd.f32 %v2655, 0.008332121
        %v2657 = vmul.f32 %v2654, %v2656
        %v2658 = vadd.f32 %v2657, -0.16666654
        %v2659 = vmul.f32 %v2654, %v2658
        %v2660 = vadd.f32 %v2659, 1.0
        %v2661 = vmul.f32 %v2660, %v2645
        %vm2662 = vweird.f32 %v639
        %v2663 = vadd.s32 %v2646, 3
        %v2664 = vand.u32 %v2663, 3
        %vm2665 = vcmp.lt.s32.totalorder %v2664, 2
        %vm2666 = vcmp.eq.s32.totalorder %v2664, 0
        %v2667 = vxor.u32 %v2661, 2147483648
        %v2668 = vsel %vm2666, %v2653, %v2667
        %vm2669 = vcmp.eq.s32.totalorder %v2664, 2
        %v2670 = vxor.u32 %v2653, 2147483648
        %v2671 = vsel %vm2669, %v2670, %v2661
        %v2672 = vsel %vm2665, %v2668, %v2671
        %v2673 = vsel %vm2662, nan, %v2672
        %v2674 = vand.u32 2147483647, %v640
        %vm2675 = vcmp.le.f32.partialorder %v2674, 0.7853982
        %vm2676 = vcmp.lt.s32.totalorder %v640, 0
        %v2677 = vand.u32 %v640, 2139095040
        %v2678 = vshrl.u32 %v2677, 23
        %v2679 = vsub.s32 %v2678, 127
        %v2680 = vand.u32 2147483647, %v640
        %v2681 = vand.u32 %v2680, 8388607
        %v2682 = vor.u32 %v2681, 8388608
        %v2683 = vsub.s32 0, %v2682
        %v2684 = vadd.s32 %v2679, 1
        %vm2685 = vcmp.gt.s32.totalorder %v2684, 0
        %v2686 = vsel %vm2685, %v2684, 0
        %v2687 = vshrl.u32 %v2686, 5
        %v2688 = vand.u32 %v2686, 31
        %v2689 = vsub.s32 32, %v2688
        %v2690 = vshrl.u32 683565275, %v2689
        %v2691 = vshll.u32 683565275, %v2688
        %v2692 = vshrl.u32 2475754826, %v2689
        %v2693 = vor.u32 %v2691, %v2692
        %v2694 = vshll.u32 2475754826, %v2688
        %v2695 = vshrl.u32 2131351028, %v2689
        %v2696 = vor.u32 %v2694, %v2695
        %v2697 = vshll.u32 2131351028, %v2688
        %v2698 = vshrl.u32 2102212464, %v2689
        %v2699 = vor.u32 %v2697, %v2698
        %v2700 = vshll.u32 2102212464, %v2688
        %v2701 = vshrl.u32 920167782, %v2689
        %v2702 = vor.u32 %v2700, %v2701
        %v2703 = vshll.u32 920167782, %v2688
        %v2704 = vshrl.u32 1326507024, %v2689
        %v2705 = vor.u32 %v2703, %v2704
        %vm2706 = vcmp.lt.s32.totalorder %v2687, 1
        %vm2707 = vcmp.lt.s32.totalorder %v2687, 2
        %vm2708 = vcmp.lt.s32.totalorder %v2687, 3
        %vm2709 = vcmp.lt.s32.totalorder %v2687, 4
        %v2710 = vsel %vm2706, %v2690, %v2693
        %v2711 = vsel %vm2709, %v2699, 2102212464
        %v2712 = vsel %vm2708, %v2696, %v2711
        %v2713 = vsel %vm2707, %v2710, %v2712
        %v2714 = vsel %vm2706, %v2693, %v2696
        %v2715 = vsel %vm2709, %v2702, 920167782
        %v2716 = vsel %vm2708, %v2699, %v2715
        %v2717 = vsel %vm2707, %v2714, %v2716
        %v2718 = vsel %vm2706, %v2696, %v2699
        %v2719 = vsel %vm2709, %v2705, 1326507024
        %v2720 = vsel %vm2708, %v2702, %v2719
        %v2721 = vsel %vm2707, %v2718, %v2720
        %v2722 = vshll.u32 %v2682, 8
        %v2723 = vand.u32 %v2722, 65535
        %v2724 = vshrl.u32 %v2722, 16
        %v2725 = vand.u32 %v2721, 65535
        %v2726 = vshrl.u32 %v2721, 16
        %v2727 = vmul.u32 %v2723, %v2725
        %v2728 = vmul.u32 %v2723, %v2726
        %v2729 = vmul.u32 %v2724, %v2725
        %v2730 = vmul.u32 %v2724, %v2726
        %v2731 = vshll.u32 %v2728, 16
        %v2732 = vshrl.u32 %v2728, 16
        %v2733 = vshll.u32 %v2729, 16
        %v2734 = vshrl.u32 %v2729, 16
        %vm2735 = vc.u32 %v2727, %v2731
        %v2736 = vsel %vm2735, 1, 0
        %v2737 = vadd.s32 %v2727, %v2731
        %v2738 = vadd.s32 %v2730, %v2736
        %vm2739 = vc.u32 %v2737, %v2733
        %v2740 = vsel %vm2739, 1, 0
        %v2741 = vadd.s32 %v2737, %v2733
        %v2742 = vadd.s32 %v2738, %v2740
        %v2743 = vadd.s32 %v2742, %v2732
        %v2744 = vadd.s32 %v2743, %v2734
        %v2745 = vand.u32 %v2722, 65535
        %v2746 = vshrl.u32 %v2722, 16
        %v2747 = vand.u32 %v2717, 65535
        %v2748 = vshrl.u32 %v2717, 16
        %v2749 = vmul.u32 %v2745, %v2747
        %v2750 = vmul.u32 %v2745, %v2748
        %v2751 = vmul.u32 %v2746, %v2747
        %v2752 = vmul.u32 %v2746, %v2748
        %v2753 = vshll.u32 %v2750, 16
        %v2754 = vshrl.u32 %v2750, 16
        %v2755 = vshll.u32 %v2751, 16
        %v2756 = vshrl.u32 %v2751, 16
        %vm2757 = vc.u32 %v2749, %v2753
        %v2758 = vsel %vm2757, 1, 0
        %v2759 = vadd.s32 %v2749, %v2753
        %v2760 = vadd.s32 %v2752, %v2758
        %vm2761 = vc.u32 %v2759, %v2755
        %v2762 = vsel %vm2761, 1, 0
        %v2763 = vadd.s32 %v2759, %v2755
        %v2764 = vadd.s32 %v2760, %v2762
        %v2765 = vadd.s32 %v2764, %v2754
        %v2766 = vadd.s32 %v2765, %v2756
        %v2767 = vmul.u32 %v2722, %v2713
        %v2768 = vadd.s32 %v2744, %v2763
        %vm2769 = vc.u32 %v2744, %v2763
        %v2770 = vadd.s32 %v2766, 1
        %v2771 = vsel %vm2769, %v2770, %v2766
        %v2772 = vadd.s32 %v2767, %v2771
        %v2773 = vadd.s32 %v2772, 536870912
        %v2774 = vshrl.u32 %v2773, 30
        %v2775 = vshll.u32 %v2774, 30
        %v2776 = vsub.s32 %v2772, %v2775
        %vm2777 = vcmp.lt.s32.totalorder %v2776, 0
        %v2778 = vsub.s32 0, %v2776
        %v2779 = vsel %vm2777, %v2778, %v2776
        %v2780 = vclz %v2779
        %v2781 = vsub.s32 %v2780, 2
        %vm2782 = vcmp.gt.s32.totalorder 0, %v2781
        %v2783 = vsel %vm2782, 0, %v2781
        %v2784 = vsub.s32 32, %v2783
        %v2785 = vshll.u32 %v2776, %v2783
        %v2786 = vshrl.u32 %v2768, %v2784
        %v2787 = vor.u32 %v2785, %v2786
        %v2788 = vsub.s32 4294967266, %v2783
        %v2789 = vadd.s32 %v2788, 127
        %v2790 = vshll.u32 %v2789, 23
        %v2791 = vor.u32 4788187, %v2790
        %v2792 = vand.u32 2147483647, %v2791
        %v2794 = vcvt.s32.f32 %v2787
        %v2795 = vmul.f32 %v2794, %v2792
        %v2796 = vxor.u32 %v2795, 2147483648
        %v2797 = vsel %vm2676, %v2796, %v2795
        %v2798 = vsub.s32 4, %v2774
        %v2799 = vsel %vm2676, %v2798, %v2774
        %v2800 = vsel %vm2675, %v640, %v2797
        %v2801 = vsel %vm2675, 0, %v2799
        %v2802 = vmul.f32 %v2800, %v2800
        %v2803 = vmul.f32 %v2802, -0.001358992
        %v2804 = vadd.f32 %v2803, 0.041655596
        %v2805 = vmul.f32 %v2802, %v2804
        %v2806 = vadd.f32 %v2805, -0.4999988
        %v2807 = vmul.f32 %v2802, %v2806
        %v2808 = vadd.f32 1.0, %v2807
        %v2809 = vmul.f32 %v2800, %v2800
        %v2810 = vmul.f32 %v2809, -0.00019511016
        %v2811 = vadd.f32 %v2810, 0.008332121
        %v2812 = vmul.f32 %v2809, %v2811
        %v2813 = vadd.f32 %v2812, -0.16666654
        %v2814 = vmul.f32 %v2809, %v2813
        %v2815 = vadd.f32 %v2814, 1.0
        %v2816 = vmul.f32 %v2815, %v2800
        %vm2817 = vweird.f32 %v640
        %v2818 = vadd.s32 %v2801, 3
        %v2819 = vand.u32 %v2818, 3
        %vm2820 = vcmp.lt.s32.totalorder %v2819, 2
        %vm2821 = vcmp.eq.s32.totalorder %v2819, 0
        %v2822 = vxor.u32 %v2816, 2147483648
        %v2823 = vsel %vm2821, %v2808, %v2822
        %vm2824 = vcmp.eq.s32.totalorder %v2819, 2
        %v2825 = vxor.u32 %v2808, 2147483648
        %v2826 = vsel %vm2824, %v2825, %v2816
        %v2827 = vsel %vm2820, %v2823, %v2826
        %v2828 = vsel %vm2817, nan, %v2827
        %v2829 = vand.u32 2147483647, %v641
        %vm2830 = vcmp.le.f32.partialorder %v2829, 0.7853982
        %vm2831 = vcmp.lt.s32.totalorder %v641, 0
        %v2832 = vand.u32 %v641, 2139095040
        %v2833 = vshrl.u32 %v2832, 23
        %v2834 = vsub.s32 %v2833, 127
        %v2835 = vand.u32 2147483647, %v641
        %v2836 = vand.u32 %v2835, 8388607
        %v2837 = vor.u32 %v2836, 8388608
        %v2838 = vsub.s32 0, %v2837
        %v2839 = vadd.s32 %v2834, 1
        %vm2840 = vcmp.gt.s32.totalorder %v2839, 0
        %v2841 = vsel %vm2840, %v2839, 0
        %v2842 = vshrl.u32 %v2841, 5
        %v2843 = vand.u32 %v2841, 31
        %v2844 = vsub.s32 32, %v2843
        %v2845 = vshrl.u32 683565275, %v2844
        %v2846 = vshll.u32 683565275, %v2843
        %v2847 = vshrl.u32 2475754826, %v2844
        %v2848 = vor.u32 %v2846, %v2847
        %v2849 = vshll.u32 2475754826, %v2843
        %v2850 = vshrl.u32 2131351028, %v2844
        %v2851 = vor.u32 %v2849, %v2850
        %v2852 = vshll.u32 2131351028, %v2843
        %v2853 = vshrl.u32 2102212464, %v2844
        %v2854 = vor.u32 %v2852, %v2853
        %v2855 = vshll.u32 2102212464, %v2843
        %v2856 = vshrl.u32 920167782, %v2844
        %v2857 = vor.u32 %v2855, %v2856
        %v2858 = vshll.u32 920167782, %v2843
        %v2859 = vshrl.u32 1326507024, %v2844
        %v2860 = vor.u32 %v2858, %v2859
        %vm2861 = vcmp.lt.s32.totalorder %v2842, 1
        %vm2862 = vcmp.lt.s32.totalorder %v2842, 2
        %vm2863 = vcmp.lt.s32.totalorder %v2842, 3
        %vm2864 = vcmp.lt.s32.totalorder %v2842, 4
        %v2865 = vsel %vm2861, %v2845, %v2848
        %v2866 = vsel %vm2864, %v2854, 2102212464
        %v2867 = vsel %vm2863, %v2851, %v2866
        %v2868 = vsel %vm2862, %v2865, %v2867
        %v2869 = vsel %vm2861, %v2848, %v2851
        %v2870 = vsel %vm2864, %v2857, 920167782
        %v2871 = vsel %vm2863, %v2854, %v2870
        %v2872 = vsel %vm2862, %v2869, %v2871
        %v2873 = vsel %vm2861, %v2851, %v2854
        %v2874 = vsel %vm2864, %v2860, 1326507024
        %v2875 = vsel %vm2863, %v2857, %v2874
        %v2876 = vsel %vm2862, %v2873, %v2875
        %v2877 = vshll.u32 %v2837, 8
        %v2878 = vand.u32 %v2877, 65535
        %v2879 = vshrl.u32 %v2877, 16
        %v2880 = vand.u32 %v2876, 65535
        %v2881 = vshrl.u32 %v2876, 16
        %v2882 = vmul.u32 %v2878, %v2880
        %v2883 = vmul.u32 %v2878, %v2881
        %v2884 = vmul.u32 %v2879, %v2880
        %v2885 = vmul.u32 %v2879, %v2881
        %v2886 = vshll.u32 %v2883, 16
        %v2887 = vshrl.u32 %v2883, 16
        %v2888 = vshll.u32 %v2884, 16
        %v2889 = vshrl.u32 %v2884, 16
        %vm2890 = vc.u32 %v2882, %v2886
        %v2891 = vsel %vm2890, 1, 0
        %v2892 = vadd.s32 %v2882, %v2886
        %v2893 = vadd.s32 %v2885, %v2891
        %vm2894 = vc.u32 %v2892, %v2888
        %v2895 = vsel %vm2894, 1, 0
        %v2896 = vadd.s32 %v2892, %v2888
        %v2897 = vadd.s32 %v2893, %v2895
        %v2898 = vadd.s32 %v2897, %v2887
        %v2899 = vadd.s32 %v2898, %v2889
        %v2900 = vand.u32 %v2877, 65535
        %v2901 = vshrl.u32 %v2877, 16
        %v2902 = vand.u32 %v2872, 65535
        %v2903 = vshrl.u32 %v2872, 16
        %v2904 = vmul.u32 %v2900, %v2902
        %v2905 = vmul.u32 %v2900, %v2903
        %v2906 = vmul.u32 %v2901, %v2902
        %v2907 = vmul.u32 %v2901, %v2903
        %v2908 = vshll.u32 %v2905, 16
        %v2909 = vshrl.u32 %v2905, 16
        %v2910 = vshll.u32 %v2906, 16
        %v2911 = vshrl.u32 %v2906, 16
        %vm2912 = vc.u32 %v2904, %v2908
        %v2913 = vsel %vm2912, 1, 0
        %v2914 = vadd.s32 %v2904, %v2908
        %v2915 = vadd.s32 %v2907, %v2913
        %vm2916 = vc.u32 %v2914, %v2910
        %v2917 = vsel %vm2916, 1, 0
        %v2918 = vadd.s32 %v2914, %v2910
        %v2919 = vadd.s32 %v2915, %v2917
        %v2920 = vadd.s32 %v2919, %v2909
        %v2921 = vadd.s32 %v2920, %v2911
        %v2922 = vmul.u32 %v2877, %v2868
        %v2923 = vadd.s32 %v2899, %v2918
        %vm2924 = vc.u32 %v2899, %v2918
        %v2925 = vadd.s32 %v2921, 1
        %v2926 = vsel %vm2924, %v2925, %v2921
        %v2927 = vadd.s32 %v2922, %v2926
        %v2928 = vadd.s32 %v2927, 536870912
        %v2929 = vshrl.u32 %v2928, 30
        %v2930 = vshll.u32 %v2929, 30
        %v2931 = vsub.s32 %v2927, %v2930
        %vm2932 = vcmp.lt.s32.totalorder %v2931, 0
        %v2933 = vsub.s32 0, %v2931
        %v2934 = vsel %vm2932, %v2933, %v2931
        %v2935 = vclz %v2934
        %v2936 = vsub.s32 %v2935, 2
        %vm2937 = vcmp.gt.s32.totalorder 0, %v2936
        %v2938 = vsel %vm2937, 0, %v2936
        %v2939 = vsub.s32 32, %v2938
        %v2940 = vshll.u32 %v2931, %v2938
        %v2941 = vshrl.u32 %v2923, %v2939
        %v2942 = vor.u32 %v2940, %v2941
        %v2943 = vsub.s32 4294967266, %v2938
        %v2944 = vadd.s32 %v2943, 127
        %v2945 = vshll.u32 %v2944, 23
        %v2946 = vor.u32 4788187, %v2945
        %v2947 = vand.u32 2147483647, %v2946
        %v2949 = vcvt.s32.f32 %v2942
        %v2950 = vmul.f32 %v2949, %v2947
        %v2951 = vxor.u32 %v2950, 2147483648
        %v2952 = vsel %vm2831, %v2951, %v2950
        %v2953 = vsub.s32 4, %v2929
        %v2954 = vsel %vm2831, %v2953, %v2929
        %v2955 = vsel %vm2830, %v641, %v2952
        %v2956 = vsel %vm2830, 0, %v2954
        %v2957 = vmul.f32 %v2955, %v2955
        %v2958 = vmul.f32 %v2957, -0.001358992
        %v2959 = vadd.f32 %v2958, 0.041655596
        %v2960 = vmul.f32 %v2957, %v2959
        %v2961 = vadd.f32 %v2960, -0.4999988
        %v2962 = vmul.f32 %v2957, %v2961
        %v2963 = vadd.f32 1.0, %v2962
        %v2964 = vmul.f32 %v2955, %v2955
        %v2965 = vmul.f32 %v2964, -0.00019511016
        %v2966 = vadd.f32 %v2965, 0.008332121
        %v2967 = vmul.f32 %v2964, %v2966
        %v2968 = vadd.f32 %v2967, -0.16666654
        %v2969 = vmul.f32 %v2964, %v2968
        %v2970 = vadd.f32 %v2969, 1.0
        %v2971 = vmul.f32 %v2970, %v2955
        %vm2972 = vweird.f32 %v641
        %v2973 = vadd.s32 %v2956, 3
        %v2974 = vand.u32 %v2973, 3
        %vm2975 = vcmp.lt.s32.totalorder %v2974, 2
        %vm2976 = vcmp.eq.s32.totalorder %v2974, 0
        %v2977 = vxor.u32 %v2971, 2147483648
        %v2978 = vsel %vm2976, %v2963, %v2977
        %vm2979 = vcmp.eq.s32.totalorder %v2974, 2
        %v2980 = vxor.u32 %v2963, 2147483648
        %v2981 = vsel %vm2979, %v2980, %v2971
        %v2982 = vsel %vm2975, %v2978, %v2981
        %v2983 = vsel %vm2972, nan, %v2982
        %v2984 = vand.u32 2147483647, %v642
        %vm2985 = vcmp.le.f32.partialorder %v2984, 0.7853982
        %vm2986 = vcmp.lt.s32.totalorder %v642, 0
        %v2987 = vand.u32 %v642, 2139095040
        %v2988 = vshrl.u32 %v2987, 23
        %v2989 = vsub.s32 %v2988, 127
        %v2990 = vand.u32 2147483647, %v642
        %v2991 = vand.u32 %v2990, 8388607
        %v2992 = vor.u32 %v2991, 8388608
        %v2993 = vsub.s32 0, %v2992
        %v2994 = vadd.s32 %v2989, 1
        %vm2995 = vcmp.gt.s32.totalorder %v2994, 0
        %v2996 = vsel %vm2995, %v2994, 0
        %v2997 = vshrl.u32 %v2996, 5
        %v2998 = vand.u32 %v2996, 31
        %v2999 = vsub.s32 32, %v2998
        %v3000 = vshrl.u32 683565275, %v2999
        %v3001 = vshll.u32 683565275, %v2998
        %v3002 = vshrl.u32 2475754826, %v2999
        %v3003 = vor.u32 %v3001, %v3002
        %v3004 = vshll.u32 2475754826, %v2998
        %v3005 = vshrl.u32 2131351028, %v2999
        %v3006 = vor.u32 %v3004, %v3005
        %v3007 = vshll.u32 2131351028, %v2998
        %v3008 = vshrl.u32 2102212464, %v2999
        %v3009 = vor.u32 %v3007, %v3008
        %v3010 = vshll.u32 2102212464, %v2998
        %v3011 = vshrl.u32 920167782, %v2999
        %v3012 = vor.u32 %v3010, %v3011
        %v3013 = vshll.u32 920167782, %v2998
        %v3014 = vshrl.u32 1326507024, %v2999
        %v3015 = vor.u32 %v3013, %v3014
        %vm3016 = vcmp.lt.s32.totalorder %v2997, 1
        %vm3017 = vcmp.lt.s32.totalorder %v2997, 2
        %vm3018 = vcmp.lt.s32.totalorder %v2997, 3
        %vm3019 = vcmp.lt.s32.totalorder %v2997, 4
        %v3020 = vsel %vm3016, %v3000, %v3003
        %v3021 = vsel %vm3019, %v3009, 2102212464
        %v3022 = vsel %vm3018, %v3006, %v3021
        %v3023 = vsel %vm3017, %v3020, %v3022
        %v3024 = vsel %vm3016, %v3003, %v3006
        %v3025 = vsel %vm3019, %v3012, 920167782
        %v3026 = vsel %vm3018, %v3009, %v3025
        %v3027 = vsel %vm3017, %v3024, %v3026
        %v3028 = vsel %vm3016, %v3006, %v3009
        %v3029 = vsel %vm3019, %v3015, 1326507024
        %v3030 = vsel %vm3018, %v3012, %v3029
        %v3031 = vsel %vm3017, %v3028, %v3030
        %v3032 = vshll.u32 %v2992, 8
        %v3033 = vand.u32 %v3032, 65535
        %v3034 = vshrl.u32 %v3032, 16
        %v3035 = vand.u32 %v3031, 65535
        %v3036 = vshrl.u32 %v3031, 16
        %v3037 = vmul.u32 %v3033, %v3035
        %v3038 = vmul.u32 %v3033, %v3036
        %v3039 = vmul.u32 %v3034, %v3035
        %v3040 = vmul.u32 %v3034, %v3036
        %v3041 = vshll.u32 %v3038, 16
        %v3042 = vshrl.u32 %v3038, 16
        %v3043 = vshll.u32 %v3039, 16
        %v3044 = vshrl.u32 %v3039, 16
        %vm3045 = vc.u32 %v3037, %v3041
        %v3046 = vsel %vm3045, 1, 0
        %v3047 = vadd.s32 %v3037, %v3041
        %v3048 = vadd.s32 %v3040, %v3046
        %vm3049 = vc.u32 %v3047, %v3043
        %v3050 = vsel %vm3049, 1, 0
        %v3051 = vadd.s32 %v3047, %v3043
        %v3052 = vadd.s32 %v3048, %v3050
        %v3053 = vadd.s32 %v3052, %v3042
        %v3054 = vadd.s32 %v3053, %v3044
        %v3055 = vand.u32 %v3032, 65535
        %v3056 = vshrl.u32 %v3032, 16
        %v3057 = vand.u32 %v3027, 65535
        %v3058 = vshrl.u32 %v3027, 16
        %v3059 = vmul.u32 %v3055, %v3057
        %v3060 = vmul.u32 %v3055, %v3058
        %v3061 = vmul.u32 %v3056, %v3057
        %v3062 = vmul.u32 %v3056, %v3058
        %v3063 = vshll.u32 %v3060, 16
        %v3064 = vshrl.u32 %v3060, 16
        %v3065 = vshll.u32 %v3061, 16
        %v3066 = vshrl.u32 %v3061, 16
        %vm3067 = vc.u32 %v3059, %v3063
        %v3068 = vsel %vm3067, 1, 0
        %v3069 = vadd.s32 %v3059, %v3063
        %v3070 = vadd.s32 %v3062, %v3068
        %vm3071 = vc.u32 %v3069, %v3065
        %v3072 = vsel %vm3071, 1, 0
        %v3073 = vadd.s32 %v3069, %v3065
        %v3074 = vadd.s32 %v3070, %v3072
        %v3075 = vadd.s32 %v3074, %v3064
        %v3076 = vadd.s32 %v3075, %v3066
        %v3077 = vmul.u32 %v3032, %v3023
        %v3078 = vadd.s32 %v3054, %v3073
        %vm3079 = vc.u32 %v3054, %v3073
        %v3080 = vadd.s32 %v3076, 1
        %v3081 = vsel %vm3079, %v3080, %v3076
        %v3082 = vadd.s32 %v3077, %v3081
        %v3083 = vadd.s32 %v3082, 536870912
        %v3084 = vshrl.u32 %v3083, 30
        %v3085 = vshll.u32 %v3084, 30
        %v3086 = vsub.s32 %v3082, %v3085
        %vm3087 = vcmp.lt.s32.totalorder %v3086, 0
        %v3088 = vsub.s32 0, %v3086
        %v3089 = vsel %vm3087, %v3088, %v3086
        %v3090 = vclz %v3089
        %v3091 = vsub.s32 %v3090, 2
        %vm3092 = vcmp.gt.s32.totalorder 0, %v3091
        %v3093 = vsel %vm3092, 0, %v3091
        %v3094 = vsub.s32 32, %v3093
        %v3095 = vshll.u32 %v3086, %v3093
        %v3096 = vshrl.u32 %v3078, %v3094
        %v3097 = vor.u32 %v3095, %v3096
        %v3098 = vsub.s32 4294967266, %v3093
        %v3099 = vadd.s32 %v3098, 127
        %v3100 = vshll.u32 %v3099, 23
        %v3101 = vor.u32 4788187, %v3100
        %v3102 = vand.u32 2147483647, %v3101
        %v3104 = vcvt.s32.f32 %v3097
        %v3105 = vmul.f32 %v3104, %v3102
        %v3106 = vxor.u32 %v3105, 2147483648
        %v3107 = vsel %vm2986, %v3106, %v3105
        %v3108 = vsub.s32 4, %v3084
        %v3109 = vsel %vm2986, %v3108, %v3084
        %v3110 = vsel %vm2985, %v642, %v3107
        %v3111 = vsel %vm2985, 0, %v3109
        %v3112 = vmul.f32 %v3110, %v3110
        %v3113 = vmul.f32 %v3112, -0.001358992
        %v3114 = vadd.f32 %v3113, 0.041655596
        %v3115 = vmul.f32 %v3112, %v3114
        %v3116 = vadd.f32 %v3115, -0.4999988
        %v3117 = vmul.f32 %v3112, %v3116
        %v3118 = vadd.f32 1.0, %v3117
        %v3119 = vmul.f32 %v3110, %v3110
        %v3120 = vmul.f32 %v3119, -0.00019511016
        %v3121 = vadd.f32 %v3120, 0.008332121
        %v3122 = vmul.f32 %v3119, %v3121
        %v3123 = vadd.f32 %v3122, -0.16666654
        %v3124 = vmul.f32 %v3119, %v3123
        %v3125 = vadd.f32 %v3124, 1.0
        %v3126 = vmul.f32 %v3125, %v3110
        %vm3127 = vweird.f32 %v642
        %v3128 = vadd.s32 %v3111, 3
        %v3129 = vand.u32 %v3128, 3
        %vm3130 = vcmp.lt.s32.totalorder %v3129, 2
        %vm3131 = vcmp.eq.s32.totalorder %v3129, 0
        %v3132 = vxor.u32 %v3126, 2147483648
        %v3133 = vsel %vm3131, %v3118, %v3132
        %vm3134 = vcmp.eq.s32.totalorder %v3129, 2
        %v3135 = vxor.u32 %v3118, 2147483648
        %v3136 = vsel %vm3134, %v3135, %v3126
        %v3137 = vsel %vm3130, %v3133, %v3136
        %v3138 = vsel %vm3127, nan, %v3137
        %v3139 = vand.u32 2147483647, %v643
        %vm3140 = vcmp.le.f32.partialorder %v3139, 0.7853982
        %vm3141 = vcmp.lt.s32.totalorder %v643, 0
        %v3142 = vand.u32 %v643, 2139095040
        %v3143 = vshrl.u32 %v3142, 23
        %v3144 = vsub.s32 %v3143, 127
        %v3145 = vand.u32 2147483647, %v643
        %v3146 = vand.u32 %v3145, 8388607
        %v3147 = vor.u32 %v3146, 8388608
        %v3148 = vsub.s32 0, %v3147
        %v3149 = vadd.s32 %v3144, 1
        %vm3150 = vcmp.gt.s32.totalorder %v3149, 0
        %v3151 = vsel %vm3150, %v3149, 0
        %v3152 = vshrl.u32 %v3151, 5
        %v3153 = vand.u32 %v3151, 31
        %v3154 = vsub.s32 32, %v3153
        %v3155 = vshrl.u32 683565275, %v3154
        %v3156 = vshll.u32 683565275, %v3153
        %v3157 = vshrl.u32 2475754826, %v3154
        %v3158 = vor.u32 %v3156, %v3157
        %v3159 = vshll.u32 2475754826, %v3153
        %v3160 = vshrl.u32 2131351028, %v3154
        %v3161 = vor.u32 %v3159, %v3160
        %v3162 = vshll.u32 2131351028, %v3153
        %v3163 = vshrl.u32 2102212464, %v3154
        %v3164 = vor.u32 %v3162, %v3163
        %v3165 = vshll.u32 2102212464, %v3153
        %v3166 = vshrl.u32 920167782, %v3154
        %v3167 = vor.u32 %v3165, %v3166
        %v3168 = vshll.u32 920167782, %v3153
        %v3169 = vshrl.u32 1326507024, %v3154
        %v3170 = vor.u32 %v3168, %v3169
        %vm3171 = vcmp.lt.s32.totalorder %v3152, 1
        %vm3172 = vcmp.lt.s32.totalorder %v3152, 2
        %vm3173 = vcmp.lt.s32.totalorder %v3152, 3
        %vm3174 = vcmp.lt.s32.totalorder %v3152, 4
        %v3175 = vsel %vm3171, %v3155, %v3158
        %v3176 = vsel %vm3174, %v3164, 2102212464
        %v3177 = vsel %vm3173, %v3161, %v3176
        %v3178 = vsel %vm3172, %v3175, %v3177
        %v3179 = vsel %vm3171, %v3158, %v3161
        %v3180 = vsel %vm3174, %v3167, 920167782
        %v3181 = vsel %vm3173, %v3164, %v3180
        %v3182 = vsel %vm3172, %v3179, %v3181
        %v3183 = vsel %vm3171, %v3161, %v3164
        %v3184 = vsel %vm3174, %v3170, 1326507024
        %v3185 = vsel %vm3173, %v3167, %v3184
        %v3186 = vsel %vm3172, %v3183, %v3185
        %v3187 = vshll.u32 %v3147, 8
        %v3188 = vand.u32 %v3187, 65535
        %v3189 = vshrl.u32 %v3187, 16
        %v3190 = vand.u32 %v3186, 65535
        %v3191 = vshrl.u32 %v3186, 16
        %v3192 = vmul.u32 %v3188, %v3190
        %v3193 = vmul.u32 %v3188, %v3191
        %v3194 = vmul.u32 %v3189, %v3190
        %v3195 = vmul.u32 %v3189, %v3191
        %v3196 = vshll.u32 %v3193, 16
        %v3197 = vshrl.u32 %v3193, 16
        %v3198 = vshll.u32 %v3194, 16
        %v3199 = vshrl.u32 %v3194, 16
        %vm3200 = vc.u32 %v3192, %v3196
        %v3201 = vsel %vm3200, 1, 0
        %v3202 = vadd.s32 %v3192, %v3196
        %v3203 = vadd.s32 %v3195, %v3201
        %vm3204 = vc.u32 %v3202, %v3198
        %v3205 = vsel %vm3204, 1, 0
        %v3206 = vadd.s32 %v3202, %v3198
        %v3207 = vadd.s32 %v3203, %v3205
        %v3208 = vadd.s32 %v3207, %v3197
        %v3209 = vadd.s32 %v3208, %v3199
        %v3210 = vand.u32 %v3187, 65535
        %v3211 = vshrl.u32 %v3187, 16
        %v3212 = vand.u32 %v3182, 65535
        %v3213 = vshrl.u32 %v3182, 16
        %v3214 = vmul.u32 %v3210, %v3212
        %v3215 = vmul.u32 %v3210, %v3213
        %v3216 = vmul.u32 %v3211, %v3212
        %v3217 = vmul.u32 %v3211, %v3213
        %v3218 = vshll.u32 %v3215, 16
        %v3219 = vshrl.u32 %v3215, 16
        %v3220 = vshll.u32 %v3216, 16
        %v3221 = vshrl.u32 %v3216, 16
        %vm3222 = vc.u32 %v3214, %v3218
        %v3223 = vsel %vm3222, 1, 0
        %v3224 = vadd.s32 %v3214, %v3218
        %v3225 = vadd.s32 %v3217, %v3223
        %vm3226 = vc.u32 %v3224, %v3220
        %v3227 = vsel %vm3226, 1, 0
        %v3228 = vadd.s32 %v3224, %v3220
        %v3229 = vadd.s32 %v3225, %v3227
        %v3230 = vadd.s32 %v3229, %v3219
        %v3231 = vadd.s32 %v3230, %v3221
        %v3232 = vmul.u32 %v3187, %v3178
        %v3233 = vadd.s32 %v3209, %v3228
        %vm3234 = vc.u32 %v3209, %v3228
        %v3235 = vadd.s32 %v3231, 1
        %v3236 = vsel %vm3234, %v3235, %v3231
        %v3237 = vadd.s32 %v3232, %v3236
        %v3238 = vadd.s32 %v3237, 536870912
        %v3239 = vshrl.u32 %v3238, 30
        %v3240 = vshll.u32 %v3239, 30
        %v3241 = vsub.s32 %v3237, %v3240
        %vm3242 = vcmp.lt.s32.totalorder %v3241, 0
        %v3243 = vsub.s32 0, %v3241
        %v3244 = vsel %vm3242, %v3243, %v3241
        %v3245 = vclz %v3244
        %v3246 = vsub.s32 %v3245, 2
        %vm3247 = vcmp.gt.s32.totalorder 0, %v3246
        %v3248 = vsel %vm3247, 0, %v3246
        %v3249 = vsub.s32 32, %v3248
        %v3250 = vshll.u32 %v3241, %v3248
        %v3251 = vshrl.u32 %v3233, %v3249
        %v3252 = vor.u32 %v3250, %v3251
        %v3253 = vsub.s32 4294967266, %v3248
        %v3254 = vadd.s32 %v3253, 127
        %v3255 = vshll.u32 %v3254, 23
        %v3256 = vor.u32 4788187, %v3255
        %v3257 = vand.u32 2147483647, %v3256
        %v3259 = vcvt.s32.f32 %v3252
        %v3260 = vmul.f32 %v3259, %v3257
        %v3261 = vxor.u32 %v3260, 2147483648
        %v3262 = vsel %vm3141, %v3261, %v3260
        %v3263 = vsub.s32 4, %v3239
        %v3264 = vsel %vm3141, %v3263, %v3239
        %v3265 = vsel %vm3140, %v643, %v3262
        %v3266 = vsel %vm3140, 0, %v3264
        %v3267 = vmul.f32 %v3265, %v3265
        %v3268 = vmul.f32 %v3267, -0.001358992
        %v3269 = vadd.f32 %v3268, 0.041655596
        %v3270 = vmul.f32 %v3267, %v3269
        %v3271 = vadd.f32 %v3270, -0.4999988
        %v3272 = vmul.f32 %v3267, %v3271
        %v3273 = vadd.f32 1.0, %v3272
        %v3274 = vmul.f32 %v3265, %v3265
        %v3275 = vmul.f32 %v3274, -0.00019511016
        %v3276 = vadd.f32 %v3275, 0.008332121
        %v3277 = vmul.f32 %v3274, %v3276
        %v3278 = vadd.f32 %v3277, -0.16666654
        %v3279 = vmul.f32 %v3274, %v3278
        %v3280 = vadd.f32 %v3279, 1.0
        %v3281 = vmul.f32 %v3280, %v3265
        %vm3282 = vweird.f32 %v643
        %v3283 = vadd.s32 %v3266, 3
        %v3284 = vand.u32 %v3283, 3
        %vm3285 = vcmp.lt.s32.totalorder %v3284, 2
        %vm3286 = vcmp.eq.s32.totalorder %v3284, 0
        %v3287 = vxor.u32 %v3281, 2147483648
        %v3288 = vsel %vm3286, %v3273, %v3287
        %vm3289 = vcmp.eq.s32.totalorder %v3284, 2
        %v3290 = vxor.u32 %v3273, 2147483648
        %v3291 = vsel %vm3289, %v3290, %v3281
        %v3292 = vsel %vm3285, %v3288, %v3291
        %v3293 = vsel %vm3282, nan, %v3292
        %v3294 = vand.u32 2147483647, %v644
        %vm3295 = vcmp.le.f32.partialorder %v3294, 0.7853982
        %vm3296 = vcmp.lt.s32.totalorder %v644, 0
        %v3297 = vand.u32 %v644, 2139095040
        %v3298 = vshrl.u32 %v3297, 23
        %v3299 = vsub.s32 %v3298, 127
        %v3300 = vand.u32 2147483647, %v644
        %v3301 = vand.u32 %v3300, 8388607
        %v3302 = vor.u32 %v3301, 8388608
        %v3303 = vsub.s32 0, %v3302
        %v3304 = vadd.s32 %v3299, 1
        %vm3305 = vcmp.gt.s32.totalorder %v3304, 0
        %v3306 = vsel %vm3305, %v3304, 0
        %v3307 = vshrl.u32 %v3306, 5
        %v3308 = vand.u32 %v3306, 31
        %v3309 = vsub.s32 32, %v3308
        %v3310 = vshrl.u32 683565275, %v3309
        %v3311 = vshll.u32 683565275, %v3308
        %v3312 = vshrl.u32 2475754826, %v3309
        %v3313 = vor.u32 %v3311, %v3312
        %v3314 = vshll.u32 2475754826, %v3308
        %v3315 = vshrl.u32 2131351028, %v3309
        %v3316 = vor.u32 %v3314, %v3315
        %v3317 = vshll.u32 2131351028, %v3308
        %v3318 = vshrl.u32 2102212464, %v3309
        %v3319 = vor.u32 %v3317, %v3318
        %v3320 = vshll.u32 2102212464, %v3308
        %v3321 = vshrl.u32 920167782, %v3309
        %v3322 = vor.u32 %v3320, %v3321
        %v3323 = vshll.u32 920167782, %v3308
        %v3324 = vshrl.u32 1326507024, %v3309
        %v3325 = vor.u32 %v3323, %v3324
        %vm3326 = vcmp.lt.s32.totalorder %v3307, 1
        %vm3327 = vcmp.lt.s32.totalorder %v3307, 2
        %vm3328 = vcmp.lt.s32.totalorder %v3307, 3
        %vm3329 = vcmp.lt.s32.totalorder %v3307, 4
        %v3330 = vsel %vm3326, %v3310, %v3313
        %v3331 = vsel %vm3329, %v3319, 2102212464
        %v3332 = vsel %vm3328, %v3316, %v3331
        %v3333 = vsel %vm3327, %v3330, %v3332
        %v3334 = vsel %vm3326, %v3313, %v3316
        %v3335 = vsel %vm3329, %v3322, 920167782
        %v3336 = vsel %vm3328, %v3319, %v3335
        %v3337 = vsel %vm3327, %v3334, %v3336
        %v3338 = vsel %vm3326, %v3316, %v3319
        %v3339 = vsel %vm3329, %v3325, 1326507024
        %v3340 = vsel %vm3328, %v3322, %v3339
        %v3341 = vsel %vm3327, %v3338, %v3340
        %v3342 = vshll.u32 %v3302, 8
        %v3343 = vand.u32 %v3342, 65535
        %v3344 = vshrl.u32 %v3342, 16
        %v3345 = vand.u32 %v3341, 65535
        %v3346 = vshrl.u32 %v3341, 16
        %v3347 = vmul.u32 %v3343, %v3345
        %v3348 = vmul.u32 %v3343, %v3346
        %v3349 = vmul.u32 %v3344, %v3345
        %v3350 = vmul.u32 %v3344, %v3346
        %v3351 = vshll.u32 %v3348, 16
        %v3352 = vshrl.u32 %v3348, 16
        %v3353 = vshll.u32 %v3349, 16
        %v3354 = vshrl.u32 %v3349, 16
        %vm3355 = vc.u32 %v3347, %v3351
        %v3356 = vsel %vm3355, 1, 0
        %v3357 = vadd.s32 %v3347, %v3351
        %v3358 = vadd.s32 %v3350, %v3356
        %vm3359 = vc.u32 %v3357, %v3353
        %v3360 = vsel %vm3359, 1, 0
        %v3361 = vadd.s32 %v3357, %v3353
        %v3362 = vadd.s32 %v3358, %v3360
        %v3363 = vadd.s32 %v3362, %v3352
        %v3364 = vadd.s32 %v3363, %v3354
        %v3365 = vand.u32 %v3342, 65535
        %v3366 = vshrl.u32 %v3342, 16
        %v3367 = vand.u32 %v3337, 65535
        %v3368 = vshrl.u32 %v3337, 16
        %v3369 = vmul.u32 %v3365, %v3367
        %v3370 = vmul.u32 %v3365, %v3368
        %v3371 = vmul.u32 %v3366, %v3367
        %v3372 = vmul.u32 %v3366, %v3368
        %v3373 = vshll.u32 %v3370, 16
        %v3374 = vshrl.u32 %v3370, 16
        %v3375 = vshll.u32 %v3371, 16
        %v3376 = vshrl.u32 %v3371, 16
        %vm3377 = vc.u32 %v3369, %v3373
        %v3378 = vsel %vm3377, 1, 0
        %v3379 = vadd.s32 %v3369, %v3373
        %v3380 = vadd.s32 %v3372, %v3378
        %vm3381 = vc.u32 %v3379, %v3375
        %v3382 = vsel %vm3381, 1, 0
        %v3383 = vadd.s32 %v3379, %v3375
        %v3384 = vadd.s32 %v3380, %v3382
        %v3385 = vadd.s32 %v3384, %v3374
        %v3386 = vadd.s32 %v3385, %v3376
        %v3387 = vmul.u32 %v3342, %v3333
        %v3388 = vadd.s32 %v3364, %v3383
        %vm3389 = vc.u32 %v3364, %v3383
        %v3390 = vadd.s32 %v3386, 1
        %v3391 = vsel %vm3389, %v3390, %v3386
        %v3392 = vadd.s32 %v3387, %v3391
        %v3393 = vadd.s32 %v3392, 536870912
        %v3394 = vshrl.u32 %v3393, 30
        %v3395 = vshll.u32 %v3394, 30
        %v3396 = vsub.s32 %v3392, %v3395
        %vm3397 = vcmp.lt.s32.totalorder %v3396, 0
        %v3398 = vsub.s32 0, %v3396
        %v3399 = vsel %vm3397, %v3398, %v3396
        %v3400 = vclz %v3399
        %v3401 = vsub.s32 %v3400, 2
        %vm3402 = vcmp.gt.s32.totalorder 0, %v3401
        %v3403 = vsel %vm3402, 0, %v3401
        %v3404 = vsub.s32 32, %v3403
        %v3405 = vshll.u32 %v3396, %v3403
        %v3406 = vshrl.u32 %v3388, %v3404
        %v3407 = vor.u32 %v3405, %v3406
        %v3408 = vsub.s32 4294967266, %v3403
        %v3409 = vadd.s32 %v3408, 127
        %v3410 = vshll.u32 %v3409, 23
        %v3411 = vor.u32 4788187, %v3410
        %v3412 = vand.u32 2147483647, %v3411
        %v3414 = vcvt.s32.f32 %v3407
        %v3415 = vmul.f32 %v3414, %v3412
        %v3416 = vxor.u32 %v3415, 2147483648
        %v3417 = vsel %vm3296, %v3416, %v3415
        %v3418 = vsub.s32 4, %v3394
        %v3419 = vsel %vm3296, %v3418, %v3394
        %v3420 = vsel %vm3295, %v644, %v3417
        %v3421 = vsel %vm3295, 0, %v3419
        %v3422 = vmul.f32 %v3420, %v3420
        %v3423 = vmul.f32 %v3422, -0.001358992
        %v3424 = vadd.f32 %v3423, 0.041655596
        %v3425 = vmul.f32 %v3422, %v3424
        %v3426 = vadd.f32 %v3425, -0.4999988
        %v3427 = vmul.f32 %v3422, %v3426
        %v3428 = vadd.f32 1.0, %v3427
        %v3429 = vmul.f32 %v3420, %v3420
        %v3430 = vmul.f32 %v3429, -0.00019511016
        %v3431 = vadd.f32 %v3430, 0.008332121
        %v3432 = vmul.f32 %v3429, %v3431
        %v3433 = vadd.f32 %v3432, -0.16666654
        %v3434 = vmul.f32 %v3429, %v3433
        %v3435 = vadd.f32 %v3434, 1.0
        %v3436 = vmul.f32 %v3435, %v3420
        %vm3437 = vweird.f32 %v644
        %v3438 = vadd.s32 %v3421, 3
        %v3439 = vand.u32 %v3438, 3
        %vm3440 = vcmp.lt.s32.totalorder %v3439, 2
        %vm3441 = vcmp.eq.s32.totalorder %v3439, 0
        %v3442 = vxor.u32 %v3436, 2147483648
        %v3443 = vsel %vm3441, %v3428, %v3442
        %vm3444 = vcmp.eq.s32.totalorder %v3439, 2
        %v3445 = vxor.u32 %v3428, 2147483648
        %v3446 = vsel %vm3444, %v3445, %v3436
        %v3447 = vsel %vm3440, %v3443, %v3446
        %v3448 = vsel %vm3437, nan, %v3447
        %v3449 = vand.u32 2147483647, %v645
        %vm3450 = vcmp.le.f32.partialorder %v3449, 0.7853982
        %vm3451 = vcmp.lt.s32.totalorder %v645, 0
        %v3452 = vand.u32 %v645, 2139095040
        %v3453 = vshrl.u32 %v3452, 23
        %v3454 = vsub.s32 %v3453, 127
        %v3455 = vand.u32 2147483647, %v645
        %v3456 = vand.u32 %v3455, 8388607
        %v3457 = vor.u32 %v3456, 8388608
        %v3458 = vsub.s32 0, %v3457
        %v3459 = vadd.s32 %v3454, 1
        %vm3460 = vcmp.gt.s32.totalorder %v3459, 0
        %v3461 = vsel %vm3460, %v3459, 0
        %v3462 = vshrl.u32 %v3461, 5
        %v3463 = vand.u32 %v3461, 31
        %v3464 = vsub.s32 32, %v3463
        %v3465 = vshrl.u32 683565275, %v3464
        %v3466 = vshll.u32 683565275, %v3463
        %v3467 = vshrl.u32 2475754826, %v3464
        %v3468 = vor.u32 %v3466, %v3467
        %v3469 = vshll.u32 2475754826, %v3463
        %v3470 = vshrl.u32 2131351028, %v3464
        %v3471 = vor.u32 %v3469, %v3470
        %v3472 = vshll.u32 2131351028, %v3463
        %v3473 = vshrl.u32 2102212464, %v3464
        %v3474 = vor.u32 %v3472, %v3473
        %v3475 = vshll.u32 2102212464, %v3463
        %v3476 = vshrl.u32 920167782, %v3464
        %v3477 = vor.u32 %v3475, %v3476
        %v3478 = vshll.u32 920167782, %v3463
        %v3479 = vshrl.u32 1326507024, %v3464
        %v3480 = vor.u32 %v3478, %v3479
        %vm3481 = vcmp.lt.s32.totalorder %v3462, 1
        %vm3482 = vcmp.lt.s32.totalorder %v3462, 2
        %vm3483 = vcmp.lt.s32.totalorder %v3462, 3
        %vm3484 = vcmp.lt.s32.totalorder %v3462, 4
        %v3485 = vsel %vm3481, %v3465, %v3468
        %v3486 = vsel %vm3484, %v3474, 2102212464
        %v3487 = vsel %vm3483, %v3471, %v3486
        %v3488 = vsel %vm3482, %v3485, %v3487
        %v3489 = vsel %vm3481, %v3468, %v3471
        %v3490 = vsel %vm3484, %v3477, 920167782
        %v3491 = vsel %vm3483, %v3474, %v3490
        %v3492 = vsel %vm3482, %v3489, %v3491
        %v3493 = vsel %vm3481, %v3471, %v3474
        %v3494 = vsel %vm3484, %v3480, 1326507024
        %v3495 = vsel %vm3483, %v3477, %v3494
        %v3496 = vsel %vm3482, %v3493, %v3495
        %v3497 = vshll.u32 %v3457, 8
        %v3498 = vand.u32 %v3497, 65535
        %v3499 = vshrl.u32 %v3497, 16
        %v3500 = vand.u32 %v3496, 65535
        %v3501 = vshrl.u32 %v3496, 16
        %v3502 = vmul.u32 %v3498, %v3500
        %v3503 = vmul.u32 %v3498, %v3501
        %v3504 = vmul.u32 %v3499, %v3500
        %v3505 = vmul.u32 %v3499, %v3501
        %v3506 = vshll.u32 %v3503, 16
        %v3507 = vshrl.u32 %v3503, 16
        %v3508 = vshll.u32 %v3504, 16
        %v3509 = vshrl.u32 %v3504, 16
        %vm3510 = vc.u32 %v3502, %v3506
        %v3511 = vsel %vm3510, 1, 0
        %v3512 = vadd.s32 %v3502, %v3506
        %v3513 = vadd.s32 %v3505, %v3511
        %vm3514 = vc.u32 %v3512, %v3508
        %v3515 = vsel %vm3514, 1, 0
        %v3516 = vadd.s32 %v3512, %v3508
        %v3517 = vadd.s32 %v3513, %v3515
        %v3518 = vadd.s32 %v3517, %v3507
        %v3519 = vadd.s32 %v3518, %v3509
        %v3520 = vand.u32 %v3497, 65535
        %v3521 = vshrl.u32 %v3497, 16
        %v3522 = vand.u32 %v3492, 65535
        %v3523 = vshrl.u32 %v3492, 16
        %v3524 = vmul.u32 %v3520, %v3522
        %v3525 = vmul.u32 %v3520, %v3523
        %v3526 = vmul.u32 %v3521, %v3522
        %v3527 = vmul.u32 %v3521, %v3523
        %v3528 = vshll.u32 %v3525, 16
        %v3529 = vshrl.u32 %v3525, 16
        %v3530 = vshll.u32 %v3526, 16
        %v3531 = vshrl.u32 %v3526, 16
        %vm3532 = vc.u32 %v3524, %v3528
        %v3533 = vsel %vm3532, 1, 0
        %v3534 = vadd.s32 %v3524, %v3528
        %v3535 = vadd.s32 %v3527, %v3533
        %vm3536 = vc.u32 %v3534, %v3530
        %v3537 = vsel %vm3536, 1, 0
        %v3538 = vadd.s32 %v3534, %v3530
        %v3539 = vadd.s32 %v3535, %v3537
        %v3540 = vadd.s32 %v3539, %v3529
        %v3541 = vadd.s32 %v3540, %v3531
        %v3542 = vmul.u32 %v3497, %v3488
        %v3543 = vadd.s32 %v3519, %v3538
        %vm3544 = vc.u32 %v3519, %v3538
        %v3545 = vadd.s32 %v3541, 1
        %v3546 = vsel %vm3544, %v3545, %v3541
        %v3547 = vadd.s32 %v3542, %v3546
        %v3548 = vadd.s32 %v3547, 536870912
        %v3549 = vshrl.u32 %v3548, 30
        %v3550 = vshll.u32 %v3549, 30
        %v3551 = vsub.s32 %v3547, %v3550
        %vm3552 = vcmp.lt.s32.totalorder %v3551, 0
        %v3553 = vsub.s32 0, %v3551
        %v3554 = vsel %vm3552, %v3553, %v3551
        %v3555 = vclz %v3554
        %v3556 = vsub.s32 %v3555, 2
        %vm3557 = vcmp.gt.s32.totalorder 0, %v3556
        %v3558 = vsel %vm3557, 0, %v3556
        %v3559 = vsub.s32 32, %v3558
        %v3560 = vshll.u32 %v3551, %v3558
        %v3561 = vshrl.u32 %v3543, %v3559
        %v3562 = vor.u32 %v3560, %v3561
        %v3563 = vsub.s32 4294967266, %v3558
        %v3564 = vadd.s32 %v3563, 127
        %v3565 = vshll.u32 %v3564, 23
        %v3566 = vor.u32 4788187, %v3565
        %v3567 = vand.u32 2147483647, %v3566
        %v3569 = vcvt.s32.f32 %v3562
        %v3570 = vmul.f32 %v3569, %v3567
        %v3571 = vxor.u32 %v3570, 2147483648
        %v3572 = vsel %vm3451, %v3571, %v3570
        %v3573 = vsub.s32 4, %v3549
        %v3574 = vsel %vm3451, %v3573, %v3549
        %v3575 = vsel %vm3450, %v645, %v3572
        %v3576 = vsel %vm3450, 0, %v3574
        %v3577 = vmul.f32 %v3575, %v3575
        %v3578 = vmul.f32 %v3577, -0.001358992
        %v3579 = vadd.f32 %v3578, 0.041655596
        %v3580 = vmul.f32 %v3577, %v3579
        %v3581 = vadd.f32 %v3580, -0.4999988
        %v3582 = vmul.f32 %v3577, %v3581
        %v3583 = vadd.f32 1.0, %v3582
        %v3584 = vmul.f32 %v3575, %v3575
        %v3585 = vmul.f32 %v3584, -0.00019511016
        %v3586 = vadd.f32 %v3585, 0.008332121
        %v3587 = vmul.f32 %v3584, %v3586
        %v3588 = vadd.f32 %v3587, -0.16666654
        %v3589 = vmul.f32 %v3584, %v3588
        %v3590 = vadd.f32 %v3589, 1.0
        %v3591 = vmul.f32 %v3590, %v3575
        %vm3592 = vweird.f32 %v645
        %v3593 = vadd.s32 %v3576, 3
        %v3594 = vand.u32 %v3593, 3
        %vm3595 = vcmp.lt.s32.totalorder %v3594, 2
        %vm3596 = vcmp.eq.s32.totalorder %v3594, 0
        %v3597 = vxor.u32 %v3591, 2147483648
        %v3598 = vsel %vm3596, %v3583, %v3597
        %vm3599 = vcmp.eq.s32.totalorder %v3594, 2
        %v3600 = vxor.u32 %v3583, 2147483648
        %v3601 = vsel %vm3599, %v3600, %v3591
        %v3602 = vsel %vm3595, %v3598, %v3601
        %v3603 = vsel %vm3592, nan, %v3602
        %v3604 = vand.u32 2147483647, %v646
        %vm3605 = vcmp.le.f32.partialorder %v3604, 0.7853982
        %vm3606 = vcmp.lt.s32.totalorder %v646, 0
        %v3607 = vand.u32 %v646, 2139095040
        %v3608 = vshrl.u32 %v3607, 23
        %v3609 = vsub.s32 %v3608, 127
        %v3610 = vand.u32 2147483647, %v646
        %v3611 = vand.u32 %v3610, 8388607
        %v3612 = vor.u32 %v3611, 8388608
        %v3613 = vsub.s32 0, %v3612
        %v3614 = vadd.s32 %v3609, 1
        %vm3615 = vcmp.gt.s32.totalorder %v3614, 0
        %v3616 = vsel %vm3615, %v3614, 0
        %v3617 = vshrl.u32 %v3616, 5
        %v3618 = vand.u32 %v3616, 31
        %v3619 = vsub.s32 32, %v3618
        %v3620 = vshrl.u32 683565275, %v3619
        %v3621 = vshll.u32 683565275, %v3618
        %v3622 = vshrl.u32 2475754826, %v3619
        %v3623 = vor.u32 %v3621, %v3622
        %v3624 = vshll.u32 2475754826, %v3618
        %v3625 = vshrl.u32 2131351028, %v3619
        %v3626 = vor.u32 %v3624, %v3625
        %v3627 = vshll.u32 2131351028, %v3618
        %v3628 = vshrl.u32 2102212464, %v3619
        %v3629 = vor.u32 %v3627, %v3628
        %v3630 = vshll.u32 2102212464, %v3618
        %v3631 = vshrl.u32 920167782, %v3619
        %v3632 = vor.u32 %v3630, %v3631
        %v3633 = vshll.u32 920167782, %v3618
        %v3634 = vshrl.u32 1326507024, %v3619
        %v3635 = vor.u32 %v3633, %v3634
        %vm3636 = vcmp.lt.s32.totalorder %v3617, 1
        %vm3637 = vcmp.lt.s32.totalorder %v3617, 2
        %vm3638 = vcmp.lt.s32.totalorder %v3617, 3
        %vm3639 = vcmp.lt.s32.totalorder %v3617, 4
        %v3640 = vsel %vm3636, %v3620, %v3623
        %v3641 = vsel %vm3639, %v3629, 2102212464
        %v3642 = vsel %vm3638, %v3626, %v3641
        %v3643 = vsel %vm3637, %v3640, %v3642
        %v3644 = vsel %vm3636, %v3623, %v3626
        %v3645 = vsel %vm3639, %v3632, 920167782
        %v3646 = vsel %vm3638, %v3629, %v3645
        %v3647 = vsel %vm3637, %v3644, %v3646
        %v3648 = vsel %vm3636, %v3626, %v3629
        %v3649 = vsel %vm3639, %v3635, 1326507024
        %v3650 = vsel %vm3638, %v3632, %v3649
        %v3651 = vsel %vm3637, %v3648, %v3650
        %v3652 = vshll.u32 %v3612, 8
        %v3653 = vand.u32 %v3652, 65535
        %v3654 = vshrl.u32 %v3652, 16
        %v3655 = vand.u32 %v3651, 65535
        %v3656 = vshrl.u32 %v3651, 16
        %v3657 = vmul.u32 %v3653, %v3655
        %v3658 = vmul.u32 %v3653, %v3656
        %v3659 = vmul.u32 %v3654, %v3655
        %v3660 = vmul.u32 %v3654, %v3656
        %v3661 = vshll.u32 %v3658, 16
        %v3662 = vshrl.u32 %v3658, 16
        %v3663 = vshll.u32 %v3659, 16
        %v3664 = vshrl.u32 %v3659, 16
        %vm3665 = vc.u32 %v3657, %v3661
        %v3666 = vsel %vm3665, 1, 0
        %v3667 = vadd.s32 %v3657, %v3661
        %v3668 = vadd.s32 %v3660, %v3666
        %vm3669 = vc.u32 %v3667, %v3663
        %v3670 = vsel %vm3669, 1, 0
        %v3671 = vadd.s32 %v3667, %v3663
        %v3672 = vadd.s32 %v3668, %v3670
        %v3673 = vadd.s32 %v3672, %v3662
        %v3674 = vadd.s32 %v3673, %v3664
        %v3675 = vand.u32 %v3652, 65535
        %v3676 = vshrl.u32 %v3652, 16
        %v3677 = vand.u32 %v3647, 65535
        %v3678 = vshrl.u32 %v3647, 16
        %v3679 = vmul.u32 %v3675, %v3677
        %v3680 = vmul.u32 %v3675, %v3678
        %v3681 = vmul.u32 %v3676, %v3677
        %v3682 = vmul.u32 %v3676, %v3678
        %v3683 = vshll.u32 %v3680, 16
        %v3684 = vshrl.u32 %v3680, 16
        %v3685 = vshll.u32 %v3681, 16
        %v3686 = vshrl.u32 %v3681, 16
        %vm3687 = vc.u32 %v3679, %v3683
        %v3688 = vsel %vm3687, 1, 0
        %v3689 = vadd.s32 %v3679, %v3683
        %v3690 = vadd.s32 %v3682, %v3688
        %vm3691 = vc.u32 %v3689, %v3685
        %v3692 = vsel %vm3691, 1, 0
        %v3693 = vadd.s32 %v3689, %v3685
        %v3694 = vadd.s32 %v3690, %v3692
        %v3695 = vadd.s32 %v3694, %v3684
        %v3696 = vadd.s32 %v3695, %v3686
        %v3697 = vmul.u32 %v3652, %v3643
        %v3698 = vadd.s32 %v3674, %v3693
        %vm3699 = vc.u32 %v3674, %v3693
        %v3700 = vadd.s32 %v3696, 1
        %v3701 = vsel %vm3699, %v3700, %v3696
        %v3702 = vadd.s32 %v3697, %v3701
        %v3703 = vadd.s32 %v3702, 536870912
        %v3704 = vshrl.u32 %v3703, 30
        %v3705 = vshll.u32 %v3704, 30
        %v3706 = vsub.s32 %v3702, %v3705
        %vm3707 = vcmp.lt.s32.totalorder %v3706, 0
        %v3708 = vsub.s32 0, %v3706
        %v3709 = vsel %vm3707, %v3708, %v3706
        %v3710 = vclz %v3709
        %v3711 = vsub.s32 %v3710, 2
        %vm3712 = vcmp.gt.s32.totalorder 0, %v3711
        %v3713 = vsel %vm3712, 0, %v3711
        %v3714 = vsub.s32 32, %v3713
        %v3715 = vshll.u32 %v3706, %v3713
        %v3716 = vshrl.u32 %v3698, %v3714
        %v3717 = vor.u32 %v3715, %v3716
        %v3718 = vsub.s32 4294967266, %v3713
        %v3719 = vadd.s32 %v3718, 127
        %v3720 = vshll.u32 %v3719, 23
        %v3721 = vor.u32 4788187, %v3720
        %v3722 = vand.u32 2147483647, %v3721
        %v3724 = vcvt.s32.f32 %v3717
        %v3725 = vmul.f32 %v3724, %v3722
        %v3726 = vxor.u32 %v3725, 2147483648
        %v3727 = vsel %vm3606, %v3726, %v3725
        %v3728 = vsub.s32 4, %v3704
        %v3729 = vsel %vm3606, %v3728, %v3704
        %v3730 = vsel %vm3605, %v646, %v3727
        %v3731 = vsel %vm3605, 0, %v3729
        %v3732 = vmul.f32 %v3730, %v3730
        %v3733 = vmul.f32 %v3732, -0.001358992
        %v3734 = vadd.f32 %v3733, 0.041655596
        %v3735 = vmul.f32 %v3732, %v3734
        %v3736 = vadd.f32 %v3735, -0.4999988
        %v3737 = vmul.f32 %v3732, %v3736
        %v3738 = vadd.f32 1.0, %v3737
        %v3739 = vmul.f32 %v3730, %v3730
        %v3740 = vmul.f32 %v3739, -0.00019511016
        %v3741 = vadd.f32 %v3740, 0.008332121
        %v3742 = vmul.f32 %v3739, %v3741
        %v3743 = vadd.f32 %v3742, -0.16666654
        %v3744 = vmul.f32 %v3739, %v3743
        %v3745 = vadd.f32 %v3744, 1.0
        %v3746 = vmul.f32 %v3745, %v3730
        %vm3747 = vweird.f32 %v646
        %v3748 = vadd.s32 %v3731, 3
        %v3749 = vand.u32 %v3748, 3
        %vm3750 = vcmp.lt.s32.totalorder %v3749, 2
        %vm3751 = vcmp.eq.s32.totalorder %v3749, 0
        %v3752 = vxor.u32 %v3746, 2147483648
        %v3753 = vsel %vm3751, %v3738, %v3752
        %vm3754 = vcmp.eq.s32.totalorder %v3749, 2
        %v3755 = vxor.u32 %v3738, 2147483648
        %v3756 = vsel %vm3754, %v3755, %v3746
        %v3757 = vsel %vm3750, %v3753, %v3756
        %v3758 = vsel %vm3747, nan, %v3757
        %v3759 = vand.u32 2147483647, %v647
        %vm3760 = vcmp.le.f32.partialorder %v3759, 0.7853982
        %vm3761 = vcmp.lt.s32.totalorder %v647, 0
        %v3762 = vand.u32 %v647, 2139095040
        %v3763 = vshrl.u32 %v3762, 23
        %v3764 = vsub.s32 %v3763, 127
        %v3765 = vand.u32 2147483647, %v647
        %v3766 = vand.u32 %v3765, 8388607
        %v3767 = vor.u32 %v3766, 8388608
        %v3768 = vsub.s32 0, %v3767
        %v3769 = vadd.s32 %v3764, 1
        %vm3770 = vcmp.gt.s32.totalorder %v3769, 0
        %v3771 = vsel %vm3770, %v3769, 0
        %v3772 = vshrl.u32 %v3771, 5
        %v3773 = vand.u32 %v3771, 31
        %v3774 = vsub.s32 32, %v3773
        %v3775 = vshrl.u32 683565275, %v3774
        %v3776 = vshll.u32 683565275, %v3773
        %v3777 = vshrl.u32 2475754826, %v3774
        %v3778 = vor.u32 %v3776, %v3777
        %v3779 = vshll.u32 2475754826, %v3773
        %v3780 = vshrl.u32 2131351028, %v3774
        %v3781 = vor.u32 %v3779, %v3780
        %v3782 = vshll.u32 2131351028, %v3773
        %v3783 = vshrl.u32 2102212464, %v3774
        %v3784 = vor.u32 %v3782, %v3783
        %v3785 = vshll.u32 2102212464, %v3773
        %v3786 = vshrl.u32 920167782, %v3774
        %v3787 = vor.u32 %v3785, %v3786
        %v3788 = vshll.u32 920167782, %v3773
        %v3789 = vshrl.u32 1326507024, %v3774
        %v3790 = vor.u32 %v3788, %v3789
        %vm3791 = vcmp.lt.s32.totalorder %v3772, 1
        %vm3792 = vcmp.lt.s32.totalorder %v3772, 2
        %vm3793 = vcmp.lt.s32.totalorder %v3772, 3
        %vm3794 = vcmp.lt.s32.totalorder %v3772, 4
        %v3795 = vsel %vm3791, %v3775, %v3778
        %v3796 = vsel %vm3794, %v3784, 2102212464
        %v3797 = vsel %vm3793, %v3781, %v3796
        %v3798 = vsel %vm3792, %v3795, %v3797
        %v3799 = vsel %vm3791, %v3778, %v3781
        %v3800 = vsel %vm3794, %v3787, 920167782
        %v3801 = vsel %vm3793, %v3784, %v3800
        %v3802 = vsel %vm3792, %v3799, %v3801
        %v3803 = vsel %vm3791, %v3781, %v3784
        %v3804 = vsel %vm3794, %v3790, 1326507024
        %v3805 = vsel %vm3793, %v3787, %v3804
        %v3806 = vsel %vm3792, %v3803, %v3805
        %v3807 = vshll.u32 %v3767, 8
        %v3808 = vand.u32 %v3807, 65535
        %v3809 = vshrl.u32 %v3807, 16
        %v3810 = vand.u32 %v3806, 65535
        %v3811 = vshrl.u32 %v3806, 16
        %v3812 = vmul.u32 %v3808, %v3810
        %v3813 = vmul.u32 %v3808, %v3811
        %v3814 = vmul.u32 %v3809, %v3810
        %v3815 = vmul.u32 %v3809, %v3811
        %v3816 = vshll.u32 %v3813, 16
        %v3817 = vshrl.u32 %v3813, 16
        %v3818 = vshll.u32 %v3814, 16
        %v3819 = vshrl.u32 %v3814, 16
        %vm3820 = vc.u32 %v3812, %v3816
        %v3821 = vsel %vm3820, 1, 0
        %v3822 = vadd.s32 %v3812, %v3816
        %v3823 = vadd.s32 %v3815, %v3821
        %vm3824 = vc.u32 %v3822, %v3818
        %v3825 = vsel %vm3824, 1, 0
        %v3826 = vadd.s32 %v3822, %v3818
        %v3827 = vadd.s32 %v3823, %v3825
        %v3828 = vadd.s32 %v3827, %v3817
        %v3829 = vadd.s32 %v3828, %v3819
        %v3830 = vand.u32 %v3807, 65535
        %v3831 = vshrl.u32 %v3807, 16
        %v3832 = vand.u32 %v3802, 65535
        %v3833 = vshrl.u32 %v3802, 16
        %v3834 = vmul.u32 %v3830, %v3832
        %v3835 = vmul.u32 %v3830, %v3833
        %v3836 = vmul.u32 %v3831, %v3832
        %v3837 = vmul.u32 %v3831, %v3833
        %v3838 = vshll.u32 %v3835, 16
        %v3839 = vshrl.u32 %v3835, 16
        %v3840 = vshll.u32 %v3836, 16
        %v3841 = vshrl.u32 %v3836, 16
        %vm3842 = vc.u32 %v3834, %v3838
        %v3843 = vsel %vm3842, 1, 0
        %v3844 = vadd.s32 %v3834, %v3838
        %v3845 = vadd.s32 %v3837, %v3843
        %vm3846 = vc.u32 %v3844, %v3840
        %v3847 = vsel %vm3846, 1, 0
        %v3848 = vadd.s32 %v3844, %v3840
        %v3849 = vadd.s32 %v3845, %v3847
        %v3850 = vadd.s32 %v3849, %v3839
        %v3851 = vadd.s32 %v3850, %v3841
        %v3852 = vmul.u32 %v3807, %v3798
        %v3853 = vadd.s32 %v3829, %v3848
        %vm3854 = vc.u32 %v3829, %v3848
        %v3855 = vadd.s32 %v3851, 1
        %v3856 = vsel %vm3854, %v3855, %v3851
        %v3857 = vadd.s32 %v3852, %v3856
        %v3858 = vadd.s32 %v3857, 536870912
        %v3859 = vshrl.u32 %v3858, 30
        %v3860 = vshll.u32 %v3859, 30
        %v3861 = vsub.s32 %v3857, %v3860
        %vm3862 = vcmp.lt.s32.totalorder %v3861, 0
        %v3863 = vsub.s32 0, %v3861
        %v3864 = vsel %vm3862, %v3863, %v3861
        %v3865 = vclz %v3864
        %v3866 = vsub.s32 %v3865, 2
        %vm3867 = vcmp.gt.s32.totalorder 0, %v3866
        %v3868 = vsel %vm3867, 0, %v3866
        %v3869 = vsub.s32 32, %v3868
        %v3870 = vshll.u32 %v3861, %v3868
        %v3871 = vshrl.u32 %v3853, %v3869
        %v3872 = vor.u32 %v3870, %v3871
        %v3873 = vsub.s32 4294967266, %v3868
        %v3874 = vadd.s32 %v3873, 127
        %v3875 = vshll.u32 %v3874, 23
        %v3876 = vor.u32 4788187, %v3875
        %v3877 = vand.u32 2147483647, %v3876
        %v3879 = vcvt.s32.f32 %v3872
        %v3880 = vmul.f32 %v3879, %v3877
        %v3881 = vxor.u32 %v3880, 2147483648
        %v3882 = vsel %vm3761, %v3881, %v3880
        %v3883 = vsub.s32 4, %v3859
        %v3884 = vsel %vm3761, %v3883, %v3859
        %v3885 = vsel %vm3760, %v647, %v3882
        %v3886 = vsel %vm3760, 0, %v3884
        %v3887 = vmul.f32 %v3885, %v3885
        %v3888 = vmul.f32 %v3887, -0.001358992
        %v3889 = vadd.f32 %v3888, 0.041655596
        %v3890 = vmul.f32 %v3887, %v3889
        %v3891 = vadd.f32 %v3890, -0.4999988
        %v3892 = vmul.f32 %v3887, %v3891
        %v3893 = vadd.f32 1.0, %v3892
        %v3894 = vmul.f32 %v3885, %v3885
        %v3895 = vmul.f32 %v3894, -0.00019511016
        %v3896 = vadd.f32 %v3895, 0.008332121
        %v3897 = vmul.f32 %v3894, %v3896
        %v3898 = vadd.f32 %v3897, -0.16666654
        %v3899 = vmul.f32 %v3894, %v3898
        %v3900 = vadd.f32 %v3899, 1.0
        %v3901 = vmul.f32 %v3900, %v3885
        %vm3902 = vweird.f32 %v647
        %v3903 = vadd.s32 %v3886, 3
        %v3904 = vand.u32 %v3903, 3
        %vm3905 = vcmp.lt.s32.totalorder %v3904, 2
        %vm3906 = vcmp.eq.s32.totalorder %v3904, 0
        %v3907 = vxor.u32 %v3901, 2147483648
        %v3908 = vsel %vm3906, %v3893, %v3907
        %vm3909 = vcmp.eq.s32.totalorder %v3904, 2
        %v3910 = vxor.u32 %v3893, 2147483648
        %v3911 = vsel %vm3909, %v3910, %v3901
        %v3912 = vsel %vm3905, %v3908, %v3911
        %v3913 = vsel %vm3902, nan, %v3912
        %v3914 = vand.u32 2147483647, %v648
        %vm3915 = vcmp.le.f32.partialorder %v3914, 0.7853982
        %vm3916 = vcmp.lt.s32.totalorder %v648, 0
        %v3917 = vand.u32 %v648, 2139095040
        %v3918 = vshrl.u32 %v3917, 23
        %v3919 = vsub.s32 %v3918, 127
        %v3920 = vand.u32 2147483647, %v648
        %v3921 = vand.u32 %v3920, 8388607
        %v3922 = vor.u32 %v3921, 8388608
        %v3923 = vsub.s32 0, %v3922
        %v3924 = vadd.s32 %v3919, 1
        %vm3925 = vcmp.gt.s32.totalorder %v3924, 0
        %v3926 = vsel %vm3925, %v3924, 0
        %v3927 = vshrl.u32 %v3926, 5
        %v3928 = vand.u32 %v3926, 31
        %v3929 = vsub.s32 32, %v3928
        %v3930 = vshrl.u32 683565275, %v3929
        %v3931 = vshll.u32 683565275, %v3928
        %v3932 = vshrl.u32 2475754826, %v3929
        %v3933 = vor.u32 %v3931, %v3932
        %v3934 = vshll.u32 2475754826, %v3928
        %v3935 = vshrl.u32 2131351028, %v3929
        %v3936 = vor.u32 %v3934, %v3935
        %v3937 = vshll.u32 2131351028, %v3928
        %v3938 = vshrl.u32 2102212464, %v3929
        %v3939 = vor.u32 %v3937, %v3938
        %v3940 = vshll.u32 2102212464, %v3928
        %v3941 = vshrl.u32 920167782, %v3929
        %v3942 = vor.u32 %v3940, %v3941
        %v3943 = vshll.u32 920167782, %v3928
        %v3944 = vshrl.u32 1326507024, %v3929
        %v3945 = vor.u32 %v3943, %v3944
        %vm3946 = vcmp.lt.s32.totalorder %v3927, 1
        %vm3947 = vcmp.lt.s32.totalorder %v3927, 2
        %vm3948 = vcmp.lt.s32.totalorder %v3927, 3
        %vm3949 = vcmp.lt.s32.totalorder %v3927, 4
        %v3950 = vsel %vm3946, %v3930, %v3933
        %v3951 = vsel %vm3949, %v3939, 2102212464
        %v3952 = vsel %vm3948, %v3936, %v3951
        %v3953 = vsel %vm3947, %v3950, %v3952
        %v3954 = vsel %vm3946, %v3933, %v3936
        %v3955 = vsel %vm3949, %v3942, 920167782
        %v3956 = vsel %vm3948, %v3939, %v3955
        %v3957 = vsel %vm3947, %v3954, %v3956
        %v3958 = vsel %vm3946, %v3936, %v3939
        %v3959 = vsel %vm3949, %v3945, 1326507024
        %v3960 = vsel %vm3948, %v3942, %v3959
        %v3961 = vsel %vm3947, %v3958, %v3960
        %v3962 = vshll.u32 %v3922, 8
        %v3963 = vand.u32 %v3962, 65535
        %v3964 = vshrl.u32 %v3962, 16
        %v3965 = vand.u32 %v3961, 65535
        %v3966 = vshrl.u32 %v3961, 16
        %v3967 = vmul.u32 %v3963, %v3965
        %v3968 = vmul.u32 %v3963, %v3966
        %v3969 = vmul.u32 %v3964, %v3965
        %v3970 = vmul.u32 %v3964, %v3966
        %v3971 = vshll.u32 %v3968, 16
        %v3972 = vshrl.u32 %v3968, 16
        %v3973 = vshll.u32 %v3969, 16
        %v3974 = vshrl.u32 %v3969, 16
        %vm3975 = vc.u32 %v3967, %v3971
        %v3976 = vsel %vm3975, 1, 0
        %v3977 = vadd.s32 %v3967, %v3971
        %v3978 = vadd.s32 %v3970, %v3976
        %vm3979 = vc.u32 %v3977, %v3973
        %v3980 = vsel %vm3979, 1, 0
        %v3981 = vadd.s32 %v3977, %v3973
        %v3982 = vadd.s32 %v3978, %v3980
        %v3983 = vadd.s32 %v3982, %v3972
        %v3984 = vadd.s32 %v3983, %v3974
        %v3985 = vand.u32 %v3962, 65535
        %v3986 = vshrl.u32 %v3962, 16
        %v3987 = vand.u32 %v3957, 65535
        %v3988 = vshrl.u32 %v3957, 16
        %v3989 = vmul.u32 %v3985, %v3987
        %v3990 = vmul.u32 %v3985, %v3988
        %v3991 = vmul.u32 %v3986, %v3987
        %v3992 = vmul.u32 %v3986, %v3988
        %v3993 = vshll.u32 %v3990, 16
        %v3994 = vshrl.u32 %v3990, 16
        %v3995 = vshll.u32 %v3991, 16
        %v3996 = vshrl.u32 %v3991, 16
        %vm3997 = vc.u32 %v3989, %v3993
        %v3998 = vsel %vm3997, 1, 0
        %v3999 = vadd.s32 %v3989, %v3993
        %v4000 = vadd.s32 %v3992, %v3998
        %vm4001 = vc.u32 %v3999, %v3995
        %v4002 = vsel %vm4001, 1, 0
        %v4003 = vadd.s32 %v3999, %v3995
        %v4004 = vadd.s32 %v4000, %v4002
        %v4005 = vadd.s32 %v4004, %v3994
        %v4006 = vadd.s32 %v4005, %v3996
        %v4007 = vmul.u32 %v3962, %v3953
        %v4008 = vadd.s32 %v3984, %v4003
        %vm4009 = vc.u32 %v3984, %v4003
        %v4010 = vadd.s32 %v4006, 1
        %v4011 = vsel %vm4009, %v4010, %v4006
        %v4012 = vadd.s32 %v4007, %v4011
        %v4013 = vadd.s32 %v4012, 536870912
        %v4014 = vshrl.u32 %v4013, 30
        %v4015 = vshll.u32 %v4014, 30
        %v4016 = vsub.s32 %v4012, %v4015
        %vm4017 = vcmp.lt.s32.totalorder %v4016, 0
        %v4018 = vsub.s32 0, %v4016
        %v4019 = vsel %vm4017, %v4018, %v4016
        %v4020 = vclz %v4019
        %v4021 = vsub.s32 %v4020, 2
        %vm4022 = vcmp.gt.s32.totalorder 0, %v4021
        %v4023 = vsel %vm4022, 0, %v4021
        %v4024 = vsub.s32 32, %v4023
        %v4025 = vshll.u32 %v4016, %v4023
        %v4026 = vshrl.u32 %v4008, %v4024
        %v4027 = vor.u32 %v4025, %v4026
        %v4028 = vsub.s32 4294967266, %v4023
        %v4029 = vadd.s32 %v4028, 127
        %v4030 = vshll.u32 %v4029, 23
        %v4031 = vor.u32 4788187, %v4030
        %v4032 = vand.u32 2147483647, %v4031
        %v4034 = vcvt.s32.f32 %v4027
        %v4035 = vmul.f32 %v4034, %v4032
        %v4036 = vxor.u32 %v4035, 2147483648
        %v4037 = vsel %vm3916, %v4036, %v4035
        %v4038 = vsub.s32 4, %v4014
        %v4039 = vsel %vm3916, %v4038, %v4014
        %v4040 = vsel %vm3915, %v648, %v4037
        %v4041 = vsel %vm3915, 0, %v4039
        %v4042 = vmul.f32 %v4040, %v4040
        %v4043 = vmul.f32 %v4042, -0.001358992
        %v4044 = vadd.f32 %v4043, 0.041655596
        %v4045 = vmul.f32 %v4042, %v4044
        %v4046 = vadd.f32 %v4045, -0.4999988
        %v4047 = vmul.f32 %v4042, %v4046
        %v4048 = vadd.f32 1.0, %v4047
        %v4049 = vmul.f32 %v4040, %v4040
        %v4050 = vmul.f32 %v4049, -0.00019511016
        %v4051 = vadd.f32 %v4050, 0.008332121
        %v4052 = vmul.f32 %v4049, %v4051
        %v4053 = vadd.f32 %v4052, -0.16666654
        %v4054 = vmul.f32 %v4049, %v4053
        %v4055 = vadd.f32 %v4054, 1.0
        %v4056 = vmul.f32 %v4055, %v4040
        %vm4057 = vweird.f32 %v648
        %v4058 = vadd.s32 %v4041, 3
        %v4059 = vand.u32 %v4058, 3
        %vm4060 = vcmp.lt.s32.totalorder %v4059, 2
        %vm4061 = vcmp.eq.s32.totalorder %v4059, 0
        %v4062 = vxor.u32 %v4056, 2147483648
        %v4063 = vsel %vm4061, %v4048, %v4062
        %vm4064 = vcmp.eq.s32.totalorder %v4059, 2
        %v4065 = vxor.u32 %v4048, 2147483648
        %v4066 = vsel %vm4064, %v4065, %v4056
        %v4067 = vsel %vm4060, %v4063, %v4066
        %v4068 = vsel %vm4057, nan, %v4067
        %v4069 = vand.u32 2147483647, %v649
        %vm4070 = vcmp.le.f32.partialorder %v4069, 0.7853982
        %vm4071 = vcmp.lt.s32.totalorder %v649, 0
        %v4072 = vand.u32 %v649, 2139095040
        %v4073 = vshrl.u32 %v4072, 23
        %v4074 = vsub.s32 %v4073, 127
        %v4075 = vand.u32 2147483647, %v649
        %v4076 = vand.u32 %v4075, 8388607
        %v4077 = vor.u32 %v4076, 8388608
        %v4078 = vsub.s32 0, %v4077
        %v4079 = vadd.s32 %v4074, 1
        %vm4080 = vcmp.gt.s32.totalorder %v4079, 0
        %v4081 = vsel %vm4080, %v4079, 0
        %v4082 = vshrl.u32 %v4081, 5
        %v4083 = vand.u32 %v4081, 31
        %v4084 = vsub.s32 32, %v4083
        %v4085 = vshrl.u32 683565275, %v4084
        %v4086 = vshll.u32 683565275, %v4083
        %v4087 = vshrl.u32 2475754826, %v4084
        %v4088 = vor.u32 %v4086, %v4087
        %v4089 = vshll.u32 2475754826, %v4083
        %v4090 = vshrl.u32 2131351028, %v4084
        %v4091 = vor.u32 %v4089, %v4090
        %v4092 = vshll.u32 2131351028, %v4083
        %v4093 = vshrl.u32 2102212464, %v4084
        %v4094 = vor.u32 %v4092, %v4093
        %v4095 = vshll.u32 2102212464, %v4083
        %v4096 = vshrl.u32 920167782, %v4084
        %v4097 = vor.u32 %v4095, %v4096
        %v4098 = vshll.u32 920167782, %v4083
        %v4099 = vshrl.u32 1326507024, %v4084
        %v4100 = vor.u32 %v4098, %v4099
        %vm4101 = vcmp.lt.s32.totalorder %v4082, 1
        %vm4102 = vcmp.lt.s32.totalorder %v4082, 2
        %vm4103 = vcmp.lt.s32.totalorder %v4082, 3
        %vm4104 = vcmp.lt.s32.totalorder %v4082, 4
        %v4105 = vsel %vm4101, %v4085, %v4088
        %v4106 = vsel %vm4104, %v4094, 2102212464
        %v4107 = vsel %vm4103, %v4091, %v4106
        %v4108 = vsel %vm4102, %v4105, %v4107
        %v4109 = vsel %vm4101, %v4088, %v4091
        %v4110 = vsel %vm4104, %v4097, 920167782
        %v4111 = vsel %vm4103, %v4094, %v4110
        %v4112 = vsel %vm4102, %v4109, %v4111
        %v4113 = vsel %vm4101, %v4091, %v4094
        %v4114 = vsel %vm4104, %v4100, 1326507024
        %v4115 = vsel %vm4103, %v4097, %v4114
        %v4116 = vsel %vm4102, %v4113, %v4115
        %v4117 = vshll.u32 %v4077, 8
        %v4118 = vand.u32 %v4117, 65535
        %v4119 = vshrl.u32 %v4117, 16
        %v4120 = vand.u32 %v4116, 65535
        %v4121 = vshrl.u32 %v4116, 16
        %v4122 = vmul.u32 %v4118, %v4120
        %v4123 = vmul.u32 %v4118, %v4121
        %v4124 = vmul.u32 %v4119, %v4120
        %v4125 = vmul.u32 %v4119, %v4121
        %v4126 = vshll.u32 %v4123, 16
        %v4127 = vshrl.u32 %v4123, 16
        %v4128 = vshll.u32 %v4124, 16
        %v4129 = vshrl.u32 %v4124, 16
        %vm4130 = vc.u32 %v4122, %v4126
        %v4131 = vsel %vm4130, 1, 0
        %v4132 = vadd.s32 %v4122, %v4126
        %v4133 = vadd.s32 %v4125, %v4131
        %vm4134 = vc.u32 %v4132, %v4128
        %v4135 = vsel %vm4134, 1, 0
        %v4136 = vadd.s32 %v4132, %v4128
        %v4137 = vadd.s32 %v4133, %v4135
        %v4138 = vadd.s32 %v4137, %v4127
        %v4139 = vadd.s32 %v4138, %v4129
        %v4140 = vand.u32 %v4117, 65535
        %v4141 = vshrl.u32 %v4117, 16
        %v4142 = vand.u32 %v4112, 65535
        %v4143 = vshrl.u32 %v4112, 16
        %v4144 = vmul.u32 %v4140, %v4142
        %v4145 = vmul.u32 %v4140, %v4143
        %v4146 = vmul.u32 %v4141, %v4142
        %v4147 = vmul.u32 %v4141, %v4143
        %v4148 = vshll.u32 %v4145, 16
        %v4149 = vshrl.u32 %v4145, 16
        %v4150 = vshll.u32 %v4146, 16
        %v4151 = vshrl.u32 %v4146, 16
        %vm4152 = vc.u32 %v4144, %v4148
        %v4153 = vsel %vm4152, 1, 0
        %v4154 = vadd.s32 %v4144, %v4148
        %v4155 = vadd.s32 %v4147, %v4153
        %vm4156 = vc.u32 %v4154, %v4150
        %v4157 = vsel %vm4156, 1, 0
        %v4158 = vadd.s32 %v4154, %v4150
        %v4159 = vadd.s32 %v4155, %v4157
        %v4160 = vadd.s32 %v4159, %v4149
        %v4161 = vadd.s32 %v4160, %v4151
        %v4162 = vmul.u32 %v4117, %v4108
        %v4163 = vadd.s32 %v4139, %v4158
        %vm4164 = vc.u32 %v4139, %v4158
        %v4165 = vadd.s32 %v4161, 1
        %v4166 = vsel %vm4164, %v4165, %v4161
        %v4167 = vadd.s32 %v4162, %v4166
        %v4168 = vadd.s32 %v4167, 536870912
        %v4169 = vshrl.u32 %v4168, 30
        %v4170 = vshll.u32 %v4169, 30
        %v4171 = vsub.s32 %v4167, %v4170
        %vm4172 = vcmp.lt.s32.totalorder %v4171, 0
        %v4173 = vsub.s32 0, %v4171
        %v4174 = vsel %vm4172, %v4173, %v4171
        %v4175 = vclz %v4174
        %v4176 = vsub.s32 %v4175, 2
        %vm4177 = vcmp.gt.s32.totalorder 0, %v4176
        %v4178 = vsel %vm4177, 0, %v4176
        %v4179 = vsub.s32 32, %v4178
        %v4180 = vshll.u32 %v4171, %v4178
        %v4181 = vshrl.u32 %v4163, %v4179
        %v4182 = vor.u32 %v4180, %v4181
        %v4183 = vsub.s32 4294967266, %v4178
        %v4184 = vadd.s32 %v4183, 127
        %v4185 = vshll.u32 %v4184, 23
        %v4186 = vor.u32 4788187, %v4185
        %v4187 = vand.u32 2147483647, %v4186
        %v4189 = vcvt.s32.f32 %v4182
        %v4190 = vmul.f32 %v4189, %v4187
        %v4191 = vxor.u32 %v4190, 2147483648
        %v4192 = vsel %vm4071, %v4191, %v4190
        %v4193 = vsub.s32 4, %v4169
        %v4194 = vsel %vm4071, %v4193, %v4169
        %v4195 = vsel %vm4070, %v649, %v4192
        %v4196 = vsel %vm4070, 0, %v4194
        %v4197 = vmul.f32 %v4195, %v4195
        %v4198 = vmul.f32 %v4197, -0.001358992
        %v4199 = vadd.f32 %v4198, 0.041655596
        %v4200 = vmul.f32 %v4197, %v4199
        %v4201 = vadd.f32 %v4200, -0.4999988
        %v4202 = vmul.f32 %v4197, %v4201
        %v4203 = vadd.f32 1.0, %v4202
        %v4204 = vmul.f32 %v4195, %v4195
        %v4205 = vmul.f32 %v4204, -0.00019511016
        %v4206 = vadd.f32 %v4205, 0.008332121
        %v4207 = vmul.f32 %v4204, %v4206
        %v4208 = vadd.f32 %v4207, -0.16666654
        %v4209 = vmul.f32 %v4204, %v4208
        %v4210 = vadd.f32 %v4209, 1.0
        %v4211 = vmul.f32 %v4210, %v4195
        %vm4212 = vweird.f32 %v649
        %v4213 = vadd.s32 %v4196, 3
        %v4214 = vand.u32 %v4213, 3
        %vm4215 = vcmp.lt.s32.totalorder %v4214, 2
        %vm4216 = vcmp.eq.s32.totalorder %v4214, 0
        %v4217 = vxor.u32 %v4211, 2147483648
        %v4218 = vsel %vm4216, %v4203, %v4217
        %vm4219 = vcmp.eq.s32.totalorder %v4214, 2
        %v4220 = vxor.u32 %v4203, 2147483648
        %v4221 = vsel %vm4219, %v4220, %v4211
        %v4222 = vsel %vm4215, %v4218, %v4221
        %v4223 = vsel %vm4212, nan, %v4222
        %v4224 = vand.u32 2147483647, %v650
        %vm4225 = vcmp.le.f32.partialorder %v4224, 0.7853982
        %vm4226 = vcmp.lt.s32.totalorder %v650, 0
        %v4227 = vand.u32 %v650, 2139095040
        %v4228 = vshrl.u32 %v4227, 23
        %v4229 = vsub.s32 %v4228, 127
        %v4230 = vand.u32 2147483647, %v650
        %v4231 = vand.u32 %v4230, 8388607
        %v4232 = vor.u32 %v4231, 8388608
        %v4233 = vsub.s32 0, %v4232
        %v4234 = vadd.s32 %v4229, 1
        %vm4235 = vcmp.gt.s32.totalorder %v4234, 0
        %v4236 = vsel %vm4235, %v4234, 0
        %v4237 = vshrl.u32 %v4236, 5
        %v4238 = vand.u32 %v4236, 31
        %v4239 = vsub.s32 32, %v4238
        %v4240 = vshrl.u32 683565275, %v4239
        %v4241 = vshll.u32 683565275, %v4238
        %v4242 = vshrl.u32 2475754826, %v4239
        %v4243 = vor.u32 %v4241, %v4242
        %v4244 = vshll.u32 2475754826, %v4238
        %v4245 = vshrl.u32 2131351028, %v4239
        %v4246 = vor.u32 %v4244, %v4245
        %v4247 = vshll.u32 2131351028, %v4238
        %v4248 = vshrl.u32 2102212464, %v4239
        %v4249 = vor.u32 %v4247, %v4248
        %v4250 = vshll.u32 2102212464, %v4238
        %v4251 = vshrl.u32 920167782, %v4239
        %v4252 = vor.u32 %v4250, %v4251
        %v4253 = vshll.u32 920167782, %v4238
        %v4254 = vshrl.u32 1326507024, %v4239
        %v4255 = vor.u32 %v4253, %v4254
        %vm4256 = vcmp.lt.s32.totalorder %v4237, 1
        %vm4257 = vcmp.lt.s32.totalorder %v4237, 2
        %vm4258 = vcmp.lt.s32.totalorder %v4237, 3
        %vm4259 = vcmp.lt.s32.totalorder %v4237, 4
        %v4260 = vsel %vm4256, %v4240, %v4243
        %v4261 = vsel %vm4259, %v4249, 2102212464
        %v4262 = vsel %vm4258, %v4246, %v4261
        %v4263 = vsel %vm4257, %v4260, %v4262
        %v4264 = vsel %vm4256, %v4243, %v4246
        %v4265 = vsel %vm4259, %v4252, 920167782
        %v4266 = vsel %vm4258, %v4249, %v4265
        %v4267 = vsel %vm4257, %v4264, %v4266
        %v4268 = vsel %vm4256, %v4246, %v4249
        %v4269 = vsel %vm4259, %v4255, 1326507024
        %v4270 = vsel %vm4258, %v4252, %v4269
        %v4271 = vsel %vm4257, %v4268, %v4270
        %v4272 = vshll.u32 %v4232, 8
        %v4273 = vand.u32 %v4272, 65535
        %v4274 = vshrl.u32 %v4272, 16
        %v4275 = vand.u32 %v4271, 65535
        %v4276 = vshrl.u32 %v4271, 16
        %v4277 = vmul.u32 %v4273, %v4275
        %v4278 = vmul.u32 %v4273, %v4276
        %v4279 = vmul.u32 %v4274, %v4275
        %v4280 = vmul.u32 %v4274, %v4276
        %v4281 = vshll.u32 %v4278, 16
        %v4282 = vshrl.u32 %v4278, 16
        %v4283 = vshll.u32 %v4279, 16
        %v4284 = vshrl.u32 %v4279, 16
        %vm4285 = vc.u32 %v4277, %v4281
        %v4286 = vsel %vm4285, 1, 0
        %v4287 = vadd.s32 %v4277, %v4281
        %v4288 = vadd.s32 %v4280, %v4286
        %vm4289 = vc.u32 %v4287, %v4283
        %v4290 = vsel %vm4289, 1, 0
        %v4291 = vadd.s32 %v4287, %v4283
        %v4292 = vadd.s32 %v4288, %v4290
        %v4293 = vadd.s32 %v4292, %v4282
        %v4294 = vadd.s32 %v4293, %v4284
        %v4295 = vand.u32 %v4272, 65535
        %v4296 = vshrl.u32 %v4272, 16
        %v4297 = vand.u32 %v4267, 65535
        %v4298 = vshrl.u32 %v4267, 16
        %v4299 = vmul.u32 %v4295, %v4297
        %v4300 = vmul.u32 %v4295, %v4298
        %v4301 = vmul.u32 %v4296, %v4297
        %v4302 = vmul.u32 %v4296, %v4298
        %v4303 = vshll.u32 %v4300, 16
        %v4304 = vshrl.u32 %v4300, 16
        %v4305 = vshll.u32 %v4301, 16
        %v4306 = vshrl.u32 %v4301, 16
        %vm4307 = vc.u32 %v4299, %v4303
        %v4308 = vsel %vm4307, 1, 0
        %v4309 = vadd.s32 %v4299, %v4303
        %v4310 = vadd.s32 %v4302, %v4308
        %vm4311 = vc.u32 %v4309, %v4305
        %v4312 = vsel %vm4311, 1, 0
        %v4313 = vadd.s32 %v4309, %v4305
        %v4314 = vadd.s32 %v4310, %v4312
        %v4315 = vadd.s32 %v4314, %v4304
        %v4316 = vadd.s32 %v4315, %v4306
        %v4317 = vmul.u32 %v4272, %v4263
        %v4318 = vadd.s32 %v4294, %v4313
        %vm4319 = vc.u32 %v4294, %v4313
        %v4320 = vadd.s32 %v4316, 1
        %v4321 = vsel %vm4319, %v4320, %v4316
        %v4322 = vadd.s32 %v4317, %v4321
        %v4323 = vadd.s32 %v4322, 536870912
        %v4324 = vshrl.u32 %v4323, 30
        %v4325 = vshll.u32 %v4324, 30
        %v4326 = vsub.s32 %v4322, %v4325
        %vm4327 = vcmp.lt.s32.totalorder %v4326, 0
        %v4328 = vsub.s32 0, %v4326
        %v4329 = vsel %vm4327, %v4328, %v4326
        %v4330 = vclz %v4329
        %v4331 = vsub.s32 %v4330, 2
        %vm4332 = vcmp.gt.s32.totalorder 0, %v4331
        %v4333 = vsel %vm4332, 0, %v4331
        %v4334 = vsub.s32 32, %v4333
        %v4335 = vshll.u32 %v4326, %v4333
        %v4336 = vshrl.u32 %v4318, %v4334
        %v4337 = vor.u32 %v4335, %v4336
        %v4338 = vsub.s32 4294967266, %v4333
        %v4339 = vadd.s32 %v4338, 127
        %v4340 = vshll.u32 %v4339, 23
        %v4341 = vor.u32 4788187, %v4340
        %v4342 = vand.u32 2147483647, %v4341
        %v4344 = vcvt.s32.f32 %v4337
        %v4345 = vmul.f32 %v4344, %v4342
        %v4346 = vxor.u32 %v4345, 2147483648
        %v4347 = vsel %vm4226, %v4346, %v4345
        %v4348 = vsub.s32 4, %v4324
        %v4349 = vsel %vm4226, %v4348, %v4324
        %v4350 = vsel %vm4225, %v650, %v4347
        %v4351 = vsel %vm4225, 0, %v4349
        %v4352 = vmul.f32 %v4350, %v4350
        %v4353 = vmul.f32 %v4352, -0.001358992
        %v4354 = vadd.f32 %v4353, 0.041655596
        %v4355 = vmul.f32 %v4352, %v4354
        %v4356 = vadd.f32 %v4355, -0.4999988
        %v4357 = vmul.f32 %v4352, %v4356
        %v4358 = vadd.f32 1.0, %v4357
        %v4359 = vmul.f32 %v4350, %v4350
        %v4360 = vmul.f32 %v4359, -0.00019511016
        %v4361 = vadd.f32 %v4360, 0.008332121
        %v4362 = vmul.f32 %v4359, %v4361
        %v4363 = vadd.f32 %v4362, -0.16666654
        %v4364 = vmul.f32 %v4359, %v4363
        %v4365 = vadd.f32 %v4364, 1.0
        %v4366 = vmul.f32 %v4365, %v4350
        %vm4367 = vweird.f32 %v650
        %v4368 = vadd.s32 %v4351, 3
        %v4369 = vand.u32 %v4368, 3
        %vm4370 = vcmp.lt.s32.totalorder %v4369, 2
        %vm4371 = vcmp.eq.s32.totalorder %v4369, 0
        %v4372 = vxor.u32 %v4366, 2147483648
        %v4373 = vsel %vm4371, %v4358, %v4372
        %vm4374 = vcmp.eq.s32.totalorder %v4369, 2
        %v4375 = vxor.u32 %v4358, 2147483648
        %v4376 = vsel %vm4374, %v4375, %v4366
        %v4377 = vsel %vm4370, %v4373, %v4376
        %v4378 = vsel %vm4367, nan, %v4377
        %v4379 = vand.u32 2147483647, %v651
        %vm4380 = vcmp.le.f32.partialorder %v4379, 0.7853982
        %vm4381 = vcmp.lt.s32.totalorder %v651, 0
        %v4382 = vand.u32 %v651, 2139095040
        %v4383 = vshrl.u32 %v4382, 23
        %v4384 = vsub.s32 %v4383, 127
        %v4385 = vand.u32 2147483647, %v651
        %v4386 = vand.u32 %v4385, 8388607
        %v4387 = vor.u32 %v4386, 8388608
        %v4388 = vsub.s32 0, %v4387
        %v4389 = vadd.s32 %v4384, 1
        %vm4390 = vcmp.gt.s32.totalorder %v4389, 0
        %v4391 = vsel %vm4390, %v4389, 0
        %v4392 = vshrl.u32 %v4391, 5
        %v4393 = vand.u32 %v4391, 31
        %v4394 = vsub.s32 32, %v4393
        %v4395 = vshrl.u32 683565275, %v4394
        %v4396 = vshll.u32 683565275, %v4393
        %v4397 = vshrl.u32 2475754826, %v4394
        %v4398 = vor.u32 %v4396, %v4397
        %v4399 = vshll.u32 2475754826, %v4393
        %v4400 = vshrl.u32 2131351028, %v4394
        %v4401 = vor.u32 %v4399, %v4400
        %v4402 = vshll.u32 2131351028, %v4393
        %v4403 = vshrl.u32 2102212464, %v4394
        %v4404 = vor.u32 %v4402, %v4403
        %v4405 = vshll.u32 2102212464, %v4393
        %v4406 = vshrl.u32 920167782, %v4394
        %v4407 = vor.u32 %v4405, %v4406
        %v4408 = vshll.u32 920167782, %v4393
        %v4409 = vshrl.u32 1326507024, %v4394
        %v4410 = vor.u32 %v4408, %v4409
        %vm4411 = vcmp.lt.s32.totalorder %v4392, 1
        %vm4412 = vcmp.lt.s32.totalorder %v4392, 2
        %vm4413 = vcmp.lt.s32.totalorder %v4392, 3
        %vm4414 = vcmp.lt.s32.totalorder %v4392, 4
        %v4415 = vsel %vm4411, %v4395, %v4398
        %v4416 = vsel %vm4414, %v4404, 2102212464
        %v4417 = vsel %vm4413, %v4401, %v4416
        %v4418 = vsel %vm4412, %v4415, %v4417
        %v4419 = vsel %vm4411, %v4398, %v4401
        %v4420 = vsel %vm4414, %v4407, 920167782
        %v4421 = vsel %vm4413, %v4404, %v4420
        %v4422 = vsel %vm4412, %v4419, %v4421
        %v4423 = vsel %vm4411, %v4401, %v4404
        %v4424 = vsel %vm4414, %v4410, 1326507024
        %v4425 = vsel %vm4413, %v4407, %v4424
        %v4426 = vsel %vm4412, %v4423, %v4425
        %v4427 = vshll.u32 %v4387, 8
        %v4428 = vand.u32 %v4427, 65535
        %v4429 = vshrl.u32 %v4427, 16
        %v4430 = vand.u32 %v4426, 65535
        %v4431 = vshrl.u32 %v4426, 16
        %v4432 = vmul.u32 %v4428, %v4430
        %v4433 = vmul.u32 %v4428, %v4431
        %v4434 = vmul.u32 %v4429, %v4430
        %v4435 = vmul.u32 %v4429, %v4431
        %v4436 = vshll.u32 %v4433, 16
        %v4437 = vshrl.u32 %v4433, 16
        %v4438 = vshll.u32 %v4434, 16
        %v4439 = vshrl.u32 %v4434, 16
        %vm4440 = vc.u32 %v4432, %v4436
        %v4441 = vsel %vm4440, 1, 0
        %v4442 = vadd.s32 %v4432, %v4436
        %v4443 = vadd.s32 %v4435, %v4441
        %vm4444 = vc.u32 %v4442, %v4438
        %v4445 = vsel %vm4444, 1, 0
        %v4446 = vadd.s32 %v4442, %v4438
        %v4447 = vadd.s32 %v4443, %v4445
        %v4448 = vadd.s32 %v4447, %v4437
        %v4449 = vadd.s32 %v4448, %v4439
        %v4450 = vand.u32 %v4427, 65535
        %v4451 = vshrl.u32 %v4427, 16
        %v4452 = vand.u32 %v4422, 65535
        %v4453 = vshrl.u32 %v4422, 16
        %v4454 = vmul.u32 %v4450, %v4452
        %v4455 = vmul.u32 %v4450, %v4453
        %v4456 = vmul.u32 %v4451, %v4452
        %v4457 = vmul.u32 %v4451, %v4453
        %v4458 = vshll.u32 %v4455, 16
        %v4459 = vshrl.u32 %v4455, 16
        %v4460 = vshll.u32 %v4456, 16
        %v4461 = vshrl.u32 %v4456, 16
        %vm4462 = vc.u32 %v4454, %v4458
        %v4463 = vsel %vm4462, 1, 0
        %v4464 = vadd.s32 %v4454, %v4458
        %v4465 = vadd.s32 %v4457, %v4463
        %vm4466 = vc.u32 %v4464, %v4460
        %v4467 = vsel %vm4466, 1, 0
        %v4468 = vadd.s32 %v4464, %v4460
        %v4469 = vadd.s32 %v4465, %v4467
        %v4470 = vadd.s32 %v4469, %v4459
        %v4471 = vadd.s32 %v4470, %v4461
        %v4472 = vmul.u32 %v4427, %v4418
        %v4473 = vadd.s32 %v4449, %v4468
        %vm4474 = vc.u32 %v4449, %v4468
        %v4475 = vadd.s32 %v4471, 1
        %v4476 = vsel %vm4474, %v4475, %v4471
        %v4477 = vadd.s32 %v4472, %v4476
        %v4478 = vadd.s32 %v4477, 536870912
        %v4479 = vshrl.u32 %v4478, 30
        %v4480 = vshll.u32 %v4479, 30
        %v4481 = vsub.s32 %v4477, %v4480
        %vm4482 = vcmp.lt.s32.totalorder %v4481, 0
        %v4483 = vsub.s32 0, %v4481
        %v4484 = vsel %vm4482, %v4483, %v4481
        %v4485 = vclz %v4484
        %v4486 = vsub.s32 %v4485, 2
        %vm4487 = vcmp.gt.s32.totalorder 0, %v4486
        %v4488 = vsel %vm4487, 0, %v4486
        %v4489 = vsub.s32 32, %v4488
        %v4490 = vshll.u32 %v4481, %v4488
        %v4491 = vshrl.u32 %v4473, %v4489
        %v4492 = vor.u32 %v4490, %v4491
        %v4493 = vsub.s32 4294967266, %v4488
        %v4494 = vadd.s32 %v4493, 127
        %v4495 = vshll.u32 %v4494, 23
        %v4496 = vor.u32 4788187, %v4495
        %v4497 = vand.u32 2147483647, %v4496
        %v4499 = vcvt.s32.f32 %v4492
        %v4500 = vmul.f32 %v4499, %v4497
        %v4501 = vxor.u32 %v4500, 2147483648
        %v4502 = vsel %vm4381, %v4501, %v4500
        %v4503 = vsub.s32 4, %v4479
        %v4504 = vsel %vm4381, %v4503, %v4479
        %v4505 = vsel %vm4380, %v651, %v4502
        %v4506 = vsel %vm4380, 0, %v4504
        %v4507 = vmul.f32 %v4505, %v4505
        %v4508 = vmul.f32 %v4507, -0.001358992
        %v4509 = vadd.f32 %v4508, 0.041655596
        %v4510 = vmul.f32 %v4507, %v4509
        %v4511 = vadd.f32 %v4510, -0.4999988
        %v4512 = vmul.f32 %v4507, %v4511
        %v4513 = vadd.f32 1.0, %v4512
        %v4514 = vmul.f32 %v4505, %v4505
        %v4515 = vmul.f32 %v4514, -0.00019511016
        %v4516 = vadd.f32 %v4515, 0.008332121
        %v4517 = vmul.f32 %v4514, %v4516
        %v4518 = vadd.f32 %v4517, -0.16666654
        %v4519 = vmul.f32 %v4514, %v4518
        %v4520 = vadd.f32 %v4519, 1.0
        %v4521 = vmul.f32 %v4520, %v4505
        %vm4522 = vweird.f32 %v651
        %v4523 = vadd.s32 %v4506, 3
        %v4524 = vand.u32 %v4523, 3
        %vm4525 = vcmp.lt.s32.totalorder %v4524, 2
        %vm4526 = vcmp.eq.s32.totalorder %v4524, 0
        %v4527 = vxor.u32 %v4521, 2147483648
        %v4528 = vsel %vm4526, %v4513, %v4527
        %vm4529 = vcmp.eq.s32.totalorder %v4524, 2
        %v4530 = vxor.u32 %v4513, 2147483648
        %v4531 = vsel %vm4529, %v4530, %v4521
        %v4532 = vsel %vm4525, %v4528, %v4531
        %v4533 = vsel %vm4522, nan, %v4532
        %v4534 = vand.u32 2147483647, %v652
        %vm4535 = vcmp.le.f32.partialorder %v4534, 0.7853982
        %vm4536 = vcmp.lt.s32.totalorder %v652, 0
        %v4537 = vand.u32 %v652, 2139095040
        %v4538 = vshrl.u32 %v4537, 23
        %v4539 = vsub.s32 %v4538, 127
        %v4540 = vand.u32 2147483647, %v652
        %v4541 = vand.u32 %v4540, 8388607
        %v4542 = vor.u32 %v4541, 8388608
        %v4543 = vsub.s32 0, %v4542
        %v4544 = vadd.s32 %v4539, 1
        %vm4545 = vcmp.gt.s32.totalorder %v4544, 0
        %v4546 = vsel %vm4545, %v4544, 0
        %v4547 = vshrl.u32 %v4546, 5
        %v4548 = vand.u32 %v4546, 31
        %v4549 = vsub.s32 32, %v4548
        %v4550 = vshrl.u32 683565275, %v4549
        %v4551 = vshll.u32 683565275, %v4548
        %v4552 = vshrl.u32 2475754826, %v4549
        %v4553 = vor.u32 %v4551, %v4552
        %v4554 = vshll.u32 2475754826, %v4548
        %v4555 = vshrl.u32 2131351028, %v4549
        %v4556 = vor.u32 %v4554, %v4555
        %v4557 = vshll.u32 2131351028, %v4548
        %v4558 = vshrl.u32 2102212464, %v4549
        %v4559 = vor.u32 %v4557, %v4558
        %v4560 = vshll.u32 2102212464, %v4548
        %v4561 = vshrl.u32 920167782, %v4549
        %v4562 = vor.u32 %v4560, %v4561
        %v4563 = vshll.u32 920167782, %v4548
        %v4564 = vshrl.u32 1326507024, %v4549
        %v4565 = vor.u32 %v4563, %v4564
        %vm4566 = vcmp.lt.s32.totalorder %v4547, 1
        %vm4567 = vcmp.lt.s32.totalorder %v4547, 2
        %vm4568 = vcmp.lt.s32.totalorder %v4547, 3
        %vm4569 = vcmp.lt.s32.totalorder %v4547, 4
        %v4570 = vsel %vm4566, %v4550, %v4553
        %v4571 = vsel %vm4569, %v4559, 2102212464
        %v4572 = vsel %vm4568, %v4556, %v4571
        %v4573 = vsel %vm4567, %v4570, %v4572
        %v4574 = vsel %vm4566, %v4553, %v4556
        %v4575 = vsel %vm4569, %v4562, 920167782
        %v4576 = vsel %vm4568, %v4559, %v4575
        %v4577 = vsel %vm4567, %v4574, %v4576
        %v4578 = vsel %vm4566, %v4556, %v4559
        %v4579 = vsel %vm4569, %v4565, 1326507024
        %v4580 = vsel %vm4568, %v4562, %v4579
        %v4581 = vsel %vm4567, %v4578, %v4580
        %v4582 = vshll.u32 %v4542, 8
        %v4583 = vand.u32 %v4582, 65535
        %v4584 = vshrl.u32 %v4582, 16
        %v4585 = vand.u32 %v4581, 65535
        %v4586 = vshrl.u32 %v4581, 16
        %v4587 = vmul.u32 %v4583, %v4585
        %v4588 = vmul.u32 %v4583, %v4586
        %v4589 = vmul.u32 %v4584, %v4585
        %v4590 = vmul.u32 %v4584, %v4586
        %v4591 = vshll.u32 %v4588, 16
        %v4592 = vshrl.u32 %v4588, 16
        %v4593 = vshll.u32 %v4589, 16
        %v4594 = vshrl.u32 %v4589, 16
        %vm4595 = vc.u32 %v4587, %v4591
        %v4596 = vsel %vm4595, 1, 0
        %v4597 = vadd.s32 %v4587, %v4591
        %v4598 = vadd.s32 %v4590, %v4596
        %vm4599 = vc.u32 %v4597, %v4593
        %v4600 = vsel %vm4599, 1, 0
        %v4601 = vadd.s32 %v4597, %v4593
        %v4602 = vadd.s32 %v4598, %v4600
        %v4603 = vadd.s32 %v4602, %v4592
        %v4604 = vadd.s32 %v4603, %v4594
        %v4605 = vand.u32 %v4582, 65535
        %v4606 = vshrl.u32 %v4582, 16
        %v4607 = vand.u32 %v4577, 65535
        %v4608 = vshrl.u32 %v4577, 16
        %v4609 = vmul.u32 %v4605, %v4607
        %v4610 = vmul.u32 %v4605, %v4608
        %v4611 = vmul.u32 %v4606, %v4607
        %v4612 = vmul.u32 %v4606, %v4608
        %v4613 = vshll.u32 %v4610, 16
        %v4614 = vshrl.u32 %v4610, 16
        %v4615 = vshll.u32 %v4611, 16
        %v4616 = vshrl.u32 %v4611, 16
        %vm4617 = vc.u32 %v4609, %v4613
        %v4618 = vsel %vm4617, 1, 0
        %v4619 = vadd.s32 %v4609, %v4613
        %v4620 = vadd.s32 %v4612, %v4618
        %vm4621 = vc.u32 %v4619, %v4615
        %v4622 = vsel %vm4621, 1, 0
        %v4623 = vadd.s32 %v4619, %v4615
        %v4624 = vadd.s32 %v4620, %v4622
        %v4625 = vadd.s32 %v4624, %v4614
        %v4626 = vadd.s32 %v4625, %v4616
        %v4627 = vmul.u32 %v4582, %v4573
        %v4628 = vadd.s32 %v4604, %v4623
        %vm4629 = vc.u32 %v4604, %v4623
        %v4630 = vadd.s32 %v4626, 1
        %v4631 = vsel %vm4629, %v4630, %v4626
        %v4632 = vadd.s32 %v4627, %v4631
        %v4633 = vadd.s32 %v4632, 536870912
        %v4634 = vshrl.u32 %v4633, 30
        %v4635 = vshll.u32 %v4634, 30
        %v4636 = vsub.s32 %v4632, %v4635
        %vm4637 = vcmp.lt.s32.totalorder %v4636, 0
        %v4638 = vsub.s32 0, %v4636
        %v4639 = vsel %vm4637, %v4638, %v4636
        %v4640 = vclz %v4639
        %v4641 = vsub.s32 %v4640, 2
        %vm4642 = vcmp.gt.s32.totalorder 0, %v4641
        %v4643 = vsel %vm4642, 0, %v4641
        %v4644 = vsub.s32 32, %v4643
        %v4645 = vshll.u32 %v4636, %v4643
        %v4646 = vshrl.u32 %v4628, %v4644
        %v4647 = vor.u32 %v4645, %v4646
        %v4648 = vsub.s32 4294967266, %v4643
        %v4649 = vadd.s32 %v4648, 127
        %v4650 = vshll.u32 %v4649, 23
        %v4651 = vor.u32 4788187, %v4650
        %v4652 = vand.u32 2147483647, %v4651
        %v4654 = vcvt.s32.f32 %v4647
        %v4655 = vmul.f32 %v4654, %v4652
        %v4656 = vxor.u32 %v4655, 2147483648
        %v4657 = vsel %vm4536, %v4656, %v4655
        %v4658 = vsub.s32 4, %v4634
        %v4659 = vsel %vm4536, %v4658, %v4634
        %v4660 = vsel %vm4535, %v652, %v4657
        %v4661 = vsel %vm4535, 0, %v4659
        %v4662 = vmul.f32 %v4660, %v4660
        %v4663 = vmul.f32 %v4662, -0.001358992
        %v4664 = vadd.f32 %v4663, 0.041655596
        %v4665 = vmul.f32 %v4662, %v4664
        %v4666 = vadd.f32 %v4665, -0.4999988
        %v4667 = vmul.f32 %v4662, %v4666
        %v4668 = vadd.f32 1.0, %v4667
        %v4669 = vmul.f32 %v4660, %v4660
        %v4670 = vmul.f32 %v4669, -0.00019511016
        %v4671 = vadd.f32 %v4670, 0.008332121
        %v4672 = vmul.f32 %v4669, %v4671
        %v4673 = vadd.f32 %v4672, -0.16666654
        %v4674 = vmul.f32 %v4669, %v4673
        %v4675 = vadd.f32 %v4674, 1.0
        %v4676 = vmul.f32 %v4675, %v4660
        %vm4677 = vweird.f32 %v652
        %v4678 = vadd.s32 %v4661, 3
        %v4679 = vand.u32 %v4678, 3
        %vm4680 = vcmp.lt.s32.totalorder %v4679, 2
        %vm4681 = vcmp.eq.s32.totalorder %v4679, 0
        %v4682 = vxor.u32 %v4676, 2147483648
        %v4683 = vsel %vm4681, %v4668, %v4682
        %vm4684 = vcmp.eq.s32.totalorder %v4679, 2
        %v4685 = vxor.u32 %v4668, 2147483648
        %v4686 = vsel %vm4684, %v4685, %v4676
        %v4687 = vsel %vm4680, %v4683, %v4686
        %v4688 = vsel %vm4677, nan, %v4687
        %v4689 = vand.u32 2147483647, %v653
        %vm4690 = vcmp.le.f32.partialorder %v4689, 0.7853982
        %vm4691 = vcmp.lt.s32.totalorder %v653, 0
        %v4692 = vand.u32 %v653, 2139095040
        %v4693 = vshrl.u32 %v4692, 23
        %v4694 = vsub.s32 %v4693, 127
        %v4695 = vand.u32 2147483647, %v653
        %v4696 = vand.u32 %v4695, 8388607
        %v4697 = vor.u32 %v4696, 8388608
        %v4698 = vsub.s32 0, %v4697
        %v4699 = vadd.s32 %v4694, 1
        %vm4700 = vcmp.gt.s32.totalorder %v4699, 0
        %v4701 = vsel %vm4700, %v4699, 0
        %v4702 = vshrl.u32 %v4701, 5
        %v4703 = vand.u32 %v4701, 31
        %v4704 = vsub.s32 32, %v4703
        %v4705 = vshrl.u32 683565275, %v4704
        %v4706 = vshll.u32 683565275, %v4703
        %v4707 = vshrl.u32 2475754826, %v4704
        %v4708 = vor.u32 %v4706, %v4707
        %v4709 = vshll.u32 2475754826, %v4703
        %v4710 = vshrl.u32 2131351028, %v4704
        %v4711 = vor.u32 %v4709, %v4710
        %v4712 = vshll.u32 2131351028, %v4703
        %v4713 = vshrl.u32 2102212464, %v4704
        %v4714 = vor.u32 %v4712, %v4713
        %v4715 = vshll.u32 2102212464, %v4703
        %v4716 = vshrl.u32 920167782, %v4704
        %v4717 = vor.u32 %v4715, %v4716
        %v4718 = vshll.u32 920167782, %v4703
        %v4719 = vshrl.u32 1326507024, %v4704
        %v4720 = vor.u32 %v4718, %v4719
        %vm4721 = vcmp.lt.s32.totalorder %v4702, 1
        %vm4722 = vcmp.lt.s32.totalorder %v4702, 2
        %vm4723 = vcmp.lt.s32.totalorder %v4702, 3
        %vm4724 = vcmp.lt.s32.totalorder %v4702, 4
        %v4725 = vsel %vm4721, %v4705, %v4708
        %v4726 = vsel %vm4724, %v4714, 2102212464
        %v4727 = vsel %vm4723, %v4711, %v4726
        %v4728 = vsel %vm4722, %v4725, %v4727
        %v4729 = vsel %vm4721, %v4708, %v4711
        %v4730 = vsel %vm4724, %v4717, 920167782
        %v4731 = vsel %vm4723, %v4714, %v4730
        %v4732 = vsel %vm4722, %v4729, %v4731
        %v4733 = vsel %vm4721, %v4711, %v4714
        %v4734 = vsel %vm4724, %v4720, 1326507024
        %v4735 = vsel %vm4723, %v4717, %v4734
        %v4736 = vsel %vm4722, %v4733, %v4735
        %v4737 = vshll.u32 %v4697, 8
        %v4738 = vand.u32 %v4737, 65535
        %v4739 = vshrl.u32 %v4737, 16
        %v4740 = vand.u32 %v4736, 65535
        %v4741 = vshrl.u32 %v4736, 16
        %v4742 = vmul.u32 %v4738, %v4740
        %v4743 = vmul.u32 %v4738, %v4741
        %v4744 = vmul.u32 %v4739, %v4740
        %v4745 = vmul.u32 %v4739, %v4741
        %v4746 = vshll.u32 %v4743, 16
        %v4747 = vshrl.u32 %v4743, 16
        %v4748 = vshll.u32 %v4744, 16
        %v4749 = vshrl.u32 %v4744, 16
        %vm4750 = vc.u32 %v4742, %v4746
        %v4751 = vsel %vm4750, 1, 0
        %v4752 = vadd.s32 %v4742, %v4746
        %v4753 = vadd.s32 %v4745, %v4751
        %vm4754 = vc.u32 %v4752, %v4748
        %v4755 = vsel %vm4754, 1, 0
        %v4756 = vadd.s32 %v4752, %v4748
        %v4757 = vadd.s32 %v4753, %v4755
        %v4758 = vadd.s32 %v4757, %v4747
        %v4759 = vadd.s32 %v4758, %v4749
        %v4760 = vand.u32 %v4737, 65535
        %v4761 = vshrl.u32 %v4737, 16
        %v4762 = vand.u32 %v4732, 65535
        %v4763 = vshrl.u32 %v4732, 16
        %v4764 = vmul.u32 %v4760, %v4762
        %v4765 = vmul.u32 %v4760, %v4763
        %v4766 = vmul.u32 %v4761, %v4762
        %v4767 = vmul.u32 %v4761, %v4763
        %v4768 = vshll.u32 %v4765, 16
        %v4769 = vshrl.u32 %v4765, 16
        %v4770 = vshll.u32 %v4766, 16
        %v4771 = vshrl.u32 %v4766, 16
        %vm4772 = vc.u32 %v4764, %v4768
        %v4773 = vsel %vm4772, 1, 0
        %v4774 = vadd.s32 %v4764, %v4768
        %v4775 = vadd.s32 %v4767, %v4773
        %vm4776 = vc.u32 %v4774, %v4770
        %v4777 = vsel %vm4776, 1, 0
        %v4778 = vadd.s32 %v4774, %v4770
        %v4779 = vadd.s32 %v4775, %v4777
        %v4780 = vadd.s32 %v4779, %v4769
        %v4781 = vadd.s32 %v4780, %v4771
        %v4782 = vmul.u32 %v4737, %v4728
        %v4783 = vadd.s32 %v4759, %v4778
        %vm4784 = vc.u32 %v4759, %v4778
        %v4785 = vadd.s32 %v4781, 1
        %v4786 = vsel %vm4784, %v4785, %v4781
        %v4787 = vadd.s32 %v4782, %v4786
        %v4788 = vadd.s32 %v4787, 536870912
        %v4789 = vshrl.u32 %v4788, 30
        %v4790 = vshll.u32 %v4789, 30
        %v4791 = vsub.s32 %v4787, %v4790
        %vm4792 = vcmp.lt.s32.totalorder %v4791, 0
        %v4793 = vsub.s32 0, %v4791
        %v4794 = vsel %vm4792, %v4793, %v4791
        %v4795 = vclz %v4794
        %v4796 = vsub.s32 %v4795, 2
        %vm4797 = vcmp.gt.s32.totalorder 0, %v4796
        %v4798 = vsel %vm4797, 0, %v4796
        %v4799 = vsub.s32 32, %v4798
        %v4800 = vshll.u32 %v4791, %v4798
        %v4801 = vshrl.u32 %v4783, %v4799
        %v4802 = vor.u32 %v4800, %v4801
        %v4803 = vsub.s32 4294967266, %v4798
        %v4804 = vadd.s32 %v4803, 127
        %v4805 = vshll.u32 %v4804, 23
        %v4806 = vor.u32 4788187, %v4805
        %v4807 = vand.u32 2147483647, %v4806
        %v4809 = vcvt.s32.f32 %v4802
        %v4810 = vmul.f32 %v4809, %v4807
        %v4811 = vxor.u32 %v4810, 2147483648
        %v4812 = vsel %vm4691, %v4811, %v4810
        %v4813 = vsub.s32 4, %v4789
        %v4814 = vsel %vm4691, %v4813, %v4789
        %v4815 = vsel %vm4690, %v653, %v4812
        %v4816 = vsel %vm4690, 0, %v4814
        %v4817 = vmul.f32 %v4815, %v4815
        %v4818 = vmul.f32 %v4817, -0.001358992
        %v4819 = vadd.f32 %v4818, 0.041655596
        %v4820 = vmul.f32 %v4817, %v4819
        %v4821 = vadd.f32 %v4820, -0.4999988
        %v4822 = vmul.f32 %v4817, %v4821
        %v4823 = vadd.f32 1.0, %v4822
        %v4824 = vmul.f32 %v4815, %v4815
        %v4825 = vmul.f32 %v4824, -0.00019511016
        %v4826 = vadd.f32 %v4825, 0.008332121
        %v4827 = vmul.f32 %v4824, %v4826
        %v4828 = vadd.f32 %v4827, -0.16666654
        %v4829 = vmul.f32 %v4824, %v4828
        %v4830 = vadd.f32 %v4829, 1.0
        %v4831 = vmul.f32 %v4830, %v4815
        %vm4832 = vweird.f32 %v653
        %v4833 = vadd.s32 %v4816, 3
        %v4834 = vand.u32 %v4833, 3
        %vm4835 = vcmp.lt.s32.totalorder %v4834, 2
        %vm4836 = vcmp.eq.s32.totalorder %v4834, 0
        %v4837 = vxor.u32 %v4831, 2147483648
        %v4838 = vsel %vm4836, %v4823, %v4837
        %vm4839 = vcmp.eq.s32.totalorder %v4834, 2
        %v4840 = vxor.u32 %v4823, 2147483648
        %v4841 = vsel %vm4839, %v4840, %v4831
        %v4842 = vsel %vm4835, %v4838, %v4841
        %v4843 = vsel %vm4832, nan, %v4842
        %v4844 = vand.u32 2147483647, %v654
        %vm4845 = vcmp.le.f32.partialorder %v4844, 0.7853982
        %vm4846 = vcmp.lt.s32.totalorder %v654, 0
        %v4847 = vand.u32 %v654, 2139095040
        %v4848 = vshrl.u32 %v4847, 23
        %v4849 = vsub.s32 %v4848, 127
        %v4850 = vand.u32 2147483647, %v654
        %v4851 = vand.u32 %v4850, 8388607
        %v4852 = vor.u32 %v4851, 8388608
        %v4853 = vsub.s32 0, %v4852
        %v4854 = vadd.s32 %v4849, 1
        %vm4855 = vcmp.gt.s32.totalorder %v4854, 0
        %v4856 = vsel %vm4855, %v4854, 0
        %v4857 = vshrl.u32 %v4856, 5
        %v4858 = vand.u32 %v4856, 31
        %v4859 = vsub.s32 32, %v4858
        %v4860 = vshrl.u32 683565275, %v4859
        %v4861 = vshll.u32 683565275, %v4858
        %v4862 = vshrl.u32 2475754826, %v4859
        %v4863 = vor.u32 %v4861, %v4862
        %v4864 = vshll.u32 2475754826, %v4858
        %v4865 = vshrl.u32 2131351028, %v4859
        %v4866 = vor.u32 %v4864, %v4865
        %v4867 = vshll.u32 2131351028, %v4858
        %v4868 = vshrl.u32 2102212464, %v4859
        %v4869 = vor.u32 %v4867, %v4868
        %v4870 = vshll.u32 2102212464, %v4858
        %v4871 = vshrl.u32 920167782, %v4859
        %v4872 = vor.u32 %v4870, %v4871
        %v4873 = vshll.u32 920167782, %v4858
        %v4874 = vshrl.u32 1326507024, %v4859
        %v4875 = vor.u32 %v4873, %v4874
        %vm4876 = vcmp.lt.s32.totalorder %v4857, 1
        %vm4877 = vcmp.lt.s32.totalorder %v4857, 2
        %vm4878 = vcmp.lt.s32.totalorder %v4857, 3
        %vm4879 = vcmp.lt.s32.totalorder %v4857, 4
        %v4880 = vsel %vm4876, %v4860, %v4863
        %v4881 = vsel %vm4879, %v4869, 2102212464
        %v4882 = vsel %vm4878, %v4866, %v4881
        %v4883 = vsel %vm4877, %v4880, %v4882
        %v4884 = vsel %vm4876, %v4863, %v4866
        %v4885 = vsel %vm4879, %v4872, 920167782
        %v4886 = vsel %vm4878, %v4869, %v4885
        %v4887 = vsel %vm4877, %v4884, %v4886
        %v4888 = vsel %vm4876, %v4866, %v4869
        %v4889 = vsel %vm4879, %v4875, 1326507024
        %v4890 = vsel %vm4878, %v4872, %v4889
        %v4891 = vsel %vm4877, %v4888, %v4890
        %v4892 = vshll.u32 %v4852, 8
        %v4893 = vand.u32 %v4892, 65535
        %v4894 = vshrl.u32 %v4892, 16
        %v4895 = vand.u32 %v4891, 65535
        %v4896 = vshrl.u32 %v4891, 16
        %v4897 = vmul.u32 %v4893, %v4895
        %v4898 = vmul.u32 %v4893, %v4896
        %v4899 = vmul.u32 %v4894, %v4895
        %v4900 = vmul.u32 %v4894, %v4896
        %v4901 = vshll.u32 %v4898, 16
        %v4902 = vshrl.u32 %v4898, 16
        %v4903 = vshll.u32 %v4899, 16
        %v4904 = vshrl.u32 %v4899, 16
        %vm4905 = vc.u32 %v4897, %v4901
        %v4906 = vsel %vm4905, 1, 0
        %v4907 = vadd.s32 %v4897, %v4901
        %v4908 = vadd.s32 %v4900, %v4906
        %vm4909 = vc.u32 %v4907, %v4903
        %v4910 = vsel %vm4909, 1, 0
        %v4911 = vadd.s32 %v4907, %v4903
        %v4912 = vadd.s32 %v4908, %v4910
        %v4913 = vadd.s32 %v4912, %v4902
        %v4914 = vadd.s32 %v4913, %v4904
        %v4915 = vand.u32 %v4892, 65535
        %v4916 = vshrl.u32 %v4892, 16
        %v4917 = vand.u32 %v4887, 65535
        %v4918 = vshrl.u32 %v4887, 16
        %v4919 = vmul.u32 %v4915, %v4917
        %v4920 = vmul.u32 %v4915, %v4918
        %v4921 = vmul.u32 %v4916, %v4917
        %v4922 = vmul.u32 %v4916, %v4918
        %v4923 = vshll.u32 %v4920, 16
        %v4924 = vshrl.u32 %v4920, 16
        %v4925 = vshll.u32 %v4921, 16
        %v4926 = vshrl.u32 %v4921, 16
        %vm4927 = vc.u32 %v4919, %v4923
        %v4928 = vsel %vm4927, 1, 0
        %v4929 = vadd.s32 %v4919, %v4923
        %v4930 = vadd.s32 %v4922, %v4928
        %vm4931 = vc.u32 %v4929, %v4925
        %v4932 = vsel %vm4931, 1, 0
        %v4933 = vadd.s32 %v4929, %v4925
        %v4934 = vadd.s32 %v4930, %v4932
        %v4935 = vadd.s32 %v4934, %v4924
        %v4936 = vadd.s32 %v4935, %v4926
        %v4937 = vmul.u32 %v4892, %v4883
        %v4938 = vadd.s32 %v4914, %v4933
        %vm4939 = vc.u32 %v4914, %v4933
        %v4940 = vadd.s32 %v4936, 1
        %v4941 = vsel %vm4939, %v4940, %v4936
        %v4942 = vadd.s32 %v4937, %v4941
        %v4943 = vadd.s32 %v4942, 536870912
        %v4944 = vshrl.u32 %v4943, 30
        %v4945 = vshll.u32 %v4944, 30
        %v4946 = vsub.s32 %v4942, %v4945
        %vm4947 = vcmp.lt.s32.totalorder %v4946, 0
        %v4948 = vsub.s32 0, %v4946
        %v4949 = vsel %vm4947, %v4948, %v4946
        %v4950 = vclz %v4949
        %v4951 = vsub.s32 %v4950, 2
        %vm4952 = vcmp.gt.s32.totalorder 0, %v4951
        %v4953 = vsel %vm4952, 0, %v4951
        %v4954 = vsub.s32 32, %v4953
        %v4955 = vshll.u32 %v4946, %v4953
        %v4956 = vshrl.u32 %v4938, %v4954
        %v4957 = vor.u32 %v4955, %v4956
        %v4958 = vsub.s32 4294967266, %v4953
        %v4959 = vadd.s32 %v4958, 127
        %v4960 = vshll.u32 %v4959, 23
        %v4961 = vor.u32 4788187, %v4960
        %v4962 = vand.u32 2147483647, %v4961
        %v4964 = vcvt.s32.f32 %v4957
        %v4965 = vmul.f32 %v4964, %v4962
        %v4966 = vxor.u32 %v4965, 2147483648
        %v4967 = vsel %vm4846, %v4966, %v4965
        %v4968 = vsub.s32 4, %v4944
        %v4969 = vsel %vm4846, %v4968, %v4944
        %v4970 = vsel %vm4845, %v654, %v4967
        %v4971 = vsel %vm4845, 0, %v4969
        %v4972 = vmul.f32 %v4970, %v4970
        %v4973 = vmul.f32 %v4972, -0.001358992
        %v4974 = vadd.f32 %v4973, 0.041655596
        %v4975 = vmul.f32 %v4972, %v4974
        %v4976 = vadd.f32 %v4975, -0.4999988
        %v4977 = vmul.f32 %v4972, %v4976
        %v4978 = vadd.f32 1.0, %v4977
        %v4979 = vmul.f32 %v4970, %v4970
        %v4980 = vmul.f32 %v4979, -0.00019511016
        %v4981 = vadd.f32 %v4980, 0.008332121
        %v4982 = vmul.f32 %v4979, %v4981
        %v4983 = vadd.f32 %v4982, -0.16666654
        %v4984 = vmul.f32 %v4979, %v4983
        %v4985 = vadd.f32 %v4984, 1.0
        %v4986 = vmul.f32 %v4985, %v4970
        %vm4987 = vweird.f32 %v654
        %v4988 = vadd.s32 %v4971, 3
        %v4989 = vand.u32 %v4988, 3
        %vm4990 = vcmp.lt.s32.totalorder %v4989, 2
        %vm4991 = vcmp.eq.s32.totalorder %v4989, 0
        %v4992 = vxor.u32 %v4986, 2147483648
        %v4993 = vsel %vm4991, %v4978, %v4992
        %vm4994 = vcmp.eq.s32.totalorder %v4989, 2
        %v4995 = vxor.u32 %v4978, 2147483648
        %v4996 = vsel %vm4994, %v4995, %v4986
        %v4997 = vsel %vm4990, %v4993, %v4996
        %v4998 = vsel %vm4987, nan, %v4997
        %v4999 = vand.u32 2147483647, %v655
        %vm5000 = vcmp.le.f32.partialorder %v4999, 0.7853982
        %vm5001 = vcmp.lt.s32.totalorder %v655, 0
        %v5002 = vand.u32 %v655, 2139095040
        %v5003 = vshrl.u32 %v5002, 23
        %v5004 = vsub.s32 %v5003, 127
        %v5005 = vand.u32 2147483647, %v655
        %v5006 = vand.u32 %v5005, 8388607
        %v5007 = vor.u32 %v5006, 8388608
        %v5008 = vsub.s32 0, %v5007
        %v5009 = vadd.s32 %v5004, 1
        %vm5010 = vcmp.gt.s32.totalorder %v5009, 0
        %v5011 = vsel %vm5010, %v5009, 0
        %v5012 = vshrl.u32 %v5011, 5
        %v5013 = vand.u32 %v5011, 31
        %v5014 = vsub.s32 32, %v5013
        %v5015 = vshrl.u32 683565275, %v5014
        %v5016 = vshll.u32 683565275, %v5013
        %v5017 = vshrl.u32 2475754826, %v5014
        %v5018 = vor.u32 %v5016, %v5017
        %v5019 = vshll.u32 2475754826, %v5013
        %v5020 = vshrl.u32 2131351028, %v5014
        %v5021 = vor.u32 %v5019, %v5020
        %v5022 = vshll.u32 2131351028, %v5013
        %v5023 = vshrl.u32 2102212464, %v5014
        %v5024 = vor.u32 %v5022, %v5023
        %v5025 = vshll.u32 2102212464, %v5013
        %v5026 = vshrl.u32 920167782, %v5014
        %v5027 = vor.u32 %v5025, %v5026
        %v5028 = vshll.u32 920167782, %v5013
        %v5029 = vshrl.u32 1326507024, %v5014
        %v5030 = vor.u32 %v5028, %v5029
        %vm5031 = vcmp.lt.s32.totalorder %v5012, 1
        %vm5032 = vcmp.lt.s32.totalorder %v5012, 2
        %vm5033 = vcmp.lt.s32.totalorder %v5012, 3
        %vm5034 = vcmp.lt.s32.totalorder %v5012, 4
        %v5035 = vsel %vm5031, %v5015, %v5018
        %v5036 = vsel %vm5034, %v5024, 2102212464
        %v5037 = vsel %vm5033, %v5021, %v5036
        %v5038 = vsel %vm5032, %v5035, %v5037
        %v5039 = vsel %vm5031, %v5018, %v5021
        %v5040 = vsel %vm5034, %v5027, 920167782
        %v5041 = vsel %vm5033, %v5024, %v5040
        %v5042 = vsel %vm5032, %v5039, %v5041
        %v5043 = vsel %vm5031, %v5021, %v5024
        %v5044 = vsel %vm5034, %v5030, 1326507024
        %v5045 = vsel %vm5033, %v5027, %v5044
        %v5046 = vsel %vm5032, %v5043, %v5045
        %v5047 = vshll.u32 %v5007, 8
        %v5048 = vand.u32 %v5047, 65535
        %v5049 = vshrl.u32 %v5047, 16
        %v5050 = vand.u32 %v5046, 65535
        %v5051 = vshrl.u32 %v5046, 16
        %v5052 = vmul.u32 %v5048, %v5050
        %v5053 = vmul.u32 %v5048, %v5051
        %v5054 = vmul.u32 %v5049, %v5050
        %v5055 = vmul.u32 %v5049, %v5051
        %v5056 = vshll.u32 %v5053, 16
        %v5057 = vshrl.u32 %v5053, 16
        %v5058 = vshll.u32 %v5054, 16
        %v5059 = vshrl.u32 %v5054, 16
        %vm5060 = vc.u32 %v5052, %v5056
        %v5061 = vsel %vm5060, 1, 0
        %v5062 = vadd.s32 %v5052, %v5056
        %v5063 = vadd.s32 %v5055, %v5061
        %vm5064 = vc.u32 %v5062, %v5058
        %v5065 = vsel %vm5064, 1, 0
        %v5066 = vadd.s32 %v5062, %v5058
        %v5067 = vadd.s32 %v5063, %v5065
        %v5068 = vadd.s32 %v5067, %v5057
        %v5069 = vadd.s32 %v5068, %v5059
        %v5070 = vand.u32 %v5047, 65535
        %v5071 = vshrl.u32 %v5047, 16
        %v5072 = vand.u32 %v5042, 65535
        %v5073 = vshrl.u32 %v5042, 16
        %v5074 = vmul.u32 %v5070, %v5072
        %v5075 = vmul.u32 %v5070, %v5073
        %v5076 = vmul.u32 %v5071, %v5072
        %v5077 = vmul.u32 %v5071, %v5073
        %v5078 = vshll.u32 %v5075, 16
        %v5079 = vshrl.u32 %v5075, 16
        %v5080 = vshll.u32 %v5076, 16
        %v5081 = vshrl.u32 %v5076, 16
        %vm5082 = vc.u32 %v5074, %v5078
        %v5083 = vsel %vm5082, 1, 0
        %v5084 = vadd.s32 %v5074, %v5078
        %v5085 = vadd.s32 %v5077, %v5083
        %vm5086 = vc.u32 %v5084, %v5080
        %v5087 = vsel %vm5086, 1, 0
        %v5088 = vadd.s32 %v5084, %v5080
        %v5089 = vadd.s32 %v5085, %v5087
        %v5090 = vadd.s32 %v5089, %v5079
        %v5091 = vadd.s32 %v5090, %v5081
        %v5092 = vmul.u32 %v5047, %v5038
        %v5093 = vadd.s32 %v5069, %v5088
        %vm5094 = vc.u32 %v5069, %v5088
        %v5095 = vadd.s32 %v5091, 1
        %v5096 = vsel %vm5094, %v5095, %v5091
        %v5097 = vadd.s32 %v5092, %v5096
        %v5098 = vadd.s32 %v5097, 536870912
        %v5099 = vshrl.u32 %v5098, 30
        %v5100 = vshll.u32 %v5099, 30
        %v5101 = vsub.s32 %v5097, %v5100
        %vm5102 = vcmp.lt.s32.totalorder %v5101, 0
        %v5103 = vsub.s32 0, %v5101
        %v5104 = vsel %vm5102, %v5103, %v5101
        %v5105 = vclz %v5104
        %v5106 = vsub.s32 %v5105, 2
        %vm5107 = vcmp.gt.s32.totalorder 0, %v5106
        %v5108 = vsel %vm5107, 0, %v5106
        %v5109 = vsub.s32 32, %v5108
        %v5110 = vshll.u32 %v5101, %v5108
        %v5111 = vshrl.u32 %v5093, %v5109
        %v5112 = vor.u32 %v5110, %v5111
        %v5113 = vsub.s32 4294967266, %v5108
        %v5114 = vadd.s32 %v5113, 127
        %v5115 = vshll.u32 %v5114, 23
        %v5116 = vor.u32 4788187, %v5115
        %v5117 = vand.u32 2147483647, %v5116
        %v5119 = vcvt.s32.f32 %v5112
        %v5120 = vmul.f32 %v5119, %v5117
        %v5121 = vxor.u32 %v5120, 2147483648
        %v5122 = vsel %vm5001, %v5121, %v5120
        %v5123 = vsub.s32 4, %v5099
        %v5124 = vsel %vm5001, %v5123, %v5099
        %v5125 = vsel %vm5000, %v655, %v5122
        %v5126 = vsel %vm5000, 0, %v5124
        %v5127 = vmul.f32 %v5125, %v5125
        %v5128 = vmul.f32 %v5127, -0.001358992
        %v5129 = vadd.f32 %v5128, 0.041655596
        %v5130 = vmul.f32 %v5127, %v5129
        %v5131 = vadd.f32 %v5130, -0.4999988
        %v5132 = vmul.f32 %v5127, %v5131
        %v5133 = vadd.f32 1.0, %v5132
        %v5134 = vmul.f32 %v5125, %v5125
        %v5135 = vmul.f32 %v5134, -0.00019511016
        %v5136 = vadd.f32 %v5135, 0.008332121
        %v5137 = vmul.f32 %v5134, %v5136
        %v5138 = vadd.f32 %v5137, -0.16666654
        %v5139 = vmul.f32 %v5134, %v5138
        %v5140 = vadd.f32 %v5139, 1.0
        %v5141 = vmul.f32 %v5140, %v5125
        %vm5142 = vweird.f32 %v655
        %v5143 = vadd.s32 %v5126, 3
        %v5144 = vand.u32 %v5143, 3
        %vm5145 = vcmp.lt.s32.totalorder %v5144, 2
        %vm5146 = vcmp.eq.s32.totalorder %v5144, 0
        %v5147 = vxor.u32 %v5141, 2147483648
        %v5148 = vsel %vm5146, %v5133, %v5147
        %vm5149 = vcmp.eq.s32.totalorder %v5144, 2
        %v5150 = vxor.u32 %v5133, 2147483648
        %v5151 = vsel %vm5149, %v5150, %v5141
        %v5152 = vsel %vm5145, %v5148, %v5151
        %v5153 = vsel %vm5142, nan, %v5152
        %v5154 = vand.u32 2147483647, %v656
        %vm5155 = vcmp.le.f32.partialorder %v5154, 0.7853982
        %vm5156 = vcmp.lt.s32.totalorder %v656, 0
        %v5157 = vand.u32 %v656, 2139095040
        %v5158 = vshrl.u32 %v5157, 23
        %v5159 = vsub.s32 %v5158, 127
        %v5160 = vand.u32 2147483647, %v656
        %v5161 = vand.u32 %v5160, 8388607
        %v5162 = vor.u32 %v5161, 8388608
        %v5163 = vsub.s32 0, %v5162
        %v5164 = vadd.s32 %v5159, 1
        %vm5165 = vcmp.gt.s32.totalorder %v5164, 0
        %v5166 = vsel %vm5165, %v5164, 0
        %v5167 = vshrl.u32 %v5166, 5
        %v5168 = vand.u32 %v5166, 31
        %v5169 = vsub.s32 32, %v5168
        %v5170 = vshrl.u32 683565275, %v5169
        %v5171 = vshll.u32 683565275, %v5168
        %v5172 = vshrl.u32 2475754826, %v5169
        %v5173 = vor.u32 %v5171, %v5172
        %v5174 = vshll.u32 2475754826, %v5168
        %v5175 = vshrl.u32 2131351028, %v5169
        %v5176 = vor.u32 %v5174, %v5175
        %v5177 = vshll.u32 2131351028, %v5168
        %v5178 = vshrl.u32 2102212464, %v5169
        %v5179 = vor.u32 %v5177, %v5178
        %v5180 = vshll.u32 2102212464, %v5168
        %v5181 = vshrl.u32 920167782, %v5169
        %v5182 = vor.u32 %v5180, %v5181
        %v5183 = vshll.u32 920167782, %v5168
        %v5184 = vshrl.u32 1326507024, %v5169
        %v5185 = vor.u32 %v5183, %v5184
        %vm5186 = vcmp.lt.s32.totalorder %v5167, 1
        %vm5187 = vcmp.lt.s32.totalorder %v5167, 2
        %vm5188 = vcmp.lt.s32.totalorder %v5167, 3
        %vm5189 = vcmp.lt.s32.totalorder %v5167, 4
        %v5190 = vsel %vm5186, %v5170, %v5173
        %v5191 = vsel %vm5189, %v5179, 2102212464
        %v5192 = vsel %vm5188, %v5176, %v5191
        %v5193 = vsel %vm5187, %v5190, %v5192
        %v5194 = vsel %vm5186, %v5173, %v5176
        %v5195 = vsel %vm5189, %v5182, 920167782
        %v5196 = vsel %vm5188, %v5179, %v5195
        %v5197 = vsel %vm5187, %v5194, %v5196
        %v5198 = vsel %vm5186, %v5176, %v5179
        %v5199 = vsel %vm5189, %v5185, 1326507024
        %v5200 = vsel %vm5188, %v5182, %v5199
        %v5201 = vsel %vm5187, %v5198, %v5200
        %v5202 = vshll.u32 %v5162, 8
        %v5203 = vand.u32 %v5202, 65535
        %v5204 = vshrl.u32 %v5202, 16
        %v5205 = vand.u32 %v5201, 65535
        %v5206 = vshrl.u32 %v5201, 16
        %v5207 = vmul.u32 %v5203, %v5205
        %v5208 = vmul.u32 %v5203, %v5206
        %v5209 = vmul.u32 %v5204, %v5205
        %v5210 = vmul.u32 %v5204, %v5206
        %v5211 = vshll.u32 %v5208, 16
        %v5212 = vshrl.u32 %v5208, 16
        %v5213 = vshll.u32 %v5209, 16
        %v5214 = vshrl.u32 %v5209, 16
        %vm5215 = vc.u32 %v5207, %v5211
        %v5216 = vsel %vm5215, 1, 0
        %v5217 = vadd.s32 %v5207, %v5211
        %v5218 = vadd.s32 %v5210, %v5216
        %vm5219 = vc.u32 %v5217, %v5213
        %v5220 = vsel %vm5219, 1, 0
        %v5221 = vadd.s32 %v5217, %v5213
        %v5222 = vadd.s32 %v5218, %v5220
        %v5223 = vadd.s32 %v5222, %v5212
        %v5224 = vadd.s32 %v5223, %v5214
        %v5225 = vand.u32 %v5202, 65535
        %v5226 = vshrl.u32 %v5202, 16
        %v5227 = vand.u32 %v5197, 65535
        %v5228 = vshrl.u32 %v5197, 16
        %v5229 = vmul.u32 %v5225, %v5227
        %v5230 = vmul.u32 %v5225, %v5228
        %v5231 = vmul.u32 %v5226, %v5227
        %v5232 = vmul.u32 %v5226, %v5228
        %v5233 = vshll.u32 %v5230, 16
        %v5234 = vshrl.u32 %v5230, 16
        %v5235 = vshll.u32 %v5231, 16
        %v5236 = vshrl.u32 %v5231, 16
        %vm5237 = vc.u32 %v5229, %v5233
        %v5238 = vsel %vm5237, 1, 0
        %v5239 = vadd.s32 %v5229, %v5233
        %v5240 = vadd.s32 %v5232, %v5238
        %vm5241 = vc.u32 %v5239, %v5235
        %v5242 = vsel %vm5241, 1, 0
        %v5243 = vadd.s32 %v5239, %v5235
        %v5244 = vadd.s32 %v5240, %v5242
        %v5245 = vadd.s32 %v5244, %v5234
        %v5246 = vadd.s32 %v5245, %v5236
        %v5247 = vmul.u32 %v5202, %v5193
        %v5248 = vadd.s32 %v5224, %v5243
        %vm5249 = vc.u32 %v5224, %v5243
        %v5250 = vadd.s32 %v5246, 1
        %v5251 = vsel %vm5249, %v5250, %v5246
        %v5252 = vadd.s32 %v5247, %v5251
        %v5253 = vadd.s32 %v5252, 536870912
        %v5254 = vshrl.u32 %v5253, 30
        %v5255 = vshll.u32 %v5254, 30
        %v5256 = vsub.s32 %v5252, %v5255
        %vm5257 = vcmp.lt.s32.totalorder %v5256, 0
        %v5258 = vsub.s32 0, %v5256
        %v5259 = vsel %vm5257, %v5258, %v5256
        %v5260 = vclz %v5259
        %v5261 = vsub.s32 %v5260, 2
        %vm5262 = vcmp.gt.s32.totalorder 0, %v5261
        %v5263 = vsel %vm5262, 0, %v5261
        %v5264 = vsub.s32 32, %v5263
        %v5265 = vshll.u32 %v5256, %v5263
        %v5266 = vshrl.u32 %v5248, %v5264
        %v5267 = vor.u32 %v5265, %v5266
        %v5268 = vsub.s32 4294967266, %v5263
        %v5269 = vadd.s32 %v5268, 127
        %v5270 = vshll.u32 %v5269, 23
        %v5271 = vor.u32 4788187, %v5270
        %v5272 = vand.u32 2147483647, %v5271
        %v5274 = vcvt.s32.f32 %v5267
        %v5275 = vmul.f32 %v5274, %v5272
        %v5276 = vxor.u32 %v5275, 2147483648
        %v5277 = vsel %vm5156, %v5276, %v5275
        %v5278 = vsub.s32 4, %v5254
        %v5279 = vsel %vm5156, %v5278, %v5254
        %v5280 = vsel %vm5155, %v656, %v5277
        %v5281 = vsel %vm5155, 0, %v5279
        %v5282 = vmul.f32 %v5280, %v5280
        %v5283 = vmul.f32 %v5282, -0.001358992
        %v5284 = vadd.f32 %v5283, 0.041655596
        %v5285 = vmul.f32 %v5282, %v5284
        %v5286 = vadd.f32 %v5285, -0.4999988
        %v5287 = vmul.f32 %v5282, %v5286
        %v5288 = vadd.f32 1.0, %v5287
        %v5289 = vmul.f32 %v5280, %v5280
        %v5290 = vmul.f32 %v5289, -0.00019511016
        %v5291 = vadd.f32 %v5290, 0.008332121
        %v5292 = vmul.f32 %v5289, %v5291
        %v5293 = vadd.f32 %v5292, -0.16666654
        %v5294 = vmul.f32 %v5289, %v5293
        %v5295 = vadd.f32 %v5294, 1.0
        %v5296 = vmul.f32 %v5295, %v5280
        %vm5297 = vweird.f32 %v656
        %v5298 = vadd.s32 %v5281, 3
        %v5299 = vand.u32 %v5298, 3
        %vm5300 = vcmp.lt.s32.totalorder %v5299, 2
        %vm5301 = vcmp.eq.s32.totalorder %v5299, 0
        %v5302 = vxor.u32 %v5296, 2147483648
        %v5303 = vsel %vm5301, %v5288, %v5302
        %vm5304 = vcmp.eq.s32.totalorder %v5299, 2
        %v5305 = vxor.u32 %v5288, 2147483648
        %v5306 = vsel %vm5304, %v5305, %v5296
        %v5307 = vsel %vm5300, %v5303, %v5306
        %v5308 = vsel %vm5297, nan, %v5307
        %v5309 = vand.u32 2147483647, %v657
        %vm5310 = vcmp.le.f32.partialorder %v5309, 0.7853982
        %vm5311 = vcmp.lt.s32.totalorder %v657, 0
        %v5312 = vand.u32 %v657, 2139095040
        %v5313 = vshrl.u32 %v5312, 23
        %v5314 = vsub.s32 %v5313, 127
        %v5315 = vand.u32 2147483647, %v657
        %v5316 = vand.u32 %v5315, 8388607
        %v5317 = vor.u32 %v5316, 8388608
        %v5318 = vsub.s32 0, %v5317
        %v5319 = vadd.s32 %v5314, 1
        %vm5320 = vcmp.gt.s32.totalorder %v5319, 0
        %v5321 = vsel %vm5320, %v5319, 0
        %v5322 = vshrl.u32 %v5321, 5
        %v5323 = vand.u32 %v5321, 31
        %v5324 = vsub.s32 32, %v5323
        %v5325 = vshrl.u32 683565275, %v5324
        %v5326 = vshll.u32 683565275, %v5323
        %v5327 = vshrl.u32 2475754826, %v5324
        %v5328 = vor.u32 %v5326, %v5327
        %v5329 = vshll.u32 2475754826, %v5323
        %v5330 = vshrl.u32 2131351028, %v5324
        %v5331 = vor.u32 %v5329, %v5330
        %v5332 = vshll.u32 2131351028, %v5323
        %v5333 = vshrl.u32 2102212464, %v5324
        %v5334 = vor.u32 %v5332, %v5333
        %v5335 = vshll.u32 2102212464, %v5323
        %v5336 = vshrl.u32 920167782, %v5324
        %v5337 = vor.u32 %v5335, %v5336
        %v5338 = vshll.u32 920167782, %v5323
        %v5339 = vshrl.u32 1326507024, %v5324
        %v5340 = vor.u32 %v5338, %v5339
        %vm5341 = vcmp.lt.s32.totalorder %v5322, 1
        %vm5342 = vcmp.lt.s32.totalorder %v5322, 2
        %vm5343 = vcmp.lt.s32.totalorder %v5322, 3
        %vm5344 = vcmp.lt.s32.totalorder %v5322, 4
        %v5345 = vsel %vm5341, %v5325, %v5328
        %v5346 = vsel %vm5344, %v5334, 2102212464
        %v5347 = vsel %vm5343, %v5331, %v5346
        %v5348 = vsel %vm5342, %v5345, %v5347
        %v5349 = vsel %vm5341, %v5328, %v5331
        %v5350 = vsel %vm5344, %v5337, 920167782
        %v5351 = vsel %vm5343, %v5334, %v5350
        %v5352 = vsel %vm5342, %v5349, %v5351
        %v5353 = vsel %vm5341, %v5331, %v5334
        %v5354 = vsel %vm5344, %v5340, 1326507024
        %v5355 = vsel %vm5343, %v5337, %v5354
        %v5356 = vsel %vm5342, %v5353, %v5355
        %v5357 = vshll.u32 %v5317, 8
        %v5358 = vand.u32 %v5357, 65535
        %v5359 = vshrl.u32 %v5357, 16
        %v5360 = vand.u32 %v5356, 65535
        %v5361 = vshrl.u32 %v5356, 16
        %v5362 = vmul.u32 %v5358, %v5360
        %v5363 = vmul.u32 %v5358, %v5361
        %v5364 = vmul.u32 %v5359, %v5360
        %v5365 = vmul.u32 %v5359, %v5361
        %v5366 = vshll.u32 %v5363, 16
        %v5367 = vshrl.u32 %v5363, 16
        %v5368 = vshll.u32 %v5364, 16
        %v5369 = vshrl.u32 %v5364, 16
        %vm5370 = vc.u32 %v5362, %v5366
        %v5371 = vsel %vm5370, 1, 0
        %v5372 = vadd.s32 %v5362, %v5366
        %v5373 = vadd.s32 %v5365, %v5371
        %vm5374 = vc.u32 %v5372, %v5368
        %v5375 = vsel %vm5374, 1, 0
        %v5376 = vadd.s32 %v5372, %v5368
        %v5377 = vadd.s32 %v5373, %v5375
        %v5378 = vadd.s32 %v5377, %v5367
        %v5379 = vadd.s32 %v5378, %v5369
        %v5380 = vand.u32 %v5357, 65535
        %v5381 = vshrl.u32 %v5357, 16
        %v5382 = vand.u32 %v5352, 65535
        %v5383 = vshrl.u32 %v5352, 16
        %v5384 = vmul.u32 %v5380, %v5382
        %v5385 = vmul.u32 %v5380, %v5383
        %v5386 = vmul.u32 %v5381, %v5382
        %v5387 = vmul.u32 %v5381, %v5383
        %v5388 = vshll.u32 %v5385, 16
        %v5389 = vshrl.u32 %v5385, 16
        %v5390 = vshll.u32 %v5386, 16
        %v5391 = vshrl.u32 %v5386, 16
        %vm5392 = vc.u32 %v5384, %v5388
        %v5393 = vsel %vm5392, 1, 0
        %v5394 = vadd.s32 %v5384, %v5388
        %v5395 = vadd.s32 %v5387, %v5393
        %vm5396 = vc.u32 %v5394, %v5390
        %v5397 = vsel %vm5396, 1, 0
        %v5398 = vadd.s32 %v5394, %v5390
        %v5399 = vadd.s32 %v5395, %v5397
        %v5400 = vadd.s32 %v5399, %v5389
        %v5401 = vadd.s32 %v5400, %v5391
        %v5402 = vmul.u32 %v5357, %v5348
        %v5403 = vadd.s32 %v5379, %v5398
        %vm5404 = vc.u32 %v5379, %v5398
        %v5405 = vadd.s32 %v5401, 1
        %v5406 = vsel %vm5404, %v5405, %v5401
        %v5407 = vadd.s32 %v5402, %v5406
        %v5408 = vadd.s32 %v5407, 536870912
        %v5409 = vshrl.u32 %v5408, 30
        %v5410 = vshll.u32 %v5409, 30
        %v5411 = vsub.s32 %v5407, %v5410
        %vm5412 = vcmp.lt.s32.totalorder %v5411, 0
        %v5413 = vsub.s32 0, %v5411
        %v5414 = vsel %vm5412, %v5413, %v5411
        %v5415 = vclz %v5414
        %v5416 = vsub.s32 %v5415, 2
        %vm5417 = vcmp.gt.s32.totalorder 0, %v5416
        %v5418 = vsel %vm5417, 0, %v5416
        %v5419 = vsub.s32 32, %v5418
        %v5420 = vshll.u32 %v5411, %v5418
        %v5421 = vshrl.u32 %v5403, %v5419
        %v5422 = vor.u32 %v5420, %v5421
        %v5423 = vsub.s32 4294967266, %v5418
        %v5424 = vadd.s32 %v5423, 127
        %v5425 = vshll.u32 %v5424, 23
        %v5426 = vor.u32 4788187, %v5425
        %v5427 = vand.u32 2147483647, %v5426
        %v5429 = vcvt.s32.f32 %v5422
        %v5430 = vmul.f32 %v5429, %v5427
        %v5431 = vxor.u32 %v5430, 2147483648
        %v5432 = vsel %vm5311, %v5431, %v5430
        %v5433 = vsub.s32 4, %v5409
        %v5434 = vsel %vm5311, %v5433, %v5409
        %v5435 = vsel %vm5310, %v657, %v5432
        %v5436 = vsel %vm5310, 0, %v5434
        %v5437 = vmul.f32 %v5435, %v5435
        %v5438 = vmul.f32 %v5437, -0.001358992
        %v5439 = vadd.f32 %v5438, 0.041655596
        %v5440 = vmul.f32 %v5437, %v5439
        %v5441 = vadd.f32 %v5440, -0.4999988
        %v5442 = vmul.f32 %v5437, %v5441
        %v5443 = vadd.f32 1.0, %v5442
        %v5444 = vmul.f32 %v5435, %v5435
        %v5445 = vmul.f32 %v5444, -0.00019511016
        %v5446 = vadd.f32 %v5445, 0.008332121
        %v5447 = vmul.f32 %v5444, %v5446
        %v5448 = vadd.f32 %v5447, -0.16666654
        %v5449 = vmul.f32 %v5444, %v5448
        %v5450 = vadd.f32 %v5449, 1.0
        %v5451 = vmul.f32 %v5450, %v5435
        %vm5452 = vweird.f32 %v657
        %v5453 = vadd.s32 %v5436, 3
        %v5454 = vand.u32 %v5453, 3
        %vm5455 = vcmp.lt.s32.totalorder %v5454, 2
        %vm5456 = vcmp.eq.s32.totalorder %v5454, 0
        %v5457 = vxor.u32 %v5451, 2147483648
        %v5458 = vsel %vm5456, %v5443, %v5457
        %vm5459 = vcmp.eq.s32.totalorder %v5454, 2
        %v5460 = vxor.u32 %v5443, 2147483648
        %v5461 = vsel %vm5459, %v5460, %v5451
        %v5462 = vsel %vm5455, %v5458, %v5461
        %v5463 = vsel %vm5452, nan, %v5462
        %v5464 = vand.u32 2147483647, %v658
        %vm5465 = vcmp.le.f32.partialorder %v5464, 0.7853982
        %vm5466 = vcmp.lt.s32.totalorder %v658, 0
        %v5467 = vand.u32 %v658, 2139095040
        %v5468 = vshrl.u32 %v5467, 23
        %v5469 = vsub.s32 %v5468, 127
        %v5470 = vand.u32 2147483647, %v658
        %v5471 = vand.u32 %v5470, 8388607
        %v5472 = vor.u32 %v5471, 8388608
        %v5473 = vsub.s32 0, %v5472
        %v5474 = vadd.s32 %v5469, 1
        %vm5475 = vcmp.gt.s32.totalorder %v5474, 0
        %v5476 = vsel %vm5475, %v5474, 0
        %v5477 = vshrl.u32 %v5476, 5
        %v5478 = vand.u32 %v5476, 31
        %v5479 = vsub.s32 32, %v5478
        %v5480 = vshrl.u32 683565275, %v5479
        %v5481 = vshll.u32 683565275, %v5478
        %v5482 = vshrl.u32 2475754826, %v5479
        %v5483 = vor.u32 %v5481, %v5482
        %v5484 = vshll.u32 2475754826, %v5478
        %v5485 = vshrl.u32 2131351028, %v5479
        %v5486 = vor.u32 %v5484, %v5485
        %v5487 = vshll.u32 2131351028, %v5478
        %v5488 = vshrl.u32 2102212464, %v5479
        %v5489 = vor.u32 %v5487, %v5488
        %v5490 = vshll.u32 2102212464, %v5478
        %v5491 = vshrl.u32 920167782, %v5479
        %v5492 = vor.u32 %v5490, %v5491
        %v5493 = vshll.u32 920167782, %v5478
        %v5494 = vshrl.u32 1326507024, %v5479
        %v5495 = vor.u32 %v5493, %v5494
        %vm5496 = vcmp.lt.s32.totalorder %v5477, 1
        %vm5497 = vcmp.lt.s32.totalorder %v5477, 2
        %vm5498 = vcmp.lt.s32.totalorder %v5477, 3
        %vm5499 = vcmp.lt.s32.totalorder %v5477, 4
        %v5500 = vsel %vm5496, %v5480, %v5483
        %v5501 = vsel %vm5499, %v5489, 2102212464
        %v5502 = vsel %vm5498, %v5486, %v5501
        %v5503 = vsel %vm5497, %v5500, %v5502
        %v5504 = vsel %vm5496, %v5483, %v5486
        %v5505 = vsel %vm5499, %v5492, 920167782
        %v5506 = vsel %vm5498, %v5489, %v5505
        %v5507 = vsel %vm5497, %v5504, %v5506
        %v5508 = vsel %vm5496, %v5486, %v5489
        %v5509 = vsel %vm5499, %v5495, 1326507024
        %v5510 = vsel %vm5498, %v5492, %v5509
        %v5511 = vsel %vm5497, %v5508, %v5510
        %v5512 = vshll.u32 %v5472, 8
        %v5513 = vand.u32 %v5512, 65535
        %v5514 = vshrl.u32 %v5512, 16
        %v5515 = vand.u32 %v5511, 65535
        %v5516 = vshrl.u32 %v5511, 16
        %v5517 = vmul.u32 %v5513, %v5515
        %v5518 = vmul.u32 %v5513, %v5516
        %v5519 = vmul.u32 %v5514, %v5515
        %v5520 = vmul.u32 %v5514, %v5516
        %v5521 = vshll.u32 %v5518, 16
        %v5522 = vshrl.u32 %v5518, 16
        %v5523 = vshll.u32 %v5519, 16
        %v5524 = vshrl.u32 %v5519, 16
        %vm5525 = vc.u32 %v5517, %v5521
        %v5526 = vsel %vm5525, 1, 0
        %v5527 = vadd.s32 %v5517, %v5521
        %v5528 = vadd.s32 %v5520, %v5526
        %vm5529 = vc.u32 %v5527, %v5523
        %v5530 = vsel %vm5529, 1, 0
        %v5531 = vadd.s32 %v5527, %v5523
        %v5532 = vadd.s32 %v5528, %v5530
        %v5533 = vadd.s32 %v5532, %v5522
        %v5534 = vadd.s32 %v5533, %v5524
        %v5535 = vand.u32 %v5512, 65535
        %v5536 = vshrl.u32 %v5512, 16
        %v5537 = vand.u32 %v5507, 65535
        %v5538 = vshrl.u32 %v5507, 16
        %v5539 = vmul.u32 %v5535, %v5537
        %v5540 = vmul.u32 %v5535, %v5538
        %v5541 = vmul.u32 %v5536, %v5537
        %v5542 = vmul.u32 %v5536, %v5538
        %v5543 = vshll.u32 %v5540, 16
        %v5544 = vshrl.u32 %v5540, 16
        %v5545 = vshll.u32 %v5541, 16
        %v5546 = vshrl.u32 %v5541, 16
        %vm5547 = vc.u32 %v5539, %v5543
        %v5548 = vsel %vm5547, 1, 0
        %v5549 = vadd.s32 %v5539, %v5543
        %v5550 = vadd.s32 %v5542, %v5548
        %vm5551 = vc.u32 %v5549, %v5545
        %v5552 = vsel %vm5551, 1, 0
        %v5553 = vadd.s32 %v5549, %v5545
        %v5554 = vadd.s32 %v5550, %v5552
        %v5555 = vadd.s32 %v5554, %v5544
        %v5556 = vadd.s32 %v5555, %v5546
        %v5557 = vmul.u32 %v5512, %v5503
        %v5558 = vadd.s32 %v5534, %v5553
        %vm5559 = vc.u32 %v5534, %v5553
        %v5560 = vadd.s32 %v5556, 1
        %v5561 = vsel %vm5559, %v5560, %v5556
        %v5562 = vadd.s32 %v5557, %v5561
        %v5563 = vadd.s32 %v5562, 536870912
        %v5564 = vshrl.u32 %v5563, 30
        %v5565 = vshll.u32 %v5564, 30
        %v5566 = vsub.s32 %v5562, %v5565
        %vm5567 = vcmp.lt.s32.totalorder %v5566, 0
        %v5568 = vsub.s32 0, %v5566
        %v5569 = vsel %vm5567, %v5568, %v5566
        %v5570 = vclz %v5569
        %v5571 = vsub.s32 %v5570, 2
        %vm5572 = vcmp.gt.s32.totalorder 0, %v5571
        %v5573 = vsel %vm5572, 0, %v5571
        %v5574 = vsub.s32 32, %v5573
        %v5575 = vshll.u32 %v5566, %v5573
        %v5576 = vshrl.u32 %v5558, %v5574
        %v5577 = vor.u32 %v5575, %v5576
        %v5578 = vsub.s32 4294967266, %v5573
        %v5579 = vadd.s32 %v5578, 127
        %v5580 = vshll.u32 %v5579, 23
        %v5581 = vor.u32 4788187, %v5580
        %v5582 = vand.u32 2147483647, %v5581
        %v5584 = vcvt.s32.f32 %v5577
        %v5585 = vmul.f32 %v5584, %v5582
        %v5586 = vxor.u32 %v5585, 2147483648
        %v5587 = vsel %vm5466, %v5586, %v5585
        %v5588 = vsub.s32 4, %v5564
        %v5589 = vsel %vm5466, %v5588, %v5564
        %v5590 = vsel %vm5465, %v658, %v5587
        %v5591 = vsel %vm5465, 0, %v5589
        %v5592 = vmul.f32 %v5590, %v5590
        %v5593 = vmul.f32 %v5592, -0.001358992
        %v5594 = vadd.f32 %v5593, 0.041655596
        %v5595 = vmul.f32 %v5592, %v5594
        %v5596 = vadd.f32 %v5595, -0.4999988
        %v5597 = vmul.f32 %v5592, %v5596
        %v5598 = vadd.f32 1.0, %v5597
        %v5599 = vmul.f32 %v5590, %v5590
        %v5600 = vmul.f32 %v5599, -0.00019511016
        %v5601 = vadd.f32 %v5600, 0.008332121
        %v5602 = vmul.f32 %v5599, %v5601
        %v5603 = vadd.f32 %v5602, -0.16666654
        %v5604 = vmul.f32 %v5599, %v5603
        %v5605 = vadd.f32 %v5604, 1.0
        %v5606 = vmul.f32 %v5605, %v5590
        %vm5607 = vweird.f32 %v658
        %v5608 = vadd.s32 %v5591, 3
        %v5609 = vand.u32 %v5608, 3
        %vm5610 = vcmp.lt.s32.totalorder %v5609, 2
        %vm5611 = vcmp.eq.s32.totalorder %v5609, 0
        %v5612 = vxor.u32 %v5606, 2147483648
        %v5613 = vsel %vm5611, %v5598, %v5612
        %vm5614 = vcmp.eq.s32.totalorder %v5609, 2
        %v5615 = vxor.u32 %v5598, 2147483648
        %v5616 = vsel %vm5614, %v5615, %v5606
        %v5617 = vsel %vm5610, %v5613, %v5616
        %v5618 = vsel %vm5607, nan, %v5617
        %v5619 = vperm.slane %v381, 0
        %v5620 = vlaneseq
        %v5621 = vshrl.u32 %v5620, 7
        %5623 = vset.pattern.permute.xlu0 %v5621
        %5624 = vperm.xlu0 %5623, %v5619
        %v5625 = vpop.permute.xlu0 %5624
        %v5626 = vlaneseq
        %v5627 = vshrl.u32 %v5626, 7
        %v5628 = vadd.s32 %v5627, 8
        %5629 = vset.pattern.permute.xlu0 %v5628
        %5630 = vperm.xlu0 %5629, %v5619
        %v5631 = vpop.permute.xlu0 %5630
        %v5632 = vperm.slane %v381, 1
        %v5633 = vlaneseq
        %v5634 = vshrl.u32 %v5633, 7
        %5636 = vset.pattern.permute.xlu0 %v5634
        %5637 = vperm.xlu0 %5636, %v5632
        %v5638 = vpop.permute.xlu0 %5637
        %v5639 = vlaneseq
        %v5640 = vshrl.u32 %v5639, 7
        %v5641 = vadd.s32 %v5640, 8
        %5642 = vset.pattern.permute.xlu0 %v5641
        %5643 = vperm.xlu0 %5642, %v5632
        %v5644 = vpop.permute.xlu0 %5643
        %v5645 = vperm.slane %v381, 2
        %v5646 = vlaneseq
        %v5647 = vshrl.u32 %v5646, 7
        %5649 = vset.pattern.permute.xlu0 %v5647
        %5650 = vperm.xlu0 %5649, %v5645
        %v5651 = vpop.permute.xlu0 %5650
        %v5652 = vlaneseq
        %v5653 = vshrl.u32 %v5652, 7
        %v5654 = vadd.s32 %v5653, 8
        %5655 = vset.pattern.permute.xlu0 %v5654
        %5656 = vperm.xlu0 %5655, %v5645
        %v5657 = vpop.permute.xlu0 %5656
        %v5658 = vperm.slane %v381, 3
        %v5659 = vlaneseq
        %v5660 = vshrl.u32 %v5659, 7
        %5662 = vset.pattern.permute.xlu0 %v5660
        %5663 = vperm.xlu0 %5662, %v5658
        %v5664 = vpop.permute.xlu0 %5663
        %v5665 = vlaneseq
        %v5666 = vshrl.u32 %v5665, 7
        %v5667 = vadd.s32 %v5666, 8
        %5668 = vset.pattern.permute.xlu0 %v5667
        %5669 = vperm.xlu0 %5668, %v5658
        %v5670 = vpop.permute.xlu0 %5669
        %v5671 = vperm.slane %v381, 4
        %v5672 = vlaneseq
        %v5673 = vshrl.u32 %v5672, 7
        %5675 = vset.pattern.permute.xlu0 %v5673
        %5676 = vperm.xlu0 %5675, %v5671
        %v5677 = vpop.permute.xlu0 %5676
        %v5678 = vlaneseq
        %v5679 = vshrl.u32 %v5678, 7
        %v5680 = vadd.s32 %v5679, 8
        %5681 = vset.pattern.permute.xlu0 %v5680
        %5682 = vperm.xlu0 %5681, %v5671
        %v5683 = vpop.permute.xlu0 %5682
        %v5684 = vperm.slane %v381, 5
        %v5685 = vlaneseq
        %v5686 = vshrl.u32 %v5685, 7
        %5688 = vset.pattern.permute.xlu0 %v5686
        %5689 = vperm.xlu0 %5688, %v5684
        %v5690 = vpop.permute.xlu0 %5689
        %v5691 = vlaneseq
        %v5692 = vshrl.u32 %v5691, 7
        %v5693 = vadd.s32 %v5692, 8
        %5694 = vset.pattern.permute.xlu0 %v5693
        %5695 = vperm.xlu0 %5694, %v5684
        %v5696 = vpop.permute.xlu0 %5695
        %v5697 = vperm.slane %v381, 6
        %v5698 = vlaneseq
        %v5699 = vshrl.u32 %v5698, 7
        %5701 = vset.pattern.permute.xlu0 %v5699
        %5702 = vperm.xlu0 %5701, %v5697
        %v5703 = vpop.permute.xlu0 %5702
        %v5704 = vlaneseq
        %v5705 = vshrl.u32 %v5704, 7
        %v5706 = vadd.s32 %v5705, 8
        %5707 = vset.pattern.permute.xlu0 %v5706
        %5708 = vperm.xlu0 %5707, %v5697
        %v5709 = vpop.permute.xlu0 %5708
        %v5710 = vperm.slane %v381, 7
        %v5711 = vlaneseq
        %v5712 = vshrl.u32 %v5711, 7
        %5714 = vset.pattern.permute.xlu0 %v5712
        %5715 = vperm.xlu0 %5714, %v5710
        %v5716 = vpop.permute.xlu0 %5715
        %v5717 = vlaneseq
        %v5718 = vshrl.u32 %v5717, 7
        %v5719 = vadd.s32 %v5718, 8
        %5720 = vset.pattern.permute.xlu0 %v5719
        %5721 = vperm.xlu0 %5720, %v5710
        %v5722 = vpop.permute.xlu0 %5721
        %v5723 = vperm.slane %v382, 0
        %v5724 = vlaneseq
        %v5725 = vshrl.u32 %v5724, 7
        %5727 = vset.pattern.permute.xlu0 %v5725
        %5728 = vperm.xlu0 %5727, %v5723
        %v5729 = vpop.permute.xlu0 %5728
        %v5730 = vlaneseq
        %v5731 = vshrl.u32 %v5730, 7
        %v5732 = vadd.s32 %v5731, 8
        %5733 = vset.pattern.permute.xlu0 %v5732
        %5734 = vperm.xlu0 %5733, %v5723
        %v5735 = vpop.permute.xlu0 %5734
        %v5736 = vperm.slane %v382, 1
        %v5737 = vlaneseq
        %v5738 = vshrl.u32 %v5737, 7
        %5740 = vset.pattern.permute.xlu0 %v5738
        %5741 = vperm.xlu0 %5740, %v5736
        %v5742 = vpop.permute.xlu0 %5741
        %v5743 = vlaneseq
        %v5744 = vshrl.u32 %v5743, 7
        %v5745 = vadd.s32 %v5744, 8
        %5746 = vset.pattern.permute.xlu0 %v5745
        %5747 = vperm.xlu0 %5746, %v5736
        %v5748 = vpop.permute.xlu0 %5747
        %v5749 = vperm.slane %v382, 2
        %v5750 = vlaneseq
        %v5751 = vshrl.u32 %v5750, 7
        %5753 = vset.pattern.permute.xlu0 %v5751
        %5754 = vperm.xlu0 %5753, %v5749
        %v5755 = vpop.permute.xlu0 %5754
        %v5756 = vlaneseq
        %v5757 = vshrl.u32 %v5756, 7
        %v5758 = vadd.s32 %v5757, 8
        %5759 = vset.pattern.permute.xlu0 %v5758
        %5760 = vperm.xlu0 %5759, %v5749
        %v5761 = vpop.permute.xlu0 %5760
        %v5762 = vperm.slane %v382, 3
        %v5763 = vlaneseq
        %v5764 = vshrl.u32 %v5763, 7
        %5766 = vset.pattern.permute.xlu0 %v5764
        %5767 = vperm.xlu0 %5766, %v5762
        %v5768 = vpop.permute.xlu0 %5767
        %v5769 = vlaneseq
        %v5770 = vshrl.u32 %v5769, 7
        %v5771 = vadd.s32 %v5770, 8
        %5772 = vset.pattern.permute.xlu0 %v5771
        %5773 = vperm.xlu0 %5772, %v5762
        %v5774 = vpop.permute.xlu0 %5773
        %v5775 = vperm.slane %v382, 4
        %v5776 = vlaneseq
        %v5777 = vshrl.u32 %v5776, 7
        %5779 = vset.pattern.permute.xlu0 %v5777
        %5780 = vperm.xlu0 %5779, %v5775
        %v5781 = vpop.permute.xlu0 %5780
        %v5782 = vlaneseq
        %v5783 = vshrl.u32 %v5782, 7
        %v5784 = vadd.s32 %v5783, 8
        %5785 = vset.pattern.permute.xlu0 %v5784
        %5786 = vperm.xlu0 %5785, %v5775
        %v5787 = vpop.permute.xlu0 %5786
        %v5788 = vperm.slane %v382, 5
        %v5789 = vlaneseq
        %v5790 = vshrl.u32 %v5789, 7
        %5792 = vset.pattern.permute.xlu0 %v5790
        %5793 = vperm.xlu0 %5792, %v5788
        %v5794 = vpop.permute.xlu0 %5793
        %v5795 = vlaneseq
        %v5796 = vshrl.u32 %v5795, 7
        %v5797 = vadd.s32 %v5796, 8
        %5798 = vset.pattern.permute.xlu0 %v5797
        %5799 = vperm.xlu0 %5798, %v5788
        %v5800 = vpop.permute.xlu0 %5799
        %v5801 = vperm.slane %v382, 6
        %v5802 = vlaneseq
        %v5803 = vshrl.u32 %v5802, 7
        %5805 = vset.pattern.permute.xlu0 %v5803
        %5806 = vperm.xlu0 %5805, %v5801
        %v5807 = vpop.permute.xlu0 %5806
        %v5808 = vlaneseq
        %v5809 = vshrl.u32 %v5808, 7
        %v5810 = vadd.s32 %v5809, 8
        %5811 = vset.pattern.permute.xlu0 %v5810
        %5812 = vperm.xlu0 %5811, %v5801
        %v5813 = vpop.permute.xlu0 %5812
        %v5814 = vperm.slane %v382, 7
        %v5815 = vlaneseq
        %v5816 = vshrl.u32 %v5815, 7
        %5818 = vset.pattern.permute.xlu0 %v5816
        %5819 = vperm.xlu0 %5818, %v5814
        %v5820 = vpop.permute.xlu0 %5819
        %v5821 = vlaneseq
        %v5822 = vshrl.u32 %v5821, 7
        %v5823 = vadd.s32 %v5822, 8
        %5824 = vset.pattern.permute.xlu0 %v5823
        %5825 = vperm.xlu0 %5824, %v5814
        %v5826 = vpop.permute.xlu0 %5825
        %v5827 = vmul.f32 %v5625, %v593
        %v5828 = vmul.f32 %v5631, %v593
        %v5829 = vmul.f32 %v5638, %v593
        %v5830 = vmul.f32 %v5644, %v593
        %v5831 = vmul.f32 %v5651, %v593
        %v5832 = vmul.f32 %v5657, %v593
        %v5833 = vmul.f32 %v5664, %v593
        %v5834 = vmul.f32 %v5670, %v593
        %v5835 = vmul.f32 %v5677, %v593
        %v5836 = vmul.f32 %v5683, %v593
        %v5837 = vmul.f32 %v5690, %v593
        %v5838 = vmul.f32 %v5696, %v593
        %v5839 = vmul.f32 %v5703, %v593
        %v5840 = vmul.f32 %v5709, %v593
        %v5841 = vmul.f32 %v5716, %v593
        %v5842 = vmul.f32 %v5722, %v593
        %v5843 = vmul.f32 %v5729, %v593
        %v5844 = vmul.f32 %v5735, %v593
        %v5845 = vmul.f32 %v5742, %v593
        %v5846 = vmul.f32 %v5748, %v593
        %v5847 = vmul.f32 %v5755, %v593
        %v5848 = vmul.f32 %v5761, %v593
        %v5849 = vmul.f32 %v5768, %v593
        %v5850 = vmul.f32 %v5774, %v593
        %v5851 = vmul.f32 %v5781, %v593
        %v5852 = vmul.f32 %v5787, %v593
        %v5853 = vmul.f32 %v5794, %v593
        %v5854 = vmul.f32 %v5800, %v593
        %v5855 = vmul.f32 %v5807, %v593
        %v5856 = vmul.f32 %v5813, %v593
        %v5857 = vmul.f32 %v5820, %v593
        %v5858 = vmul.f32 %v5826, %v593
        %v5859 = vadd.f32 %v5827, %v626
        %v5860 = vadd.f32 %v5828, %v626
        %v5861 = vadd.f32 %v5829, %v626
        %v5862 = vadd.f32 %v5830, %v626
        %v5863 = vadd.f32 %v5831, %v626
        %v5864 = vadd.f32 %v5832, %v626
        %v5865 = vadd.f32 %v5833, %v626
        %v5866 = vadd.f32 %v5834, %v626
        %v5867 = vadd.f32 %v5835, %v626
        %v5868 = vadd.f32 %v5836, %v626
        %v5869 = vadd.f32 %v5837, %v626
        %v5870 = vadd.f32 %v5838, %v626
        %v5871 = vadd.f32 %v5839, %v626
        %v5872 = vadd.f32 %v5840, %v626
        %v5873 = vadd.f32 %v5841, %v626
        %v5874 = vadd.f32 %v5842, %v626
        %v5875 = vadd.f32 %v5843, %v626
        %v5876 = vadd.f32 %v5844, %v626
        %v5877 = vadd.f32 %v5845, %v626
        %v5878 = vadd.f32 %v5846, %v626
        %v5879 = vadd.f32 %v5847, %v626
        %v5880 = vadd.f32 %v5848, %v626
        %v5881 = vadd.f32 %v5849, %v626
        %v5882 = vadd.f32 %v5850, %v626
        %v5883 = vadd.f32 %v5851, %v626
        %v5884 = vadd.f32 %v5852, %v626
        %v5885 = vadd.f32 %v5853, %v626
        %v5886 = vadd.f32 %v5854, %v626
        %v5887 = vadd.f32 %v5855, %v626
        %v5888 = vadd.f32 %v5856, %v626
        %v5889 = vadd.f32 %v5857, %v626
        %v5890 = vadd.f32 %v5858, %v626
        %v5891 = vand.u32 2147483647, %v5859
        %vm5892 = vcmp.le.f32.partialorder %v5891, 0.7853982
        %vm5893 = vcmp.lt.s32.totalorder %v5859, 0
        %v5894 = vand.u32 %v5859, 2139095040
        %v5895 = vshrl.u32 %v5894, 23
        %v5896 = vsub.s32 %v5895, 127
        %v5897 = vand.u32 2147483647, %v5859
        %v5898 = vand.u32 %v5897, 8388607
        %v5899 = vor.u32 %v5898, 8388608
        %v5900 = vsub.s32 0, %v5899
        %v5901 = vadd.s32 %v5896, 1
        %vm5902 = vcmp.gt.s32.totalorder %v5901, 0
        %v5903 = vsel %vm5902, %v5901, 0
        %v5904 = vshrl.u32 %v5903, 5
        %v5905 = vand.u32 %v5903, 31
        %v5906 = vsub.s32 32, %v5905
        %v5907 = vshrl.u32 683565275, %v5906
        %v5908 = vshll.u32 683565275, %v5905
        %v5909 = vshrl.u32 2475754826, %v5906
        %v5910 = vor.u32 %v5908, %v5909
        %v5911 = vshll.u32 2475754826, %v5905
        %v5912 = vshrl.u32 2131351028, %v5906
        %v5913 = vor.u32 %v5911, %v5912
        %v5914 = vshll.u32 2131351028, %v5905
        %v5915 = vshrl.u32 2102212464, %v5906
        %v5916 = vor.u32 %v5914, %v5915
        %v5917 = vshll.u32 2102212464, %v5905
        %v5918 = vshrl.u32 920167782, %v5906
        %v5919 = vor.u32 %v5917, %v5918
        %v5920 = vshll.u32 920167782, %v5905
        %v5921 = vshrl.u32 1326507024, %v5906
        %v5922 = vor.u32 %v5920, %v5921
        %vm5923 = vcmp.lt.s32.totalorder %v5904, 1
        %vm5924 = vcmp.lt.s32.totalorder %v5904, 2
        %vm5925 = vcmp.lt.s32.totalorder %v5904, 3
        %vm5926 = vcmp.lt.s32.totalorder %v5904, 4
        %v5927 = vsel %vm5923, %v5907, %v5910
        %v5928 = vsel %vm5926, %v5916, 2102212464
        %v5929 = vsel %vm5925, %v5913, %v5928
        %v5930 = vsel %vm5924, %v5927, %v5929
        %v5931 = vsel %vm5923, %v5910, %v5913
        %v5932 = vsel %vm5926, %v5919, 920167782
        %v5933 = vsel %vm5925, %v5916, %v5932
        %v5934 = vsel %vm5924, %v5931, %v5933
        %v5935 = vsel %vm5923, %v5913, %v5916
        %v5936 = vsel %vm5926, %v5922, 1326507024
        %v5937 = vsel %vm5925, %v5919, %v5936
        %v5938 = vsel %vm5924, %v5935, %v5937
        %v5939 = vshll.u32 %v5899, 8
        %v5940 = vand.u32 %v5939, 65535
        %v5941 = vshrl.u32 %v5939, 16
        %v5942 = vand.u32 %v5938, 65535
        %v5943 = vshrl.u32 %v5938, 16
        %v5944 = vmul.u32 %v5940, %v5942
        %v5945 = vmul.u32 %v5940, %v5943
        %v5946 = vmul.u32 %v5941, %v5942
        %v5947 = vmul.u32 %v5941, %v5943
        %v5948 = vshll.u32 %v5945, 16
        %v5949 = vshrl.u32 %v5945, 16
        %v5950 = vshll.u32 %v5946, 16
        %v5951 = vshrl.u32 %v5946, 16
        %vm5952 = vc.u32 %v5944, %v5948
        %v5953 = vsel %vm5952, 1, 0
        %v5954 = vadd.s32 %v5944, %v5948
        %v5955 = vadd.s32 %v5947, %v5953
        %vm5956 = vc.u32 %v5954, %v5950
        %v5957 = vsel %vm5956, 1, 0
        %v5958 = vadd.s32 %v5954, %v5950
        %v5959 = vadd.s32 %v5955, %v5957
        %v5960 = vadd.s32 %v5959, %v5949
        %v5961 = vadd.s32 %v5960, %v5951
        %v5962 = vand.u32 %v5939, 65535
        %v5963 = vshrl.u32 %v5939, 16
        %v5964 = vand.u32 %v5934, 65535
        %v5965 = vshrl.u32 %v5934, 16
        %v5966 = vmul.u32 %v5962, %v5964
        %v5967 = vmul.u32 %v5962, %v5965
        %v5968 = vmul.u32 %v5963, %v5964
        %v5969 = vmul.u32 %v5963, %v5965
        %v5970 = vshll.u32 %v5967, 16
        %v5971 = vshrl.u32 %v5967, 16
        %v5972 = vshll.u32 %v5968, 16
        %v5973 = vshrl.u32 %v5968, 16
        %vm5974 = vc.u32 %v5966, %v5970
        %v5975 = vsel %vm5974, 1, 0
        %v5976 = vadd.s32 %v5966, %v5970
        %v5977 = vadd.s32 %v5969, %v5975
        %vm5978 = vc.u32 %v5976, %v5972
        %v5979 = vsel %vm5978, 1, 0
        %v5980 = vadd.s32 %v5976, %v5972
        %v5981 = vadd.s32 %v5977, %v5979
        %v5982 = vadd.s32 %v5981, %v5971
        %v5983 = vadd.s32 %v5982, %v5973
        %v5984 = vmul.u32 %v5939, %v5930
        %v5985 = vadd.s32 %v5961, %v5980
        %vm5986 = vc.u32 %v5961, %v5980
        %v5987 = vadd.s32 %v5983, 1
        %v5988 = vsel %vm5986, %v5987, %v5983
        %v5989 = vadd.s32 %v5984, %v5988
        %v5990 = vadd.s32 %v5989, 536870912
        %v5991 = vshrl.u32 %v5990, 30
        %v5992 = vshll.u32 %v5991, 30
        %v5993 = vsub.s32 %v5989, %v5992
        %vm5994 = vcmp.lt.s32.totalorder %v5993, 0
        %v5995 = vsub.s32 0, %v5993
        %v5996 = vsel %vm5994, %v5995, %v5993
        %v5997 = vclz %v5996
        %v5998 = vsub.s32 %v5997, 2
        %vm5999 = vcmp.gt.s32.totalorder 0, %v5998
        %v6000 = vsel %vm5999, 0, %v5998
        %v6001 = vsub.s32 32, %v6000
        %v6002 = vshll.u32 %v5993, %v6000
        %v6003 = vshrl.u32 %v5985, %v6001
        %v6004 = vor.u32 %v6002, %v6003
        %v6005 = vsub.s32 4294967266, %v6000
        %v6006 = vadd.s32 %v6005, 127
        %v6007 = vshll.u32 %v6006, 23
        %v6008 = vor.u32 4788187, %v6007
        %v6009 = vand.u32 2147483647, %v6008
        %v6011 = vcvt.s32.f32 %v6004
        %v6012 = vmul.f32 %v6011, %v6009
        %v6013 = vxor.u32 %v6012, 2147483648
        %v6014 = vsel %vm5893, %v6013, %v6012
        %v6015 = vsub.s32 4, %v5991
        %v6016 = vsel %vm5893, %v6015, %v5991
        %v6017 = vsel %vm5892, %v5859, %v6014
        %v6018 = vsel %vm5892, 0, %v6016
        %v6019 = vmul.f32 %v6017, %v6017
        %v6020 = vmul.f32 %v6019, -0.001358992
        %v6021 = vadd.f32 %v6020, 0.041655596
        %v6022 = vmul.f32 %v6019, %v6021
        %v6023 = vadd.f32 %v6022, -0.4999988
        %v6024 = vmul.f32 %v6019, %v6023
        %v6025 = vadd.f32 1.0, %v6024
        %v6026 = vmul.f32 %v6017, %v6017
        %v6027 = vmul.f32 %v6026, -0.00019511016
        %v6028 = vadd.f32 %v6027, 0.008332121
        %v6029 = vmul.f32 %v6026, %v6028
        %v6030 = vadd.f32 %v6029, -0.16666654
        %v6031 = vmul.f32 %v6026, %v6030
        %v6032 = vadd.f32 %v6031, 1.0
        %v6033 = vmul.f32 %v6032, %v6017
        %vm6034 = vweird.f32 %v5859
        %v6035 = vadd.s32 %v6018, 3
        %v6036 = vand.u32 %v6035, 3
        %vm6037 = vcmp.lt.s32.totalorder %v6036, 2
        %vm6038 = vcmp.eq.s32.totalorder %v6036, 0
        %v6039 = vxor.u32 %v6033, 2147483648
        %v6040 = vsel %vm6038, %v6025, %v6039
        %vm6041 = vcmp.eq.s32.totalorder %v6036, 2
        %v6042 = vxor.u32 %v6025, 2147483648
        %v6043 = vsel %vm6041, %v6042, %v6033
        %v6044 = vsel %vm6037, %v6040, %v6043
        %v6045 = vsel %vm6034, nan, %v6044
        %v6046 = vand.u32 2147483647, %v5860
        %vm6047 = vcmp.le.f32.partialorder %v6046, 0.7853982
        %vm6048 = vcmp.lt.s32.totalorder %v5860, 0
        %v6049 = vand.u32 %v5860, 2139095040
        %v6050 = vshrl.u32 %v6049, 23
        %v6051 = vsub.s32 %v6050, 127
        %v6052 = vand.u32 2147483647, %v5860
        %v6053 = vand.u32 %v6052, 8388607
        %v6054 = vor.u32 %v6053, 8388608
        %v6055 = vsub.s32 0, %v6054
        %v6056 = vadd.s32 %v6051, 1
        %vm6057 = vcmp.gt.s32.totalorder %v6056, 0
        %v6058 = vsel %vm6057, %v6056, 0
        %v6059 = vshrl.u32 %v6058, 5
        %v6060 = vand.u32 %v6058, 31
        %v6061 = vsub.s32 32, %v6060
        %v6062 = vshrl.u32 683565275, %v6061
        %v6063 = vshll.u32 683565275, %v6060
        %v6064 = vshrl.u32 2475754826, %v6061
        %v6065 = vor.u32 %v6063, %v6064
        %v6066 = vshll.u32 2475754826, %v6060
        %v6067 = vshrl.u32 2131351028, %v6061
        %v6068 = vor.u32 %v6066, %v6067
        %v6069 = vshll.u32 2131351028, %v6060
        %v6070 = vshrl.u32 2102212464, %v6061
        %v6071 = vor.u32 %v6069, %v6070
        %v6072 = vshll.u32 2102212464, %v6060
        %v6073 = vshrl.u32 920167782, %v6061
        %v6074 = vor.u32 %v6072, %v6073
        %v6075 = vshll.u32 920167782, %v6060
        %v6076 = vshrl.u32 1326507024, %v6061
        %v6077 = vor.u32 %v6075, %v6076
        %vm6078 = vcmp.lt.s32.totalorder %v6059, 1
        %vm6079 = vcmp.lt.s32.totalorder %v6059, 2
        %vm6080 = vcmp.lt.s32.totalorder %v6059, 3
        %vm6081 = vcmp.lt.s32.totalorder %v6059, 4
        %v6082 = vsel %vm6078, %v6062, %v6065
        %v6083 = vsel %vm6081, %v6071, 2102212464
        %v6084 = vsel %vm6080, %v6068, %v6083
        %v6085 = vsel %vm6079, %v6082, %v6084
        %v6086 = vsel %vm6078, %v6065, %v6068
        %v6087 = vsel %vm6081, %v6074, 920167782
        %v6088 = vsel %vm6080, %v6071, %v6087
        %v6089 = vsel %vm6079, %v6086, %v6088
        %v6090 = vsel %vm6078, %v6068, %v6071
        %v6091 = vsel %vm6081, %v6077, 1326507024
        %v6092 = vsel %vm6080, %v6074, %v6091
        %v6093 = vsel %vm6079, %v6090, %v6092
        %v6094 = vshll.u32 %v6054, 8
        %v6095 = vand.u32 %v6094, 65535
        %v6096 = vshrl.u32 %v6094, 16
        %v6097 = vand.u32 %v6093, 65535
        %v6098 = vshrl.u32 %v6093, 16
        %v6099 = vmul.u32 %v6095, %v6097
        %v6100 = vmul.u32 %v6095, %v6098
        %v6101 = vmul.u32 %v6096, %v6097
        %v6102 = vmul.u32 %v6096, %v6098
        %v6103 = vshll.u32 %v6100, 16
        %v6104 = vshrl.u32 %v6100, 16
        %v6105 = vshll.u32 %v6101, 16
        %v6106 = vshrl.u32 %v6101, 16
        %vm6107 = vc.u32 %v6099, %v6103
        %v6108 = vsel %vm6107, 1, 0
        %v6109 = vadd.s32 %v6099, %v6103
        %v6110 = vadd.s32 %v6102, %v6108
        %vm6111 = vc.u32 %v6109, %v6105
        %v6112 = vsel %vm6111, 1, 0
        %v6113 = vadd.s32 %v6109, %v6105
        %v6114 = vadd.s32 %v6110, %v6112
        %v6115 = vadd.s32 %v6114, %v6104
        %v6116 = vadd.s32 %v6115, %v6106
        %v6117 = vand.u32 %v6094, 65535
        %v6118 = vshrl.u32 %v6094, 16
        %v6119 = vand.u32 %v6089, 65535
        %v6120 = vshrl.u32 %v6089, 16
        %v6121 = vmul.u32 %v6117, %v6119
        %v6122 = vmul.u32 %v6117, %v6120
        %v6123 = vmul.u32 %v6118, %v6119
        %v6124 = vmul.u32 %v6118, %v6120
        %v6125 = vshll.u32 %v6122, 16
        %v6126 = vshrl.u32 %v6122, 16
        %v6127 = vshll.u32 %v6123, 16
        %v6128 = vshrl.u32 %v6123, 16
        %vm6129 = vc.u32 %v6121, %v6125
        %v6130 = vsel %vm6129, 1, 0
        %v6131 = vadd.s32 %v6121, %v6125
        %v6132 = vadd.s32 %v6124, %v6130
        %vm6133 = vc.u32 %v6131, %v6127
        %v6134 = vsel %vm6133, 1, 0
        %v6135 = vadd.s32 %v6131, %v6127
        %v6136 = vadd.s32 %v6132, %v6134
        %v6137 = vadd.s32 %v6136, %v6126
        %v6138 = vadd.s32 %v6137, %v6128
        %v6139 = vmul.u32 %v6094, %v6085
        %v6140 = vadd.s32 %v6116, %v6135
        %vm6141 = vc.u32 %v6116, %v6135
        %v6142 = vadd.s32 %v6138, 1
        %v6143 = vsel %vm6141, %v6142, %v6138
        %v6144 = vadd.s32 %v6139, %v6143
        %v6145 = vadd.s32 %v6144, 536870912
        %v6146 = vshrl.u32 %v6145, 30
        %v6147 = vshll.u32 %v6146, 30
        %v6148 = vsub.s32 %v6144, %v6147
        %vm6149 = vcmp.lt.s32.totalorder %v6148, 0
        %v6150 = vsub.s32 0, %v6148
        %v6151 = vsel %vm6149, %v6150, %v6148
        %v6152 = vclz %v6151
        %v6153 = vsub.s32 %v6152, 2
        %vm6154 = vcmp.gt.s32.totalorder 0, %v6153
        %v6155 = vsel %vm6154, 0, %v6153
        %v6156 = vsub.s32 32, %v6155
        %v6157 = vshll.u32 %v6148, %v6155
        %v6158 = vshrl.u32 %v6140, %v6156
        %v6159 = vor.u32 %v6157, %v6158
        %v6160 = vsub.s32 4294967266, %v6155
        %v6161 = vadd.s32 %v6160, 127
        %v6162 = vshll.u32 %v6161, 23
        %v6163 = vor.u32 4788187, %v6162
        %v6164 = vand.u32 2147483647, %v6163
        %v6166 = vcvt.s32.f32 %v6159
        %v6167 = vmul.f32 %v6166, %v6164
        %v6168 = vxor.u32 %v6167, 2147483648
        %v6169 = vsel %vm6048, %v6168, %v6167
        %v6170 = vsub.s32 4, %v6146
        %v6171 = vsel %vm6048, %v6170, %v6146
        %v6172 = vsel %vm6047, %v5860, %v6169
        %v6173 = vsel %vm6047, 0, %v6171
        %v6174 = vmul.f32 %v6172, %v6172
        %v6175 = vmul.f32 %v6174, -0.001358992
        %v6176 = vadd.f32 %v6175, 0.041655596
        %v6177 = vmul.f32 %v6174, %v6176
        %v6178 = vadd.f32 %v6177, -0.4999988
        %v6179 = vmul.f32 %v6174, %v6178
        %v6180 = vadd.f32 1.0, %v6179
        %v6181 = vmul.f32 %v6172, %v6172
        %v6182 = vmul.f32 %v6181, -0.00019511016
        %v6183 = vadd.f32 %v6182, 0.008332121
        %v6184 = vmul.f32 %v6181, %v6183
        %v6185 = vadd.f32 %v6184, -0.16666654
        %v6186 = vmul.f32 %v6181, %v6185
        %v6187 = vadd.f32 %v6186, 1.0
        %v6188 = vmul.f32 %v6187, %v6172
        %vm6189 = vweird.f32 %v5860
        %v6190 = vadd.s32 %v6173, 3
        %v6191 = vand.u32 %v6190, 3
        %vm6192 = vcmp.lt.s32.totalorder %v6191, 2
        %vm6193 = vcmp.eq.s32.totalorder %v6191, 0
        %v6194 = vxor.u32 %v6188, 2147483648
        %v6195 = vsel %vm6193, %v6180, %v6194
        %vm6196 = vcmp.eq.s32.totalorder %v6191, 2
        %v6197 = vxor.u32 %v6180, 2147483648
        %v6198 = vsel %vm6196, %v6197, %v6188
        %v6199 = vsel %vm6192, %v6195, %v6198
        %v6200 = vsel %vm6189, nan, %v6199
        %v6201 = vand.u32 2147483647, %v5861
        %vm6202 = vcmp.le.f32.partialorder %v6201, 0.7853982
        %vm6203 = vcmp.lt.s32.totalorder %v5861, 0
        %v6204 = vand.u32 %v5861, 2139095040
        %v6205 = vshrl.u32 %v6204, 23
        %v6206 = vsub.s32 %v6205, 127
        %v6207 = vand.u32 2147483647, %v5861
        %v6208 = vand.u32 %v6207, 8388607
        %v6209 = vor.u32 %v6208, 8388608
        %v6210 = vsub.s32 0, %v6209
        %v6211 = vadd.s32 %v6206, 1
        %vm6212 = vcmp.gt.s32.totalorder %v6211, 0
        %v6213 = vsel %vm6212, %v6211, 0
        %v6214 = vshrl.u32 %v6213, 5
        %v6215 = vand.u32 %v6213, 31
        %v6216 = vsub.s32 32, %v6215
        %v6217 = vshrl.u32 683565275, %v6216
        %v6218 = vshll.u32 683565275, %v6215
        %v6219 = vshrl.u32 2475754826, %v6216
        %v6220 = vor.u32 %v6218, %v6219
        %v6221 = vshll.u32 2475754826, %v6215
        %v6222 = vshrl.u32 2131351028, %v6216
        %v6223 = vor.u32 %v6221, %v6222
        %v6224 = vshll.u32 2131351028, %v6215
        %v6225 = vshrl.u32 2102212464, %v6216
        %v6226 = vor.u32 %v6224, %v6225
        %v6227 = vshll.u32 2102212464, %v6215
        %v6228 = vshrl.u32 920167782, %v6216
        %v6229 = vor.u32 %v6227, %v6228
        %v6230 = vshll.u32 920167782, %v6215
        %v6231 = vshrl.u32 1326507024, %v6216
        %v6232 = vor.u32 %v6230, %v6231
        %vm6233 = vcmp.lt.s32.totalorder %v6214, 1
        %vm6234 = vcmp.lt.s32.totalorder %v6214, 2
        %vm6235 = vcmp.lt.s32.totalorder %v6214, 3
        %vm6236 = vcmp.lt.s32.totalorder %v6214, 4
        %v6237 = vsel %vm6233, %v6217, %v6220
        %v6238 = vsel %vm6236, %v6226, 2102212464
        %v6239 = vsel %vm6235, %v6223, %v6238
        %v6240 = vsel %vm6234, %v6237, %v6239
        %v6241 = vsel %vm6233, %v6220, %v6223
        %v6242 = vsel %vm6236, %v6229, 920167782
        %v6243 = vsel %vm6235, %v6226, %v6242
        %v6244 = vsel %vm6234, %v6241, %v6243
        %v6245 = vsel %vm6233, %v6223, %v6226
        %v6246 = vsel %vm6236, %v6232, 1326507024
        %v6247 = vsel %vm6235, %v6229, %v6246
        %v6248 = vsel %vm6234, %v6245, %v6247
        %v6249 = vshll.u32 %v6209, 8
        %v6250 = vand.u32 %v6249, 65535
        %v6251 = vshrl.u32 %v6249, 16
        %v6252 = vand.u32 %v6248, 65535
        %v6253 = vshrl.u32 %v6248, 16
        %v6254 = vmul.u32 %v6250, %v6252
        %v6255 = vmul.u32 %v6250, %v6253
        %v6256 = vmul.u32 %v6251, %v6252
        %v6257 = vmul.u32 %v6251, %v6253
        %v6258 = vshll.u32 %v6255, 16
        %v6259 = vshrl.u32 %v6255, 16
        %v6260 = vshll.u32 %v6256, 16
        %v6261 = vshrl.u32 %v6256, 16
        %vm6262 = vc.u32 %v6254, %v6258
        %v6263 = vsel %vm6262, 1, 0
        %v6264 = vadd.s32 %v6254, %v6258
        %v6265 = vadd.s32 %v6257, %v6263
        %vm6266 = vc.u32 %v6264, %v6260
        %v6267 = vsel %vm6266, 1, 0
        %v6268 = vadd.s32 %v6264, %v6260
        %v6269 = vadd.s32 %v6265, %v6267
        %v6270 = vadd.s32 %v6269, %v6259
        %v6271 = vadd.s32 %v6270, %v6261
        %v6272 = vand.u32 %v6249, 65535
        %v6273 = vshrl.u32 %v6249, 16
        %v6274 = vand.u32 %v6244, 65535
        %v6275 = vshrl.u32 %v6244, 16
        %v6276 = vmul.u32 %v6272, %v6274
        %v6277 = vmul.u32 %v6272, %v6275
        %v6278 = vmul.u32 %v6273, %v6274
        %v6279 = vmul.u32 %v6273, %v6275
        %v6280 = vshll.u32 %v6277, 16
        %v6281 = vshrl.u32 %v6277, 16
        %v6282 = vshll.u32 %v6278, 16
        %v6283 = vshrl.u32 %v6278, 16
        %vm6284 = vc.u32 %v6276, %v6280
        %v6285 = vsel %vm6284, 1, 0
        %v6286 = vadd.s32 %v6276, %v6280
        %v6287 = vadd.s32 %v6279, %v6285
        %vm6288 = vc.u32 %v6286, %v6282
        %v6289 = vsel %vm6288, 1, 0
        %v6290 = vadd.s32 %v6286, %v6282
        %v6291 = vadd.s32 %v6287, %v6289
        %v6292 = vadd.s32 %v6291, %v6281
        %v6293 = vadd.s32 %v6292, %v6283
        %v6294 = vmul.u32 %v6249, %v6240
        %v6295 = vadd.s32 %v6271, %v6290
        %vm6296 = vc.u32 %v6271, %v6290
        %v6297 = vadd.s32 %v6293, 1
        %v6298 = vsel %vm6296, %v6297, %v6293
        %v6299 = vadd.s32 %v6294, %v6298
        %v6300 = vadd.s32 %v6299, 536870912
        %v6301 = vshrl.u32 %v6300, 30
        %v6302 = vshll.u32 %v6301, 30
        %v6303 = vsub.s32 %v6299, %v6302
        %vm6304 = vcmp.lt.s32.totalorder %v6303, 0
        %v6305 = vsub.s32 0, %v6303
        %v6306 = vsel %vm6304, %v6305, %v6303
        %v6307 = vclz %v6306
        %v6308 = vsub.s32 %v6307, 2
        %vm6309 = vcmp.gt.s32.totalorder 0, %v6308
        %v6310 = vsel %vm6309, 0, %v6308
        %v6311 = vsub.s32 32, %v6310
        %v6312 = vshll.u32 %v6303, %v6310
        %v6313 = vshrl.u32 %v6295, %v6311
        %v6314 = vor.u32 %v6312, %v6313
        %v6315 = vsub.s32 4294967266, %v6310
        %v6316 = vadd.s32 %v6315, 127
        %v6317 = vshll.u32 %v6316, 23
        %v6318 = vor.u32 4788187, %v6317
        %v6319 = vand.u32 2147483647, %v6318
        %v6321 = vcvt.s32.f32 %v6314
        %v6322 = vmul.f32 %v6321, %v6319
        %v6323 = vxor.u32 %v6322, 2147483648
        %v6324 = vsel %vm6203, %v6323, %v6322
        %v6325 = vsub.s32 4, %v6301
        %v6326 = vsel %vm6203, %v6325, %v6301
        %v6327 = vsel %vm6202, %v5861, %v6324
        %v6328 = vsel %vm6202, 0, %v6326
        %v6329 = vmul.f32 %v6327, %v6327
        %v6330 = vmul.f32 %v6329, -0.001358992
        %v6331 = vadd.f32 %v6330, 0.041655596
        %v6332 = vmul.f32 %v6329, %v6331
        %v6333 = vadd.f32 %v6332, -0.4999988
        %v6334 = vmul.f32 %v6329, %v6333
        %v6335 = vadd.f32 1.0, %v6334
        %v6336 = vmul.f32 %v6327, %v6327
        %v6337 = vmul.f32 %v6336, -0.00019511016
        %v6338 = vadd.f32 %v6337, 0.008332121
        %v6339 = vmul.f32 %v6336, %v6338
        %v6340 = vadd.f32 %v6339, -0.16666654
        %v6341 = vmul.f32 %v6336, %v6340
        %v6342 = vadd.f32 %v6341, 1.0
        %v6343 = vmul.f32 %v6342, %v6327
        %vm6344 = vweird.f32 %v5861
        %v6345 = vadd.s32 %v6328, 3
        %v6346 = vand.u32 %v6345, 3
        %vm6347 = vcmp.lt.s32.totalorder %v6346, 2
        %vm6348 = vcmp.eq.s32.totalorder %v6346, 0
        %v6349 = vxor.u32 %v6343, 2147483648
        %v6350 = vsel %vm6348, %v6335, %v6349
        %vm6351 = vcmp.eq.s32.totalorder %v6346, 2
        %v6352 = vxor.u32 %v6335, 2147483648
        %v6353 = vsel %vm6351, %v6352, %v6343
        %v6354 = vsel %vm6347, %v6350, %v6353
        %v6355 = vsel %vm6344, nan, %v6354
        %v6356 = vand.u32 2147483647, %v5862
        %vm6357 = vcmp.le.f32.partialorder %v6356, 0.7853982
        %vm6358 = vcmp.lt.s32.totalorder %v5862, 0
        %v6359 = vand.u32 %v5862, 2139095040
        %v6360 = vshrl.u32 %v6359, 23
        %v6361 = vsub.s32 %v6360, 127
        %v6362 = vand.u32 2147483647, %v5862
        %v6363 = vand.u32 %v6362, 8388607
        %v6364 = vor.u32 %v6363, 8388608
        %v6365 = vsub.s32 0, %v6364
        %v6366 = vadd.s32 %v6361, 1
        %vm6367 = vcmp.gt.s32.totalorder %v6366, 0
        %v6368 = vsel %vm6367, %v6366, 0
        %v6369 = vshrl.u32 %v6368, 5
        %v6370 = vand.u32 %v6368, 31
        %v6371 = vsub.s32 32, %v6370
        %v6372 = vshrl.u32 683565275, %v6371
        %v6373 = vshll.u32 683565275, %v6370
        %v6374 = vshrl.u32 2475754826, %v6371
        %v6375 = vor.u32 %v6373, %v6374
        %v6376 = vshll.u32 2475754826, %v6370
        %v6377 = vshrl.u32 2131351028, %v6371
        %v6378 = vor.u32 %v6376, %v6377
        %v6379 = vshll.u32 2131351028, %v6370
        %v6380 = vshrl.u32 2102212464, %v6371
        %v6381 = vor.u32 %v6379, %v6380
        %v6382 = vshll.u32 2102212464, %v6370
        %v6383 = vshrl.u32 920167782, %v6371
        %v6384 = vor.u32 %v6382, %v6383
        %v6385 = vshll.u32 920167782, %v6370
        %v6386 = vshrl.u32 1326507024, %v6371
        %v6387 = vor.u32 %v6385, %v6386
        %vm6388 = vcmp.lt.s32.totalorder %v6369, 1
        %vm6389 = vcmp.lt.s32.totalorder %v6369, 2
        %vm6390 = vcmp.lt.s32.totalorder %v6369, 3
        %vm6391 = vcmp.lt.s32.totalorder %v6369, 4
        %v6392 = vsel %vm6388, %v6372, %v6375
        %v6393 = vsel %vm6391, %v6381, 2102212464
        %v6394 = vsel %vm6390, %v6378, %v6393
        %v6395 = vsel %vm6389, %v6392, %v6394
        %v6396 = vsel %vm6388, %v6375, %v6378
        %v6397 = vsel %vm6391, %v6384, 920167782
        %v6398 = vsel %vm6390, %v6381, %v6397
        %v6399 = vsel %vm6389, %v6396, %v6398
        %v6400 = vsel %vm6388, %v6378, %v6381
        %v6401 = vsel %vm6391, %v6387, 1326507024
        %v6402 = vsel %vm6390, %v6384, %v6401
        %v6403 = vsel %vm6389, %v6400, %v6402
        %v6404 = vshll.u32 %v6364, 8
        %v6405 = vand.u32 %v6404, 65535
        %v6406 = vshrl.u32 %v6404, 16
        %v6407 = vand.u32 %v6403, 65535
        %v6408 = vshrl.u32 %v6403, 16
        %v6409 = vmul.u32 %v6405, %v6407
        %v6410 = vmul.u32 %v6405, %v6408
        %v6411 = vmul.u32 %v6406, %v6407
        %v6412 = vmul.u32 %v6406, %v6408
        %v6413 = vshll.u32 %v6410, 16
        %v6414 = vshrl.u32 %v6410, 16
        %v6415 = vshll.u32 %v6411, 16
        %v6416 = vshrl.u32 %v6411, 16
        %vm6417 = vc.u32 %v6409, %v6413
        %v6418 = vsel %vm6417, 1, 0
        %v6419 = vadd.s32 %v6409, %v6413
        %v6420 = vadd.s32 %v6412, %v6418
        %vm6421 = vc.u32 %v6419, %v6415
        %v6422 = vsel %vm6421, 1, 0
        %v6423 = vadd.s32 %v6419, %v6415
        %v6424 = vadd.s32 %v6420, %v6422
        %v6425 = vadd.s32 %v6424, %v6414
        %v6426 = vadd.s32 %v6425, %v6416
        %v6427 = vand.u32 %v6404, 65535
        %v6428 = vshrl.u32 %v6404, 16
        %v6429 = vand.u32 %v6399, 65535
        %v6430 = vshrl.u32 %v6399, 16
        %v6431 = vmul.u32 %v6427, %v6429
        %v6432 = vmul.u32 %v6427, %v6430
        %v6433 = vmul.u32 %v6428, %v6429
        %v6434 = vmul.u32 %v6428, %v6430
        %v6435 = vshll.u32 %v6432, 16
        %v6436 = vshrl.u32 %v6432, 16
        %v6437 = vshll.u32 %v6433, 16
        %v6438 = vshrl.u32 %v6433, 16
        %vm6439 = vc.u32 %v6431, %v6435
        %v6440 = vsel %vm6439, 1, 0
        %v6441 = vadd.s32 %v6431, %v6435
        %v6442 = vadd.s32 %v6434, %v6440
        %vm6443 = vc.u32 %v6441, %v6437
        %v6444 = vsel %vm6443, 1, 0
        %v6445 = vadd.s32 %v6441, %v6437
        %v6446 = vadd.s32 %v6442, %v6444
        %v6447 = vadd.s32 %v6446, %v6436
        %v6448 = vadd.s32 %v6447, %v6438
        %v6449 = vmul.u32 %v6404, %v6395
        %v6450 = vadd.s32 %v6426, %v6445
        %vm6451 = vc.u32 %v6426, %v6445
        %v6452 = vadd.s32 %v6448, 1
        %v6453 = vsel %vm6451, %v6452, %v6448
        %v6454 = vadd.s32 %v6449, %v6453
        %v6455 = vadd.s32 %v6454, 536870912
        %v6456 = vshrl.u32 %v6455, 30
        %v6457 = vshll.u32 %v6456, 30
        %v6458 = vsub.s32 %v6454, %v6457
        %vm6459 = vcmp.lt.s32.totalorder %v6458, 0
        %v6460 = vsub.s32 0, %v6458
        %v6461 = vsel %vm6459, %v6460, %v6458
        %v6462 = vclz %v6461
        %v6463 = vsub.s32 %v6462, 2
        %vm6464 = vcmp.gt.s32.totalorder 0, %v6463
        %v6465 = vsel %vm6464, 0, %v6463
        %v6466 = vsub.s32 32, %v6465
        %v6467 = vshll.u32 %v6458, %v6465
        %v6468 = vshrl.u32 %v6450, %v6466
        %v6469 = vor.u32 %v6467, %v6468
        %v6470 = vsub.s32 4294967266, %v6465
        %v6471 = vadd.s32 %v6470, 127
        %v6472 = vshll.u32 %v6471, 23
        %v6473 = vor.u32 4788187, %v6472
        %v6474 = vand.u32 2147483647, %v6473
        %v6476 = vcvt.s32.f32 %v6469
        %v6477 = vmul.f32 %v6476, %v6474
        %v6478 = vxor.u32 %v6477, 2147483648
        %v6479 = vsel %vm6358, %v6478, %v6477
        %v6480 = vsub.s32 4, %v6456
        %v6481 = vsel %vm6358, %v6480, %v6456
        %v6482 = vsel %vm6357, %v5862, %v6479
        %v6483 = vsel %vm6357, 0, %v6481
        %v6484 = vmul.f32 %v6482, %v6482
        %v6485 = vmul.f32 %v6484, -0.001358992
        %v6486 = vadd.f32 %v6485, 0.041655596
        %v6487 = vmul.f32 %v6484, %v6486
        %v6488 = vadd.f32 %v6487, -0.4999988
        %v6489 = vmul.f32 %v6484, %v6488
        %v6490 = vadd.f32 1.0, %v6489
        %v6491 = vmul.f32 %v6482, %v6482
        %v6492 = vmul.f32 %v6491, -0.00019511016
        %v6493 = vadd.f32 %v6492, 0.008332121
        %v6494 = vmul.f32 %v6491, %v6493
        %v6495 = vadd.f32 %v6494, -0.16666654
        %v6496 = vmul.f32 %v6491, %v6495
        %v6497 = vadd.f32 %v6496, 1.0
        %v6498 = vmul.f32 %v6497, %v6482
        %vm6499 = vweird.f32 %v5862
        %v6500 = vadd.s32 %v6483, 3
        %v6501 = vand.u32 %v6500, 3
        %vm6502 = vcmp.lt.s32.totalorder %v6501, 2
        %vm6503 = vcmp.eq.s32.totalorder %v6501, 0
        %v6504 = vxor.u32 %v6498, 2147483648
        %v6505 = vsel %vm6503, %v6490, %v6504
        %vm6506 = vcmp.eq.s32.totalorder %v6501, 2
        %v6507 = vxor.u32 %v6490, 2147483648
        %v6508 = vsel %vm6506, %v6507, %v6498
        %v6509 = vsel %vm6502, %v6505, %v6508
        %v6510 = vsel %vm6499, nan, %v6509
        %v6511 = vand.u32 2147483647, %v5863
        %vm6512 = vcmp.le.f32.partialorder %v6511, 0.7853982
        %vm6513 = vcmp.lt.s32.totalorder %v5863, 0
        %v6514 = vand.u32 %v5863, 2139095040
        %v6515 = vshrl.u32 %v6514, 23
        %v6516 = vsub.s32 %v6515, 127
        %v6517 = vand.u32 2147483647, %v5863
        %v6518 = vand.u32 %v6517, 8388607
        %v6519 = vor.u32 %v6518, 8388608
        %v6520 = vsub.s32 0, %v6519
        %v6521 = vadd.s32 %v6516, 1
        %vm6522 = vcmp.gt.s32.totalorder %v6521, 0
        %v6523 = vsel %vm6522, %v6521, 0
        %v6524 = vshrl.u32 %v6523, 5
        %v6525 = vand.u32 %v6523, 31
        %v6526 = vsub.s32 32, %v6525
        %v6527 = vshrl.u32 683565275, %v6526
        %v6528 = vshll.u32 683565275, %v6525
        %v6529 = vshrl.u32 2475754826, %v6526
        %v6530 = vor.u32 %v6528, %v6529
        %v6531 = vshll.u32 2475754826, %v6525
        %v6532 = vshrl.u32 2131351028, %v6526
        %v6533 = vor.u32 %v6531, %v6532
        %v6534 = vshll.u32 2131351028, %v6525
        %v6535 = vshrl.u32 2102212464, %v6526
        %v6536 = vor.u32 %v6534, %v6535
        %v6537 = vshll.u32 2102212464, %v6525
        %v6538 = vshrl.u32 920167782, %v6526
        %v6539 = vor.u32 %v6537, %v6538
        %v6540 = vshll.u32 920167782, %v6525
        %v6541 = vshrl.u32 1326507024, %v6526
        %v6542 = vor.u32 %v6540, %v6541
        %vm6543 = vcmp.lt.s32.totalorder %v6524, 1
        %vm6544 = vcmp.lt.s32.totalorder %v6524, 2
        %vm6545 = vcmp.lt.s32.totalorder %v6524, 3
        %vm6546 = vcmp.lt.s32.totalorder %v6524, 4
        %v6547 = vsel %vm6543, %v6527, %v6530
        %v6548 = vsel %vm6546, %v6536, 2102212464
        %v6549 = vsel %vm6545, %v6533, %v6548
        %v6550 = vsel %vm6544, %v6547, %v6549
        %v6551 = vsel %vm6543, %v6530, %v6533
        %v6552 = vsel %vm6546, %v6539, 920167782
        %v6553 = vsel %vm6545, %v6536, %v6552
        %v6554 = vsel %vm6544, %v6551, %v6553
        %v6555 = vsel %vm6543, %v6533, %v6536
        %v6556 = vsel %vm6546, %v6542, 1326507024
        %v6557 = vsel %vm6545, %v6539, %v6556
        %v6558 = vsel %vm6544, %v6555, %v6557
        %v6559 = vshll.u32 %v6519, 8
        %v6560 = vand.u32 %v6559, 65535
        %v6561 = vshrl.u32 %v6559, 16
        %v6562 = vand.u32 %v6558, 65535
        %v6563 = vshrl.u32 %v6558, 16
        %v6564 = vmul.u32 %v6560, %v6562
        %v6565 = vmul.u32 %v6560, %v6563
        %v6566 = vmul.u32 %v6561, %v6562
        %v6567 = vmul.u32 %v6561, %v6563
        %v6568 = vshll.u32 %v6565, 16
        %v6569 = vshrl.u32 %v6565, 16
        %v6570 = vshll.u32 %v6566, 16
        %v6571 = vshrl.u32 %v6566, 16
        %vm6572 = vc.u32 %v6564, %v6568
        %v6573 = vsel %vm6572, 1, 0
        %v6574 = vadd.s32 %v6564, %v6568
        %v6575 = vadd.s32 %v6567, %v6573
        %vm6576 = vc.u32 %v6574, %v6570
        %v6577 = vsel %vm6576, 1, 0
        %v6578 = vadd.s32 %v6574, %v6570
        %v6579 = vadd.s32 %v6575, %v6577
        %v6580 = vadd.s32 %v6579, %v6569
        %v6581 = vadd.s32 %v6580, %v6571
        %v6582 = vand.u32 %v6559, 65535
        %v6583 = vshrl.u32 %v6559, 16
        %v6584 = vand.u32 %v6554, 65535
        %v6585 = vshrl.u32 %v6554, 16
        %v6586 = vmul.u32 %v6582, %v6584
        %v6587 = vmul.u32 %v6582, %v6585
        %v6588 = vmul.u32 %v6583, %v6584
        %v6589 = vmul.u32 %v6583, %v6585
        %v6590 = vshll.u32 %v6587, 16
        %v6591 = vshrl.u32 %v6587, 16
        %v6592 = vshll.u32 %v6588, 16
        %v6593 = vshrl.u32 %v6588, 16
        %vm6594 = vc.u32 %v6586, %v6590
        %v6595 = vsel %vm6594, 1, 0
        %v6596 = vadd.s32 %v6586, %v6590
        %v6597 = vadd.s32 %v6589, %v6595
        %vm6598 = vc.u32 %v6596, %v6592
        %v6599 = vsel %vm6598, 1, 0
        %v6600 = vadd.s32 %v6596, %v6592
        %v6601 = vadd.s32 %v6597, %v6599
        %v6602 = vadd.s32 %v6601, %v6591
        %v6603 = vadd.s32 %v6602, %v6593
        %v6604 = vmul.u32 %v6559, %v6550
        %v6605 = vadd.s32 %v6581, %v6600
        %vm6606 = vc.u32 %v6581, %v6600
        %v6607 = vadd.s32 %v6603, 1
        %v6608 = vsel %vm6606, %v6607, %v6603
        %v6609 = vadd.s32 %v6604, %v6608
        %v6610 = vadd.s32 %v6609, 536870912
        %v6611 = vshrl.u32 %v6610, 30
        %v6612 = vshll.u32 %v6611, 30
        %v6613 = vsub.s32 %v6609, %v6612
        %vm6614 = vcmp.lt.s32.totalorder %v6613, 0
        %v6615 = vsub.s32 0, %v6613
        %v6616 = vsel %vm6614, %v6615, %v6613
        %v6617 = vclz %v6616
        %v6618 = vsub.s32 %v6617, 2
        %vm6619 = vcmp.gt.s32.totalorder 0, %v6618
        %v6620 = vsel %vm6619, 0, %v6618
        %v6621 = vsub.s32 32, %v6620
        %v6622 = vshll.u32 %v6613, %v6620
        %v6623 = vshrl.u32 %v6605, %v6621
        %v6624 = vor.u32 %v6622, %v6623
        %v6625 = vsub.s32 4294967266, %v6620
        %v6626 = vadd.s32 %v6625, 127
        %v6627 = vshll.u32 %v6626, 23
        %v6628 = vor.u32 4788187, %v6627
        %v6629 = vand.u32 2147483647, %v6628
        %v6631 = vcvt.s32.f32 %v6624
        %v6632 = vmul.f32 %v6631, %v6629
        %v6633 = vxor.u32 %v6632, 2147483648
        %v6634 = vsel %vm6513, %v6633, %v6632
        %v6635 = vsub.s32 4, %v6611
        %v6636 = vsel %vm6513, %v6635, %v6611
        %v6637 = vsel %vm6512, %v5863, %v6634
        %v6638 = vsel %vm6512, 0, %v6636
        %v6639 = vmul.f32 %v6637, %v6637
        %v6640 = vmul.f32 %v6639, -0.001358992
        %v6641 = vadd.f32 %v6640, 0.041655596
        %v6642 = vmul.f32 %v6639, %v6641
        %v6643 = vadd.f32 %v6642, -0.4999988
        %v6644 = vmul.f32 %v6639, %v6643
        %v6645 = vadd.f32 1.0, %v6644
        %v6646 = vmul.f32 %v6637, %v6637
        %v6647 = vmul.f32 %v6646, -0.00019511016
        %v6648 = vadd.f32 %v6647, 0.008332121
        %v6649 = vmul.f32 %v6646, %v6648
        %v6650 = vadd.f32 %v6649, -0.16666654
        %v6651 = vmul.f32 %v6646, %v6650
        %v6652 = vadd.f32 %v6651, 1.0
        %v6653 = vmul.f32 %v6652, %v6637
        %vm6654 = vweird.f32 %v5863
        %v6655 = vadd.s32 %v6638, 3
        %v6656 = vand.u32 %v6655, 3
        %vm6657 = vcmp.lt.s32.totalorder %v6656, 2
        %vm6658 = vcmp.eq.s32.totalorder %v6656, 0
        %v6659 = vxor.u32 %v6653, 2147483648
        %v6660 = vsel %vm6658, %v6645, %v6659
        %vm6661 = vcmp.eq.s32.totalorder %v6656, 2
        %v6662 = vxor.u32 %v6645, 2147483648
        %v6663 = vsel %vm6661, %v6662, %v6653
        %v6664 = vsel %vm6657, %v6660, %v6663
        %v6665 = vsel %vm6654, nan, %v6664
        %v6666 = vand.u32 2147483647, %v5864
        %vm6667 = vcmp.le.f32.partialorder %v6666, 0.7853982
        %vm6668 = vcmp.lt.s32.totalorder %v5864, 0
        %v6669 = vand.u32 %v5864, 2139095040
        %v6670 = vshrl.u32 %v6669, 23
        %v6671 = vsub.s32 %v6670, 127
        %v6672 = vand.u32 2147483647, %v5864
        %v6673 = vand.u32 %v6672, 8388607
        %v6674 = vor.u32 %v6673, 8388608
        %v6675 = vsub.s32 0, %v6674
        %v6676 = vadd.s32 %v6671, 1
        %vm6677 = vcmp.gt.s32.totalorder %v6676, 0
        %v6678 = vsel %vm6677, %v6676, 0
        %v6679 = vshrl.u32 %v6678, 5
        %v6680 = vand.u32 %v6678, 31
        %v6681 = vsub.s32 32, %v6680
        %v6682 = vshrl.u32 683565275, %v6681
        %v6683 = vshll.u32 683565275, %v6680
        %v6684 = vshrl.u32 2475754826, %v6681
        %v6685 = vor.u32 %v6683, %v6684
        %v6686 = vshll.u32 2475754826, %v6680
        %v6687 = vshrl.u32 2131351028, %v6681
        %v6688 = vor.u32 %v6686, %v6687
        %v6689 = vshll.u32 2131351028, %v6680
        %v6690 = vshrl.u32 2102212464, %v6681
        %v6691 = vor.u32 %v6689, %v6690
        %v6692 = vshll.u32 2102212464, %v6680
        %v6693 = vshrl.u32 920167782, %v6681
        %v6694 = vor.u32 %v6692, %v6693
        %v6695 = vshll.u32 920167782, %v6680
        %v6696 = vshrl.u32 1326507024, %v6681
        %v6697 = vor.u32 %v6695, %v6696
        %vm6698 = vcmp.lt.s32.totalorder %v6679, 1
        %vm6699 = vcmp.lt.s32.totalorder %v6679, 2
        %vm6700 = vcmp.lt.s32.totalorder %v6679, 3
        %vm6701 = vcmp.lt.s32.totalorder %v6679, 4
        %v6702 = vsel %vm6698, %v6682, %v6685
        %v6703 = vsel %vm6701, %v6691, 2102212464
        %v6704 = vsel %vm6700, %v6688, %v6703
        %v6705 = vsel %vm6699, %v6702, %v6704
        %v6706 = vsel %vm6698, %v6685, %v6688
        %v6707 = vsel %vm6701, %v6694, 920167782
        %v6708 = vsel %vm6700, %v6691, %v6707
        %v6709 = vsel %vm6699, %v6706, %v6708
        %v6710 = vsel %vm6698, %v6688, %v6691
        %v6711 = vsel %vm6701, %v6697, 1326507024
        %v6712 = vsel %vm6700, %v6694, %v6711
        %v6713 = vsel %vm6699, %v6710, %v6712
        %v6714 = vshll.u32 %v6674, 8
        %v6715 = vand.u32 %v6714, 65535
        %v6716 = vshrl.u32 %v6714, 16
        %v6717 = vand.u32 %v6713, 65535
        %v6718 = vshrl.u32 %v6713, 16
        %v6719 = vmul.u32 %v6715, %v6717
        %v6720 = vmul.u32 %v6715, %v6718
        %v6721 = vmul.u32 %v6716, %v6717
        %v6722 = vmul.u32 %v6716, %v6718
        %v6723 = vshll.u32 %v6720, 16
        %v6724 = vshrl.u32 %v6720, 16
        %v6725 = vshll.u32 %v6721, 16
        %v6726 = vshrl.u32 %v6721, 16
        %vm6727 = vc.u32 %v6719, %v6723
        %v6728 = vsel %vm6727, 1, 0
        %v6729 = vadd.s32 %v6719, %v6723
        %v6730 = vadd.s32 %v6722, %v6728
        %vm6731 = vc.u32 %v6729, %v6725
        %v6732 = vsel %vm6731, 1, 0
        %v6733 = vadd.s32 %v6729, %v6725
        %v6734 = vadd.s32 %v6730, %v6732
        %v6735 = vadd.s32 %v6734, %v6724
        %v6736 = vadd.s32 %v6735, %v6726
        %v6737 = vand.u32 %v6714, 65535
        %v6738 = vshrl.u32 %v6714, 16
        %v6739 = vand.u32 %v6709, 65535
        %v6740 = vshrl.u32 %v6709, 16
        %v6741 = vmul.u32 %v6737, %v6739
        %v6742 = vmul.u32 %v6737, %v6740
        %v6743 = vmul.u32 %v6738, %v6739
        %v6744 = vmul.u32 %v6738, %v6740
        %v6745 = vshll.u32 %v6742, 16
        %v6746 = vshrl.u32 %v6742, 16
        %v6747 = vshll.u32 %v6743, 16
        %v6748 = vshrl.u32 %v6743, 16
        %vm6749 = vc.u32 %v6741, %v6745
        %v6750 = vsel %vm6749, 1, 0
        %v6751 = vadd.s32 %v6741, %v6745
        %v6752 = vadd.s32 %v6744, %v6750
        %vm6753 = vc.u32 %v6751, %v6747
        %v6754 = vsel %vm6753, 1, 0
        %v6755 = vadd.s32 %v6751, %v6747
        %v6756 = vadd.s32 %v6752, %v6754
        %v6757 = vadd.s32 %v6756, %v6746
        %v6758 = vadd.s32 %v6757, %v6748
        %v6759 = vmul.u32 %v6714, %v6705
        %v6760 = vadd.s32 %v6736, %v6755
        %vm6761 = vc.u32 %v6736, %v6755
        %v6762 = vadd.s32 %v6758, 1
        %v6763 = vsel %vm6761, %v6762, %v6758
        %v6764 = vadd.s32 %v6759, %v6763
        %v6765 = vadd.s32 %v6764, 536870912
        %v6766 = vshrl.u32 %v6765, 30
        %v6767 = vshll.u32 %v6766, 30
        %v6768 = vsub.s32 %v6764, %v6767
        %vm6769 = vcmp.lt.s32.totalorder %v6768, 0
        %v6770 = vsub.s32 0, %v6768
        %v6771 = vsel %vm6769, %v6770, %v6768
        %v6772 = vclz %v6771
        %v6773 = vsub.s32 %v6772, 2
        %vm6774 = vcmp.gt.s32.totalorder 0, %v6773
        %v6775 = vsel %vm6774, 0, %v6773
        %v6776 = vsub.s32 32, %v6775
        %v6777 = vshll.u32 %v6768, %v6775
        %v6778 = vshrl.u32 %v6760, %v6776
        %v6779 = vor.u32 %v6777, %v6778
        %v6780 = vsub.s32 4294967266, %v6775
        %v6781 = vadd.s32 %v6780, 127
        %v6782 = vshll.u32 %v6781, 23
        %v6783 = vor.u32 4788187, %v6782
        %v6784 = vand.u32 2147483647, %v6783
        %v6786 = vcvt.s32.f32 %v6779
        %v6787 = vmul.f32 %v6786, %v6784
        %v6788 = vxor.u32 %v6787, 2147483648
        %v6789 = vsel %vm6668, %v6788, %v6787
        %v6790 = vsub.s32 4, %v6766
        %v6791 = vsel %vm6668, %v6790, %v6766
        %v6792 = vsel %vm6667, %v5864, %v6789
        %v6793 = vsel %vm6667, 0, %v6791
        %v6794 = vmul.f32 %v6792, %v6792
        %v6795 = vmul.f32 %v6794, -0.001358992
        %v6796 = vadd.f32 %v6795, 0.041655596
        %v6797 = vmul.f32 %v6794, %v6796
        %v6798 = vadd.f32 %v6797, -0.4999988
        %v6799 = vmul.f32 %v6794, %v6798
        %v6800 = vadd.f32 1.0, %v6799
        %v6801 = vmul.f32 %v6792, %v6792
        %v6802 = vmul.f32 %v6801, -0.00019511016
        %v6803 = vadd.f32 %v6802, 0.008332121
        %v6804 = vmul.f32 %v6801, %v6803
        %v6805 = vadd.f32 %v6804, -0.16666654
        %v6806 = vmul.f32 %v6801, %v6805
        %v6807 = vadd.f32 %v6806, 1.0
        %v6808 = vmul.f32 %v6807, %v6792
        %vm6809 = vweird.f32 %v5864
        %v6810 = vadd.s32 %v6793, 3
        %v6811 = vand.u32 %v6810, 3
        %vm6812 = vcmp.lt.s32.totalorder %v6811, 2
        %vm6813 = vcmp.eq.s32.totalorder %v6811, 0
        %v6814 = vxor.u32 %v6808, 2147483648
        %v6815 = vsel %vm6813, %v6800, %v6814
        %vm6816 = vcmp.eq.s32.totalorder %v6811, 2
        %v6817 = vxor.u32 %v6800, 2147483648
        %v6818 = vsel %vm6816, %v6817, %v6808
        %v6819 = vsel %vm6812, %v6815, %v6818
        %v6820 = vsel %vm6809, nan, %v6819
        %v6821 = vand.u32 2147483647, %v5865
        %vm6822 = vcmp.le.f32.partialorder %v6821, 0.7853982
        %vm6823 = vcmp.lt.s32.totalorder %v5865, 0
        %v6824 = vand.u32 %v5865, 2139095040
        %v6825 = vshrl.u32 %v6824, 23
        %v6826 = vsub.s32 %v6825, 127
        %v6827 = vand.u32 2147483647, %v5865
        %v6828 = vand.u32 %v6827, 8388607
        %v6829 = vor.u32 %v6828, 8388608
        %v6830 = vsub.s32 0, %v6829
        %v6831 = vadd.s32 %v6826, 1
        %vm6832 = vcmp.gt.s32.totalorder %v6831, 0
        %v6833 = vsel %vm6832, %v6831, 0
        %v6834 = vshrl.u32 %v6833, 5
        %v6835 = vand.u32 %v6833, 31
        %v6836 = vsub.s32 32, %v6835
        %v6837 = vshrl.u32 683565275, %v6836
        %v6838 = vshll.u32 683565275, %v6835
        %v6839 = vshrl.u32 2475754826, %v6836
        %v6840 = vor.u32 %v6838, %v6839
        %v6841 = vshll.u32 2475754826, %v6835
        %v6842 = vshrl.u32 2131351028, %v6836
        %v6843 = vor.u32 %v6841, %v6842
        %v6844 = vshll.u32 2131351028, %v6835
        %v6845 = vshrl.u32 2102212464, %v6836
        %v6846 = vor.u32 %v6844, %v6845
        %v6847 = vshll.u32 2102212464, %v6835
        %v6848 = vshrl.u32 920167782, %v6836
        %v6849 = vor.u32 %v6847, %v6848
        %v6850 = vshll.u32 920167782, %v6835
        %v6851 = vshrl.u32 1326507024, %v6836
        %v6852 = vor.u32 %v6850, %v6851
        %vm6853 = vcmp.lt.s32.totalorder %v6834, 1
        %vm6854 = vcmp.lt.s32.totalorder %v6834, 2
        %vm6855 = vcmp.lt.s32.totalorder %v6834, 3
        %vm6856 = vcmp.lt.s32.totalorder %v6834, 4
        %v6857 = vsel %vm6853, %v6837, %v6840
        %v6858 = vsel %vm6856, %v6846, 2102212464
        %v6859 = vsel %vm6855, %v6843, %v6858
        %v6860 = vsel %vm6854, %v6857, %v6859
        %v6861 = vsel %vm6853, %v6840, %v6843
        %v6862 = vsel %vm6856, %v6849, 920167782
        %v6863 = vsel %vm6855, %v6846, %v6862
        %v6864 = vsel %vm6854, %v6861, %v6863
        %v6865 = vsel %vm6853, %v6843, %v6846
        %v6866 = vsel %vm6856, %v6852, 1326507024
        %v6867 = vsel %vm6855, %v6849, %v6866
        %v6868 = vsel %vm6854, %v6865, %v6867
        %v6869 = vshll.u32 %v6829, 8
        %v6870 = vand.u32 %v6869, 65535
        %v6871 = vshrl.u32 %v6869, 16
        %v6872 = vand.u32 %v6868, 65535
        %v6873 = vshrl.u32 %v6868, 16
        %v6874 = vmul.u32 %v6870, %v6872
        %v6875 = vmul.u32 %v6870, %v6873
        %v6876 = vmul.u32 %v6871, %v6872
        %v6877 = vmul.u32 %v6871, %v6873
        %v6878 = vshll.u32 %v6875, 16
        %v6879 = vshrl.u32 %v6875, 16
        %v6880 = vshll.u32 %v6876, 16
        %v6881 = vshrl.u32 %v6876, 16
        %vm6882 = vc.u32 %v6874, %v6878
        %v6883 = vsel %vm6882, 1, 0
        %v6884 = vadd.s32 %v6874, %v6878
        %v6885 = vadd.s32 %v6877, %v6883
        %vm6886 = vc.u32 %v6884, %v6880
        %v6887 = vsel %vm6886, 1, 0
        %v6888 = vadd.s32 %v6884, %v6880
        %v6889 = vadd.s32 %v6885, %v6887
        %v6890 = vadd.s32 %v6889, %v6879
        %v6891 = vadd.s32 %v6890, %v6881
        %v6892 = vand.u32 %v6869, 65535
        %v6893 = vshrl.u32 %v6869, 16
        %v6894 = vand.u32 %v6864, 65535
        %v6895 = vshrl.u32 %v6864, 16
        %v6896 = vmul.u32 %v6892, %v6894
        %v6897 = vmul.u32 %v6892, %v6895
        %v6898 = vmul.u32 %v6893, %v6894
        %v6899 = vmul.u32 %v6893, %v6895
        %v6900 = vshll.u32 %v6897, 16
        %v6901 = vshrl.u32 %v6897, 16
        %v6902 = vshll.u32 %v6898, 16
        %v6903 = vshrl.u32 %v6898, 16
        %vm6904 = vc.u32 %v6896, %v6900
        %v6905 = vsel %vm6904, 1, 0
        %v6906 = vadd.s32 %v6896, %v6900
        %v6907 = vadd.s32 %v6899, %v6905
        %vm6908 = vc.u32 %v6906, %v6902
        %v6909 = vsel %vm6908, 1, 0
        %v6910 = vadd.s32 %v6906, %v6902
        %v6911 = vadd.s32 %v6907, %v6909
        %v6912 = vadd.s32 %v6911, %v6901
        %v6913 = vadd.s32 %v6912, %v6903
        %v6914 = vmul.u32 %v6869, %v6860
        %v6915 = vadd.s32 %v6891, %v6910
        %vm6916 = vc.u32 %v6891, %v6910
        %v6917 = vadd.s32 %v6913, 1
        %v6918 = vsel %vm6916, %v6917, %v6913
        %v6919 = vadd.s32 %v6914, %v6918
        %v6920 = vadd.s32 %v6919, 536870912
        %v6921 = vshrl.u32 %v6920, 30
        %v6922 = vshll.u32 %v6921, 30
        %v6923 = vsub.s32 %v6919, %v6922
        %vm6924 = vcmp.lt.s32.totalorder %v6923, 0
        %v6925 = vsub.s32 0, %v6923
        %v6926 = vsel %vm6924, %v6925, %v6923
        %v6927 = vclz %v6926
        %v6928 = vsub.s32 %v6927, 2
        %vm6929 = vcmp.gt.s32.totalorder 0, %v6928
        %v6930 = vsel %vm6929, 0, %v6928
        %v6931 = vsub.s32 32, %v6930
        %v6932 = vshll.u32 %v6923, %v6930
        %v6933 = vshrl.u32 %v6915, %v6931
        %v6934 = vor.u32 %v6932, %v6933
        %v6935 = vsub.s32 4294967266, %v6930
        %v6936 = vadd.s32 %v6935, 127
        %v6937 = vshll.u32 %v6936, 23
        %v6938 = vor.u32 4788187, %v6937
        %v6939 = vand.u32 2147483647, %v6938
        %v6941 = vcvt.s32.f32 %v6934
        %v6942 = vmul.f32 %v6941, %v6939
        %v6943 = vxor.u32 %v6942, 2147483648
        %v6944 = vsel %vm6823, %v6943, %v6942
        %v6945 = vsub.s32 4, %v6921
        %v6946 = vsel %vm6823, %v6945, %v6921
        %v6947 = vsel %vm6822, %v5865, %v6944
        %v6948 = vsel %vm6822, 0, %v6946
        %v6949 = vmul.f32 %v6947, %v6947
        %v6950 = vmul.f32 %v6949, -0.001358992
        %v6951 = vadd.f32 %v6950, 0.041655596
        %v6952 = vmul.f32 %v6949, %v6951
        %v6953 = vadd.f32 %v6952, -0.4999988
        %v6954 = vmul.f32 %v6949, %v6953
        %v6955 = vadd.f32 1.0, %v6954
        %v6956 = vmul.f32 %v6947, %v6947
        %v6957 = vmul.f32 %v6956, -0.00019511016
        %v6958 = vadd.f32 %v6957, 0.008332121
        %v6959 = vmul.f32 %v6956, %v6958
        %v6960 = vadd.f32 %v6959, -0.16666654
        %v6961 = vmul.f32 %v6956, %v6960
        %v6962 = vadd.f32 %v6961, 1.0
        %v6963 = vmul.f32 %v6962, %v6947
        %vm6964 = vweird.f32 %v5865
        %v6965 = vadd.s32 %v6948, 3
        %v6966 = vand.u32 %v6965, 3
        %vm6967 = vcmp.lt.s32.totalorder %v6966, 2
        %vm6968 = vcmp.eq.s32.totalorder %v6966, 0
        %v6969 = vxor.u32 %v6963, 2147483648
        %v6970 = vsel %vm6968, %v6955, %v6969
        %vm6971 = vcmp.eq.s32.totalorder %v6966, 2
        %v6972 = vxor.u32 %v6955, 2147483648
        %v6973 = vsel %vm6971, %v6972, %v6963
        %v6974 = vsel %vm6967, %v6970, %v6973
        %v6975 = vsel %vm6964, nan, %v6974
        %v6976 = vand.u32 2147483647, %v5866
        %vm6977 = vcmp.le.f32.partialorder %v6976, 0.7853982
        %vm6978 = vcmp.lt.s32.totalorder %v5866, 0
        %v6979 = vand.u32 %v5866, 2139095040
        %v6980 = vshrl.u32 %v6979, 23
        %v6981 = vsub.s32 %v6980, 127
        %v6982 = vand.u32 2147483647, %v5866
        %v6983 = vand.u32 %v6982, 8388607
        %v6984 = vor.u32 %v6983, 8388608
        %v6985 = vsub.s32 0, %v6984
        %v6986 = vadd.s32 %v6981, 1
        %vm6987 = vcmp.gt.s32.totalorder %v6986, 0
        %v6988 = vsel %vm6987, %v6986, 0
        %v6989 = vshrl.u32 %v6988, 5
        %v6990 = vand.u32 %v6988, 31
        %v6991 = vsub.s32 32, %v6990
        %v6992 = vshrl.u32 683565275, %v6991
        %v6993 = vshll.u32 683565275, %v6990
        %v6994 = vshrl.u32 2475754826, %v6991
        %v6995 = vor.u32 %v6993, %v6994
        %v6996 = vshll.u32 2475754826, %v6990
        %v6997 = vshrl.u32 2131351028, %v6991
        %v6998 = vor.u32 %v6996, %v6997
        %v6999 = vshll.u32 2131351028, %v6990
        %v7000 = vshrl.u32 2102212464, %v6991
        %v7001 = vor.u32 %v6999, %v7000
        %v7002 = vshll.u32 2102212464, %v6990
        %v7003 = vshrl.u32 920167782, %v6991
        %v7004 = vor.u32 %v7002, %v7003
        %v7005 = vshll.u32 920167782, %v6990
        %v7006 = vshrl.u32 1326507024, %v6991
        %v7007 = vor.u32 %v7005, %v7006
        %vm7008 = vcmp.lt.s32.totalorder %v6989, 1
        %vm7009 = vcmp.lt.s32.totalorder %v6989, 2
        %vm7010 = vcmp.lt.s32.totalorder %v6989, 3
        %vm7011 = vcmp.lt.s32.totalorder %v6989, 4
        %v7012 = vsel %vm7008, %v6992, %v6995
        %v7013 = vsel %vm7011, %v7001, 2102212464
        %v7014 = vsel %vm7010, %v6998, %v7013
        %v7015 = vsel %vm7009, %v7012, %v7014
        %v7016 = vsel %vm7008, %v6995, %v6998
        %v7017 = vsel %vm7011, %v7004, 920167782
        %v7018 = vsel %vm7010, %v7001, %v7017
        %v7019 = vsel %vm7009, %v7016, %v7018
        %v7020 = vsel %vm7008, %v6998, %v7001
        %v7021 = vsel %vm7011, %v7007, 1326507024
        %v7022 = vsel %vm7010, %v7004, %v7021
        %v7023 = vsel %vm7009, %v7020, %v7022
        %v7024 = vshll.u32 %v6984, 8
        %v7025 = vand.u32 %v7024, 65535
        %v7026 = vshrl.u32 %v7024, 16
        %v7027 = vand.u32 %v7023, 65535
        %v7028 = vshrl.u32 %v7023, 16
        %v7029 = vmul.u32 %v7025, %v7027
        %v7030 = vmul.u32 %v7025, %v7028
        %v7031 = vmul.u32 %v7026, %v7027
        %v7032 = vmul.u32 %v7026, %v7028
        %v7033 = vshll.u32 %v7030, 16
        %v7034 = vshrl.u32 %v7030, 16
        %v7035 = vshll.u32 %v7031, 16
        %v7036 = vshrl.u32 %v7031, 16
        %vm7037 = vc.u32 %v7029, %v7033
        %v7038 = vsel %vm7037, 1, 0
        %v7039 = vadd.s32 %v7029, %v7033
        %v7040 = vadd.s32 %v7032, %v7038
        %vm7041 = vc.u32 %v7039, %v7035
        %v7042 = vsel %vm7041, 1, 0
        %v7043 = vadd.s32 %v7039, %v7035
        %v7044 = vadd.s32 %v7040, %v7042
        %v7045 = vadd.s32 %v7044, %v7034
        %v7046 = vadd.s32 %v7045, %v7036
        %v7047 = vand.u32 %v7024, 65535
        %v7048 = vshrl.u32 %v7024, 16
        %v7049 = vand.u32 %v7019, 65535
        %v7050 = vshrl.u32 %v7019, 16
        %v7051 = vmul.u32 %v7047, %v7049
        %v7052 = vmul.u32 %v7047, %v7050
        %v7053 = vmul.u32 %v7048, %v7049
        %v7054 = vmul.u32 %v7048, %v7050
        %v7055 = vshll.u32 %v7052, 16
        %v7056 = vshrl.u32 %v7052, 16
        %v7057 = vshll.u32 %v7053, 16
        %v7058 = vshrl.u32 %v7053, 16
        %vm7059 = vc.u32 %v7051, %v7055
        %v7060 = vsel %vm7059, 1, 0
        %v7061 = vadd.s32 %v7051, %v7055
        %v7062 = vadd.s32 %v7054, %v7060
        %vm7063 = vc.u32 %v7061, %v7057
        %v7064 = vsel %vm7063, 1, 0
        %v7065 = vadd.s32 %v7061, %v7057
        %v7066 = vadd.s32 %v7062, %v7064
        %v7067 = vadd.s32 %v7066, %v7056
        %v7068 = vadd.s32 %v7067, %v7058
        %v7069 = vmul.u32 %v7024, %v7015
        %v7070 = vadd.s32 %v7046, %v7065
        %vm7071 = vc.u32 %v7046, %v7065
        %v7072 = vadd.s32 %v7068, 1
        %v7073 = vsel %vm7071, %v7072, %v7068
        %v7074 = vadd.s32 %v7069, %v7073
        %v7075 = vadd.s32 %v7074, 536870912
        %v7076 = vshrl.u32 %v7075, 30
        %v7077 = vshll.u32 %v7076, 30
        %v7078 = vsub.s32 %v7074, %v7077
        %vm7079 = vcmp.lt.s32.totalorder %v7078, 0
        %v7080 = vsub.s32 0, %v7078
        %v7081 = vsel %vm7079, %v7080, %v7078
        %v7082 = vclz %v7081
        %v7083 = vsub.s32 %v7082, 2
        %vm7084 = vcmp.gt.s32.totalorder 0, %v7083
        %v7085 = vsel %vm7084, 0, %v7083
        %v7086 = vsub.s32 32, %v7085
        %v7087 = vshll.u32 %v7078, %v7085
        %v7088 = vshrl.u32 %v7070, %v7086
        %v7089 = vor.u32 %v7087, %v7088
        %v7090 = vsub.s32 4294967266, %v7085
        %v7091 = vadd.s32 %v7090, 127
        %v7092 = vshll.u32 %v7091, 23
        %v7093 = vor.u32 4788187, %v7092
        %v7094 = vand.u32 2147483647, %v7093
        %v7096 = vcvt.s32.f32 %v7089
        %v7097 = vmul.f32 %v7096, %v7094
        %v7098 = vxor.u32 %v7097, 2147483648
        %v7099 = vsel %vm6978, %v7098, %v7097
        %v7100 = vsub.s32 4, %v7076
        %v7101 = vsel %vm6978, %v7100, %v7076
        %v7102 = vsel %vm6977, %v5866, %v7099
        %v7103 = vsel %vm6977, 0, %v7101
        %v7104 = vmul.f32 %v7102, %v7102
        %v7105 = vmul.f32 %v7104, -0.001358992
        %v7106 = vadd.f32 %v7105, 0.041655596
        %v7107 = vmul.f32 %v7104, %v7106
        %v7108 = vadd.f32 %v7107, -0.4999988
        %v7109 = vmul.f32 %v7104, %v7108
        %v7110 = vadd.f32 1.0, %v7109
        %v7111 = vmul.f32 %v7102, %v7102
        %v7112 = vmul.f32 %v7111, -0.00019511016
        %v7113 = vadd.f32 %v7112, 0.008332121
        %v7114 = vmul.f32 %v7111, %v7113
        %v7115 = vadd.f32 %v7114, -0.16666654
        %v7116 = vmul.f32 %v7111, %v7115
        %v7117 = vadd.f32 %v7116, 1.0
        %v7118 = vmul.f32 %v7117, %v7102
        %vm7119 = vweird.f32 %v5866
        %v7120 = vadd.s32 %v7103, 3
        %v7121 = vand.u32 %v7120, 3
        %vm7122 = vcmp.lt.s32.totalorder %v7121, 2
        %vm7123 = vcmp.eq.s32.totalorder %v7121, 0
        %v7124 = vxor.u32 %v7118, 2147483648
        %v7125 = vsel %vm7123, %v7110, %v7124
        %vm7126 = vcmp.eq.s32.totalorder %v7121, 2
        %v7127 = vxor.u32 %v7110, 2147483648
        %v7128 = vsel %vm7126, %v7127, %v7118
        %v7129 = vsel %vm7122, %v7125, %v7128
        %v7130 = vsel %vm7119, nan, %v7129
        %v7131 = vand.u32 2147483647, %v5867
        %vm7132 = vcmp.le.f32.partialorder %v7131, 0.7853982
        %vm7133 = vcmp.lt.s32.totalorder %v5867, 0
        %v7134 = vand.u32 %v5867, 2139095040
        %v7135 = vshrl.u32 %v7134, 23
        %v7136 = vsub.s32 %v7135, 127
        %v7137 = vand.u32 2147483647, %v5867
        %v7138 = vand.u32 %v7137, 8388607
        %v7139 = vor.u32 %v7138, 8388608
        %v7140 = vsub.s32 0, %v7139
        %v7141 = vadd.s32 %v7136, 1
        %vm7142 = vcmp.gt.s32.totalorder %v7141, 0
        %v7143 = vsel %vm7142, %v7141, 0
        %v7144 = vshrl.u32 %v7143, 5
        %v7145 = vand.u32 %v7143, 31
        %v7146 = vsub.s32 32, %v7145
        %v7147 = vshrl.u32 683565275, %v7146
        %v7148 = vshll.u32 683565275, %v7145
        %v7149 = vshrl.u32 2475754826, %v7146
        %v7150 = vor.u32 %v7148, %v7149
        %v7151 = vshll.u32 2475754826, %v7145
        %v7152 = vshrl.u32 2131351028, %v7146
        %v7153 = vor.u32 %v7151, %v7152
        %v7154 = vshll.u32 2131351028, %v7145
        %v7155 = vshrl.u32 2102212464, %v7146
        %v7156 = vor.u32 %v7154, %v7155
        %v7157 = vshll.u32 2102212464, %v7145
        %v7158 = vshrl.u32 920167782, %v7146
        %v7159 = vor.u32 %v7157, %v7158
        %v7160 = vshll.u32 920167782, %v7145
        %v7161 = vshrl.u32 1326507024, %v7146
        %v7162 = vor.u32 %v7160, %v7161
        %vm7163 = vcmp.lt.s32.totalorder %v7144, 1
        %vm7164 = vcmp.lt.s32.totalorder %v7144, 2
        %vm7165 = vcmp.lt.s32.totalorder %v7144, 3
        %vm7166 = vcmp.lt.s32.totalorder %v7144, 4
        %v7167 = vsel %vm7163, %v7147, %v7150
        %v7168 = vsel %vm7166, %v7156, 2102212464
        %v7169 = vsel %vm7165, %v7153, %v7168
        %v7170 = vsel %vm7164, %v7167, %v7169
        %v7171 = vsel %vm7163, %v7150, %v7153
        %v7172 = vsel %vm7166, %v7159, 920167782
        %v7173 = vsel %vm7165, %v7156, %v7172
        %v7174 = vsel %vm7164, %v7171, %v7173
        %v7175 = vsel %vm7163, %v7153, %v7156
        %v7176 = vsel %vm7166, %v7162, 1326507024
        %v7177 = vsel %vm7165, %v7159, %v7176
        %v7178 = vsel %vm7164, %v7175, %v7177
        %v7179 = vshll.u32 %v7139, 8
        %v7180 = vand.u32 %v7179, 65535
        %v7181 = vshrl.u32 %v7179, 16
        %v7182 = vand.u32 %v7178, 65535
        %v7183 = vshrl.u32 %v7178, 16
        %v7184 = vmul.u32 %v7180, %v7182
        %v7185 = vmul.u32 %v7180, %v7183
        %v7186 = vmul.u32 %v7181, %v7182
        %v7187 = vmul.u32 %v7181, %v7183
        %v7188 = vshll.u32 %v7185, 16
        %v7189 = vshrl.u32 %v7185, 16
        %v7190 = vshll.u32 %v7186, 16
        %v7191 = vshrl.u32 %v7186, 16
        %vm7192 = vc.u32 %v7184, %v7188
        %v7193 = vsel %vm7192, 1, 0
        %v7194 = vadd.s32 %v7184, %v7188
        %v7195 = vadd.s32 %v7187, %v7193
        %vm7196 = vc.u32 %v7194, %v7190
        %v7197 = vsel %vm7196, 1, 0
        %v7198 = vadd.s32 %v7194, %v7190
        %v7199 = vadd.s32 %v7195, %v7197
        %v7200 = vadd.s32 %v7199, %v7189
        %v7201 = vadd.s32 %v7200, %v7191
        %v7202 = vand.u32 %v7179, 65535
        %v7203 = vshrl.u32 %v7179, 16
        %v7204 = vand.u32 %v7174, 65535
        %v7205 = vshrl.u32 %v7174, 16
        %v7206 = vmul.u32 %v7202, %v7204
        %v7207 = vmul.u32 %v7202, %v7205
        %v7208 = vmul.u32 %v7203, %v7204
        %v7209 = vmul.u32 %v7203, %v7205
        %v7210 = vshll.u32 %v7207, 16
        %v7211 = vshrl.u32 %v7207, 16
        %v7212 = vshll.u32 %v7208, 16
        %v7213 = vshrl.u32 %v7208, 16
        %vm7214 = vc.u32 %v7206, %v7210
        %v7215 = vsel %vm7214, 1, 0
        %v7216 = vadd.s32 %v7206, %v7210
        %v7217 = vadd.s32 %v7209, %v7215
        %vm7218 = vc.u32 %v7216, %v7212
        %v7219 = vsel %vm7218, 1, 0
        %v7220 = vadd.s32 %v7216, %v7212
        %v7221 = vadd.s32 %v7217, %v7219
        %v7222 = vadd.s32 %v7221, %v7211
        %v7223 = vadd.s32 %v7222, %v7213
        %v7224 = vmul.u32 %v7179, %v7170
        %v7225 = vadd.s32 %v7201, %v7220
        %vm7226 = vc.u32 %v7201, %v7220
        %v7227 = vadd.s32 %v7223, 1
        %v7228 = vsel %vm7226, %v7227, %v7223
        %v7229 = vadd.s32 %v7224, %v7228
        %v7230 = vadd.s32 %v7229, 536870912
        %v7231 = vshrl.u32 %v7230, 30
        %v7232 = vshll.u32 %v7231, 30
        %v7233 = vsub.s32 %v7229, %v7232
        %vm7234 = vcmp.lt.s32.totalorder %v7233, 0
        %v7235 = vsub.s32 0, %v7233
        %v7236 = vsel %vm7234, %v7235, %v7233
        %v7237 = vclz %v7236
        %v7238 = vsub.s32 %v7237, 2
        %vm7239 = vcmp.gt.s32.totalorder 0, %v7238
        %v7240 = vsel %vm7239, 0, %v7238
        %v7241 = vsub.s32 32, %v7240
        %v7242 = vshll.u32 %v7233, %v7240
        %v7243 = vshrl.u32 %v7225, %v7241
        %v7244 = vor.u32 %v7242, %v7243
        %v7245 = vsub.s32 4294967266, %v7240
        %v7246 = vadd.s32 %v7245, 127
        %v7247 = vshll.u32 %v7246, 23
        %v7248 = vor.u32 4788187, %v7247
        %v7249 = vand.u32 2147483647, %v7248
        %v7251 = vcvt.s32.f32 %v7244
        %v7252 = vmul.f32 %v7251, %v7249
        %v7253 = vxor.u32 %v7252, 2147483648
        %v7254 = vsel %vm7133, %v7253, %v7252
        %v7255 = vsub.s32 4, %v7231
        %v7256 = vsel %vm7133, %v7255, %v7231
        %v7257 = vsel %vm7132, %v5867, %v7254
        %v7258 = vsel %vm7132, 0, %v7256
        %v7259 = vmul.f32 %v7257, %v7257
        %v7260 = vmul.f32 %v7259, -0.001358992
        %v7261 = vadd.f32 %v7260, 0.041655596
        %v7262 = vmul.f32 %v7259, %v7261
        %v7263 = vadd.f32 %v7262, -0.4999988
        %v7264 = vmul.f32 %v7259, %v7263
        %v7265 = vadd.f32 1.0, %v7264
        %v7266 = vmul.f32 %v7257, %v7257
        %v7267 = vmul.f32 %v7266, -0.00019511016
        %v7268 = vadd.f32 %v7267, 0.008332121
        %v7269 = vmul.f32 %v7266, %v7268
        %v7270 = vadd.f32 %v7269, -0.16666654
        %v7271 = vmul.f32 %v7266, %v7270
        %v7272 = vadd.f32 %v7271, 1.0
        %v7273 = vmul.f32 %v7272, %v7257
        %vm7274 = vweird.f32 %v5867
        %v7275 = vadd.s32 %v7258, 3
        %v7276 = vand.u32 %v7275, 3
        %vm7277 = vcmp.lt.s32.totalorder %v7276, 2
        %vm7278 = vcmp.eq.s32.totalorder %v7276, 0
        %v7279 = vxor.u32 %v7273, 2147483648
        %v7280 = vsel %vm7278, %v7265, %v7279
        %vm7281 = vcmp.eq.s32.totalorder %v7276, 2
        %v7282 = vxor.u32 %v7265, 2147483648
        %v7283 = vsel %vm7281, %v7282, %v7273
        %v7284 = vsel %vm7277, %v7280, %v7283
        %v7285 = vsel %vm7274, nan, %v7284
        %v7286 = vand.u32 2147483647, %v5868
        %vm7287 = vcmp.le.f32.partialorder %v7286, 0.7853982
        %vm7288 = vcmp.lt.s32.totalorder %v5868, 0
        %v7289 = vand.u32 %v5868, 2139095040
        %v7290 = vshrl.u32 %v7289, 23
        %v7291 = vsub.s32 %v7290, 127
        %v7292 = vand.u32 2147483647, %v5868
        %v7293 = vand.u32 %v7292, 8388607
        %v7294 = vor.u32 %v7293, 8388608
        %v7295 = vsub.s32 0, %v7294
        %v7296 = vadd.s32 %v7291, 1
        %vm7297 = vcmp.gt.s32.totalorder %v7296, 0
        %v7298 = vsel %vm7297, %v7296, 0
        %v7299 = vshrl.u32 %v7298, 5
        %v7300 = vand.u32 %v7298, 31
        %v7301 = vsub.s32 32, %v7300
        %v7302 = vshrl.u32 683565275, %v7301
        %v7303 = vshll.u32 683565275, %v7300
        %v7304 = vshrl.u32 2475754826, %v7301
        %v7305 = vor.u32 %v7303, %v7304
        %v7306 = vshll.u32 2475754826, %v7300
        %v7307 = vshrl.u32 2131351028, %v7301
        %v7308 = vor.u32 %v7306, %v7307
        %v7309 = vshll.u32 2131351028, %v7300
        %v7310 = vshrl.u32 2102212464, %v7301
        %v7311 = vor.u32 %v7309, %v7310
        %v7312 = vshll.u32 2102212464, %v7300
        %v7313 = vshrl.u32 920167782, %v7301
        %v7314 = vor.u32 %v7312, %v7313
        %v7315 = vshll.u32 920167782, %v7300
        %v7316 = vshrl.u32 1326507024, %v7301
        %v7317 = vor.u32 %v7315, %v7316
        %vm7318 = vcmp.lt.s32.totalorder %v7299, 1
        %vm7319 = vcmp.lt.s32.totalorder %v7299, 2
        %vm7320 = vcmp.lt.s32.totalorder %v7299, 3
        %vm7321 = vcmp.lt.s32.totalorder %v7299, 4
        %v7322 = vsel %vm7318, %v7302, %v7305
        %v7323 = vsel %vm7321, %v7311, 2102212464
        %v7324 = vsel %vm7320, %v7308, %v7323
        %v7325 = vsel %vm7319, %v7322, %v7324
        %v7326 = vsel %vm7318, %v7305, %v7308
        %v7327 = vsel %vm7321, %v7314, 920167782
        %v7328 = vsel %vm7320, %v7311, %v7327
        %v7329 = vsel %vm7319, %v7326, %v7328
        %v7330 = vsel %vm7318, %v7308, %v7311
        %v7331 = vsel %vm7321, %v7317, 1326507024
        %v7332 = vsel %vm7320, %v7314, %v7331
        %v7333 = vsel %vm7319, %v7330, %v7332
        %v7334 = vshll.u32 %v7294, 8
        %v7335 = vand.u32 %v7334, 65535
        %v7336 = vshrl.u32 %v7334, 16
        %v7337 = vand.u32 %v7333, 65535
        %v7338 = vshrl.u32 %v7333, 16
        %v7339 = vmul.u32 %v7335, %v7337
        %v7340 = vmul.u32 %v7335, %v7338
        %v7341 = vmul.u32 %v7336, %v7337
        %v7342 = vmul.u32 %v7336, %v7338
        %v7343 = vshll.u32 %v7340, 16
        %v7344 = vshrl.u32 %v7340, 16
        %v7345 = vshll.u32 %v7341, 16
        %v7346 = vshrl.u32 %v7341, 16
        %vm7347 = vc.u32 %v7339, %v7343
        %v7348 = vsel %vm7347, 1, 0
        %v7349 = vadd.s32 %v7339, %v7343
        %v7350 = vadd.s32 %v7342, %v7348
        %vm7351 = vc.u32 %v7349, %v7345
        %v7352 = vsel %vm7351, 1, 0
        %v7353 = vadd.s32 %v7349, %v7345
        %v7354 = vadd.s32 %v7350, %v7352
        %v7355 = vadd.s32 %v7354, %v7344
        %v7356 = vadd.s32 %v7355, %v7346
        %v7357 = vand.u32 %v7334, 65535
        %v7358 = vshrl.u32 %v7334, 16
        %v7359 = vand.u32 %v7329, 65535
        %v7360 = vshrl.u32 %v7329, 16
        %v7361 = vmul.u32 %v7357, %v7359
        %v7362 = vmul.u32 %v7357, %v7360
        %v7363 = vmul.u32 %v7358, %v7359
        %v7364 = vmul.u32 %v7358, %v7360
        %v7365 = vshll.u32 %v7362, 16
        %v7366 = vshrl.u32 %v7362, 16
        %v7367 = vshll.u32 %v7363, 16
        %v7368 = vshrl.u32 %v7363, 16
        %vm7369 = vc.u32 %v7361, %v7365
        %v7370 = vsel %vm7369, 1, 0
        %v7371 = vadd.s32 %v7361, %v7365
        %v7372 = vadd.s32 %v7364, %v7370
        %vm7373 = vc.u32 %v7371, %v7367
        %v7374 = vsel %vm7373, 1, 0
        %v7375 = vadd.s32 %v7371, %v7367
        %v7376 = vadd.s32 %v7372, %v7374
        %v7377 = vadd.s32 %v7376, %v7366
        %v7378 = vadd.s32 %v7377, %v7368
        %v7379 = vmul.u32 %v7334, %v7325
        %v7380 = vadd.s32 %v7356, %v7375
        %vm7381 = vc.u32 %v7356, %v7375
        %v7382 = vadd.s32 %v7378, 1
        %v7383 = vsel %vm7381, %v7382, %v7378
        %v7384 = vadd.s32 %v7379, %v7383
        %v7385 = vadd.s32 %v7384, 536870912
        %v7386 = vshrl.u32 %v7385, 30
        %v7387 = vshll.u32 %v7386, 30
        %v7388 = vsub.s32 %v7384, %v7387
        %vm7389 = vcmp.lt.s32.totalorder %v7388, 0
        %v7390 = vsub.s32 0, %v7388
        %v7391 = vsel %vm7389, %v7390, %v7388
        %v7392 = vclz %v7391
        %v7393 = vsub.s32 %v7392, 2
        %vm7394 = vcmp.gt.s32.totalorder 0, %v7393
        %v7395 = vsel %vm7394, 0, %v7393
        %v7396 = vsub.s32 32, %v7395
        %v7397 = vshll.u32 %v7388, %v7395
        %v7398 = vshrl.u32 %v7380, %v7396
        %v7399 = vor.u32 %v7397, %v7398
        %v7400 = vsub.s32 4294967266, %v7395
        %v7401 = vadd.s32 %v7400, 127
        %v7402 = vshll.u32 %v7401, 23
        %v7403 = vor.u32 4788187, %v7402
        %v7404 = vand.u32 2147483647, %v7403
        %v7406 = vcvt.s32.f32 %v7399
        %v7407 = vmul.f32 %v7406, %v7404
        %v7408 = vxor.u32 %v7407, 2147483648
        %v7409 = vsel %vm7288, %v7408, %v7407
        %v7410 = vsub.s32 4, %v7386
        %v7411 = vsel %vm7288, %v7410, %v7386
        %v7412 = vsel %vm7287, %v5868, %v7409
        %v7413 = vsel %vm7287, 0, %v7411
        %v7414 = vmul.f32 %v7412, %v7412
        %v7415 = vmul.f32 %v7414, -0.001358992
        %v7416 = vadd.f32 %v7415, 0.041655596
        %v7417 = vmul.f32 %v7414, %v7416
        %v7418 = vadd.f32 %v7417, -0.4999988
        %v7419 = vmul.f32 %v7414, %v7418
        %v7420 = vadd.f32 1.0, %v7419
        %v7421 = vmul.f32 %v7412, %v7412
        %v7422 = vmul.f32 %v7421, -0.00019511016
        %v7423 = vadd.f32 %v7422, 0.008332121
        %v7424 = vmul.f32 %v7421, %v7423
        %v7425 = vadd.f32 %v7424, -0.16666654
        %v7426 = vmul.f32 %v7421, %v7425
        %v7427 = vadd.f32 %v7426, 1.0
        %v7428 = vmul.f32 %v7427, %v7412
        %vm7429 = vweird.f32 %v5868
        %v7430 = vadd.s32 %v7413, 3
        %v7431 = vand.u32 %v7430, 3
        %vm7432 = vcmp.lt.s32.totalorder %v7431, 2
        %vm7433 = vcmp.eq.s32.totalorder %v7431, 0
        %v7434 = vxor.u32 %v7428, 2147483648
        %v7435 = vsel %vm7433, %v7420, %v7434
        %vm7436 = vcmp.eq.s32.totalorder %v7431, 2
        %v7437 = vxor.u32 %v7420, 2147483648
        %v7438 = vsel %vm7436, %v7437, %v7428
        %v7439 = vsel %vm7432, %v7435, %v7438
        %v7440 = vsel %vm7429, nan, %v7439
        %v7441 = vand.u32 2147483647, %v5869
        %vm7442 = vcmp.le.f32.partialorder %v7441, 0.7853982
        %vm7443 = vcmp.lt.s32.totalorder %v5869, 0
        %v7444 = vand.u32 %v5869, 2139095040
        %v7445 = vshrl.u32 %v7444, 23
        %v7446 = vsub.s32 %v7445, 127
        %v7447 = vand.u32 2147483647, %v5869
        %v7448 = vand.u32 %v7447, 8388607
        %v7449 = vor.u32 %v7448, 8388608
        %v7450 = vsub.s32 0, %v7449
        %v7451 = vadd.s32 %v7446, 1
        %vm7452 = vcmp.gt.s32.totalorder %v7451, 0
        %v7453 = vsel %vm7452, %v7451, 0
        %v7454 = vshrl.u32 %v7453, 5
        %v7455 = vand.u32 %v7453, 31
        %v7456 = vsub.s32 32, %v7455
        %v7457 = vshrl.u32 683565275, %v7456
        %v7458 = vshll.u32 683565275, %v7455
        %v7459 = vshrl.u32 2475754826, %v7456
        %v7460 = vor.u32 %v7458, %v7459
        %v7461 = vshll.u32 2475754826, %v7455
        %v7462 = vshrl.u32 2131351028, %v7456
        %v7463 = vor.u32 %v7461, %v7462
        %v7464 = vshll.u32 2131351028, %v7455
        %v7465 = vshrl.u32 2102212464, %v7456
        %v7466 = vor.u32 %v7464, %v7465
        %v7467 = vshll.u32 2102212464, %v7455
        %v7468 = vshrl.u32 920167782, %v7456
        %v7469 = vor.u32 %v7467, %v7468
        %v7470 = vshll.u32 920167782, %v7455
        %v7471 = vshrl.u32 1326507024, %v7456
        %v7472 = vor.u32 %v7470, %v7471
        %vm7473 = vcmp.lt.s32.totalorder %v7454, 1
        %vm7474 = vcmp.lt.s32.totalorder %v7454, 2
        %vm7475 = vcmp.lt.s32.totalorder %v7454, 3
        %vm7476 = vcmp.lt.s32.totalorder %v7454, 4
        %v7477 = vsel %vm7473, %v7457, %v7460
        %v7478 = vsel %vm7476, %v7466, 2102212464
        %v7479 = vsel %vm7475, %v7463, %v7478
        %v7480 = vsel %vm7474, %v7477, %v7479
        %v7481 = vsel %vm7473, %v7460, %v7463
        %v7482 = vsel %vm7476, %v7469, 920167782
        %v7483 = vsel %vm7475, %v7466, %v7482
        %v7484 = vsel %vm7474, %v7481, %v7483
        %v7485 = vsel %vm7473, %v7463, %v7466
        %v7486 = vsel %vm7476, %v7472, 1326507024
        %v7487 = vsel %vm7475, %v7469, %v7486
        %v7488 = vsel %vm7474, %v7485, %v7487
        %v7489 = vshll.u32 %v7449, 8
        %v7490 = vand.u32 %v7489, 65535
        %v7491 = vshrl.u32 %v7489, 16
        %v7492 = vand.u32 %v7488, 65535
        %v7493 = vshrl.u32 %v7488, 16
        %v7494 = vmul.u32 %v7490, %v7492
        %v7495 = vmul.u32 %v7490, %v7493
        %v7496 = vmul.u32 %v7491, %v7492
        %v7497 = vmul.u32 %v7491, %v7493
        %v7498 = vshll.u32 %v7495, 16
        %v7499 = vshrl.u32 %v7495, 16
        %v7500 = vshll.u32 %v7496, 16
        %v7501 = vshrl.u32 %v7496, 16
        %vm7502 = vc.u32 %v7494, %v7498
        %v7503 = vsel %vm7502, 1, 0
        %v7504 = vadd.s32 %v7494, %v7498
        %v7505 = vadd.s32 %v7497, %v7503
        %vm7506 = vc.u32 %v7504, %v7500
        %v7507 = vsel %vm7506, 1, 0
        %v7508 = vadd.s32 %v7504, %v7500
        %v7509 = vadd.s32 %v7505, %v7507
        %v7510 = vadd.s32 %v7509, %v7499
        %v7511 = vadd.s32 %v7510, %v7501
        %v7512 = vand.u32 %v7489, 65535
        %v7513 = vshrl.u32 %v7489, 16
        %v7514 = vand.u32 %v7484, 65535
        %v7515 = vshrl.u32 %v7484, 16
        %v7516 = vmul.u32 %v7512, %v7514
        %v7517 = vmul.u32 %v7512, %v7515
        %v7518 = vmul.u32 %v7513, %v7514
        %v7519 = vmul.u32 %v7513, %v7515
        %v7520 = vshll.u32 %v7517, 16
        %v7521 = vshrl.u32 %v7517, 16
        %v7522 = vshll.u32 %v7518, 16
        %v7523 = vshrl.u32 %v7518, 16
        %vm7524 = vc.u32 %v7516, %v7520
        %v7525 = vsel %vm7524, 1, 0
        %v7526 = vadd.s32 %v7516, %v7520
        %v7527 = vadd.s32 %v7519, %v7525
        %vm7528 = vc.u32 %v7526, %v7522
        %v7529 = vsel %vm7528, 1, 0
        %v7530 = vadd.s32 %v7526, %v7522
        %v7531 = vadd.s32 %v7527, %v7529
        %v7532 = vadd.s32 %v7531, %v7521
        %v7533 = vadd.s32 %v7532, %v7523
        %v7534 = vmul.u32 %v7489, %v7480
        %v7535 = vadd.s32 %v7511, %v7530
        %vm7536 = vc.u32 %v7511, %v7530
        %v7537 = vadd.s32 %v7533, 1
        %v7538 = vsel %vm7536, %v7537, %v7533
        %v7539 = vadd.s32 %v7534, %v7538
        %v7540 = vadd.s32 %v7539, 536870912
        %v7541 = vshrl.u32 %v7540, 30
        %v7542 = vshll.u32 %v7541, 30
        %v7543 = vsub.s32 %v7539, %v7542
        %vm7544 = vcmp.lt.s32.totalorder %v7543, 0
        %v7545 = vsub.s32 0, %v7543
        %v7546 = vsel %vm7544, %v7545, %v7543
        %v7547 = vclz %v7546
        %v7548 = vsub.s32 %v7547, 2
        %vm7549 = vcmp.gt.s32.totalorder 0, %v7548
        %v7550 = vsel %vm7549, 0, %v7548
        %v7551 = vsub.s32 32, %v7550
        %v7552 = vshll.u32 %v7543, %v7550
        %v7553 = vshrl.u32 %v7535, %v7551
        %v7554 = vor.u32 %v7552, %v7553
        %v7555 = vsub.s32 4294967266, %v7550
        %v7556 = vadd.s32 %v7555, 127
        %v7557 = vshll.u32 %v7556, 23
        %v7558 = vor.u32 4788187, %v7557
        %v7559 = vand.u32 2147483647, %v7558
        %v7561 = vcvt.s32.f32 %v7554
        %v7562 = vmul.f32 %v7561, %v7559
        %v7563 = vxor.u32 %v7562, 2147483648
        %v7564 = vsel %vm7443, %v7563, %v7562
        %v7565 = vsub.s32 4, %v7541
        %v7566 = vsel %vm7443, %v7565, %v7541
        %v7567 = vsel %vm7442, %v5869, %v7564
        %v7568 = vsel %vm7442, 0, %v7566
        %v7569 = vmul.f32 %v7567, %v7567
        %v7570 = vmul.f32 %v7569, -0.001358992
        %v7571 = vadd.f32 %v7570, 0.041655596
        %v7572 = vmul.f32 %v7569, %v7571
        %v7573 = vadd.f32 %v7572, -0.4999988
        %v7574 = vmul.f32 %v7569, %v7573
        %v7575 = vadd.f32 1.0, %v7574
        %v7576 = vmul.f32 %v7567, %v7567
        %v7577 = vmul.f32 %v7576, -0.00019511016
        %v7578 = vadd.f32 %v7577, 0.008332121
        %v7579 = vmul.f32 %v7576, %v7578
        %v7580 = vadd.f32 %v7579, -0.16666654
        %v7581 = vmul.f32 %v7576, %v7580
        %v7582 = vadd.f32 %v7581, 1.0
        %v7583 = vmul.f32 %v7582, %v7567
        %vm7584 = vweird.f32 %v5869
        %v7585 = vadd.s32 %v7568, 3
        %v7586 = vand.u32 %v7585, 3
        %vm7587 = vcmp.lt.s32.totalorder %v7586, 2
        %vm7588 = vcmp.eq.s32.totalorder %v7586, 0
        %v7589 = vxor.u32 %v7583, 2147483648
        %v7590 = vsel %vm7588, %v7575, %v7589
        %vm7591 = vcmp.eq.s32.totalorder %v7586, 2
        %v7592 = vxor.u32 %v7575, 2147483648
        %v7593 = vsel %vm7591, %v7592, %v7583
        %v7594 = vsel %vm7587, %v7590, %v7593
        %v7595 = vsel %vm7584, nan, %v7594
        %v7596 = vand.u32 2147483647, %v5870
        %vm7597 = vcmp.le.f32.partialorder %v7596, 0.7853982
        %vm7598 = vcmp.lt.s32.totalorder %v5870, 0
        %v7599 = vand.u32 %v5870, 2139095040
        %v7600 = vshrl.u32 %v7599, 23
        %v7601 = vsub.s32 %v7600, 127
        %v7602 = vand.u32 2147483647, %v5870
        %v7603 = vand.u32 %v7602, 8388607
        %v7604 = vor.u32 %v7603, 8388608
        %v7605 = vsub.s32 0, %v7604
        %v7606 = vadd.s32 %v7601, 1
        %vm7607 = vcmp.gt.s32.totalorder %v7606, 0
        %v7608 = vsel %vm7607, %v7606, 0
        %v7609 = vshrl.u32 %v7608, 5
        %v7610 = vand.u32 %v7608, 31
        %v7611 = vsub.s32 32, %v7610
        %v7612 = vshrl.u32 683565275, %v7611
        %v7613 = vshll.u32 683565275, %v7610
        %v7614 = vshrl.u32 2475754826, %v7611
        %v7615 = vor.u32 %v7613, %v7614
        %v7616 = vshll.u32 2475754826, %v7610
        %v7617 = vshrl.u32 2131351028, %v7611
        %v7618 = vor.u32 %v7616, %v7617
        %v7619 = vshll.u32 2131351028, %v7610
        %v7620 = vshrl.u32 2102212464, %v7611
        %v7621 = vor.u32 %v7619, %v7620
        %v7622 = vshll.u32 2102212464, %v7610
        %v7623 = vshrl.u32 920167782, %v7611
        %v7624 = vor.u32 %v7622, %v7623
        %v7625 = vshll.u32 920167782, %v7610
        %v7626 = vshrl.u32 1326507024, %v7611
        %v7627 = vor.u32 %v7625, %v7626
        %vm7628 = vcmp.lt.s32.totalorder %v7609, 1
        %vm7629 = vcmp.lt.s32.totalorder %v7609, 2
        %vm7630 = vcmp.lt.s32.totalorder %v7609, 3
        %vm7631 = vcmp.lt.s32.totalorder %v7609, 4
        %v7632 = vsel %vm7628, %v7612, %v7615
        %v7633 = vsel %vm7631, %v7621, 2102212464
        %v7634 = vsel %vm7630, %v7618, %v7633
        %v7635 = vsel %vm7629, %v7632, %v7634
        %v7636 = vsel %vm7628, %v7615, %v7618
        %v7637 = vsel %vm7631, %v7624, 920167782
        %v7638 = vsel %vm7630, %v7621, %v7637
        %v7639 = vsel %vm7629, %v7636, %v7638
        %v7640 = vsel %vm7628, %v7618, %v7621
        %v7641 = vsel %vm7631, %v7627, 1326507024
        %v7642 = vsel %vm7630, %v7624, %v7641
        %v7643 = vsel %vm7629, %v7640, %v7642
        %v7644 = vshll.u32 %v7604, 8
        %v7645 = vand.u32 %v7644, 65535
        %v7646 = vshrl.u32 %v7644, 16
        %v7647 = vand.u32 %v7643, 65535
        %v7648 = vshrl.u32 %v7643, 16
        %v7649 = vmul.u32 %v7645, %v7647
        %v7650 = vmul.u32 %v7645, %v7648
        %v7651 = vmul.u32 %v7646, %v7647
        %v7652 = vmul.u32 %v7646, %v7648
        %v7653 = vshll.u32 %v7650, 16
        %v7654 = vshrl.u32 %v7650, 16
        %v7655 = vshll.u32 %v7651, 16
        %v7656 = vshrl.u32 %v7651, 16
        %vm7657 = vc.u32 %v7649, %v7653
        %v7658 = vsel %vm7657, 1, 0
        %v7659 = vadd.s32 %v7649, %v7653
        %v7660 = vadd.s32 %v7652, %v7658
        %vm7661 = vc.u32 %v7659, %v7655
        %v7662 = vsel %vm7661, 1, 0
        %v7663 = vadd.s32 %v7659, %v7655
        %v7664 = vadd.s32 %v7660, %v7662
        %v7665 = vadd.s32 %v7664, %v7654
        %v7666 = vadd.s32 %v7665, %v7656
        %v7667 = vand.u32 %v7644, 65535
        %v7668 = vshrl.u32 %v7644, 16
        %v7669 = vand.u32 %v7639, 65535
        %v7670 = vshrl.u32 %v7639, 16
        %v7671 = vmul.u32 %v7667, %v7669
        %v7672 = vmul.u32 %v7667, %v7670
        %v7673 = vmul.u32 %v7668, %v7669
        %v7674 = vmul.u32 %v7668, %v7670
        %v7675 = vshll.u32 %v7672, 16
        %v7676 = vshrl.u32 %v7672, 16
        %v7677 = vshll.u32 %v7673, 16
        %v7678 = vshrl.u32 %v7673, 16
        %vm7679 = vc.u32 %v7671, %v7675
        %v7680 = vsel %vm7679, 1, 0
        %v7681 = vadd.s32 %v7671, %v7675
        %v7682 = vadd.s32 %v7674, %v7680
        %vm7683 = vc.u32 %v7681, %v7677
        %v7684 = vsel %vm7683, 1, 0
        %v7685 = vadd.s32 %v7681, %v7677
        %v7686 = vadd.s32 %v7682, %v7684
        %v7687 = vadd.s32 %v7686, %v7676
        %v7688 = vadd.s32 %v7687, %v7678
        %v7689 = vmul.u32 %v7644, %v7635
        %v7690 = vadd.s32 %v7666, %v7685
        %vm7691 = vc.u32 %v7666, %v7685
        %v7692 = vadd.s32 %v7688, 1
        %v7693 = vsel %vm7691, %v7692, %v7688
        %v7694 = vadd.s32 %v7689, %v7693
        %v7695 = vadd.s32 %v7694, 536870912
        %v7696 = vshrl.u32 %v7695, 30
        %v7697 = vshll.u32 %v7696, 30
        %v7698 = vsub.s32 %v7694, %v7697
        %vm7699 = vcmp.lt.s32.totalorder %v7698, 0
        %v7700 = vsub.s32 0, %v7698
        %v7701 = vsel %vm7699, %v7700, %v7698
        %v7702 = vclz %v7701
        %v7703 = vsub.s32 %v7702, 2
        %vm7704 = vcmp.gt.s32.totalorder 0, %v7703
        %v7705 = vsel %vm7704, 0, %v7703
        %v7706 = vsub.s32 32, %v7705
        %v7707 = vshll.u32 %v7698, %v7705
        %v7708 = vshrl.u32 %v7690, %v7706
        %v7709 = vor.u32 %v7707, %v7708
        %v7710 = vsub.s32 4294967266, %v7705
        %v7711 = vadd.s32 %v7710, 127
        %v7712 = vshll.u32 %v7711, 23
        %v7713 = vor.u32 4788187, %v7712
        %v7714 = vand.u32 2147483647, %v7713
        %v7716 = vcvt.s32.f32 %v7709
        %v7717 = vmul.f32 %v7716, %v7714
        %v7718 = vxor.u32 %v7717, 2147483648
        %v7719 = vsel %vm7598, %v7718, %v7717
        %v7720 = vsub.s32 4, %v7696
        %v7721 = vsel %vm7598, %v7720, %v7696
        %v7722 = vsel %vm7597, %v5870, %v7719
        %v7723 = vsel %vm7597, 0, %v7721
        %v7724 = vmul.f32 %v7722, %v7722
        %v7725 = vmul.f32 %v7724, -0.001358992
        %v7726 = vadd.f32 %v7725, 0.041655596
        %v7727 = vmul.f32 %v7724, %v7726
        %v7728 = vadd.f32 %v7727, -0.4999988
        %v7729 = vmul.f32 %v7724, %v7728
        %v7730 = vadd.f32 1.0, %v7729
        %v7731 = vmul.f32 %v7722, %v7722
        %v7732 = vmul.f32 %v7731, -0.00019511016
        %v7733 = vadd.f32 %v7732, 0.008332121
        %v7734 = vmul.f32 %v7731, %v7733
        %v7735 = vadd.f32 %v7734, -0.16666654
        %v7736 = vmul.f32 %v7731, %v7735
        %v7737 = vadd.f32 %v7736, 1.0
        %v7738 = vmul.f32 %v7737, %v7722
        %vm7739 = vweird.f32 %v5870
        %v7740 = vadd.s32 %v7723, 3
        %v7741 = vand.u32 %v7740, 3
        %vm7742 = vcmp.lt.s32.totalorder %v7741, 2
        %vm7743 = vcmp.eq.s32.totalorder %v7741, 0
        %v7744 = vxor.u32 %v7738, 2147483648
        %v7745 = vsel %vm7743, %v7730, %v7744
        %vm7746 = vcmp.eq.s32.totalorder %v7741, 2
        %v7747 = vxor.u32 %v7730, 2147483648
        %v7748 = vsel %vm7746, %v7747, %v7738
        %v7749 = vsel %vm7742, %v7745, %v7748
        %v7750 = vsel %vm7739, nan, %v7749
        %v7751 = vand.u32 2147483647, %v5871
        %vm7752 = vcmp.le.f32.partialorder %v7751, 0.7853982
        %vm7753 = vcmp.lt.s32.totalorder %v5871, 0
        %v7754 = vand.u32 %v5871, 2139095040
        %v7755 = vshrl.u32 %v7754, 23
        %v7756 = vsub.s32 %v7755, 127
        %v7757 = vand.u32 2147483647, %v5871
        %v7758 = vand.u32 %v7757, 8388607
        %v7759 = vor.u32 %v7758, 8388608
        %v7760 = vsub.s32 0, %v7759
        %v7761 = vadd.s32 %v7756, 1
        %vm7762 = vcmp.gt.s32.totalorder %v7761, 0
        %v7763 = vsel %vm7762, %v7761, 0
        %v7764 = vshrl.u32 %v7763, 5
        %v7765 = vand.u32 %v7763, 31
        %v7766 = vsub.s32 32, %v7765
        %v7767 = vshrl.u32 683565275, %v7766
        %v7768 = vshll.u32 683565275, %v7765
        %v7769 = vshrl.u32 2475754826, %v7766
        %v7770 = vor.u32 %v7768, %v7769
        %v7771 = vshll.u32 2475754826, %v7765
        %v7772 = vshrl.u32 2131351028, %v7766
        %v7773 = vor.u32 %v7771, %v7772
        %v7774 = vshll.u32 2131351028, %v7765
        %v7775 = vshrl.u32 2102212464, %v7766
        %v7776 = vor.u32 %v7774, %v7775
        %v7777 = vshll.u32 2102212464, %v7765
        %v7778 = vshrl.u32 920167782, %v7766
        %v7779 = vor.u32 %v7777, %v7778
        %v7780 = vshll.u32 920167782, %v7765
        %v7781 = vshrl.u32 1326507024, %v7766
        %v7782 = vor.u32 %v7780, %v7781
        %vm7783 = vcmp.lt.s32.totalorder %v7764, 1
        %vm7784 = vcmp.lt.s32.totalorder %v7764, 2
        %vm7785 = vcmp.lt.s32.totalorder %v7764, 3
        %vm7786 = vcmp.lt.s32.totalorder %v7764, 4
        %v7787 = vsel %vm7783, %v7767, %v7770
        %v7788 = vsel %vm7786, %v7776, 2102212464
        %v7789 = vsel %vm7785, %v7773, %v7788
        %v7790 = vsel %vm7784, %v7787, %v7789
        %v7791 = vsel %vm7783, %v7770, %v7773
        %v7792 = vsel %vm7786, %v7779, 920167782
        %v7793 = vsel %vm7785, %v7776, %v7792
        %v7794 = vsel %vm7784, %v7791, %v7793
        %v7795 = vsel %vm7783, %v7773, %v7776
        %v7796 = vsel %vm7786, %v7782, 1326507024
        %v7797 = vsel %vm7785, %v7779, %v7796
        %v7798 = vsel %vm7784, %v7795, %v7797
        %v7799 = vshll.u32 %v7759, 8
        %v7800 = vand.u32 %v7799, 65535
        %v7801 = vshrl.u32 %v7799, 16
        %v7802 = vand.u32 %v7798, 65535
        %v7803 = vshrl.u32 %v7798, 16
        %v7804 = vmul.u32 %v7800, %v7802
        %v7805 = vmul.u32 %v7800, %v7803
        %v7806 = vmul.u32 %v7801, %v7802
        %v7807 = vmul.u32 %v7801, %v7803
        %v7808 = vshll.u32 %v7805, 16
        %v7809 = vshrl.u32 %v7805, 16
        %v7810 = vshll.u32 %v7806, 16
        %v7811 = vshrl.u32 %v7806, 16
        %vm7812 = vc.u32 %v7804, %v7808
        %v7813 = vsel %vm7812, 1, 0
        %v7814 = vadd.s32 %v7804, %v7808
        %v7815 = vadd.s32 %v7807, %v7813
        %vm7816 = vc.u32 %v7814, %v7810
        %v7817 = vsel %vm7816, 1, 0
        %v7818 = vadd.s32 %v7814, %v7810
        %v7819 = vadd.s32 %v7815, %v7817
        %v7820 = vadd.s32 %v7819, %v7809
        %v7821 = vadd.s32 %v7820, %v7811
        %v7822 = vand.u32 %v7799, 65535
        %v7823 = vshrl.u32 %v7799, 16
        %v7824 = vand.u32 %v7794, 65535
        %v7825 = vshrl.u32 %v7794, 16
        %v7826 = vmul.u32 %v7822, %v7824
        %v7827 = vmul.u32 %v7822, %v7825
        %v7828 = vmul.u32 %v7823, %v7824
        %v7829 = vmul.u32 %v7823, %v7825
        %v7830 = vshll.u32 %v7827, 16
        %v7831 = vshrl.u32 %v7827, 16
        %v7832 = vshll.u32 %v7828, 16
        %v7833 = vshrl.u32 %v7828, 16
        %vm7834 = vc.u32 %v7826, %v7830
        %v7835 = vsel %vm7834, 1, 0
        %v7836 = vadd.s32 %v7826, %v7830
        %v7837 = vadd.s32 %v7829, %v7835
        %vm7838 = vc.u32 %v7836, %v7832
        %v7839 = vsel %vm7838, 1, 0
        %v7840 = vadd.s32 %v7836, %v7832
        %v7841 = vadd.s32 %v7837, %v7839
        %v7842 = vadd.s32 %v7841, %v7831
        %v7843 = vadd.s32 %v7842, %v7833
        %v7844 = vmul.u32 %v7799, %v7790
        %v7845 = vadd.s32 %v7821, %v7840
        %vm7846 = vc.u32 %v7821, %v7840
        %v7847 = vadd.s32 %v7843, 1
        %v7848 = vsel %vm7846, %v7847, %v7843
        %v7849 = vadd.s32 %v7844, %v7848
        %v7850 = vadd.s32 %v7849, 536870912
        %v7851 = vshrl.u32 %v7850, 30
        %v7852 = vshll.u32 %v7851, 30
        %v7853 = vsub.s32 %v7849, %v7852
        %vm7854 = vcmp.lt.s32.totalorder %v7853, 0
        %v7855 = vsub.s32 0, %v7853
        %v7856 = vsel %vm7854, %v7855, %v7853
        %v7857 = vclz %v7856
        %v7858 = vsub.s32 %v7857, 2
        %vm7859 = vcmp.gt.s32.totalorder 0, %v7858
        %v7860 = vsel %vm7859, 0, %v7858
        %v7861 = vsub.s32 32, %v7860
        %v7862 = vshll.u32 %v7853, %v7860
        %v7863 = vshrl.u32 %v7845, %v7861
        %v7864 = vor.u32 %v7862, %v7863
        %v7865 = vsub.s32 4294967266, %v7860
        %v7866 = vadd.s32 %v7865, 127
        %v7867 = vshll.u32 %v7866, 23
        %v7868 = vor.u32 4788187, %v7867
        %v7869 = vand.u32 2147483647, %v7868
        %v7871 = vcvt.s32.f32 %v7864
        %v7872 = vmul.f32 %v7871, %v7869
        %v7873 = vxor.u32 %v7872, 2147483648
        %v7874 = vsel %vm7753, %v7873, %v7872
        %v7875 = vsub.s32 4, %v7851
        %v7876 = vsel %vm7753, %v7875, %v7851
        %v7877 = vsel %vm7752, %v5871, %v7874
        %v7878 = vsel %vm7752, 0, %v7876
        %v7879 = vmul.f32 %v7877, %v7877
        %v7880 = vmul.f32 %v7879, -0.001358992
        %v7881 = vadd.f32 %v7880, 0.041655596
        %v7882 = vmul.f32 %v7879, %v7881
        %v7883 = vadd.f32 %v7882, -0.4999988
        %v7884 = vmul.f32 %v7879, %v7883
        %v7885 = vadd.f32 1.0, %v7884
        %v7886 = vmul.f32 %v7877, %v7877
        %v7887 = vmul.f32 %v7886, -0.00019511016
        %v7888 = vadd.f32 %v7887, 0.008332121
        %v7889 = vmul.f32 %v7886, %v7888
        %v7890 = vadd.f32 %v7889, -0.16666654
        %v7891 = vmul.f32 %v7886, %v7890
        %v7892 = vadd.f32 %v7891, 1.0
        %v7893 = vmul.f32 %v7892, %v7877
        %vm7894 = vweird.f32 %v5871
        %v7895 = vadd.s32 %v7878, 3
        %v7896 = vand.u32 %v7895, 3
        %vm7897 = vcmp.lt.s32.totalorder %v7896, 2
        %vm7898 = vcmp.eq.s32.totalorder %v7896, 0
        %v7899 = vxor.u32 %v7893, 2147483648
        %v7900 = vsel %vm7898, %v7885, %v7899
        %vm7901 = vcmp.eq.s32.totalorder %v7896, 2
        %v7902 = vxor.u32 %v7885, 2147483648
        %v7903 = vsel %vm7901, %v7902, %v7893
        %v7904 = vsel %vm7897, %v7900, %v7903
        %v7905 = vsel %vm7894, nan, %v7904
        %v7906 = vand.u32 2147483647, %v5872
        %vm7907 = vcmp.le.f32.partialorder %v7906, 0.7853982
        %vm7908 = vcmp.lt.s32.totalorder %v5872, 0
        %v7909 = vand.u32 %v5872, 2139095040
        %v7910 = vshrl.u32 %v7909, 23
        %v7911 = vsub.s32 %v7910, 127
        %v7912 = vand.u32 2147483647, %v5872
        %v7913 = vand.u32 %v7912, 8388607
        %v7914 = vor.u32 %v7913, 8388608
        %v7915 = vsub.s32 0, %v7914
        %v7916 = vadd.s32 %v7911, 1
        %vm7917 = vcmp.gt.s32.totalorder %v7916, 0
        %v7918 = vsel %vm7917, %v7916, 0
        %v7919 = vshrl.u32 %v7918, 5
        %v7920 = vand.u32 %v7918, 31
        %v7921 = vsub.s32 32, %v7920
        %v7922 = vshrl.u32 683565275, %v7921
        %v7923 = vshll.u32 683565275, %v7920
        %v7924 = vshrl.u32 2475754826, %v7921
        %v7925 = vor.u32 %v7923, %v7924
        %v7926 = vshll.u32 2475754826, %v7920
        %v7927 = vshrl.u32 2131351028, %v7921
        %v7928 = vor.u32 %v7926, %v7927
        %v7929 = vshll.u32 2131351028, %v7920
        %v7930 = vshrl.u32 2102212464, %v7921
        %v7931 = vor.u32 %v7929, %v7930
        %v7932 = vshll.u32 2102212464, %v7920
        %v7933 = vshrl.u32 920167782, %v7921
        %v7934 = vor.u32 %v7932, %v7933
        %v7935 = vshll.u32 920167782, %v7920
        %v7936 = vshrl.u32 1326507024, %v7921
        %v7937 = vor.u32 %v7935, %v7936
        %vm7938 = vcmp.lt.s32.totalorder %v7919, 1
        %vm7939 = vcmp.lt.s32.totalorder %v7919, 2
        %vm7940 = vcmp.lt.s32.totalorder %v7919, 3
        %vm7941 = vcmp.lt.s32.totalorder %v7919, 4
        %v7942 = vsel %vm7938, %v7922, %v7925
        %v7943 = vsel %vm7941, %v7931, 2102212464
        %v7944 = vsel %vm7940, %v7928, %v7943
        %v7945 = vsel %vm7939, %v7942, %v7944
        %v7946 = vsel %vm7938, %v7925, %v7928
        %v7947 = vsel %vm7941, %v7934, 920167782
        %v7948 = vsel %vm7940, %v7931, %v7947
        %v7949 = vsel %vm7939, %v7946, %v7948
        %v7950 = vsel %vm7938, %v7928, %v7931
        %v7951 = vsel %vm7941, %v7937, 1326507024
        %v7952 = vsel %vm7940, %v7934, %v7951
        %v7953 = vsel %vm7939, %v7950, %v7952
        %v7954 = vshll.u32 %v7914, 8
        %v7955 = vand.u32 %v7954, 65535
        %v7956 = vshrl.u32 %v7954, 16
        %v7957 = vand.u32 %v7953, 65535
        %v7958 = vshrl.u32 %v7953, 16
        %v7959 = vmul.u32 %v7955, %v7957
        %v7960 = vmul.u32 %v7955, %v7958
        %v7961 = vmul.u32 %v7956, %v7957
        %v7962 = vmul.u32 %v7956, %v7958
        %v7963 = vshll.u32 %v7960, 16
        %v7964 = vshrl.u32 %v7960, 16
        %v7965 = vshll.u32 %v7961, 16
        %v7966 = vshrl.u32 %v7961, 16
        %vm7967 = vc.u32 %v7959, %v7963
        %v7968 = vsel %vm7967, 1, 0
        %v7969 = vadd.s32 %v7959, %v7963
        %v7970 = vadd.s32 %v7962, %v7968
        %vm7971 = vc.u32 %v7969, %v7965
        %v7972 = vsel %vm7971, 1, 0
        %v7973 = vadd.s32 %v7969, %v7965
        %v7974 = vadd.s32 %v7970, %v7972
        %v7975 = vadd.s32 %v7974, %v7964
        %v7976 = vadd.s32 %v7975, %v7966
        %v7977 = vand.u32 %v7954, 65535
        %v7978 = vshrl.u32 %v7954, 16
        %v7979 = vand.u32 %v7949, 65535
        %v7980 = vshrl.u32 %v7949, 16
        %v7981 = vmul.u32 %v7977, %v7979
        %v7982 = vmul.u32 %v7977, %v7980
        %v7983 = vmul.u32 %v7978, %v7979
        %v7984 = vmul.u32 %v7978, %v7980
        %v7985 = vshll.u32 %v7982, 16
        %v7986 = vshrl.u32 %v7982, 16
        %v7987 = vshll.u32 %v7983, 16
        %v7988 = vshrl.u32 %v7983, 16
        %vm7989 = vc.u32 %v7981, %v7985
        %v7990 = vsel %vm7989, 1, 0
        %v7991 = vadd.s32 %v7981, %v7985
        %v7992 = vadd.s32 %v7984, %v7990
        %vm7993 = vc.u32 %v7991, %v7987
        %v7994 = vsel %vm7993, 1, 0
        %v7995 = vadd.s32 %v7991, %v7987
        %v7996 = vadd.s32 %v7992, %v7994
        %v7997 = vadd.s32 %v7996, %v7986
        %v7998 = vadd.s32 %v7997, %v7988
        %v7999 = vmul.u32 %v7954, %v7945
        %v8000 = vadd.s32 %v7976, %v7995
        %vm8001 = vc.u32 %v7976, %v7995
        %v8002 = vadd.s32 %v7998, 1
        %v8003 = vsel %vm8001, %v8002, %v7998
        %v8004 = vadd.s32 %v7999, %v8003
        %v8005 = vadd.s32 %v8004, 536870912
        %v8006 = vshrl.u32 %v8005, 30
        %v8007 = vshll.u32 %v8006, 30
        %v8008 = vsub.s32 %v8004, %v8007
        %vm8009 = vcmp.lt.s32.totalorder %v8008, 0
        %v8010 = vsub.s32 0, %v8008
        %v8011 = vsel %vm8009, %v8010, %v8008
        %v8012 = vclz %v8011
        %v8013 = vsub.s32 %v8012, 2
        %vm8014 = vcmp.gt.s32.totalorder 0, %v8013
        %v8015 = vsel %vm8014, 0, %v8013
        %v8016 = vsub.s32 32, %v8015
        %v8017 = vshll.u32 %v8008, %v8015
        %v8018 = vshrl.u32 %v8000, %v8016
        %v8019 = vor.u32 %v8017, %v8018
        %v8020 = vsub.s32 4294967266, %v8015
        %v8021 = vadd.s32 %v8020, 127
        %v8022 = vshll.u32 %v8021, 23
        %v8023 = vor.u32 4788187, %v8022
        %v8024 = vand.u32 2147483647, %v8023
        %v8026 = vcvt.s32.f32 %v8019
        %v8027 = vmul.f32 %v8026, %v8024
        %v8028 = vxor.u32 %v8027, 2147483648
        %v8029 = vsel %vm7908, %v8028, %v8027
        %v8030 = vsub.s32 4, %v8006
        %v8031 = vsel %vm7908, %v8030, %v8006
        %v8032 = vsel %vm7907, %v5872, %v8029
        %v8033 = vsel %vm7907, 0, %v8031
        %v8034 = vmul.f32 %v8032, %v8032
        %v8035 = vmul.f32 %v8034, -0.001358992
        %v8036 = vadd.f32 %v8035, 0.041655596
        %v8037 = vmul.f32 %v8034, %v8036
        %v8038 = vadd.f32 %v8037, -0.4999988
        %v8039 = vmul.f32 %v8034, %v8038
        %v8040 = vadd.f32 1.0, %v8039
        %v8041 = vmul.f32 %v8032, %v8032
        %v8042 = vmul.f32 %v8041, -0.00019511016
        %v8043 = vadd.f32 %v8042, 0.008332121
        %v8044 = vmul.f32 %v8041, %v8043
        %v8045 = vadd.f32 %v8044, -0.16666654
        %v8046 = vmul.f32 %v8041, %v8045
        %v8047 = vadd.f32 %v8046, 1.0
        %v8048 = vmul.f32 %v8047, %v8032
        %vm8049 = vweird.f32 %v5872
        %v8050 = vadd.s32 %v8033, 3
        %v8051 = vand.u32 %v8050, 3
        %vm8052 = vcmp.lt.s32.totalorder %v8051, 2
        %vm8053 = vcmp.eq.s32.totalorder %v8051, 0
        %v8054 = vxor.u32 %v8048, 2147483648
        %v8055 = vsel %vm8053, %v8040, %v8054
        %vm8056 = vcmp.eq.s32.totalorder %v8051, 2
        %v8057 = vxor.u32 %v8040, 2147483648
        %v8058 = vsel %vm8056, %v8057, %v8048
        %v8059 = vsel %vm8052, %v8055, %v8058
        %v8060 = vsel %vm8049, nan, %v8059
        %v8061 = vand.u32 2147483647, %v5873
        %vm8062 = vcmp.le.f32.partialorder %v8061, 0.7853982
        %vm8063 = vcmp.lt.s32.totalorder %v5873, 0
        %v8064 = vand.u32 %v5873, 2139095040
        %v8065 = vshrl.u32 %v8064, 23
        %v8066 = vsub.s32 %v8065, 127
        %v8067 = vand.u32 2147483647, %v5873
        %v8068 = vand.u32 %v8067, 8388607
        %v8069 = vor.u32 %v8068, 8388608
        %v8070 = vsub.s32 0, %v8069
        %v8071 = vadd.s32 %v8066, 1
        %vm8072 = vcmp.gt.s32.totalorder %v8071, 0
        %v8073 = vsel %vm8072, %v8071, 0
        %v8074 = vshrl.u32 %v8073, 5
        %v8075 = vand.u32 %v8073, 31
        %v8076 = vsub.s32 32, %v8075
        %v8077 = vshrl.u32 683565275, %v8076
        %v8078 = vshll.u32 683565275, %v8075
        %v8079 = vshrl.u32 2475754826, %v8076
        %v8080 = vor.u32 %v8078, %v8079
        %v8081 = vshll.u32 2475754826, %v8075
        %v8082 = vshrl.u32 2131351028, %v8076
        %v8083 = vor.u32 %v8081, %v8082
        %v8084 = vshll.u32 2131351028, %v8075
        %v8085 = vshrl.u32 2102212464, %v8076
        %v8086 = vor.u32 %v8084, %v8085
        %v8087 = vshll.u32 2102212464, %v8075
        %v8088 = vshrl.u32 920167782, %v8076
        %v8089 = vor.u32 %v8087, %v8088
        %v8090 = vshll.u32 920167782, %v8075
        %v8091 = vshrl.u32 1326507024, %v8076
        %v8092 = vor.u32 %v8090, %v8091
        %vm8093 = vcmp.lt.s32.totalorder %v8074, 1
        %vm8094 = vcmp.lt.s32.totalorder %v8074, 2
        %vm8095 = vcmp.lt.s32.totalorder %v8074, 3
        %vm8096 = vcmp.lt.s32.totalorder %v8074, 4
        %v8097 = vsel %vm8093, %v8077, %v8080
        %v8098 = vsel %vm8096, %v8086, 2102212464
        %v8099 = vsel %vm8095, %v8083, %v8098
        %v8100 = vsel %vm8094, %v8097, %v8099
        %v8101 = vsel %vm8093, %v8080, %v8083
        %v8102 = vsel %vm8096, %v8089, 920167782
        %v8103 = vsel %vm8095, %v8086, %v8102
        %v8104 = vsel %vm8094, %v8101, %v8103
        %v8105 = vsel %vm8093, %v8083, %v8086
        %v8106 = vsel %vm8096, %v8092, 1326507024
        %v8107 = vsel %vm8095, %v8089, %v8106
        %v8108 = vsel %vm8094, %v8105, %v8107
        %v8109 = vshll.u32 %v8069, 8
        %v8110 = vand.u32 %v8109, 65535
        %v8111 = vshrl.u32 %v8109, 16
        %v8112 = vand.u32 %v8108, 65535
        %v8113 = vshrl.u32 %v8108, 16
        %v8114 = vmul.u32 %v8110, %v8112
        %v8115 = vmul.u32 %v8110, %v8113
        %v8116 = vmul.u32 %v8111, %v8112
        %v8117 = vmul.u32 %v8111, %v8113
        %v8118 = vshll.u32 %v8115, 16
        %v8119 = vshrl.u32 %v8115, 16
        %v8120 = vshll.u32 %v8116, 16
        %v8121 = vshrl.u32 %v8116, 16
        %vm8122 = vc.u32 %v8114, %v8118
        %v8123 = vsel %vm8122, 1, 0
        %v8124 = vadd.s32 %v8114, %v8118
        %v8125 = vadd.s32 %v8117, %v8123
        %vm8126 = vc.u32 %v8124, %v8120
        %v8127 = vsel %vm8126, 1, 0
        %v8128 = vadd.s32 %v8124, %v8120
        %v8129 = vadd.s32 %v8125, %v8127
        %v8130 = vadd.s32 %v8129, %v8119
        %v8131 = vadd.s32 %v8130, %v8121
        %v8132 = vand.u32 %v8109, 65535
        %v8133 = vshrl.u32 %v8109, 16
        %v8134 = vand.u32 %v8104, 65535
        %v8135 = vshrl.u32 %v8104, 16
        %v8136 = vmul.u32 %v8132, %v8134
        %v8137 = vmul.u32 %v8132, %v8135
        %v8138 = vmul.u32 %v8133, %v8134
        %v8139 = vmul.u32 %v8133, %v8135
        %v8140 = vshll.u32 %v8137, 16
        %v8141 = vshrl.u32 %v8137, 16
        %v8142 = vshll.u32 %v8138, 16
        %v8143 = vshrl.u32 %v8138, 16
        %vm8144 = vc.u32 %v8136, %v8140
        %v8145 = vsel %vm8144, 1, 0
        %v8146 = vadd.s32 %v8136, %v8140
        %v8147 = vadd.s32 %v8139, %v8145
        %vm8148 = vc.u32 %v8146, %v8142
        %v8149 = vsel %vm8148, 1, 0
        %v8150 = vadd.s32 %v8146, %v8142
        %v8151 = vadd.s32 %v8147, %v8149
        %v8152 = vadd.s32 %v8151, %v8141
        %v8153 = vadd.s32 %v8152, %v8143
        %v8154 = vmul.u32 %v8109, %v8100
        %v8155 = vadd.s32 %v8131, %v8150
        %vm8156 = vc.u32 %v8131, %v8150
        %v8157 = vadd.s32 %v8153, 1
        %v8158 = vsel %vm8156, %v8157, %v8153
        %v8159 = vadd.s32 %v8154, %v8158
        %v8160 = vadd.s32 %v8159, 536870912
        %v8161 = vshrl.u32 %v8160, 30
        %v8162 = vshll.u32 %v8161, 30
        %v8163 = vsub.s32 %v8159, %v8162
        %vm8164 = vcmp.lt.s32.totalorder %v8163, 0
        %v8165 = vsub.s32 0, %v8163
        %v8166 = vsel %vm8164, %v8165, %v8163
        %v8167 = vclz %v8166
        %v8168 = vsub.s32 %v8167, 2
        %vm8169 = vcmp.gt.s32.totalorder 0, %v8168
        %v8170 = vsel %vm8169, 0, %v8168
        %v8171 = vsub.s32 32, %v8170
        %v8172 = vshll.u32 %v8163, %v8170
        %v8173 = vshrl.u32 %v8155, %v8171
        %v8174 = vor.u32 %v8172, %v8173
        %v8175 = vsub.s32 4294967266, %v8170
        %v8176 = vadd.s32 %v8175, 127
        %v8177 = vshll.u32 %v8176, 23
        %v8178 = vor.u32 4788187, %v8177
        %v8179 = vand.u32 2147483647, %v8178
        %v8181 = vcvt.s32.f32 %v8174
        %v8182 = vmul.f32 %v8181, %v8179
        %v8183 = vxor.u32 %v8182, 2147483648
        %v8184 = vsel %vm8063, %v8183, %v8182
        %v8185 = vsub.s32 4, %v8161
        %v8186 = vsel %vm8063, %v8185, %v8161
        %v8187 = vsel %vm8062, %v5873, %v8184
        %v8188 = vsel %vm8062, 0, %v8186
        %v8189 = vmul.f32 %v8187, %v8187
        %v8190 = vmul.f32 %v8189, -0.001358992
        %v8191 = vadd.f32 %v8190, 0.041655596
        %v8192 = vmul.f32 %v8189, %v8191
        %v8193 = vadd.f32 %v8192, -0.4999988
        %v8194 = vmul.f32 %v8189, %v8193
        %v8195 = vadd.f32 1.0, %v8194
        %v8196 = vmul.f32 %v8187, %v8187
        %v8197 = vmul.f32 %v8196, -0.00019511016
        %v8198 = vadd.f32 %v8197, 0.008332121
        %v8199 = vmul.f32 %v8196, %v8198
        %v8200 = vadd.f32 %v8199, -0.16666654
        %v8201 = vmul.f32 %v8196, %v8200
        %v8202 = vadd.f32 %v8201, 1.0
        %v8203 = vmul.f32 %v8202, %v8187
        %vm8204 = vweird.f32 %v5873
        %v8205 = vadd.s32 %v8188, 3
        %v8206 = vand.u32 %v8205, 3
        %vm8207 = vcmp.lt.s32.totalorder %v8206, 2
        %vm8208 = vcmp.eq.s32.totalorder %v8206, 0
        %v8209 = vxor.u32 %v8203, 2147483648
        %v8210 = vsel %vm8208, %v8195, %v8209
        %vm8211 = vcmp.eq.s32.totalorder %v8206, 2
        %v8212 = vxor.u32 %v8195, 2147483648
        %v8213 = vsel %vm8211, %v8212, %v8203
        %v8214 = vsel %vm8207, %v8210, %v8213
        %v8215 = vsel %vm8204, nan, %v8214
        %v8216 = vand.u32 2147483647, %v5874
        %vm8217 = vcmp.le.f32.partialorder %v8216, 0.7853982
        %vm8218 = vcmp.lt.s32.totalorder %v5874, 0
        %v8219 = vand.u32 %v5874, 2139095040
        %v8220 = vshrl.u32 %v8219, 23
        %v8221 = vsub.s32 %v8220, 127
        %v8222 = vand.u32 2147483647, %v5874
        %v8223 = vand.u32 %v8222, 8388607
        %v8224 = vor.u32 %v8223, 8388608
        %v8225 = vsub.s32 0, %v8224
        %v8226 = vadd.s32 %v8221, 1
        %vm8227 = vcmp.gt.s32.totalorder %v8226, 0
        %v8228 = vsel %vm8227, %v8226, 0
        %v8229 = vshrl.u32 %v8228, 5
        %v8230 = vand.u32 %v8228, 31
        %v8231 = vsub.s32 32, %v8230
        %v8232 = vshrl.u32 683565275, %v8231
        %v8233 = vshll.u32 683565275, %v8230
        %v8234 = vshrl.u32 2475754826, %v8231
        %v8235 = vor.u32 %v8233, %v8234
        %v8236 = vshll.u32 2475754826, %v8230
        %v8237 = vshrl.u32 2131351028, %v8231
        %v8238 = vor.u32 %v8236, %v8237
        %v8239 = vshll.u32 2131351028, %v8230
        %v8240 = vshrl.u32 2102212464, %v8231
        %v8241 = vor.u32 %v8239, %v8240
        %v8242 = vshll.u32 2102212464, %v8230
        %v8243 = vshrl.u32 920167782, %v8231
        %v8244 = vor.u32 %v8242, %v8243
        %v8245 = vshll.u32 920167782, %v8230
        %v8246 = vshrl.u32 1326507024, %v8231
        %v8247 = vor.u32 %v8245, %v8246
        %vm8248 = vcmp.lt.s32.totalorder %v8229, 1
        %vm8249 = vcmp.lt.s32.totalorder %v8229, 2
        %vm8250 = vcmp.lt.s32.totalorder %v8229, 3
        %vm8251 = vcmp.lt.s32.totalorder %v8229, 4
        %v8252 = vsel %vm8248, %v8232, %v8235
        %v8253 = vsel %vm8251, %v8241, 2102212464
        %v8254 = vsel %vm8250, %v8238, %v8253
        %v8255 = vsel %vm8249, %v8252, %v8254
        %v8256 = vsel %vm8248, %v8235, %v8238
        %v8257 = vsel %vm8251, %v8244, 920167782
        %v8258 = vsel %vm8250, %v8241, %v8257
        %v8259 = vsel %vm8249, %v8256, %v8258
        %v8260 = vsel %vm8248, %v8238, %v8241
        %v8261 = vsel %vm8251, %v8247, 1326507024
        %v8262 = vsel %vm8250, %v8244, %v8261
        %v8263 = vsel %vm8249, %v8260, %v8262
        %v8264 = vshll.u32 %v8224, 8
        %v8265 = vand.u32 %v8264, 65535
        %v8266 = vshrl.u32 %v8264, 16
        %v8267 = vand.u32 %v8263, 65535
        %v8268 = vshrl.u32 %v8263, 16
        %v8269 = vmul.u32 %v8265, %v8267
        %v8270 = vmul.u32 %v8265, %v8268
        %v8271 = vmul.u32 %v8266, %v8267
        %v8272 = vmul.u32 %v8266, %v8268
        %v8273 = vshll.u32 %v8270, 16
        %v8274 = vshrl.u32 %v8270, 16
        %v8275 = vshll.u32 %v8271, 16
        %v8276 = vshrl.u32 %v8271, 16
        %vm8277 = vc.u32 %v8269, %v8273
        %v8278 = vsel %vm8277, 1, 0
        %v8279 = vadd.s32 %v8269, %v8273
        %v8280 = vadd.s32 %v8272, %v8278
        %vm8281 = vc.u32 %v8279, %v8275
        %v8282 = vsel %vm8281, 1, 0
        %v8283 = vadd.s32 %v8279, %v8275
        %v8284 = vadd.s32 %v8280, %v8282
        %v8285 = vadd.s32 %v8284, %v8274
        %v8286 = vadd.s32 %v8285, %v8276
        %v8287 = vand.u32 %v8264, 65535
        %v8288 = vshrl.u32 %v8264, 16
        %v8289 = vand.u32 %v8259, 65535
        %v8290 = vshrl.u32 %v8259, 16
        %v8291 = vmul.u32 %v8287, %v8289
        %v8292 = vmul.u32 %v8287, %v8290
        %v8293 = vmul.u32 %v8288, %v8289
        %v8294 = vmul.u32 %v8288, %v8290
        %v8295 = vshll.u32 %v8292, 16
        %v8296 = vshrl.u32 %v8292, 16
        %v8297 = vshll.u32 %v8293, 16
        %v8298 = vshrl.u32 %v8293, 16
        %vm8299 = vc.u32 %v8291, %v8295
        %v8300 = vsel %vm8299, 1, 0
        %v8301 = vadd.s32 %v8291, %v8295
        %v8302 = vadd.s32 %v8294, %v8300
        %vm8303 = vc.u32 %v8301, %v8297
        %v8304 = vsel %vm8303, 1, 0
        %v8305 = vadd.s32 %v8301, %v8297
        %v8306 = vadd.s32 %v8302, %v8304
        %v8307 = vadd.s32 %v8306, %v8296
        %v8308 = vadd.s32 %v8307, %v8298
        %v8309 = vmul.u32 %v8264, %v8255
        %v8310 = vadd.s32 %v8286, %v8305
        %vm8311 = vc.u32 %v8286, %v8305
        %v8312 = vadd.s32 %v8308, 1
        %v8313 = vsel %vm8311, %v8312, %v8308
        %v8314 = vadd.s32 %v8309, %v8313
        %v8315 = vadd.s32 %v8314, 536870912
        %v8316 = vshrl.u32 %v8315, 30
        %v8317 = vshll.u32 %v8316, 30
        %v8318 = vsub.s32 %v8314, %v8317
        %vm8319 = vcmp.lt.s32.totalorder %v8318, 0
        %v8320 = vsub.s32 0, %v8318
        %v8321 = vsel %vm8319, %v8320, %v8318
        %v8322 = vclz %v8321
        %v8323 = vsub.s32 %v8322, 2
        %vm8324 = vcmp.gt.s32.totalorder 0, %v8323
        %v8325 = vsel %vm8324, 0, %v8323
        %v8326 = vsub.s32 32, %v8325
        %v8327 = vshll.u32 %v8318, %v8325
        %v8328 = vshrl.u32 %v8310, %v8326
        %v8329 = vor.u32 %v8327, %v8328
        %v8330 = vsub.s32 4294967266, %v8325
        %v8331 = vadd.s32 %v8330, 127
        %v8332 = vshll.u32 %v8331, 23
        %v8333 = vor.u32 4788187, %v8332
        %v8334 = vand.u32 2147483647, %v8333
        %v8336 = vcvt.s32.f32 %v8329
        %v8337 = vmul.f32 %v8336, %v8334
        %v8338 = vxor.u32 %v8337, 2147483648
        %v8339 = vsel %vm8218, %v8338, %v8337
        %v8340 = vsub.s32 4, %v8316
        %v8341 = vsel %vm8218, %v8340, %v8316
        %v8342 = vsel %vm8217, %v5874, %v8339
        %v8343 = vsel %vm8217, 0, %v8341
        %v8344 = vmul.f32 %v8342, %v8342
        %v8345 = vmul.f32 %v8344, -0.001358992
        %v8346 = vadd.f32 %v8345, 0.041655596
        %v8347 = vmul.f32 %v8344, %v8346
        %v8348 = vadd.f32 %v8347, -0.4999988
        %v8349 = vmul.f32 %v8344, %v8348
        %v8350 = vadd.f32 1.0, %v8349
        %v8351 = vmul.f32 %v8342, %v8342
        %v8352 = vmul.f32 %v8351, -0.00019511016
        %v8353 = vadd.f32 %v8352, 0.008332121
        %v8354 = vmul.f32 %v8351, %v8353
        %v8355 = vadd.f32 %v8354, -0.16666654
        %v8356 = vmul.f32 %v8351, %v8355
        %v8357 = vadd.f32 %v8356, 1.0
        %v8358 = vmul.f32 %v8357, %v8342
        %vm8359 = vweird.f32 %v5874
        %v8360 = vadd.s32 %v8343, 3
        %v8361 = vand.u32 %v8360, 3
        %vm8362 = vcmp.lt.s32.totalorder %v8361, 2
        %vm8363 = vcmp.eq.s32.totalorder %v8361, 0
        %v8364 = vxor.u32 %v8358, 2147483648
        %v8365 = vsel %vm8363, %v8350, %v8364
        %vm8366 = vcmp.eq.s32.totalorder %v8361, 2
        %v8367 = vxor.u32 %v8350, 2147483648
        %v8368 = vsel %vm8366, %v8367, %v8358
        %v8369 = vsel %vm8362, %v8365, %v8368
        %v8370 = vsel %vm8359, nan, %v8369
        %v8371 = vand.u32 2147483647, %v5875
        %vm8372 = vcmp.le.f32.partialorder %v8371, 0.7853982
        %vm8373 = vcmp.lt.s32.totalorder %v5875, 0
        %v8374 = vand.u32 %v5875, 2139095040
        %v8375 = vshrl.u32 %v8374, 23
        %v8376 = vsub.s32 %v8375, 127
        %v8377 = vand.u32 2147483647, %v5875
        %v8378 = vand.u32 %v8377, 8388607
        %v8379 = vor.u32 %v8378, 8388608
        %v8380 = vsub.s32 0, %v8379
        %v8381 = vadd.s32 %v8376, 1
        %vm8382 = vcmp.gt.s32.totalorder %v8381, 0
        %v8383 = vsel %vm8382, %v8381, 0
        %v8384 = vshrl.u32 %v8383, 5
        %v8385 = vand.u32 %v8383, 31
        %v8386 = vsub.s32 32, %v8385
        %v8387 = vshrl.u32 683565275, %v8386
        %v8388 = vshll.u32 683565275, %v8385
        %v8389 = vshrl.u32 2475754826, %v8386
        %v8390 = vor.u32 %v8388, %v8389
        %v8391 = vshll.u32 2475754826, %v8385
        %v8392 = vshrl.u32 2131351028, %v8386
        %v8393 = vor.u32 %v8391, %v8392
        %v8394 = vshll.u32 2131351028, %v8385
        %v8395 = vshrl.u32 2102212464, %v8386
        %v8396 = vor.u32 %v8394, %v8395
        %v8397 = vshll.u32 2102212464, %v8385
        %v8398 = vshrl.u32 920167782, %v8386
        %v8399 = vor.u32 %v8397, %v8398
        %v8400 = vshll.u32 920167782, %v8385
        %v8401 = vshrl.u32 1326507024, %v8386
        %v8402 = vor.u32 %v8400, %v8401
        %vm8403 = vcmp.lt.s32.totalorder %v8384, 1
        %vm8404 = vcmp.lt.s32.totalorder %v8384, 2
        %vm8405 = vcmp.lt.s32.totalorder %v8384, 3
        %vm8406 = vcmp.lt.s32.totalorder %v8384, 4
        %v8407 = vsel %vm8403, %v8387, %v8390
        %v8408 = vsel %vm8406, %v8396, 2102212464
        %v8409 = vsel %vm8405, %v8393, %v8408
        %v8410 = vsel %vm8404, %v8407, %v8409
        %v8411 = vsel %vm8403, %v8390, %v8393
        %v8412 = vsel %vm8406, %v8399, 920167782
        %v8413 = vsel %vm8405, %v8396, %v8412
        %v8414 = vsel %vm8404, %v8411, %v8413
        %v8415 = vsel %vm8403, %v8393, %v8396
        %v8416 = vsel %vm8406, %v8402, 1326507024
        %v8417 = vsel %vm8405, %v8399, %v8416
        %v8418 = vsel %vm8404, %v8415, %v8417
        %v8419 = vshll.u32 %v8379, 8
        %v8420 = vand.u32 %v8419, 65535
        %v8421 = vshrl.u32 %v8419, 16
        %v8422 = vand.u32 %v8418, 65535
        %v8423 = vshrl.u32 %v8418, 16
        %v8424 = vmul.u32 %v8420, %v8422
        %v8425 = vmul.u32 %v8420, %v8423
        %v8426 = vmul.u32 %v8421, %v8422
        %v8427 = vmul.u32 %v8421, %v8423
        %v8428 = vshll.u32 %v8425, 16
        %v8429 = vshrl.u32 %v8425, 16
        %v8430 = vshll.u32 %v8426, 16
        %v8431 = vshrl.u32 %v8426, 16
        %vm8432 = vc.u32 %v8424, %v8428
        %v8433 = vsel %vm8432, 1, 0
        %v8434 = vadd.s32 %v8424, %v8428
        %v8435 = vadd.s32 %v8427, %v8433
        %vm8436 = vc.u32 %v8434, %v8430
        %v8437 = vsel %vm8436, 1, 0
        %v8438 = vadd.s32 %v8434, %v8430
        %v8439 = vadd.s32 %v8435, %v8437
        %v8440 = vadd.s32 %v8439, %v8429
        %v8441 = vadd.s32 %v8440, %v8431
        %v8442 = vand.u32 %v8419, 65535
        %v8443 = vshrl.u32 %v8419, 16
        %v8444 = vand.u32 %v8414, 65535
        %v8445 = vshrl.u32 %v8414, 16
        %v8446 = vmul.u32 %v8442, %v8444
        %v8447 = vmul.u32 %v8442, %v8445
        %v8448 = vmul.u32 %v8443, %v8444
        %v8449 = vmul.u32 %v8443, %v8445
        %v8450 = vshll.u32 %v8447, 16
        %v8451 = vshrl.u32 %v8447, 16
        %v8452 = vshll.u32 %v8448, 16
        %v8453 = vshrl.u32 %v8448, 16
        %vm8454 = vc.u32 %v8446, %v8450
        %v8455 = vsel %vm8454, 1, 0
        %v8456 = vadd.s32 %v8446, %v8450
        %v8457 = vadd.s32 %v8449, %v8455
        %vm8458 = vc.u32 %v8456, %v8452
        %v8459 = vsel %vm8458, 1, 0
        %v8460 = vadd.s32 %v8456, %v8452
        %v8461 = vadd.s32 %v8457, %v8459
        %v8462 = vadd.s32 %v8461, %v8451
        %v8463 = vadd.s32 %v8462, %v8453
        %v8464 = vmul.u32 %v8419, %v8410
        %v8465 = vadd.s32 %v8441, %v8460
        %vm8466 = vc.u32 %v8441, %v8460
        %v8467 = vadd.s32 %v8463, 1
        %v8468 = vsel %vm8466, %v8467, %v8463
        %v8469 = vadd.s32 %v8464, %v8468
        %v8470 = vadd.s32 %v8469, 536870912
        %v8471 = vshrl.u32 %v8470, 30
        %v8472 = vshll.u32 %v8471, 30
        %v8473 = vsub.s32 %v8469, %v8472
        %vm8474 = vcmp.lt.s32.totalorder %v8473, 0
        %v8475 = vsub.s32 0, %v8473
        %v8476 = vsel %vm8474, %v8475, %v8473
        %v8477 = vclz %v8476
        %v8478 = vsub.s32 %v8477, 2
        %vm8479 = vcmp.gt.s32.totalorder 0, %v8478
        %v8480 = vsel %vm8479, 0, %v8478
        %v8481 = vsub.s32 32, %v8480
        %v8482 = vshll.u32 %v8473, %v8480
        %v8483 = vshrl.u32 %v8465, %v8481
        %v8484 = vor.u32 %v8482, %v8483
        %v8485 = vsub.s32 4294967266, %v8480
        %v8486 = vadd.s32 %v8485, 127
        %v8487 = vshll.u32 %v8486, 23
        %v8488 = vor.u32 4788187, %v8487
        %v8489 = vand.u32 2147483647, %v8488
        %v8491 = vcvt.s32.f32 %v8484
        %v8492 = vmul.f32 %v8491, %v8489
        %v8493 = vxor.u32 %v8492, 2147483648
        %v8494 = vsel %vm8373, %v8493, %v8492
        %v8495 = vsub.s32 4, %v8471
        %v8496 = vsel %vm8373, %v8495, %v8471
        %v8497 = vsel %vm8372, %v5875, %v8494
        %v8498 = vsel %vm8372, 0, %v8496
        %v8499 = vmul.f32 %v8497, %v8497
        %v8500 = vmul.f32 %v8499, -0.001358992
        %v8501 = vadd.f32 %v8500, 0.041655596
        %v8502 = vmul.f32 %v8499, %v8501
        %v8503 = vadd.f32 %v8502, -0.4999988
        %v8504 = vmul.f32 %v8499, %v8503
        %v8505 = vadd.f32 1.0, %v8504
        %v8506 = vmul.f32 %v8497, %v8497
        %v8507 = vmul.f32 %v8506, -0.00019511016
        %v8508 = vadd.f32 %v8507, 0.008332121
        %v8509 = vmul.f32 %v8506, %v8508
        %v8510 = vadd.f32 %v8509, -0.16666654
        %v8511 = vmul.f32 %v8506, %v8510
        %v8512 = vadd.f32 %v8511, 1.0
        %v8513 = vmul.f32 %v8512, %v8497
        %vm8514 = vweird.f32 %v5875
        %v8515 = vadd.s32 %v8498, 3
        %v8516 = vand.u32 %v8515, 3
        %vm8517 = vcmp.lt.s32.totalorder %v8516, 2
        %vm8518 = vcmp.eq.s32.totalorder %v8516, 0
        %v8519 = vxor.u32 %v8513, 2147483648
        %v8520 = vsel %vm8518, %v8505, %v8519
        %vm8521 = vcmp.eq.s32.totalorder %v8516, 2
        %v8522 = vxor.u32 %v8505, 2147483648
        %v8523 = vsel %vm8521, %v8522, %v8513
        %v8524 = vsel %vm8517, %v8520, %v8523
        %v8525 = vsel %vm8514, nan, %v8524
        %v8526 = vand.u32 2147483647, %v5876
        %vm8527 = vcmp.le.f32.partialorder %v8526, 0.7853982
        %vm8528 = vcmp.lt.s32.totalorder %v5876, 0
        %v8529 = vand.u32 %v5876, 2139095040
        %v8530 = vshrl.u32 %v8529, 23
        %v8531 = vsub.s32 %v8530, 127
        %v8532 = vand.u32 2147483647, %v5876
        %v8533 = vand.u32 %v8532, 8388607
        %v8534 = vor.u32 %v8533, 8388608
        %v8535 = vsub.s32 0, %v8534
        %v8536 = vadd.s32 %v8531, 1
        %vm8537 = vcmp.gt.s32.totalorder %v8536, 0
        %v8538 = vsel %vm8537, %v8536, 0
        %v8539 = vshrl.u32 %v8538, 5
        %v8540 = vand.u32 %v8538, 31
        %v8541 = vsub.s32 32, %v8540
        %v8542 = vshrl.u32 683565275, %v8541
        %v8543 = vshll.u32 683565275, %v8540
        %v8544 = vshrl.u32 2475754826, %v8541
        %v8545 = vor.u32 %v8543, %v8544
        %v8546 = vshll.u32 2475754826, %v8540
        %v8547 = vshrl.u32 2131351028, %v8541
        %v8548 = vor.u32 %v8546, %v8547
        %v8549 = vshll.u32 2131351028, %v8540
        %v8550 = vshrl.u32 2102212464, %v8541
        %v8551 = vor.u32 %v8549, %v8550
        %v8552 = vshll.u32 2102212464, %v8540
        %v8553 = vshrl.u32 920167782, %v8541
        %v8554 = vor.u32 %v8552, %v8553
        %v8555 = vshll.u32 920167782, %v8540
        %v8556 = vshrl.u32 1326507024, %v8541
        %v8557 = vor.u32 %v8555, %v8556
        %vm8558 = vcmp.lt.s32.totalorder %v8539, 1
        %vm8559 = vcmp.lt.s32.totalorder %v8539, 2
        %vm8560 = vcmp.lt.s32.totalorder %v8539, 3
        %vm8561 = vcmp.lt.s32.totalorder %v8539, 4
        %v8562 = vsel %vm8558, %v8542, %v8545
        %v8563 = vsel %vm8561, %v8551, 2102212464
        %v8564 = vsel %vm8560, %v8548, %v8563
        %v8565 = vsel %vm8559, %v8562, %v8564
        %v8566 = vsel %vm8558, %v8545, %v8548
        %v8567 = vsel %vm8561, %v8554, 920167782
        %v8568 = vsel %vm8560, %v8551, %v8567
        %v8569 = vsel %vm8559, %v8566, %v8568
        %v8570 = vsel %vm8558, %v8548, %v8551
        %v8571 = vsel %vm8561, %v8557, 1326507024
        %v8572 = vsel %vm8560, %v8554, %v8571
        %v8573 = vsel %vm8559, %v8570, %v8572
        %v8574 = vshll.u32 %v8534, 8
        %v8575 = vand.u32 %v8574, 65535
        %v8576 = vshrl.u32 %v8574, 16
        %v8577 = vand.u32 %v8573, 65535
        %v8578 = vshrl.u32 %v8573, 16
        %v8579 = vmul.u32 %v8575, %v8577
        %v8580 = vmul.u32 %v8575, %v8578
        %v8581 = vmul.u32 %v8576, %v8577
        %v8582 = vmul.u32 %v8576, %v8578
        %v8583 = vshll.u32 %v8580, 16
        %v8584 = vshrl.u32 %v8580, 16
        %v8585 = vshll.u32 %v8581, 16
        %v8586 = vshrl.u32 %v8581, 16
        %vm8587 = vc.u32 %v8579, %v8583
        %v8588 = vsel %vm8587, 1, 0
        %v8589 = vadd.s32 %v8579, %v8583
        %v8590 = vadd.s32 %v8582, %v8588
        %vm8591 = vc.u32 %v8589, %v8585
        %v8592 = vsel %vm8591, 1, 0
        %v8593 = vadd.s32 %v8589, %v8585
        %v8594 = vadd.s32 %v8590, %v8592
        %v8595 = vadd.s32 %v8594, %v8584
        %v8596 = vadd.s32 %v8595, %v8586
        %v8597 = vand.u32 %v8574, 65535
        %v8598 = vshrl.u32 %v8574, 16
        %v8599 = vand.u32 %v8569, 65535
        %v8600 = vshrl.u32 %v8569, 16
        %v8601 = vmul.u32 %v8597, %v8599
        %v8602 = vmul.u32 %v8597, %v8600
        %v8603 = vmul.u32 %v8598, %v8599
        %v8604 = vmul.u32 %v8598, %v8600
        %v8605 = vshll.u32 %v8602, 16
        %v8606 = vshrl.u32 %v8602, 16
        %v8607 = vshll.u32 %v8603, 16
        %v8608 = vshrl.u32 %v8603, 16
        %vm8609 = vc.u32 %v8601, %v8605
        %v8610 = vsel %vm8609, 1, 0
        %v8611 = vadd.s32 %v8601, %v8605
        %v8612 = vadd.s32 %v8604, %v8610
        %vm8613 = vc.u32 %v8611, %v8607
        %v8614 = vsel %vm8613, 1, 0
        %v8615 = vadd.s32 %v8611, %v8607
        %v8616 = vadd.s32 %v8612, %v8614
        %v8617 = vadd.s32 %v8616, %v8606
        %v8618 = vadd.s32 %v8617, %v8608
        %v8619 = vmul.u32 %v8574, %v8565
        %v8620 = vadd.s32 %v8596, %v8615
        %vm8621 = vc.u32 %v8596, %v8615
        %v8622 = vadd.s32 %v8618, 1
        %v8623 = vsel %vm8621, %v8622, %v8618
        %v8624 = vadd.s32 %v8619, %v8623
        %v8625 = vadd.s32 %v8624, 536870912
        %v8626 = vshrl.u32 %v8625, 30
        %v8627 = vshll.u32 %v8626, 30
        %v8628 = vsub.s32 %v8624, %v8627
        %vm8629 = vcmp.lt.s32.totalorder %v8628, 0
        %v8630 = vsub.s32 0, %v8628
        %v8631 = vsel %vm8629, %v8630, %v8628
        %v8632 = vclz %v8631
        %v8633 = vsub.s32 %v8632, 2
        %vm8634 = vcmp.gt.s32.totalorder 0, %v8633
        %v8635 = vsel %vm8634, 0, %v8633
        %v8636 = vsub.s32 32, %v8635
        %v8637 = vshll.u32 %v8628, %v8635
        %v8638 = vshrl.u32 %v8620, %v8636
        %v8639 = vor.u32 %v8637, %v8638
        %v8640 = vsub.s32 4294967266, %v8635
        %v8641 = vadd.s32 %v8640, 127
        %v8642 = vshll.u32 %v8641, 23
        %v8643 = vor.u32 4788187, %v8642
        %v8644 = vand.u32 2147483647, %v8643
        %v8646 = vcvt.s32.f32 %v8639
        %v8647 = vmul.f32 %v8646, %v8644
        %v8648 = vxor.u32 %v8647, 2147483648
        %v8649 = vsel %vm8528, %v8648, %v8647
        %v8650 = vsub.s32 4, %v8626
        %v8651 = vsel %vm8528, %v8650, %v8626
        %v8652 = vsel %vm8527, %v5876, %v8649
        %v8653 = vsel %vm8527, 0, %v8651
        %v8654 = vmul.f32 %v8652, %v8652
        %v8655 = vmul.f32 %v8654, -0.001358992
        %v8656 = vadd.f32 %v8655, 0.041655596
        %v8657 = vmul.f32 %v8654, %v8656
        %v8658 = vadd.f32 %v8657, -0.4999988
        %v8659 = vmul.f32 %v8654, %v8658
        %v8660 = vadd.f32 1.0, %v8659
        %v8661 = vmul.f32 %v8652, %v8652
        %v8662 = vmul.f32 %v8661, -0.00019511016
        %v8663 = vadd.f32 %v8662, 0.008332121
        %v8664 = vmul.f32 %v8661, %v8663
        %v8665 = vadd.f32 %v8664, -0.16666654
        %v8666 = vmul.f32 %v8661, %v8665
        %v8667 = vadd.f32 %v8666, 1.0
        %v8668 = vmul.f32 %v8667, %v8652
        %vm8669 = vweird.f32 %v5876
        %v8670 = vadd.s32 %v8653, 3
        %v8671 = vand.u32 %v8670, 3
        %vm8672 = vcmp.lt.s32.totalorder %v8671, 2
        %vm8673 = vcmp.eq.s32.totalorder %v8671, 0
        %v8674 = vxor.u32 %v8668, 2147483648
        %v8675 = vsel %vm8673, %v8660, %v8674
        %vm8676 = vcmp.eq.s32.totalorder %v8671, 2
        %v8677 = vxor.u32 %v8660, 2147483648
        %v8678 = vsel %vm8676, %v8677, %v8668
        %v8679 = vsel %vm8672, %v8675, %v8678
        %v8680 = vsel %vm8669, nan, %v8679
        %v8681 = vand.u32 2147483647, %v5877
        %vm8682 = vcmp.le.f32.partialorder %v8681, 0.7853982
        %vm8683 = vcmp.lt.s32.totalorder %v5877, 0
        %v8684 = vand.u32 %v5877, 2139095040
        %v8685 = vshrl.u32 %v8684, 23
        %v8686 = vsub.s32 %v8685, 127
        %v8687 = vand.u32 2147483647, %v5877
        %v8688 = vand.u32 %v8687, 8388607
        %v8689 = vor.u32 %v8688, 8388608
        %v8690 = vsub.s32 0, %v8689
        %v8691 = vadd.s32 %v8686, 1
        %vm8692 = vcmp.gt.s32.totalorder %v8691, 0
        %v8693 = vsel %vm8692, %v8691, 0
        %v8694 = vshrl.u32 %v8693, 5
        %v8695 = vand.u32 %v8693, 31
        %v8696 = vsub.s32 32, %v8695
        %v8697 = vshrl.u32 683565275, %v8696
        %v8698 = vshll.u32 683565275, %v8695
        %v8699 = vshrl.u32 2475754826, %v8696
        %v8700 = vor.u32 %v8698, %v8699
        %v8701 = vshll.u32 2475754826, %v8695
        %v8702 = vshrl.u32 2131351028, %v8696
        %v8703 = vor.u32 %v8701, %v8702
        %v8704 = vshll.u32 2131351028, %v8695
        %v8705 = vshrl.u32 2102212464, %v8696
        %v8706 = vor.u32 %v8704, %v8705
        %v8707 = vshll.u32 2102212464, %v8695
        %v8708 = vshrl.u32 920167782, %v8696
        %v8709 = vor.u32 %v8707, %v8708
        %v8710 = vshll.u32 920167782, %v8695
        %v8711 = vshrl.u32 1326507024, %v8696
        %v8712 = vor.u32 %v8710, %v8711
        %vm8713 = vcmp.lt.s32.totalorder %v8694, 1
        %vm8714 = vcmp.lt.s32.totalorder %v8694, 2
        %vm8715 = vcmp.lt.s32.totalorder %v8694, 3
        %vm8716 = vcmp.lt.s32.totalorder %v8694, 4
        %v8717 = vsel %vm8713, %v8697, %v8700
        %v8718 = vsel %vm8716, %v8706, 2102212464
        %v8719 = vsel %vm8715, %v8703, %v8718
        %v8720 = vsel %vm8714, %v8717, %v8719
        %v8721 = vsel %vm8713, %v8700, %v8703
        %v8722 = vsel %vm8716, %v8709, 920167782
        %v8723 = vsel %vm8715, %v8706, %v8722
        %v8724 = vsel %vm8714, %v8721, %v8723
        %v8725 = vsel %vm8713, %v8703, %v8706
        %v8726 = vsel %vm8716, %v8712, 1326507024
        %v8727 = vsel %vm8715, %v8709, %v8726
        %v8728 = vsel %vm8714, %v8725, %v8727
        %v8729 = vshll.u32 %v8689, 8
        %v8730 = vand.u32 %v8729, 65535
        %v8731 = vshrl.u32 %v8729, 16
        %v8732 = vand.u32 %v8728, 65535
        %v8733 = vshrl.u32 %v8728, 16
        %v8734 = vmul.u32 %v8730, %v8732
        %v8735 = vmul.u32 %v8730, %v8733
        %v8736 = vmul.u32 %v8731, %v8732
        %v8737 = vmul.u32 %v8731, %v8733
        %v8738 = vshll.u32 %v8735, 16
        %v8739 = vshrl.u32 %v8735, 16
        %v8740 = vshll.u32 %v8736, 16
        %v8741 = vshrl.u32 %v8736, 16
        %vm8742 = vc.u32 %v8734, %v8738
        %v8743 = vsel %vm8742, 1, 0
        %v8744 = vadd.s32 %v8734, %v8738
        %v8745 = vadd.s32 %v8737, %v8743
        %vm8746 = vc.u32 %v8744, %v8740
        %v8747 = vsel %vm8746, 1, 0
        %v8748 = vadd.s32 %v8744, %v8740
        %v8749 = vadd.s32 %v8745, %v8747
        %v8750 = vadd.s32 %v8749, %v8739
        %v8751 = vadd.s32 %v8750, %v8741
        %v8752 = vand.u32 %v8729, 65535
        %v8753 = vshrl.u32 %v8729, 16
        %v8754 = vand.u32 %v8724, 65535
        %v8755 = vshrl.u32 %v8724, 16
        %v8756 = vmul.u32 %v8752, %v8754
        %v8757 = vmul.u32 %v8752, %v8755
        %v8758 = vmul.u32 %v8753, %v8754
        %v8759 = vmul.u32 %v8753, %v8755
        %v8760 = vshll.u32 %v8757, 16
        %v8761 = vshrl.u32 %v8757, 16
        %v8762 = vshll.u32 %v8758, 16
        %v8763 = vshrl.u32 %v8758, 16
        %vm8764 = vc.u32 %v8756, %v8760
        %v8765 = vsel %vm8764, 1, 0
        %v8766 = vadd.s32 %v8756, %v8760
        %v8767 = vadd.s32 %v8759, %v8765
        %vm8768 = vc.u32 %v8766, %v8762
        %v8769 = vsel %vm8768, 1, 0
        %v8770 = vadd.s32 %v8766, %v8762
        %v8771 = vadd.s32 %v8767, %v8769
        %v8772 = vadd.s32 %v8771, %v8761
        %v8773 = vadd.s32 %v8772, %v8763
        %v8774 = vmul.u32 %v8729, %v8720
        %v8775 = vadd.s32 %v8751, %v8770
        %vm8776 = vc.u32 %v8751, %v8770
        %v8777 = vadd.s32 %v8773, 1
        %v8778 = vsel %vm8776, %v8777, %v8773
        %v8779 = vadd.s32 %v8774, %v8778
        %v8780 = vadd.s32 %v8779, 536870912
        %v8781 = vshrl.u32 %v8780, 30
        %v8782 = vshll.u32 %v8781, 30
        %v8783 = vsub.s32 %v8779, %v8782
        %vm8784 = vcmp.lt.s32.totalorder %v8783, 0
        %v8785 = vsub.s32 0, %v8783
        %v8786 = vsel %vm8784, %v8785, %v8783
        %v8787 = vclz %v8786
        %v8788 = vsub.s32 %v8787, 2
        %vm8789 = vcmp.gt.s32.totalorder 0, %v8788
        %v8790 = vsel %vm8789, 0, %v8788
        %v8791 = vsub.s32 32, %v8790
        %v8792 = vshll.u32 %v8783, %v8790
        %v8793 = vshrl.u32 %v8775, %v8791
        %v8794 = vor.u32 %v8792, %v8793
        %v8795 = vsub.s32 4294967266, %v8790
        %v8796 = vadd.s32 %v8795, 127
        %v8797 = vshll.u32 %v8796, 23
        %v8798 = vor.u32 4788187, %v8797
        %v8799 = vand.u32 2147483647, %v8798
        %v8801 = vcvt.s32.f32 %v8794
        %v8802 = vmul.f32 %v8801, %v8799
        %v8803 = vxor.u32 %v8802, 2147483648
        %v8804 = vsel %vm8683, %v8803, %v8802
        %v8805 = vsub.s32 4, %v8781
        %v8806 = vsel %vm8683, %v8805, %v8781
        %v8807 = vsel %vm8682, %v5877, %v8804
        %v8808 = vsel %vm8682, 0, %v8806
        %v8809 = vmul.f32 %v8807, %v8807
        %v8810 = vmul.f32 %v8809, -0.001358992
        %v8811 = vadd.f32 %v8810, 0.041655596
        %v8812 = vmul.f32 %v8809, %v8811
        %v8813 = vadd.f32 %v8812, -0.4999988
        %v8814 = vmul.f32 %v8809, %v8813
        %v8815 = vadd.f32 1.0, %v8814
        %v8816 = vmul.f32 %v8807, %v8807
        %v8817 = vmul.f32 %v8816, -0.00019511016
        %v8818 = vadd.f32 %v8817, 0.008332121
        %v8819 = vmul.f32 %v8816, %v8818
        %v8820 = vadd.f32 %v8819, -0.16666654
        %v8821 = vmul.f32 %v8816, %v8820
        %v8822 = vadd.f32 %v8821, 1.0
        %v8823 = vmul.f32 %v8822, %v8807
        %vm8824 = vweird.f32 %v5877
        %v8825 = vadd.s32 %v8808, 3
        %v8826 = vand.u32 %v8825, 3
        %vm8827 = vcmp.lt.s32.totalorder %v8826, 2
        %vm8828 = vcmp.eq.s32.totalorder %v8826, 0
        %v8829 = vxor.u32 %v8823, 2147483648
        %v8830 = vsel %vm8828, %v8815, %v8829
        %vm8831 = vcmp.eq.s32.totalorder %v8826, 2
        %v8832 = vxor.u32 %v8815, 2147483648
        %v8833 = vsel %vm8831, %v8832, %v8823
        %v8834 = vsel %vm8827, %v8830, %v8833
        %v8835 = vsel %vm8824, nan, %v8834
        %v8836 = vand.u32 2147483647, %v5878
        %vm8837 = vcmp.le.f32.partialorder %v8836, 0.7853982
        %vm8838 = vcmp.lt.s32.totalorder %v5878, 0
        %v8839 = vand.u32 %v5878, 2139095040
        %v8840 = vshrl.u32 %v8839, 23
        %v8841 = vsub.s32 %v8840, 127
        %v8842 = vand.u32 2147483647, %v5878
        %v8843 = vand.u32 %v8842, 8388607
        %v8844 = vor.u32 %v8843, 8388608
        %v8845 = vsub.s32 0, %v8844
        %v8846 = vadd.s32 %v8841, 1
        %vm8847 = vcmp.gt.s32.totalorder %v8846, 0
        %v8848 = vsel %vm8847, %v8846, 0
        %v8849 = vshrl.u32 %v8848, 5
        %v8850 = vand.u32 %v8848, 31
        %v8851 = vsub.s32 32, %v8850
        %v8852 = vshrl.u32 683565275, %v8851
        %v8853 = vshll.u32 683565275, %v8850
        %v8854 = vshrl.u32 2475754826, %v8851
        %v8855 = vor.u32 %v8853, %v8854
        %v8856 = vshll.u32 2475754826, %v8850
        %v8857 = vshrl.u32 2131351028, %v8851
        %v8858 = vor.u32 %v8856, %v8857
        %v8859 = vshll.u32 2131351028, %v8850
        %v8860 = vshrl.u32 2102212464, %v8851
        %v8861 = vor.u32 %v8859, %v8860
        %v8862 = vshll.u32 2102212464, %v8850
        %v8863 = vshrl.u32 920167782, %v8851
        %v8864 = vor.u32 %v8862, %v8863
        %v8865 = vshll.u32 920167782, %v8850
        %v8866 = vshrl.u32 1326507024, %v8851
        %v8867 = vor.u32 %v8865, %v8866
        %vm8868 = vcmp.lt.s32.totalorder %v8849, 1
        %vm8869 = vcmp.lt.s32.totalorder %v8849, 2
        %vm8870 = vcmp.lt.s32.totalorder %v8849, 3
        %vm8871 = vcmp.lt.s32.totalorder %v8849, 4
        %v8872 = vsel %vm8868, %v8852, %v8855
        %v8873 = vsel %vm8871, %v8861, 2102212464
        %v8874 = vsel %vm8870, %v8858, %v8873
        %v8875 = vsel %vm8869, %v8872, %v8874
        %v8876 = vsel %vm8868, %v8855, %v8858
        %v8877 = vsel %vm8871, %v8864, 920167782
        %v8878 = vsel %vm8870, %v8861, %v8877
        %v8879 = vsel %vm8869, %v8876, %v8878
        %v8880 = vsel %vm8868, %v8858, %v8861
        %v8881 = vsel %vm8871, %v8867, 1326507024
        %v8882 = vsel %vm8870, %v8864, %v8881
        %v8883 = vsel %vm8869, %v8880, %v8882
        %v8884 = vshll.u32 %v8844, 8
        %v8885 = vand.u32 %v8884, 65535
        %v8886 = vshrl.u32 %v8884, 16
        %v8887 = vand.u32 %v8883, 65535
        %v8888 = vshrl.u32 %v8883, 16
        %v8889 = vmul.u32 %v8885, %v8887
        %v8890 = vmul.u32 %v8885, %v8888
        %v8891 = vmul.u32 %v8886, %v8887
        %v8892 = vmul.u32 %v8886, %v8888
        %v8893 = vshll.u32 %v8890, 16
        %v8894 = vshrl.u32 %v8890, 16
        %v8895 = vshll.u32 %v8891, 16
        %v8896 = vshrl.u32 %v8891, 16
        %vm8897 = vc.u32 %v8889, %v8893
        %v8898 = vsel %vm8897, 1, 0
        %v8899 = vadd.s32 %v8889, %v8893
        %v8900 = vadd.s32 %v8892, %v8898
        %vm8901 = vc.u32 %v8899, %v8895
        %v8902 = vsel %vm8901, 1, 0
        %v8903 = vadd.s32 %v8899, %v8895
        %v8904 = vadd.s32 %v8900, %v8902
        %v8905 = vadd.s32 %v8904, %v8894
        %v8906 = vadd.s32 %v8905, %v8896
        %v8907 = vand.u32 %v8884, 65535
        %v8908 = vshrl.u32 %v8884, 16
        %v8909 = vand.u32 %v8879, 65535
        %v8910 = vshrl.u32 %v8879, 16
        %v8911 = vmul.u32 %v8907, %v8909
        %v8912 = vmul.u32 %v8907, %v8910
        %v8913 = vmul.u32 %v8908, %v8909
        %v8914 = vmul.u32 %v8908, %v8910
        %v8915 = vshll.u32 %v8912, 16
        %v8916 = vshrl.u32 %v8912, 16
        %v8917 = vshll.u32 %v8913, 16
        %v8918 = vshrl.u32 %v8913, 16
        %vm8919 = vc.u32 %v8911, %v8915
        %v8920 = vsel %vm8919, 1, 0
        %v8921 = vadd.s32 %v8911, %v8915
        %v8922 = vadd.s32 %v8914, %v8920
        %vm8923 = vc.u32 %v8921, %v8917
        %v8924 = vsel %vm8923, 1, 0
        %v8925 = vadd.s32 %v8921, %v8917
        %v8926 = vadd.s32 %v8922, %v8924
        %v8927 = vadd.s32 %v8926, %v8916
        %v8928 = vadd.s32 %v8927, %v8918
        %v8929 = vmul.u32 %v8884, %v8875
        %v8930 = vadd.s32 %v8906, %v8925
        %vm8931 = vc.u32 %v8906, %v8925
        %v8932 = vadd.s32 %v8928, 1
        %v8933 = vsel %vm8931, %v8932, %v8928
        %v8934 = vadd.s32 %v8929, %v8933
        %v8935 = vadd.s32 %v8934, 536870912
        %v8936 = vshrl.u32 %v8935, 30
        %v8937 = vshll.u32 %v8936, 30
        %v8938 = vsub.s32 %v8934, %v8937
        %vm8939 = vcmp.lt.s32.totalorder %v8938, 0
        %v8940 = vsub.s32 0, %v8938
        %v8941 = vsel %vm8939, %v8940, %v8938
        %v8942 = vclz %v8941
        %v8943 = vsub.s32 %v8942, 2
        %vm8944 = vcmp.gt.s32.totalorder 0, %v8943
        %v8945 = vsel %vm8944, 0, %v8943
        %v8946 = vsub.s32 32, %v8945
        %v8947 = vshll.u32 %v8938, %v8945
        %v8948 = vshrl.u32 %v8930, %v8946
        %v8949 = vor.u32 %v8947, %v8948
        %v8950 = vsub.s32 4294967266, %v8945
        %v8951 = vadd.s32 %v8950, 127
        %v8952 = vshll.u32 %v8951, 23
        %v8953 = vor.u32 4788187, %v8952
        %v8954 = vand.u32 2147483647, %v8953
        %v8956 = vcvt.s32.f32 %v8949
        %v8957 = vmul.f32 %v8956, %v8954
        %v8958 = vxor.u32 %v8957, 2147483648
        %v8959 = vsel %vm8838, %v8958, %v8957
        %v8960 = vsub.s32 4, %v8936
        %v8961 = vsel %vm8838, %v8960, %v8936
        %v8962 = vsel %vm8837, %v5878, %v8959
        %v8963 = vsel %vm8837, 0, %v8961
        %v8964 = vmul.f32 %v8962, %v8962
        %v8965 = vmul.f32 %v8964, -0.001358992
        %v8966 = vadd.f32 %v8965, 0.041655596
        %v8967 = vmul.f32 %v8964, %v8966
        %v8968 = vadd.f32 %v8967, -0.4999988
        %v8969 = vmul.f32 %v8964, %v8968
        %v8970 = vadd.f32 1.0, %v8969
        %v8971 = vmul.f32 %v8962, %v8962
        %v8972 = vmul.f32 %v8971, -0.00019511016
        %v8973 = vadd.f32 %v8972, 0.008332121
        %v8974 = vmul.f32 %v8971, %v8973
        %v8975 = vadd.f32 %v8974, -0.16666654
        %v8976 = vmul.f32 %v8971, %v8975
        %v8977 = vadd.f32 %v8976, 1.0
        %v8978 = vmul.f32 %v8977, %v8962
        %vm8979 = vweird.f32 %v5878
        %v8980 = vadd.s32 %v8963, 3
        %v8981 = vand.u32 %v8980, 3
        %vm8982 = vcmp.lt.s32.totalorder %v8981, 2
        %vm8983 = vcmp.eq.s32.totalorder %v8981, 0
        %v8984 = vxor.u32 %v8978, 2147483648
        %v8985 = vsel %vm8983, %v8970, %v8984
        %vm8986 = vcmp.eq.s32.totalorder %v8981, 2
        %v8987 = vxor.u32 %v8970, 2147483648
        %v8988 = vsel %vm8986, %v8987, %v8978
        %v8989 = vsel %vm8982, %v8985, %v8988
        %v8990 = vsel %vm8979, nan, %v8989
        %v8991 = vand.u32 2147483647, %v5879
        %vm8992 = vcmp.le.f32.partialorder %v8991, 0.7853982
        %vm8993 = vcmp.lt.s32.totalorder %v5879, 0
        %v8994 = vand.u32 %v5879, 2139095040
        %v8995 = vshrl.u32 %v8994, 23
        %v8996 = vsub.s32 %v8995, 127
        %v8997 = vand.u32 2147483647, %v5879
        %v8998 = vand.u32 %v8997, 8388607
        %v8999 = vor.u32 %v8998, 8388608
        %v9000 = vsub.s32 0, %v8999
        %v9001 = vadd.s32 %v8996, 1
        %vm9002 = vcmp.gt.s32.totalorder %v9001, 0
        %v9003 = vsel %vm9002, %v9001, 0
        %v9004 = vshrl.u32 %v9003, 5
        %v9005 = vand.u32 %v9003, 31
        %v9006 = vsub.s32 32, %v9005
        %v9007 = vshrl.u32 683565275, %v9006
        %v9008 = vshll.u32 683565275, %v9005
        %v9009 = vshrl.u32 2475754826, %v9006
        %v9010 = vor.u32 %v9008, %v9009
        %v9011 = vshll.u32 2475754826, %v9005
        %v9012 = vshrl.u32 2131351028, %v9006
        %v9013 = vor.u32 %v9011, %v9012
        %v9014 = vshll.u32 2131351028, %v9005
        %v9015 = vshrl.u32 2102212464, %v9006
        %v9016 = vor.u32 %v9014, %v9015
        %v9017 = vshll.u32 2102212464, %v9005
        %v9018 = vshrl.u32 920167782, %v9006
        %v9019 = vor.u32 %v9017, %v9018
        %v9020 = vshll.u32 920167782, %v9005
        %v9021 = vshrl.u32 1326507024, %v9006
        %v9022 = vor.u32 %v9020, %v9021
        %vm9023 = vcmp.lt.s32.totalorder %v9004, 1
        %vm9024 = vcmp.lt.s32.totalorder %v9004, 2
        %vm9025 = vcmp.lt.s32.totalorder %v9004, 3
        %vm9026 = vcmp.lt.s32.totalorder %v9004, 4
        %v9027 = vsel %vm9023, %v9007, %v9010
        %v9028 = vsel %vm9026, %v9016, 2102212464
        %v9029 = vsel %vm9025, %v9013, %v9028
        %v9030 = vsel %vm9024, %v9027, %v9029
        %v9031 = vsel %vm9023, %v9010, %v9013
        %v9032 = vsel %vm9026, %v9019, 920167782
        %v9033 = vsel %vm9025, %v9016, %v9032
        %v9034 = vsel %vm9024, %v9031, %v9033
        %v9035 = vsel %vm9023, %v9013, %v9016
        %v9036 = vsel %vm9026, %v9022, 1326507024
        %v9037 = vsel %vm9025, %v9019, %v9036
        %v9038 = vsel %vm9024, %v9035, %v9037
        %v9039 = vshll.u32 %v8999, 8
        %v9040 = vand.u32 %v9039, 65535
        %v9041 = vshrl.u32 %v9039, 16
        %v9042 = vand.u32 %v9038, 65535
        %v9043 = vshrl.u32 %v9038, 16
        %v9044 = vmul.u32 %v9040, %v9042
        %v9045 = vmul.u32 %v9040, %v9043
        %v9046 = vmul.u32 %v9041, %v9042
        %v9047 = vmul.u32 %v9041, %v9043
        %v9048 = vshll.u32 %v9045, 16
        %v9049 = vshrl.u32 %v9045, 16
        %v9050 = vshll.u32 %v9046, 16
        %v9051 = vshrl.u32 %v9046, 16
        %vm9052 = vc.u32 %v9044, %v9048
        %v9053 = vsel %vm9052, 1, 0
        %v9054 = vadd.s32 %v9044, %v9048
        %v9055 = vadd.s32 %v9047, %v9053
        %vm9056 = vc.u32 %v9054, %v9050
        %v9057 = vsel %vm9056, 1, 0
        %v9058 = vadd.s32 %v9054, %v9050
        %v9059 = vadd.s32 %v9055, %v9057
        %v9060 = vadd.s32 %v9059, %v9049
        %v9061 = vadd.s32 %v9060, %v9051
        %v9062 = vand.u32 %v9039, 65535
        %v9063 = vshrl.u32 %v9039, 16
        %v9064 = vand.u32 %v9034, 65535
        %v9065 = vshrl.u32 %v9034, 16
        %v9066 = vmul.u32 %v9062, %v9064
        %v9067 = vmul.u32 %v9062, %v9065
        %v9068 = vmul.u32 %v9063, %v9064
        %v9069 = vmul.u32 %v9063, %v9065
        %v9070 = vshll.u32 %v9067, 16
        %v9071 = vshrl.u32 %v9067, 16
        %v9072 = vshll.u32 %v9068, 16
        %v9073 = vshrl.u32 %v9068, 16
        %vm9074 = vc.u32 %v9066, %v9070
        %v9075 = vsel %vm9074, 1, 0
        %v9076 = vadd.s32 %v9066, %v9070
        %v9077 = vadd.s32 %v9069, %v9075
        %vm9078 = vc.u32 %v9076, %v9072
        %v9079 = vsel %vm9078, 1, 0
        %v9080 = vadd.s32 %v9076, %v9072
        %v9081 = vadd.s32 %v9077, %v9079
        %v9082 = vadd.s32 %v9081, %v9071
        %v9083 = vadd.s32 %v9082, %v9073
        %v9084 = vmul.u32 %v9039, %v9030
        %v9085 = vadd.s32 %v9061, %v9080
        %vm9086 = vc.u32 %v9061, %v9080
        %v9087 = vadd.s32 %v9083, 1
        %v9088 = vsel %vm9086, %v9087, %v9083
        %v9089 = vadd.s32 %v9084, %v9088
        %v9090 = vadd.s32 %v9089, 536870912
        %v9091 = vshrl.u32 %v9090, 30
        %v9092 = vshll.u32 %v9091, 30
        %v9093 = vsub.s32 %v9089, %v9092
        %vm9094 = vcmp.lt.s32.totalorder %v9093, 0
        %v9095 = vsub.s32 0, %v9093
        %v9096 = vsel %vm9094, %v9095, %v9093
        %v9097 = vclz %v9096
        %v9098 = vsub.s32 %v9097, 2
        %vm9099 = vcmp.gt.s32.totalorder 0, %v9098
        %v9100 = vsel %vm9099, 0, %v9098
        %v9101 = vsub.s32 32, %v9100
        %v9102 = vshll.u32 %v9093, %v9100
        %v9103 = vshrl.u32 %v9085, %v9101
        %v9104 = vor.u32 %v9102, %v9103
        %v9105 = vsub.s32 4294967266, %v9100
        %v9106 = vadd.s32 %v9105, 127
        %v9107 = vshll.u32 %v9106, 23
        %v9108 = vor.u32 4788187, %v9107
        %v9109 = vand.u32 2147483647, %v9108
        %v9111 = vcvt.s32.f32 %v9104
        %v9112 = vmul.f32 %v9111, %v9109
        %v9113 = vxor.u32 %v9112, 2147483648
        %v9114 = vsel %vm8993, %v9113, %v9112
        %v9115 = vsub.s32 4, %v9091
        %v9116 = vsel %vm8993, %v9115, %v9091
        %v9117 = vsel %vm8992, %v5879, %v9114
        %v9118 = vsel %vm8992, 0, %v9116
        %v9119 = vmul.f32 %v9117, %v9117
        %v9120 = vmul.f32 %v9119, -0.001358992
        %v9121 = vadd.f32 %v9120, 0.041655596
        %v9122 = vmul.f32 %v9119, %v9121
        %v9123 = vadd.f32 %v9122, -0.4999988
        %v9124 = vmul.f32 %v9119, %v9123
        %v9125 = vadd.f32 1.0, %v9124
        %v9126 = vmul.f32 %v9117, %v9117
        %v9127 = vmul.f32 %v9126, -0.00019511016
        %v9128 = vadd.f32 %v9127, 0.008332121
        %v9129 = vmul.f32 %v9126, %v9128
        %v9130 = vadd.f32 %v9129, -0.16666654
        %v9131 = vmul.f32 %v9126, %v9130
        %v9132 = vadd.f32 %v9131, 1.0
        %v9133 = vmul.f32 %v9132, %v9117
        %vm9134 = vweird.f32 %v5879
        %v9135 = vadd.s32 %v9118, 3
        %v9136 = vand.u32 %v9135, 3
        %vm9137 = vcmp.lt.s32.totalorder %v9136, 2
        %vm9138 = vcmp.eq.s32.totalorder %v9136, 0
        %v9139 = vxor.u32 %v9133, 2147483648
        %v9140 = vsel %vm9138, %v9125, %v9139
        %vm9141 = vcmp.eq.s32.totalorder %v9136, 2
        %v9142 = vxor.u32 %v9125, 2147483648
        %v9143 = vsel %vm9141, %v9142, %v9133
        %v9144 = vsel %vm9137, %v9140, %v9143
        %v9145 = vsel %vm9134, nan, %v9144
        %v9146 = vand.u32 2147483647, %v5880
        %vm9147 = vcmp.le.f32.partialorder %v9146, 0.7853982
        %vm9148 = vcmp.lt.s32.totalorder %v5880, 0
        %v9149 = vand.u32 %v5880, 2139095040
        %v9150 = vshrl.u32 %v9149, 23
        %v9151 = vsub.s32 %v9150, 127
        %v9152 = vand.u32 2147483647, %v5880
        %v9153 = vand.u32 %v9152, 8388607
        %v9154 = vor.u32 %v9153, 8388608
        %v9155 = vsub.s32 0, %v9154
        %v9156 = vadd.s32 %v9151, 1
        %vm9157 = vcmp.gt.s32.totalorder %v9156, 0
        %v9158 = vsel %vm9157, %v9156, 0
        %v9159 = vshrl.u32 %v9158, 5
        %v9160 = vand.u32 %v9158, 31
        %v9161 = vsub.s32 32, %v9160
        %v9162 = vshrl.u32 683565275, %v9161
        %v9163 = vshll.u32 683565275, %v9160
        %v9164 = vshrl.u32 2475754826, %v9161
        %v9165 = vor.u32 %v9163, %v9164
        %v9166 = vshll.u32 2475754826, %v9160
        %v9167 = vshrl.u32 2131351028, %v9161
        %v9168 = vor.u32 %v9166, %v9167
        %v9169 = vshll.u32 2131351028, %v9160
        %v9170 = vshrl.u32 2102212464, %v9161
        %v9171 = vor.u32 %v9169, %v9170
        %v9172 = vshll.u32 2102212464, %v9160
        %v9173 = vshrl.u32 920167782, %v9161
        %v9174 = vor.u32 %v9172, %v9173
        %v9175 = vshll.u32 920167782, %v9160
        %v9176 = vshrl.u32 1326507024, %v9161
        %v9177 = vor.u32 %v9175, %v9176
        %vm9178 = vcmp.lt.s32.totalorder %v9159, 1
        %vm9179 = vcmp.lt.s32.totalorder %v9159, 2
        %vm9180 = vcmp.lt.s32.totalorder %v9159, 3
        %vm9181 = vcmp.lt.s32.totalorder %v9159, 4
        %v9182 = vsel %vm9178, %v9162, %v9165
        %v9183 = vsel %vm9181, %v9171, 2102212464
        %v9184 = vsel %vm9180, %v9168, %v9183
        %v9185 = vsel %vm9179, %v9182, %v9184
        %v9186 = vsel %vm9178, %v9165, %v9168
        %v9187 = vsel %vm9181, %v9174, 920167782
        %v9188 = vsel %vm9180, %v9171, %v9187
        %v9189 = vsel %vm9179, %v9186, %v9188
        %v9190 = vsel %vm9178, %v9168, %v9171
        %v9191 = vsel %vm9181, %v9177, 1326507024
        %v9192 = vsel %vm9180, %v9174, %v9191
        %v9193 = vsel %vm9179, %v9190, %v9192
        %v9194 = vshll.u32 %v9154, 8
        %v9195 = vand.u32 %v9194, 65535
        %v9196 = vshrl.u32 %v9194, 16
        %v9197 = vand.u32 %v9193, 65535
        %v9198 = vshrl.u32 %v9193, 16
        %v9199 = vmul.u32 %v9195, %v9197
        %v9200 = vmul.u32 %v9195, %v9198
        %v9201 = vmul.u32 %v9196, %v9197
        %v9202 = vmul.u32 %v9196, %v9198
        %v9203 = vshll.u32 %v9200, 16
        %v9204 = vshrl.u32 %v9200, 16
        %v9205 = vshll.u32 %v9201, 16
        %v9206 = vshrl.u32 %v9201, 16
        %vm9207 = vc.u32 %v9199, %v9203
        %v9208 = vsel %vm9207, 1, 0
        %v9209 = vadd.s32 %v9199, %v9203
        %v9210 = vadd.s32 %v9202, %v9208
        %vm9211 = vc.u32 %v9209, %v9205
        %v9212 = vsel %vm9211, 1, 0
        %v9213 = vadd.s32 %v9209, %v9205
        %v9214 = vadd.s32 %v9210, %v9212
        %v9215 = vadd.s32 %v9214, %v9204
        %v9216 = vadd.s32 %v9215, %v9206
        %v9217 = vand.u32 %v9194, 65535
        %v9218 = vshrl.u32 %v9194, 16
        %v9219 = vand.u32 %v9189, 65535
        %v9220 = vshrl.u32 %v9189, 16
        %v9221 = vmul.u32 %v9217, %v9219
        %v9222 = vmul.u32 %v9217, %v9220
        %v9223 = vmul.u32 %v9218, %v9219
        %v9224 = vmul.u32 %v9218, %v9220
        %v9225 = vshll.u32 %v9222, 16
        %v9226 = vshrl.u32 %v9222, 16
        %v9227 = vshll.u32 %v9223, 16
        %v9228 = vshrl.u32 %v9223, 16
        %vm9229 = vc.u32 %v9221, %v9225
        %v9230 = vsel %vm9229, 1, 0
        %v9231 = vadd.s32 %v9221, %v9225
        %v9232 = vadd.s32 %v9224, %v9230
        %vm9233 = vc.u32 %v9231, %v9227
        %v9234 = vsel %vm9233, 1, 0
        %v9235 = vadd.s32 %v9231, %v9227
        %v9236 = vadd.s32 %v9232, %v9234
        %v9237 = vadd.s32 %v9236, %v9226
        %v9238 = vadd.s32 %v9237, %v9228
        %v9239 = vmul.u32 %v9194, %v9185
        %v9240 = vadd.s32 %v9216, %v9235
        %vm9241 = vc.u32 %v9216, %v9235
        %v9242 = vadd.s32 %v9238, 1
        %v9243 = vsel %vm9241, %v9242, %v9238
        %v9244 = vadd.s32 %v9239, %v9243
        %v9245 = vadd.s32 %v9244, 536870912
        %v9246 = vshrl.u32 %v9245, 30
        %v9247 = vshll.u32 %v9246, 30
        %v9248 = vsub.s32 %v9244, %v9247
        %vm9249 = vcmp.lt.s32.totalorder %v9248, 0
        %v9250 = vsub.s32 0, %v9248
        %v9251 = vsel %vm9249, %v9250, %v9248
        %v9252 = vclz %v9251
        %v9253 = vsub.s32 %v9252, 2
        %vm9254 = vcmp.gt.s32.totalorder 0, %v9253
        %v9255 = vsel %vm9254, 0, %v9253
        %v9256 = vsub.s32 32, %v9255
        %v9257 = vshll.u32 %v9248, %v9255
        %v9258 = vshrl.u32 %v9240, %v9256
        %v9259 = vor.u32 %v9257, %v9258
        %v9260 = vsub.s32 4294967266, %v9255
        %v9261 = vadd.s32 %v9260, 127
        %v9262 = vshll.u32 %v9261, 23
        %v9263 = vor.u32 4788187, %v9262
        %v9264 = vand.u32 2147483647, %v9263
        %v9266 = vcvt.s32.f32 %v9259
        %v9267 = vmul.f32 %v9266, %v9264
        %v9268 = vxor.u32 %v9267, 2147483648
        %v9269 = vsel %vm9148, %v9268, %v9267
        %v9270 = vsub.s32 4, %v9246
        %v9271 = vsel %vm9148, %v9270, %v9246
        %v9272 = vsel %vm9147, %v5880, %v9269
        %v9273 = vsel %vm9147, 0, %v9271
        %v9274 = vmul.f32 %v9272, %v9272
        %v9275 = vmul.f32 %v9274, -0.001358992
        %v9276 = vadd.f32 %v9275, 0.041655596
        %v9277 = vmul.f32 %v9274, %v9276
        %v9278 = vadd.f32 %v9277, -0.4999988
        %v9279 = vmul.f32 %v9274, %v9278
        %v9280 = vadd.f32 1.0, %v9279
        %v9281 = vmul.f32 %v9272, %v9272
        %v9282 = vmul.f32 %v9281, -0.00019511016
        %v9283 = vadd.f32 %v9282, 0.008332121
        %v9284 = vmul.f32 %v9281, %v9283
        %v9285 = vadd.f32 %v9284, -0.16666654
        %v9286 = vmul.f32 %v9281, %v9285
        %v9287 = vadd.f32 %v9286, 1.0
        %v9288 = vmul.f32 %v9287, %v9272
        %vm9289 = vweird.f32 %v5880
        %v9290 = vadd.s32 %v9273, 3
        %v9291 = vand.u32 %v9290, 3
        %vm9292 = vcmp.lt.s32.totalorder %v9291, 2
        %vm9293 = vcmp.eq.s32.totalorder %v9291, 0
        %v9294 = vxor.u32 %v9288, 2147483648
        %v9295 = vsel %vm9293, %v9280, %v9294
        %vm9296 = vcmp.eq.s32.totalorder %v9291, 2
        %v9297 = vxor.u32 %v9280, 2147483648
        %v9298 = vsel %vm9296, %v9297, %v9288
        %v9299 = vsel %vm9292, %v9295, %v9298
        %v9300 = vsel %vm9289, nan, %v9299
        %v9301 = vand.u32 2147483647, %v5881
        %vm9302 = vcmp.le.f32.partialorder %v9301, 0.7853982
        %vm9303 = vcmp.lt.s32.totalorder %v5881, 0
        %v9304 = vand.u32 %v5881, 2139095040
        %v9305 = vshrl.u32 %v9304, 23
        %v9306 = vsub.s32 %v9305, 127
        %v9307 = vand.u32 2147483647, %v5881
        %v9308 = vand.u32 %v9307, 8388607
        %v9309 = vor.u32 %v9308, 8388608
        %v9310 = vsub.s32 0, %v9309
        %v9311 = vadd.s32 %v9306, 1
        %vm9312 = vcmp.gt.s32.totalorder %v9311, 0
        %v9313 = vsel %vm9312, %v9311, 0
        %v9314 = vshrl.u32 %v9313, 5
        %v9315 = vand.u32 %v9313, 31
        %v9316 = vsub.s32 32, %v9315
        %v9317 = vshrl.u32 683565275, %v9316
        %v9318 = vshll.u32 683565275, %v9315
        %v9319 = vshrl.u32 2475754826, %v9316
        %v9320 = vor.u32 %v9318, %v9319
        %v9321 = vshll.u32 2475754826, %v9315
        %v9322 = vshrl.u32 2131351028, %v9316
        %v9323 = vor.u32 %v9321, %v9322
        %v9324 = vshll.u32 2131351028, %v9315
        %v9325 = vshrl.u32 2102212464, %v9316
        %v9326 = vor.u32 %v9324, %v9325
        %v9327 = vshll.u32 2102212464, %v9315
        %v9328 = vshrl.u32 920167782, %v9316
        %v9329 = vor.u32 %v9327, %v9328
        %v9330 = vshll.u32 920167782, %v9315
        %v9331 = vshrl.u32 1326507024, %v9316
        %v9332 = vor.u32 %v9330, %v9331
        %vm9333 = vcmp.lt.s32.totalorder %v9314, 1
        %vm9334 = vcmp.lt.s32.totalorder %v9314, 2
        %vm9335 = vcmp.lt.s32.totalorder %v9314, 3
        %vm9336 = vcmp.lt.s32.totalorder %v9314, 4
        %v9337 = vsel %vm9333, %v9317, %v9320
        %v9338 = vsel %vm9336, %v9326, 2102212464
        %v9339 = vsel %vm9335, %v9323, %v9338
        %v9340 = vsel %vm9334, %v9337, %v9339
        %v9341 = vsel %vm9333, %v9320, %v9323
        %v9342 = vsel %vm9336, %v9329, 920167782
        %v9343 = vsel %vm9335, %v9326, %v9342
        %v9344 = vsel %vm9334, %v9341, %v9343
        %v9345 = vsel %vm9333, %v9323, %v9326
        %v9346 = vsel %vm9336, %v9332, 1326507024
        %v9347 = vsel %vm9335, %v9329, %v9346
        %v9348 = vsel %vm9334, %v9345, %v9347
        %v9349 = vshll.u32 %v9309, 8
        %v9350 = vand.u32 %v9349, 65535
        %v9351 = vshrl.u32 %v9349, 16
        %v9352 = vand.u32 %v9348, 65535
        %v9353 = vshrl.u32 %v9348, 16
        %v9354 = vmul.u32 %v9350, %v9352
        %v9355 = vmul.u32 %v9350, %v9353
        %v9356 = vmul.u32 %v9351, %v9352
        %v9357 = vmul.u32 %v9351, %v9353
        %v9358 = vshll.u32 %v9355, 16
        %v9359 = vshrl.u32 %v9355, 16
        %v9360 = vshll.u32 %v9356, 16
        %v9361 = vshrl.u32 %v9356, 16
        %vm9362 = vc.u32 %v9354, %v9358
        %v9363 = vsel %vm9362, 1, 0
        %v9364 = vadd.s32 %v9354, %v9358
        %v9365 = vadd.s32 %v9357, %v9363
        %vm9366 = vc.u32 %v9364, %v9360
        %v9367 = vsel %vm9366, 1, 0
        %v9368 = vadd.s32 %v9364, %v9360
        %v9369 = vadd.s32 %v9365, %v9367
        %v9370 = vadd.s32 %v9369, %v9359
        %v9371 = vadd.s32 %v9370, %v9361
        %v9372 = vand.u32 %v9349, 65535
        %v9373 = vshrl.u32 %v9349, 16
        %v9374 = vand.u32 %v9344, 65535
        %v9375 = vshrl.u32 %v9344, 16
        %v9376 = vmul.u32 %v9372, %v9374
        %v9377 = vmul.u32 %v9372, %v9375
        %v9378 = vmul.u32 %v9373, %v9374
        %v9379 = vmul.u32 %v9373, %v9375
        %v9380 = vshll.u32 %v9377, 16
        %v9381 = vshrl.u32 %v9377, 16
        %v9382 = vshll.u32 %v9378, 16
        %v9383 = vshrl.u32 %v9378, 16
        %vm9384 = vc.u32 %v9376, %v9380
        %v9385 = vsel %vm9384, 1, 0
        %v9386 = vadd.s32 %v9376, %v9380
        %v9387 = vadd.s32 %v9379, %v9385
        %vm9388 = vc.u32 %v9386, %v9382
        %v9389 = vsel %vm9388, 1, 0
        %v9390 = vadd.s32 %v9386, %v9382
        %v9391 = vadd.s32 %v9387, %v9389
        %v9392 = vadd.s32 %v9391, %v9381
        %v9393 = vadd.s32 %v9392, %v9383
        %v9394 = vmul.u32 %v9349, %v9340
        %v9395 = vadd.s32 %v9371, %v9390
        %vm9396 = vc.u32 %v9371, %v9390
        %v9397 = vadd.s32 %v9393, 1
        %v9398 = vsel %vm9396, %v9397, %v9393
        %v9399 = vadd.s32 %v9394, %v9398
        %v9400 = vadd.s32 %v9399, 536870912
        %v9401 = vshrl.u32 %v9400, 30
        %v9402 = vshll.u32 %v9401, 30
        %v9403 = vsub.s32 %v9399, %v9402
        %vm9404 = vcmp.lt.s32.totalorder %v9403, 0
        %v9405 = vsub.s32 0, %v9403
        %v9406 = vsel %vm9404, %v9405, %v9403
        %v9407 = vclz %v9406
        %v9408 = vsub.s32 %v9407, 2
        %vm9409 = vcmp.gt.s32.totalorder 0, %v9408
        %v9410 = vsel %vm9409, 0, %v9408
        %v9411 = vsub.s32 32, %v9410
        %v9412 = vshll.u32 %v9403, %v9410
        %v9413 = vshrl.u32 %v9395, %v9411
        %v9414 = vor.u32 %v9412, %v9413
        %v9415 = vsub.s32 4294967266, %v9410
        %v9416 = vadd.s32 %v9415, 127
        %v9417 = vshll.u32 %v9416, 23
        %v9418 = vor.u32 4788187, %v9417
        %v9419 = vand.u32 2147483647, %v9418
        %v9421 = vcvt.s32.f32 %v9414
        %v9422 = vmul.f32 %v9421, %v9419
        %v9423 = vxor.u32 %v9422, 2147483648
        %v9424 = vsel %vm9303, %v9423, %v9422
        %v9425 = vsub.s32 4, %v9401
        %v9426 = vsel %vm9303, %v9425, %v9401
        %v9427 = vsel %vm9302, %v5881, %v9424
        %v9428 = vsel %vm9302, 0, %v9426
        %v9429 = vmul.f32 %v9427, %v9427
        %v9430 = vmul.f32 %v9429, -0.001358992
        %v9431 = vadd.f32 %v9430, 0.041655596
        %v9432 = vmul.f32 %v9429, %v9431
        %v9433 = vadd.f32 %v9432, -0.4999988
        %v9434 = vmul.f32 %v9429, %v9433
        %v9435 = vadd.f32 1.0, %v9434
        %v9436 = vmul.f32 %v9427, %v9427
        %v9437 = vmul.f32 %v9436, -0.00019511016
        %v9438 = vadd.f32 %v9437, 0.008332121
        %v9439 = vmul.f32 %v9436, %v9438
        %v9440 = vadd.f32 %v9439, -0.16666654
        %v9441 = vmul.f32 %v9436, %v9440
        %v9442 = vadd.f32 %v9441, 1.0
        %v9443 = vmul.f32 %v9442, %v9427
        %vm9444 = vweird.f32 %v5881
        %v9445 = vadd.s32 %v9428, 3
        %v9446 = vand.u32 %v9445, 3
        %vm9447 = vcmp.lt.s32.totalorder %v9446, 2
        %vm9448 = vcmp.eq.s32.totalorder %v9446, 0
        %v9449 = vxor.u32 %v9443, 2147483648
        %v9450 = vsel %vm9448, %v9435, %v9449
        %vm9451 = vcmp.eq.s32.totalorder %v9446, 2
        %v9452 = vxor.u32 %v9435, 2147483648
        %v9453 = vsel %vm9451, %v9452, %v9443
        %v9454 = vsel %vm9447, %v9450, %v9453
        %v9455 = vsel %vm9444, nan, %v9454
        %v9456 = vand.u32 2147483647, %v5882
        %vm9457 = vcmp.le.f32.partialorder %v9456, 0.7853982
        %vm9458 = vcmp.lt.s32.totalorder %v5882, 0
        %v9459 = vand.u32 %v5882, 2139095040
        %v9460 = vshrl.u32 %v9459, 23
        %v9461 = vsub.s32 %v9460, 127
        %v9462 = vand.u32 2147483647, %v5882
        %v9463 = vand.u32 %v9462, 8388607
        %v9464 = vor.u32 %v9463, 8388608
        %v9465 = vsub.s32 0, %v9464
        %v9466 = vadd.s32 %v9461, 1
        %vm9467 = vcmp.gt.s32.totalorder %v9466, 0
        %v9468 = vsel %vm9467, %v9466, 0
        %v9469 = vshrl.u32 %v9468, 5
        %v9470 = vand.u32 %v9468, 31
        %v9471 = vsub.s32 32, %v9470
        %v9472 = vshrl.u32 683565275, %v9471
        %v9473 = vshll.u32 683565275, %v9470
        %v9474 = vshrl.u32 2475754826, %v9471
        %v9475 = vor.u32 %v9473, %v9474
        %v9476 = vshll.u32 2475754826, %v9470
        %v9477 = vshrl.u32 2131351028, %v9471
        %v9478 = vor.u32 %v9476, %v9477
        %v9479 = vshll.u32 2131351028, %v9470
        %v9480 = vshrl.u32 2102212464, %v9471
        %v9481 = vor.u32 %v9479, %v9480
        %v9482 = vshll.u32 2102212464, %v9470
        %v9483 = vshrl.u32 920167782, %v9471
        %v9484 = vor.u32 %v9482, %v9483
        %v9485 = vshll.u32 920167782, %v9470
        %v9486 = vshrl.u32 1326507024, %v9471
        %v9487 = vor.u32 %v9485, %v9486
        %vm9488 = vcmp.lt.s32.totalorder %v9469, 1
        %vm9489 = vcmp.lt.s32.totalorder %v9469, 2
        %vm9490 = vcmp.lt.s32.totalorder %v9469, 3
        %vm9491 = vcmp.lt.s32.totalorder %v9469, 4
        %v9492 = vsel %vm9488, %v9472, %v9475
        %v9493 = vsel %vm9491, %v9481, 2102212464
        %v9494 = vsel %vm9490, %v9478, %v9493
        %v9495 = vsel %vm9489, %v9492, %v9494
        %v9496 = vsel %vm9488, %v9475, %v9478
        %v9497 = vsel %vm9491, %v9484, 920167782
        %v9498 = vsel %vm9490, %v9481, %v9497
        %v9499 = vsel %vm9489, %v9496, %v9498
        %v9500 = vsel %vm9488, %v9478, %v9481
        %v9501 = vsel %vm9491, %v9487, 1326507024
        %v9502 = vsel %vm9490, %v9484, %v9501
        %v9503 = vsel %vm9489, %v9500, %v9502
        %v9504 = vshll.u32 %v9464, 8
        %v9505 = vand.u32 %v9504, 65535
        %v9506 = vshrl.u32 %v9504, 16
        %v9507 = vand.u32 %v9503, 65535
        %v9508 = vshrl.u32 %v9503, 16
        %v9509 = vmul.u32 %v9505, %v9507
        %v9510 = vmul.u32 %v9505, %v9508
        %v9511 = vmul.u32 %v9506, %v9507
        %v9512 = vmul.u32 %v9506, %v9508
        %v9513 = vshll.u32 %v9510, 16
        %v9514 = vshrl.u32 %v9510, 16
        %v9515 = vshll.u32 %v9511, 16
        %v9516 = vshrl.u32 %v9511, 16
        %vm9517 = vc.u32 %v9509, %v9513
        %v9518 = vsel %vm9517, 1, 0
        %v9519 = vadd.s32 %v9509, %v9513
        %v9520 = vadd.s32 %v9512, %v9518
        %vm9521 = vc.u32 %v9519, %v9515
        %v9522 = vsel %vm9521, 1, 0
        %v9523 = vadd.s32 %v9519, %v9515
        %v9524 = vadd.s32 %v9520, %v9522
        %v9525 = vadd.s32 %v9524, %v9514
        %v9526 = vadd.s32 %v9525, %v9516
        %v9527 = vand.u32 %v9504, 65535
        %v9528 = vshrl.u32 %v9504, 16
        %v9529 = vand.u32 %v9499, 65535
        %v9530 = vshrl.u32 %v9499, 16
        %v9531 = vmul.u32 %v9527, %v9529
        %v9532 = vmul.u32 %v9527, %v9530
        %v9533 = vmul.u32 %v9528, %v9529
        %v9534 = vmul.u32 %v9528, %v9530
        %v9535 = vshll.u32 %v9532, 16
        %v9536 = vshrl.u32 %v9532, 16
        %v9537 = vshll.u32 %v9533, 16
        %v9538 = vshrl.u32 %v9533, 16
        %vm9539 = vc.u32 %v9531, %v9535
        %v9540 = vsel %vm9539, 1, 0
        %v9541 = vadd.s32 %v9531, %v9535
        %v9542 = vadd.s32 %v9534, %v9540
        %vm9543 = vc.u32 %v9541, %v9537
        %v9544 = vsel %vm9543, 1, 0
        %v9545 = vadd.s32 %v9541, %v9537
        %v9546 = vadd.s32 %v9542, %v9544
        %v9547 = vadd.s32 %v9546, %v9536
        %v9548 = vadd.s32 %v9547, %v9538
        %v9549 = vmul.u32 %v9504, %v9495
        %v9550 = vadd.s32 %v9526, %v9545
        %vm9551 = vc.u32 %v9526, %v9545
        %v9552 = vadd.s32 %v9548, 1
        %v9553 = vsel %vm9551, %v9552, %v9548
        %v9554 = vadd.s32 %v9549, %v9553
        %v9555 = vadd.s32 %v9554, 536870912
        %v9556 = vshrl.u32 %v9555, 30
        %v9557 = vshll.u32 %v9556, 30
        %v9558 = vsub.s32 %v9554, %v9557
        %vm9559 = vcmp.lt.s32.totalorder %v9558, 0
        %v9560 = vsub.s32 0, %v9558
        %v9561 = vsel %vm9559, %v9560, %v9558
        %v9562 = vclz %v9561
        %v9563 = vsub.s32 %v9562, 2
        %vm9564 = vcmp.gt.s32.totalorder 0, %v9563
        %v9565 = vsel %vm9564, 0, %v9563
        %v9566 = vsub.s32 32, %v9565
        %v9567 = vshll.u32 %v9558, %v9565
        %v9568 = vshrl.u32 %v9550, %v9566
        %v9569 = vor.u32 %v9567, %v9568
        %v9570 = vsub.s32 4294967266, %v9565
        %v9571 = vadd.s32 %v9570, 127
        %v9572 = vshll.u32 %v9571, 23
        %v9573 = vor.u32 4788187, %v9572
        %v9574 = vand.u32 2147483647, %v9573
        %v9576 = vcvt.s32.f32 %v9569
        %v9577 = vmul.f32 %v9576, %v9574
        %v9578 = vxor.u32 %v9577, 2147483648
        %v9579 = vsel %vm9458, %v9578, %v9577
        %v9580 = vsub.s32 4, %v9556
        %v9581 = vsel %vm9458, %v9580, %v9556
        %v9582 = vsel %vm9457, %v5882, %v9579
        %v9583 = vsel %vm9457, 0, %v9581
        %v9584 = vmul.f32 %v9582, %v9582
        %v9585 = vmul.f32 %v9584, -0.001358992
        %v9586 = vadd.f32 %v9585, 0.041655596
        %v9587 = vmul.f32 %v9584, %v9586
        %v9588 = vadd.f32 %v9587, -0.4999988
        %v9589 = vmul.f32 %v9584, %v9588
        %v9590 = vadd.f32 1.0, %v9589
        %v9591 = vmul.f32 %v9582, %v9582
        %v9592 = vmul.f32 %v9591, -0.00019511016
        %v9593 = vadd.f32 %v9592, 0.008332121
        %v9594 = vmul.f32 %v9591, %v9593
        %v9595 = vadd.f32 %v9594, -0.16666654
        %v9596 = vmul.f32 %v9591, %v9595
        %v9597 = vadd.f32 %v9596, 1.0
        %v9598 = vmul.f32 %v9597, %v9582
        %vm9599 = vweird.f32 %v5882
        %v9600 = vadd.s32 %v9583, 3
        %v9601 = vand.u32 %v9600, 3
        %vm9602 = vcmp.lt.s32.totalorder %v9601, 2
        %vm9603 = vcmp.eq.s32.totalorder %v9601, 0
        %v9604 = vxor.u32 %v9598, 2147483648
        %v9605 = vsel %vm9603, %v9590, %v9604
        %vm9606 = vcmp.eq.s32.totalorder %v9601, 2
        %v9607 = vxor.u32 %v9590, 2147483648
        %v9608 = vsel %vm9606, %v9607, %v9598
        %v9609 = vsel %vm9602, %v9605, %v9608
        %v9610 = vsel %vm9599, nan, %v9609
        %v9611 = vand.u32 2147483647, %v5883
        %vm9612 = vcmp.le.f32.partialorder %v9611, 0.7853982
        %vm9613 = vcmp.lt.s32.totalorder %v5883, 0
        %v9614 = vand.u32 %v5883, 2139095040
        %v9615 = vshrl.u32 %v9614, 23
        %v9616 = vsub.s32 %v9615, 127
        %v9617 = vand.u32 2147483647, %v5883
        %v9618 = vand.u32 %v9617, 8388607
        %v9619 = vor.u32 %v9618, 8388608
        %v9620 = vsub.s32 0, %v9619
        %v9621 = vadd.s32 %v9616, 1
        %vm9622 = vcmp.gt.s32.totalorder %v9621, 0
        %v9623 = vsel %vm9622, %v9621, 0
        %v9624 = vshrl.u32 %v9623, 5
        %v9625 = vand.u32 %v9623, 31
        %v9626 = vsub.s32 32, %v9625
        %v9627 = vshrl.u32 683565275, %v9626
        %v9628 = vshll.u32 683565275, %v9625
        %v9629 = vshrl.u32 2475754826, %v9626
        %v9630 = vor.u32 %v9628, %v9629
        %v9631 = vshll.u32 2475754826, %v9625
        %v9632 = vshrl.u32 2131351028, %v9626
        %v9633 = vor.u32 %v9631, %v9632
        %v9634 = vshll.u32 2131351028, %v9625
        %v9635 = vshrl.u32 2102212464, %v9626
        %v9636 = vor.u32 %v9634, %v9635
        %v9637 = vshll.u32 2102212464, %v9625
        %v9638 = vshrl.u32 920167782, %v9626
        %v9639 = vor.u32 %v9637, %v9638
        %v9640 = vshll.u32 920167782, %v9625
        %v9641 = vshrl.u32 1326507024, %v9626
        %v9642 = vor.u32 %v9640, %v9641
        %vm9643 = vcmp.lt.s32.totalorder %v9624, 1
        %vm9644 = vcmp.lt.s32.totalorder %v9624, 2
        %vm9645 = vcmp.lt.s32.totalorder %v9624, 3
        %vm9646 = vcmp.lt.s32.totalorder %v9624, 4
        %v9647 = vsel %vm9643, %v9627, %v9630
        %v9648 = vsel %vm9646, %v9636, 2102212464
        %v9649 = vsel %vm9645, %v9633, %v9648
        %v9650 = vsel %vm9644, %v9647, %v9649
        %v9651 = vsel %vm9643, %v9630, %v9633
        %v9652 = vsel %vm9646, %v9639, 920167782
        %v9653 = vsel %vm9645, %v9636, %v9652
        %v9654 = vsel %vm9644, %v9651, %v9653
        %v9655 = vsel %vm9643, %v9633, %v9636
        %v9656 = vsel %vm9646, %v9642, 1326507024
        %v9657 = vsel %vm9645, %v9639, %v9656
        %v9658 = vsel %vm9644, %v9655, %v9657
        %v9659 = vshll.u32 %v9619, 8
        %v9660 = vand.u32 %v9659, 65535
        %v9661 = vshrl.u32 %v9659, 16
        %v9662 = vand.u32 %v9658, 65535
        %v9663 = vshrl.u32 %v9658, 16
        %v9664 = vmul.u32 %v9660, %v9662
        %v9665 = vmul.u32 %v9660, %v9663
        %v9666 = vmul.u32 %v9661, %v9662
        %v9667 = vmul.u32 %v9661, %v9663
        %v9668 = vshll.u32 %v9665, 16
        %v9669 = vshrl.u32 %v9665, 16
        %v9670 = vshll.u32 %v9666, 16
        %v9671 = vshrl.u32 %v9666, 16
        %vm9672 = vc.u32 %v9664, %v9668
        %v9673 = vsel %vm9672, 1, 0
        %v9674 = vadd.s32 %v9664, %v9668
        %v9675 = vadd.s32 %v9667, %v9673
        %vm9676 = vc.u32 %v9674, %v9670
        %v9677 = vsel %vm9676, 1, 0
        %v9678 = vadd.s32 %v9674, %v9670
        %v9679 = vadd.s32 %v9675, %v9677
        %v9680 = vadd.s32 %v9679, %v9669
        %v9681 = vadd.s32 %v9680, %v9671
        %v9682 = vand.u32 %v9659, 65535
        %v9683 = vshrl.u32 %v9659, 16
        %v9684 = vand.u32 %v9654, 65535
        %v9685 = vshrl.u32 %v9654, 16
        %v9686 = vmul.u32 %v9682, %v9684
        %v9687 = vmul.u32 %v9682, %v9685
        %v9688 = vmul.u32 %v9683, %v9684
        %v9689 = vmul.u32 %v9683, %v9685
        %v9690 = vshll.u32 %v9687, 16
        %v9691 = vshrl.u32 %v9687, 16
        %v9692 = vshll.u32 %v9688, 16
        %v9693 = vshrl.u32 %v9688, 16
        %vm9694 = vc.u32 %v9686, %v9690
        %v9695 = vsel %vm9694, 1, 0
        %v9696 = vadd.s32 %v9686, %v9690
        %v9697 = vadd.s32 %v9689, %v9695
        %vm9698 = vc.u32 %v9696, %v9692
        %v9699 = vsel %vm9698, 1, 0
        %v9700 = vadd.s32 %v9696, %v9692
        %v9701 = vadd.s32 %v9697, %v9699
        %v9702 = vadd.s32 %v9701, %v9691
        %v9703 = vadd.s32 %v9702, %v9693
        %v9704 = vmul.u32 %v9659, %v9650
        %v9705 = vadd.s32 %v9681, %v9700
        %vm9706 = vc.u32 %v9681, %v9700
        %v9707 = vadd.s32 %v9703, 1
        %v9708 = vsel %vm9706, %v9707, %v9703
        %v9709 = vadd.s32 %v9704, %v9708
        %v9710 = vadd.s32 %v9709, 536870912
        %v9711 = vshrl.u32 %v9710, 30
        %v9712 = vshll.u32 %v9711, 30
        %v9713 = vsub.s32 %v9709, %v9712
        %vm9714 = vcmp.lt.s32.totalorder %v9713, 0
        %v9715 = vsub.s32 0, %v9713
        %v9716 = vsel %vm9714, %v9715, %v9713
        %v9717 = vclz %v9716
        %v9718 = vsub.s32 %v9717, 2
        %vm9719 = vcmp.gt.s32.totalorder 0, %v9718
        %v9720 = vsel %vm9719, 0, %v9718
        %v9721 = vsub.s32 32, %v9720
        %v9722 = vshll.u32 %v9713, %v9720
        %v9723 = vshrl.u32 %v9705, %v9721
        %v9724 = vor.u32 %v9722, %v9723
        %v9725 = vsub.s32 4294967266, %v9720
        %v9726 = vadd.s32 %v9725, 127
        %v9727 = vshll.u32 %v9726, 23
        %v9728 = vor.u32 4788187, %v9727
        %v9729 = vand.u32 2147483647, %v9728
        %v9731 = vcvt.s32.f32 %v9724
        %v9732 = vmul.f32 %v9731, %v9729
        %v9733 = vxor.u32 %v9732, 2147483648
        %v9734 = vsel %vm9613, %v9733, %v9732
        %v9735 = vsub.s32 4, %v9711
        %v9736 = vsel %vm9613, %v9735, %v9711
        %v9737 = vsel %vm9612, %v5883, %v9734
        %v9738 = vsel %vm9612, 0, %v9736
        %v9739 = vmul.f32 %v9737, %v9737
        %v9740 = vmul.f32 %v9739, -0.001358992
        %v9741 = vadd.f32 %v9740, 0.041655596
        %v9742 = vmul.f32 %v9739, %v9741
        %v9743 = vadd.f32 %v9742, -0.4999988
        %v9744 = vmul.f32 %v9739, %v9743
        %v9745 = vadd.f32 1.0, %v9744
        %v9746 = vmul.f32 %v9737, %v9737
        %v9747 = vmul.f32 %v9746, -0.00019511016
        %v9748 = vadd.f32 %v9747, 0.008332121
        %v9749 = vmul.f32 %v9746, %v9748
        %v9750 = vadd.f32 %v9749, -0.16666654
        %v9751 = vmul.f32 %v9746, %v9750
        %v9752 = vadd.f32 %v9751, 1.0
        %v9753 = vmul.f32 %v9752, %v9737
        %vm9754 = vweird.f32 %v5883
        %v9755 = vadd.s32 %v9738, 3
        %v9756 = vand.u32 %v9755, 3
        %vm9757 = vcmp.lt.s32.totalorder %v9756, 2
        %vm9758 = vcmp.eq.s32.totalorder %v9756, 0
        %v9759 = vxor.u32 %v9753, 2147483648
        %v9760 = vsel %vm9758, %v9745, %v9759
        %vm9761 = vcmp.eq.s32.totalorder %v9756, 2
        %v9762 = vxor.u32 %v9745, 2147483648
        %v9763 = vsel %vm9761, %v9762, %v9753
        %v9764 = vsel %vm9757, %v9760, %v9763
        %v9765 = vsel %vm9754, nan, %v9764
        %v9766 = vand.u32 2147483647, %v5884
        %vm9767 = vcmp.le.f32.partialorder %v9766, 0.7853982
        %vm9768 = vcmp.lt.s32.totalorder %v5884, 0
        %v9769 = vand.u32 %v5884, 2139095040
        %v9770 = vshrl.u32 %v9769, 23
        %v9771 = vsub.s32 %v9770, 127
        %v9772 = vand.u32 2147483647, %v5884
        %v9773 = vand.u32 %v9772, 8388607
        %v9774 = vor.u32 %v9773, 8388608
        %v9775 = vsub.s32 0, %v9774
        %v9776 = vadd.s32 %v9771, 1
        %vm9777 = vcmp.gt.s32.totalorder %v9776, 0
        %v9778 = vsel %vm9777, %v9776, 0
        %v9779 = vshrl.u32 %v9778, 5
        %v9780 = vand.u32 %v9778, 31
        %v9781 = vsub.s32 32, %v9780
        %v9782 = vshrl.u32 683565275, %v9781
        %v9783 = vshll.u32 683565275, %v9780
        %v9784 = vshrl.u32 2475754826, %v9781
        %v9785 = vor.u32 %v9783, %v9784
        %v9786 = vshll.u32 2475754826, %v9780
        %v9787 = vshrl.u32 2131351028, %v9781
        %v9788 = vor.u32 %v9786, %v9787
        %v9789 = vshll.u32 2131351028, %v9780
        %v9790 = vshrl.u32 2102212464, %v9781
        %v9791 = vor.u32 %v9789, %v9790
        %v9792 = vshll.u32 2102212464, %v9780
        %v9793 = vshrl.u32 920167782, %v9781
        %v9794 = vor.u32 %v9792, %v9793
        %v9795 = vshll.u32 920167782, %v9780
        %v9796 = vshrl.u32 1326507024, %v9781
        %v9797 = vor.u32 %v9795, %v9796
        %vm9798 = vcmp.lt.s32.totalorder %v9779, 1
        %vm9799 = vcmp.lt.s32.totalorder %v9779, 2
        %vm9800 = vcmp.lt.s32.totalorder %v9779, 3
        %vm9801 = vcmp.lt.s32.totalorder %v9779, 4
        %v9802 = vsel %vm9798, %v9782, %v9785
        %v9803 = vsel %vm9801, %v9791, 2102212464
        %v9804 = vsel %vm9800, %v9788, %v9803
        %v9805 = vsel %vm9799, %v9802, %v9804
        %v9806 = vsel %vm9798, %v9785, %v9788
        %v9807 = vsel %vm9801, %v9794, 920167782
        %v9808 = vsel %vm9800, %v9791, %v9807
        %v9809 = vsel %vm9799, %v9806, %v9808
        %v9810 = vsel %vm9798, %v9788, %v9791
        %v9811 = vsel %vm9801, %v9797, 1326507024
        %v9812 = vsel %vm9800, %v9794, %v9811
        %v9813 = vsel %vm9799, %v9810, %v9812
        %v9814 = vshll.u32 %v9774, 8
        %v9815 = vand.u32 %v9814, 65535
        %v9816 = vshrl.u32 %v9814, 16
        %v9817 = vand.u32 %v9813, 65535
        %v9818 = vshrl.u32 %v9813, 16
        %v9819 = vmul.u32 %v9815, %v9817
        %v9820 = vmul.u32 %v9815, %v9818
        %v9821 = vmul.u32 %v9816, %v9817
        %v9822 = vmul.u32 %v9816, %v9818
        %v9823 = vshll.u32 %v9820, 16
        %v9824 = vshrl.u32 %v9820, 16
        %v9825 = vshll.u32 %v9821, 16
        %v9826 = vshrl.u32 %v9821, 16
        %vm9827 = vc.u32 %v9819, %v9823
        %v9828 = vsel %vm9827, 1, 0
        %v9829 = vadd.s32 %v9819, %v9823
        %v9830 = vadd.s32 %v9822, %v9828
        %vm9831 = vc.u32 %v9829, %v9825
        %v9832 = vsel %vm9831, 1, 0
        %v9833 = vadd.s32 %v9829, %v9825
        %v9834 = vadd.s32 %v9830, %v9832
        %v9835 = vadd.s32 %v9834, %v9824
        %v9836 = vadd.s32 %v9835, %v9826
        %v9837 = vand.u32 %v9814, 65535
        %v9838 = vshrl.u32 %v9814, 16
        %v9839 = vand.u32 %v9809, 65535
        %v9840 = vshrl.u32 %v9809, 16
        %v9841 = vmul.u32 %v9837, %v9839
        %v9842 = vmul.u32 %v9837, %v9840
        %v9843 = vmul.u32 %v9838, %v9839
        %v9844 = vmul.u32 %v9838, %v9840
        %v9845 = vshll.u32 %v9842, 16
        %v9846 = vshrl.u32 %v9842, 16
        %v9847 = vshll.u32 %v9843, 16
        %v9848 = vshrl.u32 %v9843, 16
        %vm9849 = vc.u32 %v9841, %v9845
        %v9850 = vsel %vm9849, 1, 0
        %v9851 = vadd.s32 %v9841, %v9845
        %v9852 = vadd.s32 %v9844, %v9850
        %vm9853 = vc.u32 %v9851, %v9847
        %v9854 = vsel %vm9853, 1, 0
        %v9855 = vadd.s32 %v9851, %v9847
        %v9856 = vadd.s32 %v9852, %v9854
        %v9857 = vadd.s32 %v9856, %v9846
        %v9858 = vadd.s32 %v9857, %v9848
        %v9859 = vmul.u32 %v9814, %v9805
        %v9860 = vadd.s32 %v9836, %v9855
        %vm9861 = vc.u32 %v9836, %v9855
        %v9862 = vadd.s32 %v9858, 1
        %v9863 = vsel %vm9861, %v9862, %v9858
        %v9864 = vadd.s32 %v9859, %v9863
        %v9865 = vadd.s32 %v9864, 536870912
        %v9866 = vshrl.u32 %v9865, 30
        %v9867 = vshll.u32 %v9866, 30
        %v9868 = vsub.s32 %v9864, %v9867
        %vm9869 = vcmp.lt.s32.totalorder %v9868, 0
        %v9870 = vsub.s32 0, %v9868
        %v9871 = vsel %vm9869, %v9870, %v9868
        %v9872 = vclz %v9871
        %v9873 = vsub.s32 %v9872, 2
        %vm9874 = vcmp.gt.s32.totalorder 0, %v9873
        %v9875 = vsel %vm9874, 0, %v9873
        %v9876 = vsub.s32 32, %v9875
        %v9877 = vshll.u32 %v9868, %v9875
        %v9878 = vshrl.u32 %v9860, %v9876
        %v9879 = vor.u32 %v9877, %v9878
        %v9880 = vsub.s32 4294967266, %v9875
        %v9881 = vadd.s32 %v9880, 127
        %v9882 = vshll.u32 %v9881, 23
        %v9883 = vor.u32 4788187, %v9882
        %v9884 = vand.u32 2147483647, %v9883
        %v9886 = vcvt.s32.f32 %v9879
        %v9887 = vmul.f32 %v9886, %v9884
        %v9888 = vxor.u32 %v9887, 2147483648
        %v9889 = vsel %vm9768, %v9888, %v9887
        %v9890 = vsub.s32 4, %v9866
        %v9891 = vsel %vm9768, %v9890, %v9866
        %v9892 = vsel %vm9767, %v5884, %v9889
        %v9893 = vsel %vm9767, 0, %v9891
        %v9894 = vmul.f32 %v9892, %v9892
        %v9895 = vmul.f32 %v9894, -0.001358992
        %v9896 = vadd.f32 %v9895, 0.041655596
        %v9897 = vmul.f32 %v9894, %v9896
        %v9898 = vadd.f32 %v9897, -0.4999988
        %v9899 = vmul.f32 %v9894, %v9898
        %v9900 = vadd.f32 1.0, %v9899
        %v9901 = vmul.f32 %v9892, %v9892
        %v9902 = vmul.f32 %v9901, -0.00019511016
        %v9903 = vadd.f32 %v9902, 0.008332121
        %v9904 = vmul.f32 %v9901, %v9903
        %v9905 = vadd.f32 %v9904, -0.16666654
        %v9906 = vmul.f32 %v9901, %v9905
        %v9907 = vadd.f32 %v9906, 1.0
        %v9908 = vmul.f32 %v9907, %v9892
        %vm9909 = vweird.f32 %v5884
        %v9910 = vadd.s32 %v9893, 3
        %v9911 = vand.u32 %v9910, 3
        %vm9912 = vcmp.lt.s32.totalorder %v9911, 2
        %vm9913 = vcmp.eq.s32.totalorder %v9911, 0
        %v9914 = vxor.u32 %v9908, 2147483648
        %v9915 = vsel %vm9913, %v9900, %v9914
        %vm9916 = vcmp.eq.s32.totalorder %v9911, 2
        %v9917 = vxor.u32 %v9900, 2147483648
        %v9918 = vsel %vm9916, %v9917, %v9908
        %v9919 = vsel %vm9912, %v9915, %v9918
        %v9920 = vsel %vm9909, nan, %v9919
        %v9921 = vand.u32 2147483647, %v5885
        %vm9922 = vcmp.le.f32.partialorder %v9921, 0.7853982
        %vm9923 = vcmp.lt.s32.totalorder %v5885, 0
        %v9924 = vand.u32 %v5885, 2139095040
        %v9925 = vshrl.u32 %v9924, 23
        %v9926 = vsub.s32 %v9925, 127
        %v9927 = vand.u32 2147483647, %v5885
        %v9928 = vand.u32 %v9927, 8388607
        %v9929 = vor.u32 %v9928, 8388608
        %v9930 = vsub.s32 0, %v9929
        %v9931 = vadd.s32 %v9926, 1
        %vm9932 = vcmp.gt.s32.totalorder %v9931, 0
        %v9933 = vsel %vm9932, %v9931, 0
        %v9934 = vshrl.u32 %v9933, 5
        %v9935 = vand.u32 %v9933, 31
        %v9936 = vsub.s32 32, %v9935
        %v9937 = vshrl.u32 683565275, %v9936
        %v9938 = vshll.u32 683565275, %v9935
        %v9939 = vshrl.u32 2475754826, %v9936
        %v9940 = vor.u32 %v9938, %v9939
        %v9941 = vshll.u32 2475754826, %v9935
        %v9942 = vshrl.u32 2131351028, %v9936
        %v9943 = vor.u32 %v9941, %v9942
        %v9944 = vshll.u32 2131351028, %v9935
        %v9945 = vshrl.u32 2102212464, %v9936
        %v9946 = vor.u32 %v9944, %v9945
        %v9947 = vshll.u32 2102212464, %v9935
        %v9948 = vshrl.u32 920167782, %v9936
        %v9949 = vor.u32 %v9947, %v9948
        %v9950 = vshll.u32 920167782, %v9935
        %v9951 = vshrl.u32 1326507024, %v9936
        %v9952 = vor.u32 %v9950, %v9951
        %vm9953 = vcmp.lt.s32.totalorder %v9934, 1
        %vm9954 = vcmp.lt.s32.totalorder %v9934, 2
        %vm9955 = vcmp.lt.s32.totalorder %v9934, 3
        %vm9956 = vcmp.lt.s32.totalorder %v9934, 4
        %v9957 = vsel %vm9953, %v9937, %v9940
        %v9958 = vsel %vm9956, %v9946, 2102212464
        %v9959 = vsel %vm9955, %v9943, %v9958
        %v9960 = vsel %vm9954, %v9957, %v9959
        %v9961 = vsel %vm9953, %v9940, %v9943
        %v9962 = vsel %vm9956, %v9949, 920167782
        %v9963 = vsel %vm9955, %v9946, %v9962
        %v9964 = vsel %vm9954, %v9961, %v9963
        %v9965 = vsel %vm9953, %v9943, %v9946
        %v9966 = vsel %vm9956, %v9952, 1326507024
        %v9967 = vsel %vm9955, %v9949, %v9966
        %v9968 = vsel %vm9954, %v9965, %v9967
        %v9969 = vshll.u32 %v9929, 8
        %v9970 = vand.u32 %v9969, 65535
        %v9971 = vshrl.u32 %v9969, 16
        %v9972 = vand.u32 %v9968, 65535
        %v9973 = vshrl.u32 %v9968, 16
        %v9974 = vmul.u32 %v9970, %v9972
        %v9975 = vmul.u32 %v9970, %v9973
        %v9976 = vmul.u32 %v9971, %v9972
        %v9977 = vmul.u32 %v9971, %v9973
        %v9978 = vshll.u32 %v9975, 16
        %v9979 = vshrl.u32 %v9975, 16
        %v9980 = vshll.u32 %v9976, 16
        %v9981 = vshrl.u32 %v9976, 16
        %vm9982 = vc.u32 %v9974, %v9978
        %v9983 = vsel %vm9982, 1, 0
        %v9984 = vadd.s32 %v9974, %v9978
        %v9985 = vadd.s32 %v9977, %v9983
        %vm9986 = vc.u32 %v9984, %v9980
        %v9987 = vsel %vm9986, 1, 0
        %v9988 = vadd.s32 %v9984, %v9980
        %v9989 = vadd.s32 %v9985, %v9987
        %v9990 = vadd.s32 %v9989, %v9979
        %v9991 = vadd.s32 %v9990, %v9981
        %v9992 = vand.u32 %v9969, 65535
        %v9993 = vshrl.u32 %v9969, 16
        %v9994 = vand.u32 %v9964, 65535
        %v9995 = vshrl.u32 %v9964, 16
        %v9996 = vmul.u32 %v9992, %v9994
        %v9997 = vmul.u32 %v9992, %v9995
        %v9998 = vmul.u32 %v9993, %v9994
        %v9999 = vmul.u32 %v9993, %v9995
        %v10000 = vshll.u32 %v9997, 16
        %v10001 = vshrl.u32 %v9997, 16
        %v10002 = vshll.u32 %v9998, 16
        %v10003 = vshrl.u32 %v9998, 16
        %vm10004 = vc.u32 %v9996, %v10000
        %v10005 = vsel %vm10004, 1, 0
        %v10006 = vadd.s32 %v9996, %v10000
        %v10007 = vadd.s32 %v9999, %v10005
        %vm10008 = vc.u32 %v10006, %v10002
        %v10009 = vsel %vm10008, 1, 0
        %v10010 = vadd.s32 %v10006, %v10002
        %v10011 = vadd.s32 %v10007, %v10009
        %v10012 = vadd.s32 %v10011, %v10001
        %v10013 = vadd.s32 %v10012, %v10003
        %v10014 = vmul.u32 %v9969, %v9960
        %v10015 = vadd.s32 %v9991, %v10010
        %vm10016 = vc.u32 %v9991, %v10010
        %v10017 = vadd.s32 %v10013, 1
        %v10018 = vsel %vm10016, %v10017, %v10013
        %v10019 = vadd.s32 %v10014, %v10018
        %v10020 = vadd.s32 %v10019, 536870912
        %v10021 = vshrl.u32 %v10020, 30
        %v10022 = vshll.u32 %v10021, 30
        %v10023 = vsub.s32 %v10019, %v10022
        %vm10024 = vcmp.lt.s32.totalorder %v10023, 0
        %v10025 = vsub.s32 0, %v10023
        %v10026 = vsel %vm10024, %v10025, %v10023
        %v10027 = vclz %v10026
        %v10028 = vsub.s32 %v10027, 2
        %vm10029 = vcmp.gt.s32.totalorder 0, %v10028
        %v10030 = vsel %vm10029, 0, %v10028
        %v10031 = vsub.s32 32, %v10030
        %v10032 = vshll.u32 %v10023, %v10030
        %v10033 = vshrl.u32 %v10015, %v10031
        %v10034 = vor.u32 %v10032, %v10033
        %v10035 = vsub.s32 4294967266, %v10030
        %v10036 = vadd.s32 %v10035, 127
        %v10037 = vshll.u32 %v10036, 23
        %v10038 = vor.u32 4788187, %v10037
        %v10039 = vand.u32 2147483647, %v10038
        %v10041 = vcvt.s32.f32 %v10034
        %v10042 = vmul.f32 %v10041, %v10039
        %v10043 = vxor.u32 %v10042, 2147483648
        %v10044 = vsel %vm9923, %v10043, %v10042
        %v10045 = vsub.s32 4, %v10021
        %v10046 = vsel %vm9923, %v10045, %v10021
        %v10047 = vsel %vm9922, %v5885, %v10044
        %v10048 = vsel %vm9922, 0, %v10046
        %v10049 = vmul.f32 %v10047, %v10047
        %v10050 = vmul.f32 %v10049, -0.001358992
        %v10051 = vadd.f32 %v10050, 0.041655596
        %v10052 = vmul.f32 %v10049, %v10051
        %v10053 = vadd.f32 %v10052, -0.4999988
        %v10054 = vmul.f32 %v10049, %v10053
        %v10055 = vadd.f32 1.0, %v10054
        %v10056 = vmul.f32 %v10047, %v10047
        %v10057 = vmul.f32 %v10056, -0.00019511016
        %v10058 = vadd.f32 %v10057, 0.008332121
        %v10059 = vmul.f32 %v10056, %v10058
        %v10060 = vadd.f32 %v10059, -0.16666654
        %v10061 = vmul.f32 %v10056, %v10060
        %v10062 = vadd.f32 %v10061, 1.0
        %v10063 = vmul.f32 %v10062, %v10047
        %vm10064 = vweird.f32 %v5885
        %v10065 = vadd.s32 %v10048, 3
        %v10066 = vand.u32 %v10065, 3
        %vm10067 = vcmp.lt.s32.totalorder %v10066, 2
        %vm10068 = vcmp.eq.s32.totalorder %v10066, 0
        %v10069 = vxor.u32 %v10063, 2147483648
        %v10070 = vsel %vm10068, %v10055, %v10069
        %vm10071 = vcmp.eq.s32.totalorder %v10066, 2
        %v10072 = vxor.u32 %v10055, 2147483648
        %v10073 = vsel %vm10071, %v10072, %v10063
        %v10074 = vsel %vm10067, %v10070, %v10073
        %v10075 = vsel %vm10064, nan, %v10074
        %v10076 = vand.u32 2147483647, %v5886
        %vm10077 = vcmp.le.f32.partialorder %v10076, 0.7853982
        %vm10078 = vcmp.lt.s32.totalorder %v5886, 0
        %v10079 = vand.u32 %v5886, 2139095040
        %v10080 = vshrl.u32 %v10079, 23
        %v10081 = vsub.s32 %v10080, 127
        %v10082 = vand.u32 2147483647, %v5886
        %v10083 = vand.u32 %v10082, 8388607
        %v10084 = vor.u32 %v10083, 8388608
        %v10085 = vsub.s32 0, %v10084
        %v10086 = vadd.s32 %v10081, 1
        %vm10087 = vcmp.gt.s32.totalorder %v10086, 0
        %v10088 = vsel %vm10087, %v10086, 0
        %v10089 = vshrl.u32 %v10088, 5
        %v10090 = vand.u32 %v10088, 31
        %v10091 = vsub.s32 32, %v10090
        %v10092 = vshrl.u32 683565275, %v10091
        %v10093 = vshll.u32 683565275, %v10090
        %v10094 = vshrl.u32 2475754826, %v10091
        %v10095 = vor.u32 %v10093, %v10094
        %v10096 = vshll.u32 2475754826, %v10090
        %v10097 = vshrl.u32 2131351028, %v10091
        %v10098 = vor.u32 %v10096, %v10097
        %v10099 = vshll.u32 2131351028, %v10090
        %v10100 = vshrl.u32 2102212464, %v10091
        %v10101 = vor.u32 %v10099, %v10100
        %v10102 = vshll.u32 2102212464, %v10090
        %v10103 = vshrl.u32 920167782, %v10091
        %v10104 = vor.u32 %v10102, %v10103
        %v10105 = vshll.u32 920167782, %v10090
        %v10106 = vshrl.u32 1326507024, %v10091
        %v10107 = vor.u32 %v10105, %v10106
        %vm10108 = vcmp.lt.s32.totalorder %v10089, 1
        %vm10109 = vcmp.lt.s32.totalorder %v10089, 2
        %vm10110 = vcmp.lt.s32.totalorder %v10089, 3
        %vm10111 = vcmp.lt.s32.totalorder %v10089, 4
        %v10112 = vsel %vm10108, %v10092, %v10095
        %v10113 = vsel %vm10111, %v10101, 2102212464
        %v10114 = vsel %vm10110, %v10098, %v10113
        %v10115 = vsel %vm10109, %v10112, %v10114
        %v10116 = vsel %vm10108, %v10095, %v10098
        %v10117 = vsel %vm10111, %v10104, 920167782
        %v10118 = vsel %vm10110, %v10101, %v10117
        %v10119 = vsel %vm10109, %v10116, %v10118
        %v10120 = vsel %vm10108, %v10098, %v10101
        %v10121 = vsel %vm10111, %v10107, 1326507024
        %v10122 = vsel %vm10110, %v10104, %v10121
        %v10123 = vsel %vm10109, %v10120, %v10122
        %v10124 = vshll.u32 %v10084, 8
        %v10125 = vand.u32 %v10124, 65535
        %v10126 = vshrl.u32 %v10124, 16
        %v10127 = vand.u32 %v10123, 65535
        %v10128 = vshrl.u32 %v10123, 16
        %v10129 = vmul.u32 %v10125, %v10127
        %v10130 = vmul.u32 %v10125, %v10128
        %v10131 = vmul.u32 %v10126, %v10127
        %v10132 = vmul.u32 %v10126, %v10128
        %v10133 = vshll.u32 %v10130, 16
        %v10134 = vshrl.u32 %v10130, 16
        %v10135 = vshll.u32 %v10131, 16
        %v10136 = vshrl.u32 %v10131, 16
        %vm10137 = vc.u32 %v10129, %v10133
        %v10138 = vsel %vm10137, 1, 0
        %v10139 = vadd.s32 %v10129, %v10133
        %v10140 = vadd.s32 %v10132, %v10138
        %vm10141 = vc.u32 %v10139, %v10135
        %v10142 = vsel %vm10141, 1, 0
        %v10143 = vadd.s32 %v10139, %v10135
        %v10144 = vadd.s32 %v10140, %v10142
        %v10145 = vadd.s32 %v10144, %v10134
        %v10146 = vadd.s32 %v10145, %v10136
        %v10147 = vand.u32 %v10124, 65535
        %v10148 = vshrl.u32 %v10124, 16
        %v10149 = vand.u32 %v10119, 65535
        %v10150 = vshrl.u32 %v10119, 16
        %v10151 = vmul.u32 %v10147, %v10149
        %v10152 = vmul.u32 %v10147, %v10150
        %v10153 = vmul.u32 %v10148, %v10149
        %v10154 = vmul.u32 %v10148, %v10150
        %v10155 = vshll.u32 %v10152, 16
        %v10156 = vshrl.u32 %v10152, 16
        %v10157 = vshll.u32 %v10153, 16
        %v10158 = vshrl.u32 %v10153, 16
        %vm10159 = vc.u32 %v10151, %v10155
        %v10160 = vsel %vm10159, 1, 0
        %v10161 = vadd.s32 %v10151, %v10155
        %v10162 = vadd.s32 %v10154, %v10160
        %vm10163 = vc.u32 %v10161, %v10157
        %v10164 = vsel %vm10163, 1, 0
        %v10165 = vadd.s32 %v10161, %v10157
        %v10166 = vadd.s32 %v10162, %v10164
        %v10167 = vadd.s32 %v10166, %v10156
        %v10168 = vadd.s32 %v10167, %v10158
        %v10169 = vmul.u32 %v10124, %v10115
        %v10170 = vadd.s32 %v10146, %v10165
        %vm10171 = vc.u32 %v10146, %v10165
        %v10172 = vadd.s32 %v10168, 1
        %v10173 = vsel %vm10171, %v10172, %v10168
        %v10174 = vadd.s32 %v10169, %v10173
        %v10175 = vadd.s32 %v10174, 536870912
        %v10176 = vshrl.u32 %v10175, 30
        %v10177 = vshll.u32 %v10176, 30
        %v10178 = vsub.s32 %v10174, %v10177
        %vm10179 = vcmp.lt.s32.totalorder %v10178, 0
        %v10180 = vsub.s32 0, %v10178
        %v10181 = vsel %vm10179, %v10180, %v10178
        %v10182 = vclz %v10181
        %v10183 = vsub.s32 %v10182, 2
        %vm10184 = vcmp.gt.s32.totalorder 0, %v10183
        %v10185 = vsel %vm10184, 0, %v10183
        %v10186 = vsub.s32 32, %v10185
        %v10187 = vshll.u32 %v10178, %v10185
        %v10188 = vshrl.u32 %v10170, %v10186
        %v10189 = vor.u32 %v10187, %v10188
        %v10190 = vsub.s32 4294967266, %v10185
        %v10191 = vadd.s32 %v10190, 127
        %v10192 = vshll.u32 %v10191, 23
        %v10193 = vor.u32 4788187, %v10192
        %v10194 = vand.u32 2147483647, %v10193
        %v10196 = vcvt.s32.f32 %v10189
        %v10197 = vmul.f32 %v10196, %v10194
        %v10198 = vxor.u32 %v10197, 2147483648
        %v10199 = vsel %vm10078, %v10198, %v10197
        %v10200 = vsub.s32 4, %v10176
        %v10201 = vsel %vm10078, %v10200, %v10176
        %v10202 = vsel %vm10077, %v5886, %v10199
        %v10203 = vsel %vm10077, 0, %v10201
        %v10204 = vmul.f32 %v10202, %v10202
        %v10205 = vmul.f32 %v10204, -0.001358992
        %v10206 = vadd.f32 %v10205, 0.041655596
        %v10207 = vmul.f32 %v10204, %v10206
        %v10208 = vadd.f32 %v10207, -0.4999988
        %v10209 = vmul.f32 %v10204, %v10208
        %v10210 = vadd.f32 1.0, %v10209
        %v10211 = vmul.f32 %v10202, %v10202
        %v10212 = vmul.f32 %v10211, -0.00019511016
        %v10213 = vadd.f32 %v10212, 0.008332121
        %v10214 = vmul.f32 %v10211, %v10213
        %v10215 = vadd.f32 %v10214, -0.16666654
        %v10216 = vmul.f32 %v10211, %v10215
        %v10217 = vadd.f32 %v10216, 1.0
        %v10218 = vmul.f32 %v10217, %v10202
        %vm10219 = vweird.f32 %v5886
        %v10220 = vadd.s32 %v10203, 3
        %v10221 = vand.u32 %v10220, 3
        %vm10222 = vcmp.lt.s32.totalorder %v10221, 2
        %vm10223 = vcmp.eq.s32.totalorder %v10221, 0
        %v10224 = vxor.u32 %v10218, 2147483648
        %v10225 = vsel %vm10223, %v10210, %v10224
        %vm10226 = vcmp.eq.s32.totalorder %v10221, 2
        %v10227 = vxor.u32 %v10210, 2147483648
        %v10228 = vsel %vm10226, %v10227, %v10218
        %v10229 = vsel %vm10222, %v10225, %v10228
        %v10230 = vsel %vm10219, nan, %v10229
        %v10231 = vand.u32 2147483647, %v5887
        %vm10232 = vcmp.le.f32.partialorder %v10231, 0.7853982
        %vm10233 = vcmp.lt.s32.totalorder %v5887, 0
        %v10234 = vand.u32 %v5887, 2139095040
        %v10235 = vshrl.u32 %v10234, 23
        %v10236 = vsub.s32 %v10235, 127
        %v10237 = vand.u32 2147483647, %v5887
        %v10238 = vand.u32 %v10237, 8388607
        %v10239 = vor.u32 %v10238, 8388608
        %v10240 = vsub.s32 0, %v10239
        %v10241 = vadd.s32 %v10236, 1
        %vm10242 = vcmp.gt.s32.totalorder %v10241, 0
        %v10243 = vsel %vm10242, %v10241, 0
        %v10244 = vshrl.u32 %v10243, 5
        %v10245 = vand.u32 %v10243, 31
        %v10246 = vsub.s32 32, %v10245
        %v10247 = vshrl.u32 683565275, %v10246
        %v10248 = vshll.u32 683565275, %v10245
        %v10249 = vshrl.u32 2475754826, %v10246
        %v10250 = vor.u32 %v10248, %v10249
        %v10251 = vshll.u32 2475754826, %v10245
        %v10252 = vshrl.u32 2131351028, %v10246
        %v10253 = vor.u32 %v10251, %v10252
        %v10254 = vshll.u32 2131351028, %v10245
        %v10255 = vshrl.u32 2102212464, %v10246
        %v10256 = vor.u32 %v10254, %v10255
        %v10257 = vshll.u32 2102212464, %v10245
        %v10258 = vshrl.u32 920167782, %v10246
        %v10259 = vor.u32 %v10257, %v10258
        %v10260 = vshll.u32 920167782, %v10245
        %v10261 = vshrl.u32 1326507024, %v10246
        %v10262 = vor.u32 %v10260, %v10261
        %vm10263 = vcmp.lt.s32.totalorder %v10244, 1
        %vm10264 = vcmp.lt.s32.totalorder %v10244, 2
        %vm10265 = vcmp.lt.s32.totalorder %v10244, 3
        %vm10266 = vcmp.lt.s32.totalorder %v10244, 4
        %v10267 = vsel %vm10263, %v10247, %v10250
        %v10268 = vsel %vm10266, %v10256, 2102212464
        %v10269 = vsel %vm10265, %v10253, %v10268
        %v10270 = vsel %vm10264, %v10267, %v10269
        %v10271 = vsel %vm10263, %v10250, %v10253
        %v10272 = vsel %vm10266, %v10259, 920167782
        %v10273 = vsel %vm10265, %v10256, %v10272
        %v10274 = vsel %vm10264, %v10271, %v10273
        %v10275 = vsel %vm10263, %v10253, %v10256
        %v10276 = vsel %vm10266, %v10262, 1326507024
        %v10277 = vsel %vm10265, %v10259, %v10276
        %v10278 = vsel %vm10264, %v10275, %v10277
        %v10279 = vshll.u32 %v10239, 8
        %v10280 = vand.u32 %v10279, 65535
        %v10281 = vshrl.u32 %v10279, 16
        %v10282 = vand.u32 %v10278, 65535
        %v10283 = vshrl.u32 %v10278, 16
        %v10284 = vmul.u32 %v10280, %v10282
        %v10285 = vmul.u32 %v10280, %v10283
        %v10286 = vmul.u32 %v10281, %v10282
        %v10287 = vmul.u32 %v10281, %v10283
        %v10288 = vshll.u32 %v10285, 16
        %v10289 = vshrl.u32 %v10285, 16
        %v10290 = vshll.u32 %v10286, 16
        %v10291 = vshrl.u32 %v10286, 16
        %vm10292 = vc.u32 %v10284, %v10288
        %v10293 = vsel %vm10292, 1, 0
        %v10294 = vadd.s32 %v10284, %v10288
        %v10295 = vadd.s32 %v10287, %v10293
        %vm10296 = vc.u32 %v10294, %v10290
        %v10297 = vsel %vm10296, 1, 0
        %v10298 = vadd.s32 %v10294, %v10290
        %v10299 = vadd.s32 %v10295, %v10297
        %v10300 = vadd.s32 %v10299, %v10289
        %v10301 = vadd.s32 %v10300, %v10291
        %v10302 = vand.u32 %v10279, 65535
        %v10303 = vshrl.u32 %v10279, 16
        %v10304 = vand.u32 %v10274, 65535
        %v10305 = vshrl.u32 %v10274, 16
        %v10306 = vmul.u32 %v10302, %v10304
        %v10307 = vmul.u32 %v10302, %v10305
        %v10308 = vmul.u32 %v10303, %v10304
        %v10309 = vmul.u32 %v10303, %v10305
        %v10310 = vshll.u32 %v10307, 16
        %v10311 = vshrl.u32 %v10307, 16
        %v10312 = vshll.u32 %v10308, 16
        %v10313 = vshrl.u32 %v10308, 16
        %vm10314 = vc.u32 %v10306, %v10310
        %v10315 = vsel %vm10314, 1, 0
        %v10316 = vadd.s32 %v10306, %v10310
        %v10317 = vadd.s32 %v10309, %v10315
        %vm10318 = vc.u32 %v10316, %v10312
        %v10319 = vsel %vm10318, 1, 0
        %v10320 = vadd.s32 %v10316, %v10312
        %v10321 = vadd.s32 %v10317, %v10319
        %v10322 = vadd.s32 %v10321, %v10311
        %v10323 = vadd.s32 %v10322, %v10313
        %v10324 = vmul.u32 %v10279, %v10270
        %v10325 = vadd.s32 %v10301, %v10320
        %vm10326 = vc.u32 %v10301, %v10320
        %v10327 = vadd.s32 %v10323, 1
        %v10328 = vsel %vm10326, %v10327, %v10323
        %v10329 = vadd.s32 %v10324, %v10328
        %v10330 = vadd.s32 %v10329, 536870912
        %v10331 = vshrl.u32 %v10330, 30
        %v10332 = vshll.u32 %v10331, 30
        %v10333 = vsub.s32 %v10329, %v10332
        %vm10334 = vcmp.lt.s32.totalorder %v10333, 0
        %v10335 = vsub.s32 0, %v10333
        %v10336 = vsel %vm10334, %v10335, %v10333
        %v10337 = vclz %v10336
        %v10338 = vsub.s32 %v10337, 2
        %vm10339 = vcmp.gt.s32.totalorder 0, %v10338
        %v10340 = vsel %vm10339, 0, %v10338
        %v10341 = vsub.s32 32, %v10340
        %v10342 = vshll.u32 %v10333, %v10340
        %v10343 = vshrl.u32 %v10325, %v10341
        %v10344 = vor.u32 %v10342, %v10343
        %v10345 = vsub.s32 4294967266, %v10340
        %v10346 = vadd.s32 %v10345, 127
        %v10347 = vshll.u32 %v10346, 23
        %v10348 = vor.u32 4788187, %v10347
        %v10349 = vand.u32 2147483647, %v10348
        %v10351 = vcvt.s32.f32 %v10344
        %v10352 = vmul.f32 %v10351, %v10349
        %v10353 = vxor.u32 %v10352, 2147483648
        %v10354 = vsel %vm10233, %v10353, %v10352
        %v10355 = vsub.s32 4, %v10331
        %v10356 = vsel %vm10233, %v10355, %v10331
        %v10357 = vsel %vm10232, %v5887, %v10354
        %v10358 = vsel %vm10232, 0, %v10356
        %v10359 = vmul.f32 %v10357, %v10357
        %v10360 = vmul.f32 %v10359, -0.001358992
        %v10361 = vadd.f32 %v10360, 0.041655596
        %v10362 = vmul.f32 %v10359, %v10361
        %v10363 = vadd.f32 %v10362, -0.4999988
        %v10364 = vmul.f32 %v10359, %v10363
        %v10365 = vadd.f32 1.0, %v10364
        %v10366 = vmul.f32 %v10357, %v10357
        %v10367 = vmul.f32 %v10366, -0.00019511016
        %v10368 = vadd.f32 %v10367, 0.008332121
        %v10369 = vmul.f32 %v10366, %v10368
        %v10370 = vadd.f32 %v10369, -0.16666654
        %v10371 = vmul.f32 %v10366, %v10370
        %v10372 = vadd.f32 %v10371, 1.0
        %v10373 = vmul.f32 %v10372, %v10357
        %vm10374 = vweird.f32 %v5887
        %v10375 = vadd.s32 %v10358, 3
        %v10376 = vand.u32 %v10375, 3
        %vm10377 = vcmp.lt.s32.totalorder %v10376, 2
        %vm10378 = vcmp.eq.s32.totalorder %v10376, 0
        %v10379 = vxor.u32 %v10373, 2147483648
        %v10380 = vsel %vm10378, %v10365, %v10379
        %vm10381 = vcmp.eq.s32.totalorder %v10376, 2
        %v10382 = vxor.u32 %v10365, 2147483648
        %v10383 = vsel %vm10381, %v10382, %v10373
        %v10384 = vsel %vm10377, %v10380, %v10383
        %v10385 = vsel %vm10374, nan, %v10384
        %v10386 = vand.u32 2147483647, %v5888
        %vm10387 = vcmp.le.f32.partialorder %v10386, 0.7853982
        %vm10388 = vcmp.lt.s32.totalorder %v5888, 0
        %v10389 = vand.u32 %v5888, 2139095040
        %v10390 = vshrl.u32 %v10389, 23
        %v10391 = vsub.s32 %v10390, 127
        %v10392 = vand.u32 2147483647, %v5888
        %v10393 = vand.u32 %v10392, 8388607
        %v10394 = vor.u32 %v10393, 8388608
        %v10395 = vsub.s32 0, %v10394
        %v10396 = vadd.s32 %v10391, 1
        %vm10397 = vcmp.gt.s32.totalorder %v10396, 0
        %v10398 = vsel %vm10397, %v10396, 0
        %v10399 = vshrl.u32 %v10398, 5
        %v10400 = vand.u32 %v10398, 31
        %v10401 = vsub.s32 32, %v10400
        %v10402 = vshrl.u32 683565275, %v10401
        %v10403 = vshll.u32 683565275, %v10400
        %v10404 = vshrl.u32 2475754826, %v10401
        %v10405 = vor.u32 %v10403, %v10404
        %v10406 = vshll.u32 2475754826, %v10400
        %v10407 = vshrl.u32 2131351028, %v10401
        %v10408 = vor.u32 %v10406, %v10407
        %v10409 = vshll.u32 2131351028, %v10400
        %v10410 = vshrl.u32 2102212464, %v10401
        %v10411 = vor.u32 %v10409, %v10410
        %v10412 = vshll.u32 2102212464, %v10400
        %v10413 = vshrl.u32 920167782, %v10401
        %v10414 = vor.u32 %v10412, %v10413
        %v10415 = vshll.u32 920167782, %v10400
        %v10416 = vshrl.u32 1326507024, %v10401
        %v10417 = vor.u32 %v10415, %v10416
        %vm10418 = vcmp.lt.s32.totalorder %v10399, 1
        %vm10419 = vcmp.lt.s32.totalorder %v10399, 2
        %vm10420 = vcmp.lt.s32.totalorder %v10399, 3
        %vm10421 = vcmp.lt.s32.totalorder %v10399, 4
        %v10422 = vsel %vm10418, %v10402, %v10405
        %v10423 = vsel %vm10421, %v10411, 2102212464
        %v10424 = vsel %vm10420, %v10408, %v10423
        %v10425 = vsel %vm10419, %v10422, %v10424
        %v10426 = vsel %vm10418, %v10405, %v10408
        %v10427 = vsel %vm10421, %v10414, 920167782
        %v10428 = vsel %vm10420, %v10411, %v10427
        %v10429 = vsel %vm10419, %v10426, %v10428
        %v10430 = vsel %vm10418, %v10408, %v10411
        %v10431 = vsel %vm10421, %v10417, 1326507024
        %v10432 = vsel %vm10420, %v10414, %v10431
        %v10433 = vsel %vm10419, %v10430, %v10432
        %v10434 = vshll.u32 %v10394, 8
        %v10435 = vand.u32 %v10434, 65535
        %v10436 = vshrl.u32 %v10434, 16
        %v10437 = vand.u32 %v10433, 65535
        %v10438 = vshrl.u32 %v10433, 16
        %v10439 = vmul.u32 %v10435, %v10437
        %v10440 = vmul.u32 %v10435, %v10438
        %v10441 = vmul.u32 %v10436, %v10437
        %v10442 = vmul.u32 %v10436, %v10438
        %v10443 = vshll.u32 %v10440, 16
        %v10444 = vshrl.u32 %v10440, 16
        %v10445 = vshll.u32 %v10441, 16
        %v10446 = vshrl.u32 %v10441, 16
        %vm10447 = vc.u32 %v10439, %v10443
        %v10448 = vsel %vm10447, 1, 0
        %v10449 = vadd.s32 %v10439, %v10443
        %v10450 = vadd.s32 %v10442, %v10448
        %vm10451 = vc.u32 %v10449, %v10445
        %v10452 = vsel %vm10451, 1, 0
        %v10453 = vadd.s32 %v10449, %v10445
        %v10454 = vadd.s32 %v10450, %v10452
        %v10455 = vadd.s32 %v10454, %v10444
        %v10456 = vadd.s32 %v10455, %v10446
        %v10457 = vand.u32 %v10434, 65535
        %v10458 = vshrl.u32 %v10434, 16
        %v10459 = vand.u32 %v10429, 65535
        %v10460 = vshrl.u32 %v10429, 16
        %v10461 = vmul.u32 %v10457, %v10459
        %v10462 = vmul.u32 %v10457, %v10460
        %v10463 = vmul.u32 %v10458, %v10459
        %v10464 = vmul.u32 %v10458, %v10460
        %v10465 = vshll.u32 %v10462, 16
        %v10466 = vshrl.u32 %v10462, 16
        %v10467 = vshll.u32 %v10463, 16
        %v10468 = vshrl.u32 %v10463, 16
        %vm10469 = vc.u32 %v10461, %v10465
        %v10470 = vsel %vm10469, 1, 0
        %v10471 = vadd.s32 %v10461, %v10465
        %v10472 = vadd.s32 %v10464, %v10470
        %vm10473 = vc.u32 %v10471, %v10467
        %v10474 = vsel %vm10473, 1, 0
        %v10475 = vadd.s32 %v10471, %v10467
        %v10476 = vadd.s32 %v10472, %v10474
        %v10477 = vadd.s32 %v10476, %v10466
        %v10478 = vadd.s32 %v10477, %v10468
        %v10479 = vmul.u32 %v10434, %v10425
        %v10480 = vadd.s32 %v10456, %v10475
        %vm10481 = vc.u32 %v10456, %v10475
        %v10482 = vadd.s32 %v10478, 1
        %v10483 = vsel %vm10481, %v10482, %v10478
        %v10484 = vadd.s32 %v10479, %v10483
        %v10485 = vadd.s32 %v10484, 536870912
        %v10486 = vshrl.u32 %v10485, 30
        %v10487 = vshll.u32 %v10486, 30
        %v10488 = vsub.s32 %v10484, %v10487
        %vm10489 = vcmp.lt.s32.totalorder %v10488, 0
        %v10490 = vsub.s32 0, %v10488
        %v10491 = vsel %vm10489, %v10490, %v10488
        %v10492 = vclz %v10491
        %v10493 = vsub.s32 %v10492, 2
        %vm10494 = vcmp.gt.s32.totalorder 0, %v10493
        %v10495 = vsel %vm10494, 0, %v10493
        %v10496 = vsub.s32 32, %v10495
        %v10497 = vshll.u32 %v10488, %v10495
        %v10498 = vshrl.u32 %v10480, %v10496
        %v10499 = vor.u32 %v10497, %v10498
        %v10500 = vsub.s32 4294967266, %v10495
        %v10501 = vadd.s32 %v10500, 127
        %v10502 = vshll.u32 %v10501, 23
        %v10503 = vor.u32 4788187, %v10502
        %v10504 = vand.u32 2147483647, %v10503
        %v10506 = vcvt.s32.f32 %v10499
        %v10507 = vmul.f32 %v10506, %v10504
        %v10508 = vxor.u32 %v10507, 2147483648
        %v10509 = vsel %vm10388, %v10508, %v10507
        %v10510 = vsub.s32 4, %v10486
        %v10511 = vsel %vm10388, %v10510, %v10486
        %v10512 = vsel %vm10387, %v5888, %v10509
        %v10513 = vsel %vm10387, 0, %v10511
        %v10514 = vmul.f32 %v10512, %v10512
        %v10515 = vmul.f32 %v10514, -0.001358992
        %v10516 = vadd.f32 %v10515, 0.041655596
        %v10517 = vmul.f32 %v10514, %v10516
        %v10518 = vadd.f32 %v10517, -0.4999988
        %v10519 = vmul.f32 %v10514, %v10518
        %v10520 = vadd.f32 1.0, %v10519
        %v10521 = vmul.f32 %v10512, %v10512
        %v10522 = vmul.f32 %v10521, -0.00019511016
        %v10523 = vadd.f32 %v10522, 0.008332121
        %v10524 = vmul.f32 %v10521, %v10523
        %v10525 = vadd.f32 %v10524, -0.16666654
        %v10526 = vmul.f32 %v10521, %v10525
        %v10527 = vadd.f32 %v10526, 1.0
        %v10528 = vmul.f32 %v10527, %v10512
        %vm10529 = vweird.f32 %v5888
        %v10530 = vadd.s32 %v10513, 3
        %v10531 = vand.u32 %v10530, 3
        %vm10532 = vcmp.lt.s32.totalorder %v10531, 2
        %vm10533 = vcmp.eq.s32.totalorder %v10531, 0
        %v10534 = vxor.u32 %v10528, 2147483648
        %v10535 = vsel %vm10533, %v10520, %v10534
        %vm10536 = vcmp.eq.s32.totalorder %v10531, 2
        %v10537 = vxor.u32 %v10520, 2147483648
        %v10538 = vsel %vm10536, %v10537, %v10528
        %v10539 = vsel %vm10532, %v10535, %v10538
        %v10540 = vsel %vm10529, nan, %v10539
        %v10541 = vand.u32 2147483647, %v5889
        %vm10542 = vcmp.le.f32.partialorder %v10541, 0.7853982
        %vm10543 = vcmp.lt.s32.totalorder %v5889, 0
        %v10544 = vand.u32 %v5889, 2139095040
        %v10545 = vshrl.u32 %v10544, 23
        %v10546 = vsub.s32 %v10545, 127
        %v10547 = vand.u32 2147483647, %v5889
        %v10548 = vand.u32 %v10547, 8388607
        %v10549 = vor.u32 %v10548, 8388608
        %v10550 = vsub.s32 0, %v10549
        %v10551 = vadd.s32 %v10546, 1
        %vm10552 = vcmp.gt.s32.totalorder %v10551, 0
        %v10553 = vsel %vm10552, %v10551, 0
        %v10554 = vshrl.u32 %v10553, 5
        %v10555 = vand.u32 %v10553, 31
        %v10556 = vsub.s32 32, %v10555
        %v10557 = vshrl.u32 683565275, %v10556
        %v10558 = vshll.u32 683565275, %v10555
        %v10559 = vshrl.u32 2475754826, %v10556
        %v10560 = vor.u32 %v10558, %v10559
        %v10561 = vshll.u32 2475754826, %v10555
        %v10562 = vshrl.u32 2131351028, %v10556
        %v10563 = vor.u32 %v10561, %v10562
        %v10564 = vshll.u32 2131351028, %v10555
        %v10565 = vshrl.u32 2102212464, %v10556
        %v10566 = vor.u32 %v10564, %v10565
        %v10567 = vshll.u32 2102212464, %v10555
        %v10568 = vshrl.u32 920167782, %v10556
        %v10569 = vor.u32 %v10567, %v10568
        %v10570 = vshll.u32 920167782, %v10555
        %v10571 = vshrl.u32 1326507024, %v10556
        %v10572 = vor.u32 %v10570, %v10571
        %vm10573 = vcmp.lt.s32.totalorder %v10554, 1
        %vm10574 = vcmp.lt.s32.totalorder %v10554, 2
        %vm10575 = vcmp.lt.s32.totalorder %v10554, 3
        %vm10576 = vcmp.lt.s32.totalorder %v10554, 4
        %v10577 = vsel %vm10573, %v10557, %v10560
        %v10578 = vsel %vm10576, %v10566, 2102212464
        %v10579 = vsel %vm10575, %v10563, %v10578
        %v10580 = vsel %vm10574, %v10577, %v10579
        %v10581 = vsel %vm10573, %v10560, %v10563
        %v10582 = vsel %vm10576, %v10569, 920167782
        %v10583 = vsel %vm10575, %v10566, %v10582
        %v10584 = vsel %vm10574, %v10581, %v10583
        %v10585 = vsel %vm10573, %v10563, %v10566
        %v10586 = vsel %vm10576, %v10572, 1326507024
        %v10587 = vsel %vm10575, %v10569, %v10586
        %v10588 = vsel %vm10574, %v10585, %v10587
        %v10589 = vshll.u32 %v10549, 8
        %v10590 = vand.u32 %v10589, 65535
        %v10591 = vshrl.u32 %v10589, 16
        %v10592 = vand.u32 %v10588, 65535
        %v10593 = vshrl.u32 %v10588, 16
        %v10594 = vmul.u32 %v10590, %v10592
        %v10595 = vmul.u32 %v10590, %v10593
        %v10596 = vmul.u32 %v10591, %v10592
        %v10597 = vmul.u32 %v10591, %v10593
        %v10598 = vshll.u32 %v10595, 16
        %v10599 = vshrl.u32 %v10595, 16
        %v10600 = vshll.u32 %v10596, 16
        %v10601 = vshrl.u32 %v10596, 16
        %vm10602 = vc.u32 %v10594, %v10598
        %v10603 = vsel %vm10602, 1, 0
        %v10604 = vadd.s32 %v10594, %v10598
        %v10605 = vadd.s32 %v10597, %v10603
        %vm10606 = vc.u32 %v10604, %v10600
        %v10607 = vsel %vm10606, 1, 0
        %v10608 = vadd.s32 %v10604, %v10600
        %v10609 = vadd.s32 %v10605, %v10607
        %v10610 = vadd.s32 %v10609, %v10599
        %v10611 = vadd.s32 %v10610, %v10601
        %v10612 = vand.u32 %v10589, 65535
        %v10613 = vshrl.u32 %v10589, 16
        %v10614 = vand.u32 %v10584, 65535
        %v10615 = vshrl.u32 %v10584, 16
        %v10616 = vmul.u32 %v10612, %v10614
        %v10617 = vmul.u32 %v10612, %v10615
        %v10618 = vmul.u32 %v10613, %v10614
        %v10619 = vmul.u32 %v10613, %v10615
        %v10620 = vshll.u32 %v10617, 16
        %v10621 = vshrl.u32 %v10617, 16
        %v10622 = vshll.u32 %v10618, 16
        %v10623 = vshrl.u32 %v10618, 16
        %vm10624 = vc.u32 %v10616, %v10620
        %v10625 = vsel %vm10624, 1, 0
        %v10626 = vadd.s32 %v10616, %v10620
        %v10627 = vadd.s32 %v10619, %v10625
        %vm10628 = vc.u32 %v10626, %v10622
        %v10629 = vsel %vm10628, 1, 0
        %v10630 = vadd.s32 %v10626, %v10622
        %v10631 = vadd.s32 %v10627, %v10629
        %v10632 = vadd.s32 %v10631, %v10621
        %v10633 = vadd.s32 %v10632, %v10623
        %v10634 = vmul.u32 %v10589, %v10580
        %v10635 = vadd.s32 %v10611, %v10630
        %vm10636 = vc.u32 %v10611, %v10630
        %v10637 = vadd.s32 %v10633, 1
        %v10638 = vsel %vm10636, %v10637, %v10633
        %v10639 = vadd.s32 %v10634, %v10638
        %v10640 = vadd.s32 %v10639, 536870912
        %v10641 = vshrl.u32 %v10640, 30
        %v10642 = vshll.u32 %v10641, 30
        %v10643 = vsub.s32 %v10639, %v10642
        %vm10644 = vcmp.lt.s32.totalorder %v10643, 0
        %v10645 = vsub.s32 0, %v10643
        %v10646 = vsel %vm10644, %v10645, %v10643
        %v10647 = vclz %v10646
        %v10648 = vsub.s32 %v10647, 2
        %vm10649 = vcmp.gt.s32.totalorder 0, %v10648
        %v10650 = vsel %vm10649, 0, %v10648
        %v10651 = vsub.s32 32, %v10650
        %v10652 = vshll.u32 %v10643, %v10650
        %v10653 = vshrl.u32 %v10635, %v10651
        %v10654 = vor.u32 %v10652, %v10653
        %v10655 = vsub.s32 4294967266, %v10650
        %v10656 = vadd.s32 %v10655, 127
        %v10657 = vshll.u32 %v10656, 23
        %v10658 = vor.u32 4788187, %v10657
        %v10659 = vand.u32 2147483647, %v10658
        %v10661 = vcvt.s32.f32 %v10654
        %v10662 = vmul.f32 %v10661, %v10659
        %v10663 = vxor.u32 %v10662, 2147483648
        %v10664 = vsel %vm10543, %v10663, %v10662
        %v10665 = vsub.s32 4, %v10641
        %v10666 = vsel %vm10543, %v10665, %v10641
        %v10667 = vsel %vm10542, %v5889, %v10664
        %v10668 = vsel %vm10542, 0, %v10666
        %v10669 = vmul.f32 %v10667, %v10667
        %v10670 = vmul.f32 %v10669, -0.001358992
        %v10671 = vadd.f32 %v10670, 0.041655596
        %v10672 = vmul.f32 %v10669, %v10671
        %v10673 = vadd.f32 %v10672, -0.4999988
        %v10674 = vmul.f32 %v10669, %v10673
        %v10675 = vadd.f32 1.0, %v10674
        %v10676 = vmul.f32 %v10667, %v10667
        %v10677 = vmul.f32 %v10676, -0.00019511016
        %v10678 = vadd.f32 %v10677, 0.008332121
        %v10679 = vmul.f32 %v10676, %v10678
        %v10680 = vadd.f32 %v10679, -0.16666654
        %v10681 = vmul.f32 %v10676, %v10680
        %v10682 = vadd.f32 %v10681, 1.0
        %v10683 = vmul.f32 %v10682, %v10667
        %vm10684 = vweird.f32 %v5889
        %v10685 = vadd.s32 %v10668, 3
        %v10686 = vand.u32 %v10685, 3
        %vm10687 = vcmp.lt.s32.totalorder %v10686, 2
        %vm10688 = vcmp.eq.s32.totalorder %v10686, 0
        %v10689 = vxor.u32 %v10683, 2147483648
        %v10690 = vsel %vm10688, %v10675, %v10689
        %vm10691 = vcmp.eq.s32.totalorder %v10686, 2
        %v10692 = vxor.u32 %v10675, 2147483648
        %v10693 = vsel %vm10691, %v10692, %v10683
        %v10694 = vsel %vm10687, %v10690, %v10693
        %v10695 = vsel %vm10684, nan, %v10694
        %v10696 = vand.u32 2147483647, %v5890
        %vm10697 = vcmp.le.f32.partialorder %v10696, 0.7853982
        %vm10698 = vcmp.lt.s32.totalorder %v5890, 0
        %v10699 = vand.u32 %v5890, 2139095040
        %v10700 = vshrl.u32 %v10699, 23
        %v10701 = vsub.s32 %v10700, 127
        %v10702 = vand.u32 2147483647, %v5890
        %v10703 = vand.u32 %v10702, 8388607
        %v10704 = vor.u32 %v10703, 8388608
        %v10705 = vsub.s32 0, %v10704
        %v10706 = vadd.s32 %v10701, 1
        %vm10707 = vcmp.gt.s32.totalorder %v10706, 0
        %v10708 = vsel %vm10707, %v10706, 0
        %v10709 = vshrl.u32 %v10708, 5
        %v10710 = vand.u32 %v10708, 31
        %v10711 = vsub.s32 32, %v10710
        %v10712 = vshrl.u32 683565275, %v10711
        %v10713 = vshll.u32 683565275, %v10710
        %v10714 = vshrl.u32 2475754826, %v10711
        %v10715 = vor.u32 %v10713, %v10714
        %v10716 = vshll.u32 2475754826, %v10710
        %v10717 = vshrl.u32 2131351028, %v10711
        %v10718 = vor.u32 %v10716, %v10717
        %v10719 = vshll.u32 2131351028, %v10710
        %v10720 = vshrl.u32 2102212464, %v10711
        %v10721 = vor.u32 %v10719, %v10720
        %v10722 = vshll.u32 2102212464, %v10710
        %v10723 = vshrl.u32 920167782, %v10711
        %v10724 = vor.u32 %v10722, %v10723
        %v10725 = vshll.u32 920167782, %v10710
        %v10726 = vshrl.u32 1326507024, %v10711
        %v10727 = vor.u32 %v10725, %v10726
        %vm10728 = vcmp.lt.s32.totalorder %v10709, 1
        %vm10729 = vcmp.lt.s32.totalorder %v10709, 2
        %vm10730 = vcmp.lt.s32.totalorder %v10709, 3
        %vm10731 = vcmp.lt.s32.totalorder %v10709, 4
        %v10732 = vsel %vm10728, %v10712, %v10715
        %v10733 = vsel %vm10731, %v10721, 2102212464
        %v10734 = vsel %vm10730, %v10718, %v10733
        %v10735 = vsel %vm10729, %v10732, %v10734
        %v10736 = vsel %vm10728, %v10715, %v10718
        %v10737 = vsel %vm10731, %v10724, 920167782
        %v10738 = vsel %vm10730, %v10721, %v10737
        %v10739 = vsel %vm10729, %v10736, %v10738
        %v10740 = vsel %vm10728, %v10718, %v10721
        %v10741 = vsel %vm10731, %v10727, 1326507024
        %v10742 = vsel %vm10730, %v10724, %v10741
        %v10743 = vsel %vm10729, %v10740, %v10742
        %v10744 = vshll.u32 %v10704, 8
        %v10745 = vand.u32 %v10744, 65535
        %v10746 = vshrl.u32 %v10744, 16
        %v10747 = vand.u32 %v10743, 65535
        %v10748 = vshrl.u32 %v10743, 16
        %v10749 = vmul.u32 %v10745, %v10747
        %v10750 = vmul.u32 %v10745, %v10748
        %v10751 = vmul.u32 %v10746, %v10747
        %v10752 = vmul.u32 %v10746, %v10748
        %v10753 = vshll.u32 %v10750, 16
        %v10754 = vshrl.u32 %v10750, 16
        %v10755 = vshll.u32 %v10751, 16
        %v10756 = vshrl.u32 %v10751, 16
        %vm10757 = vc.u32 %v10749, %v10753
        %v10758 = vsel %vm10757, 1, 0
        %v10759 = vadd.s32 %v10749, %v10753
        %v10760 = vadd.s32 %v10752, %v10758
        %vm10761 = vc.u32 %v10759, %v10755
        %v10762 = vsel %vm10761, 1, 0
        %v10763 = vadd.s32 %v10759, %v10755
        %v10764 = vadd.s32 %v10760, %v10762
        %v10765 = vadd.s32 %v10764, %v10754
        %v10766 = vadd.s32 %v10765, %v10756
        %v10767 = vand.u32 %v10744, 65535
        %v10768 = vshrl.u32 %v10744, 16
        %v10769 = vand.u32 %v10739, 65535
        %v10770 = vshrl.u32 %v10739, 16
        %v10771 = vmul.u32 %v10767, %v10769
        %v10772 = vmul.u32 %v10767, %v10770
        %v10773 = vmul.u32 %v10768, %v10769
        %v10774 = vmul.u32 %v10768, %v10770
        %v10775 = vshll.u32 %v10772, 16
        %v10776 = vshrl.u32 %v10772, 16
        %v10777 = vshll.u32 %v10773, 16
        %v10778 = vshrl.u32 %v10773, 16
        %vm10779 = vc.u32 %v10771, %v10775
        %v10780 = vsel %vm10779, 1, 0
        %v10781 = vadd.s32 %v10771, %v10775
        %v10782 = vadd.s32 %v10774, %v10780
        %vm10783 = vc.u32 %v10781, %v10777
        %v10784 = vsel %vm10783, 1, 0
        %v10785 = vadd.s32 %v10781, %v10777
        %v10786 = vadd.s32 %v10782, %v10784
        %v10787 = vadd.s32 %v10786, %v10776
        %v10788 = vadd.s32 %v10787, %v10778
        %v10789 = vmul.u32 %v10744, %v10735
        %v10790 = vadd.s32 %v10766, %v10785
        %vm10791 = vc.u32 %v10766, %v10785
        %v10792 = vadd.s32 %v10788, 1
        %v10793 = vsel %vm10791, %v10792, %v10788
        %v10794 = vadd.s32 %v10789, %v10793
        %v10795 = vadd.s32 %v10794, 536870912
        %v10796 = vshrl.u32 %v10795, 30
        %v10797 = vshll.u32 %v10796, 30
        %v10798 = vsub.s32 %v10794, %v10797
        %vm10799 = vcmp.lt.s32.totalorder %v10798, 0
        %v10800 = vsub.s32 0, %v10798
        %v10801 = vsel %vm10799, %v10800, %v10798
        %v10802 = vclz %v10801
        %v10803 = vsub.s32 %v10802, 2
        %vm10804 = vcmp.gt.s32.totalorder 0, %v10803
        %v10805 = vsel %vm10804, 0, %v10803
        %v10806 = vsub.s32 32, %v10805
        %v10807 = vshll.u32 %v10798, %v10805
        %v10808 = vshrl.u32 %v10790, %v10806
        %v10809 = vor.u32 %v10807, %v10808
        %v10810 = vsub.s32 4294967266, %v10805
        %v10811 = vadd.s32 %v10810, 127
        %v10812 = vshll.u32 %v10811, 23
        %v10813 = vor.u32 4788187, %v10812
        %v10814 = vand.u32 2147483647, %v10813
        %v10816 = vcvt.s32.f32 %v10809
        %v10817 = vmul.f32 %v10816, %v10814
        %v10818 = vxor.u32 %v10817, 2147483648
        %v10819 = vsel %vm10698, %v10818, %v10817
        %v10820 = vsub.s32 4, %v10796
        %v10821 = vsel %vm10698, %v10820, %v10796
        %v10822 = vsel %vm10697, %v5890, %v10819
        %v10823 = vsel %vm10697, 0, %v10821
        %v10824 = vmul.f32 %v10822, %v10822
        %v10825 = vmul.f32 %v10824, -0.001358992
        %v10826 = vadd.f32 %v10825, 0.041655596
        %v10827 = vmul.f32 %v10824, %v10826
        %v10828 = vadd.f32 %v10827, -0.4999988
        %v10829 = vmul.f32 %v10824, %v10828
        %v10830 = vadd.f32 1.0, %v10829
        %v10831 = vmul.f32 %v10822, %v10822
        %v10832 = vmul.f32 %v10831, -0.00019511016
        %v10833 = vadd.f32 %v10832, 0.008332121
        %v10834 = vmul.f32 %v10831, %v10833
        %v10835 = vadd.f32 %v10834, -0.16666654
        %v10836 = vmul.f32 %v10831, %v10835
        %v10837 = vadd.f32 %v10836, 1.0
        %v10838 = vmul.f32 %v10837, %v10822
        %vm10839 = vweird.f32 %v5890
        %v10840 = vadd.s32 %v10823, 3
        %v10841 = vand.u32 %v10840, 3
        %vm10842 = vcmp.lt.s32.totalorder %v10841, 2
        %vm10843 = vcmp.eq.s32.totalorder %v10841, 0
        %v10844 = vxor.u32 %v10838, 2147483648
        %v10845 = vsel %vm10843, %v10830, %v10844
        %vm10846 = vcmp.eq.s32.totalorder %v10841, 2
        %v10847 = vxor.u32 %v10830, 2147483648
        %v10848 = vsel %vm10846, %v10847, %v10838
        %v10849 = vsel %vm10842, %v10845, %v10848
        %v10850 = vsel %vm10839, nan, %v10849
        %10851 = vst.msk [vmem:[%s272] sm:$0xff] %vm285, %v813
        %10852 = vst.msk [vmem:[%s272 + $0x8] sm:$0xff] %vm285, %v968
        %10853 = vst.msk [vmem:[%s272 + $0x10] sm:$0xff] %vm285, %v1123
        %10854 = vst.msk [vmem:[%s272 + $0x18] sm:$0xff] %vm285, %v1278
        %10855 = vst.msk [vmem:[%s272 + $0x20] sm:$0xff] %vm285, %v1433
        %10856 = vst.msk [vmem:[%s272 + $0x28] sm:$0xff] %vm285, %v1588
        %10857 = vst.msk [vmem:[%s272 + $0x30] sm:$0xff] %vm285, %v1743
        %10858 = vst.msk [vmem:[%s272 + $0x38] sm:$0xff] %vm285, %v1898
        %10859 = vst.msk [vmem:[%s272 + $0x40] sm:$0xff] %vm285, %v2053
        %10860 = vst.msk [vmem:[%s272 + $0x48] sm:$0xff] %vm285, %v2208
        %10861 = vst.msk [vmem:[%s272 + $0x50] sm:$0xff] %vm285, %v2363
        %10862 = vst.msk [vmem:[%s272 + $0x58] sm:$0xff] %vm285, %v2518
        %10863 = vst.msk [vmem:[%s272 + $0x60] sm:$0xff] %vm285, %v2673
        %10864 = vst.msk [vmem:[%s272 + $0x68] sm:$0xff] %vm285, %v2828
        %10865 = vst.msk [vmem:[%s272 + $0x70] sm:$0xff] %vm285, %v2983
        %10866 = vst.msk [vmem:[%s272 + $0x78] sm:$0xff] %vm285, %v3138
        %10867 = vst.msk [vmem:[%s272 + $0x80] sm:$0xff] %vm285, %v3293
        %10868 = vst.msk [vmem:[%s272 + $0x88] sm:$0xff] %vm285, %v3448
        %10869 = vst.msk [vmem:[%s272 + $0x90] sm:$0xff] %vm285, %v3603
        %10870 = vst.msk [vmem:[%s272 + $0x98] sm:$0xff] %vm285, %v3758
        %10871 = vst.msk [vmem:[%s272 + $0xa0] sm:$0xff] %vm285, %v3913
        %10872 = vst.msk [vmem:[%s272 + $0xa8] sm:$0xff] %vm285, %v4068
        %10873 = vst.msk [vmem:[%s272 + $0xb0] sm:$0xff] %vm285, %v4223
        %10874 = vst.msk [vmem:[%s272 + $0xb8] sm:$0xff] %vm285, %v4378
        %10875 = vst.msk [vmem:[%s272 + $0xc0] sm:$0xff] %vm285, %v4533
        %10876 = vst.msk [vmem:[%s272 + $0xc8] sm:$0xff] %vm285, %v4688
        %10877 = vst.msk [vmem:[%s272 + $0xd0] sm:$0xff] %vm285, %v4843
        %10878 = vst.msk [vmem:[%s272 + $0xd8] sm:$0xff] %vm285, %v4998
        %10879 = vst.msk [vmem:[%s272 + $0xe0] sm:$0xff] %vm285, %v5153
        %10880 = vst.msk [vmem:[%s272 + $0xe8] sm:$0xff] %vm285, %v5308
        %10881 = vst.msk [vmem:[%s272 + $0xf0] sm:$0xff] %vm285, %v5463
        %10882 = vst.msk [vmem:[%s272 + $0xf8] sm:$0xff] %vm285, %v5618
        %10915 = vrot.lane.b32.xlu0 %v6045, 16
        %v10916 = vpop.permute.xlu0 %10915
        %10917 = vrot.lane.b32.xlu0 %v6200, 16
        %v10918 = vpop.permute.xlu0 %10917
        %10919 = vrot.lane.b32.xlu0 %v6355, 16
        %v10920 = vpop.permute.xlu0 %10919
        %10921 = vrot.lane.b32.xlu0 %v6510, 16
        %v10922 = vpop.permute.xlu0 %10921
        %10923 = vrot.lane.b32.xlu0 %v6665, 16
        %v10924 = vpop.permute.xlu0 %10923
        %10925 = vrot.lane.b32.xlu0 %v6820, 16
        %v10926 = vpop.permute.xlu0 %10925
        %10927 = vrot.lane.b32.xlu0 %v6975, 16
        %v10928 = vpop.permute.xlu0 %10927
        %10929 = vrot.lane.b32.xlu0 %v7130, 16
        %v10930 = vpop.permute.xlu0 %10929
        %10931 = vrot.lane.b32.xlu0 %v7285, 16
        %v10932 = vpop.permute.xlu0 %10931
        %10933 = vrot.lane.b32.xlu0 %v7440, 16
        %v10934 = vpop.permute.xlu0 %10933
        %10935 = vrot.lane.b32.xlu0 %v7595, 16
        %v10936 = vpop.permute.xlu0 %10935
        %10937 = vrot.lane.b32.xlu0 %v7750, 16
        %v10938 = vpop.permute.xlu0 %10937
        %10939 = vrot.lane.b32.xlu0 %v7905, 16
        %v10940 = vpop.permute.xlu0 %10939
        %10941 = vrot.lane.b32.xlu0 %v8060, 16
        %v10942 = vpop.permute.xlu0 %10941
        %10943 = vrot.lane.b32.xlu0 %v8215, 16
        %v10944 = vpop.permute.xlu0 %10943
        %10945 = vrot.lane.b32.xlu0 %v8370, 16
        %v10946 = vpop.permute.xlu0 %10945
        %10947 = vrot.lane.b32.xlu0 %v8525, 16
        %v10948 = vpop.permute.xlu0 %10947
        %10949 = vrot.lane.b32.xlu0 %v8680, 16
        %v10950 = vpop.permute.xlu0 %10949
        %10951 = vrot.lane.b32.xlu0 %v8835, 16
        %v10952 = vpop.permute.xlu0 %10951
        %10953 = vrot.lane.b32.xlu0 %v8990, 16
        %v10954 = vpop.permute.xlu0 %10953
        %10955 = vrot.lane.b32.xlu0 %v9145, 16
        %v10956 = vpop.permute.xlu0 %10955
        %10957 = vrot.lane.b32.xlu0 %v9300, 16
        %v10958 = vpop.permute.xlu0 %10957
        %10959 = vrot.lane.b32.xlu0 %v9455, 16
        %v10960 = vpop.permute.xlu0 %10959
        %10961 = vrot.lane.b32.xlu0 %v9610, 16
        %v10962 = vpop.permute.xlu0 %10961
        %10963 = vrot.lane.b32.xlu0 %v9765, 16
        %v10964 = vpop.permute.xlu0 %10963
        %10965 = vrot.lane.b32.xlu0 %v9920, 16
        %v10966 = vpop.permute.xlu0 %10965
        %10967 = vrot.lane.b32.xlu0 %v10075, 16
        %v10968 = vpop.permute.xlu0 %10967
        %10969 = vrot.lane.b32.xlu0 %v10230, 16
        %v10970 = vpop.permute.xlu0 %10969
        %10971 = vrot.lane.b32.xlu0 %v10385, 16
        %v10972 = vpop.permute.xlu0 %10971
        %10973 = vrot.lane.b32.xlu0 %v10540, 16
        %v10974 = vpop.permute.xlu0 %10973
        %10975 = vrot.lane.b32.xlu0 %v10695, 16
        %v10976 = vpop.permute.xlu0 %10975
        %10977 = vrot.lane.b32.xlu0 %v10850, 16
        %v10978 = vpop.permute.xlu0 %10977
        %vm11011 = vcmask 261248
        %11012 = vst.msk [vmem:[%s272] sm:$0xff] %vm11011, %v10916
        %11013 = vst.msk [vmem:[%s272 + $0x8] sm:$0xff] %vm11011, %v10918
        %11014 = vst.msk [vmem:[%s272 + $0x10] sm:$0xff] %vm11011, %v10920
        %11015 = vst.msk [vmem:[%s272 + $0x18] sm:$0xff] %vm11011, %v10922
        %11016 = vst.msk [vmem:[%s272 + $0x20] sm:$0xff] %vm11011, %v10924
        %11017 = vst.msk [vmem:[%s272 + $0x28] sm:$0xff] %vm11011, %v10926
        %11018 = vst.msk [vmem:[%s272 + $0x30] sm:$0xff] %vm11011, %v10928
        %11019 = vst.msk [vmem:[%s272 + $0x38] sm:$0xff] %vm11011, %v10930
        %11020 = vst.msk [vmem:[%s272 + $0x40] sm:$0xff] %vm11011, %v10932
        %11021 = vst.msk [vmem:[%s272 + $0x48] sm:$0xff] %vm11011, %v10934
        %11022 = vst.msk [vmem:[%s272 + $0x50] sm:$0xff] %vm11011, %v10936
        %11023 = vst.msk [vmem:[%s272 + $0x58] sm:$0xff] %vm11011, %v10938
        %11024 = vst.msk [vmem:[%s272 + $0x60] sm:$0xff] %vm11011, %v10940
        %11025 = vst.msk [vmem:[%s272 + $0x68] sm:$0xff] %vm11011, %v10942
        %11026 = vst.msk [vmem:[%s272 + $0x70] sm:$0xff] %vm11011, %v10944
        %11027 = vst.msk [vmem:[%s272 + $0x78] sm:$0xff] %vm11011, %v10946
        %11028 = vst.msk [vmem:[%s272 + $0x80] sm:$0xff] %vm11011, %v10948
        %11029 = vst.msk [vmem:[%s272 + $0x88] sm:$0xff] %vm11011, %v10950
        %11030 = vst.msk [vmem:[%s272 + $0x90] sm:$0xff] %vm11011, %v10952
        %11031 = vst.msk [vmem:[%s272 + $0x98] sm:$0xff] %vm11011, %v10954
        %11032 = vst.msk [vmem:[%s272 + $0xa0] sm:$0xff] %vm11011, %v10956
        %11033 = vst.msk [vmem:[%s272 + $0xa8] sm:$0xff] %vm11011, %v10958
        %11034 = vst.msk [vmem:[%s272 + $0xb0] sm:$0xff] %vm11011, %v10960
        %11035 = vst.msk [vmem:[%s272 + $0xb8] sm:$0xff] %vm11011, %v10962
        %11036 = vst.msk [vmem:[%s272 + $0xc0] sm:$0xff] %vm11011, %v10964
        %11037 = vst.msk [vmem:[%s272 + $0xc8] sm:$0xff] %vm11011, %v10966
        %11038 = vst.msk [vmem:[%s272 + $0xd0] sm:$0xff] %vm11011, %v10968
        %11039 = vst.msk [vmem:[%s272 + $0xd8] sm:$0xff] %vm11011, %v10970
        %11040 = vst.msk [vmem:[%s272 + $0xe0] sm:$0xff] %vm11011, %v10972
        %11041 = vst.msk [vmem:[%s272 + $0xe8] sm:$0xff] %vm11011, %v10974
        %11042 = vst.msk [vmem:[%s272 + $0xf0] sm:$0xff] %vm11011, %v10976
        %11043 = vst.msk [vmem:[%s272 + $0xf8] sm:$0xff] %vm11011, %v10978
        %s11044 = sand.u32 %s138, 1
        %s11045 = scalar_lea.sflag [#allocation4], %s11044
        %s11046 = sand.u32 %s138, 1
        %s11047 = smul.addr %s11046, 256
        %s11048 = scalar_lea.vmem [#allocation8], %s11047
        // Predicated region
        $region49: #{tpu_custom_call.1} parent=35 // pred_check
          %p11049 = pneg %p148
        $region50: #{tpu_custom_call.1} parent=35 // pred_check_branch
          %11051 = sbr.rel (%p11049) target = $region52
        $region51: #{tpu_custom_call.1} parent=35 // pred_region
          %s11052 = smul.u32 16, %s27
          %11054 = vsyncadd %s11045, 0
          %s11055 = smul.addr %s11052, 2
          %s11056 = smul.addr %s26, 32
          %s11057 = sadd.s32 %s11055, %s11056
          %s11058 = smul.addr %s11057, 8
          %s11059 = scalar_lea.hbm %s4, %s11058
          %s11060 = sshll.u32 %s11048, 4
          %s11061 = int_to_ptr.vmem [resolvable:$true] %s11060
          %s11062 = sshll.u32 %s11059, 4
          %s11063 = int_to_ptr.hbm [resolvable:$true] %s11062
          %11068 = dma.vmem_to_hbm [thread:$0]  %s11061, 4096, %s11063, %s11045, 128, 128, 8
        $region52: #{tpu_custom_call.1} parent=35 // pred_fallthru
          _
      $region36: #{tpu_custom_call.1} parent=5 // pred_fallthru
        _
      %p11069 = scmp.le.s32.totalorder 2, %s17
      // Predicated region
      $region53: #{tpu_custom_call.1} parent=5 // pred_check
        %p11070 = pneg %p11069
      $region54: #{tpu_custom_call.1} parent=5 // pred_check_branch
        %11072 = sbr.rel (%p11070) target = $region56
      $region55: #{tpu_custom_call.1} parent=5 // pred_region
        %s11073 = ssub.s32 %s17, 2
        // Predicated region
        $region57: #{tpu_custom_call.1} parent=55 // pred_check
          %p11074 = pneg %p154
        $region58: #{tpu_custom_call.1} parent=55 // pred_check_branch
          %11076 = sbr.rel (%p11074) target = $region60
        $region59: #{tpu_custom_call.1} parent=55 // pred_region
          %s11077 = sand.u32 %s139, 1
          %s11078 = scalar_lea.sflag [#allocation4], %s11077
          %s11079 = sand.u32 %s139, 1
          %s11080 = smul.addr %s11079, 256
          %s11081 = scalar_lea.vmem [#allocation8], %s11080
          %11083 = dma.done %s11078, 4096
        $region60: #{tpu_custom_call.1} parent=55 // pred_fallthru
          _
      $region56: #{tpu_custom_call.1} parent=5 // pred_fallthru
        _
    $region6: #{tpu_custom_call.1} parent=1 // loop_footer
      %s21 = sadd.s32 1, %s17
    $region7: #{tpu_custom_call.1} parent=1 // loop_footer_branch
      %16 = sbr.rel target = $region3
    $region8: #{tpu_custom_call.1} parent=1 // loop_exit
      _
    %11084 = vsyncpa [#allocation3], 1
    %s11085 = scalar_lea.sflag [#allocation3], 1
    %11086 = vsyncpa %s11085, 1
    %11087 = vsyncpa [#allocation6], 1
    %11088 = vsyncpa [#allocation4], 1
    %s11089 = scalar_lea.sflag [#allocation4], 1
    %11090 = vsyncpa %s11089, 1

</llo_original>
